<compile_context>
chip_gen: v5e
topology: v5e:2x2
jax: 0.10.0
libtpu: 0.0.40
codegen_flags: <defaults>
</compile_context>

<pallas_src>
import math

import jax
import jax.numpy as jnp
from jax import lax
from jax.experimental import pallas as pl
from jax.experimental.pallas import tpu as pltpu


# ----------------------------------------------------------------------------
# Pallas kernel: one ConvLSTM layer (all T timesteps for one batch element
# per "parallel" grid slot; the "arbitrary" axis is time).
# ----------------------------------------------------------------------------
def _make_layer_kernel(H, W, Cin, hid, kh, kw, compute_dtype):
    pad_h, pad_w = kh // 2, kw // 2
    C = Cin + hid            # channels of the (virtual) concat([x, h])
    N = H * W                # spatial positions handled per grid step
    G = 4 * hid              # gate channels

    def kernel(x_ref, w_ref, b_ref, hseq_ref, c_ref, patch_ref, hpad_ref):
        t = pl.program_id(1)

        # Reset the carried state at the start of each sequence (each batch elem).
        @pl.when(t == 0)
        def _init():
            hpad_ref[...] = jnp.zeros_like(hpad_ref)
            c_ref[...] = jnp.zeros_like(c_ref)

        x = x_ref[...]        # (Hp, Wp, Cin)  zero-padded input frame
        hp = hpad_ref[...]    # (Hp, Wp, hid)  zero-padded h_{t-1}

        # --- im2col scatter: build one fat-K patch matrix in VMEM.
        # Column order matches PyTorch OIHW weights reshaped as
        # (kh, kw, Cin+hid, 4*hid): tap-major, [x-channels ; h-channels] minor.
        for dy in range(kh):
            for dx in range(kw):
                base = (dy * kw + dx) * C
                patch_ref[:, base:base + Cin] = (
                    x[dy:dy + H, dx:dx + W, :].reshape(N, Cin))
                patch_ref[:, base + Cin:base + C] = (
                    hp[dy:dy + H, dx:dx + W, :].reshape(N, hid))

        # --- single MXU matmul (bias fused), f32 accumulation.
        patches = patch_ref[...].astype(compute_dtype)              # (N, K)
        z = jnp.dot(patches, w_ref[...],
                    preferred_element_type=jnp.float32) + b_ref[...]  # (N, 4*hid)

        # --- gates: one masked full-tile pass (i, f, o -> sigmoid ; g -> tanh)
        col = lax.broadcasted_iota(jnp.int32, z.shape, 1)
        act = jnp.where(col < 3 * hid, jax.nn.sigmoid(z), jnp.tanh(z))
        i_g = act[:, 0 * hid:1 * hid]
        f_g = act[:, 1 * hid:2 * hid]
        o_g = act[:, 2 * hid:3 * hid]
        g_g = act[:, 3 * hid:4 * hid]

        # --- state update (float32, elementwise)
        c_next = f_g * c_ref[...] + i_g * g_g                        # (N, hid)
        h_next = o_g * jnp.tanh(c_next)

        c_ref[...] = c_next                  # resident cell state / final c out
        hseq_ref[...] = h_next               # per-timestep hidden output
        # make h_t spatially addressable for step t+1 (padding ring stays zero)
        hpad_ref[pad_h:pad_h + H, pad_w:pad_w + W, :] = h_next.reshape(H, W, hid)

    return kernel


def _convlstm_layer(x_seq, w_all, b_row, hid, kh, kw, compute_dtype):
    """One ConvLSTM layer over the whole sequence.

    x_seq : (T, B, H, W, Cin) float32, channels-last.
    w_all : (kh*kw*(Cin+hid), 4*hid) im2col weight matrix (compute_dtype).
    b_row : (1, 4*hid) float32 bias.
    Returns (h_seq (T,B,H,W,hid), c_last (B,H,W,hid)) in float32.
    """
    T, B, H, W, Cin = x_seq.shape
    pad_h, pad_w = kh // 2, kw // 2
    Hp, Wp = H + 2 * pad_h, W + 2 * pad_w
    C = Cin + hid
    K = kh * kw * C
    N = H * W
    G = 4 * hid

    # "same" padding of the whole sequence, once per layer (no per-step pad).
    x_pad = jnp.pad(x_seq, ((0, 0), (0, 0), (pad_h, pad_h), (pad_w, pad_w), (0, 0)))
    x_pad = x_pad.reshape(T * B, Hp, Wp, Cin)

    kernel = _make_layer_kernel(H, W, Cin, hid, kh, kw, compute_dtype)

    h_seq, c_last = pl.pallas_call(
        kernel,
        grid=(B, T),
        out_shape=(jax.ShapeDtypeStruct((T * B, N, hid), jnp.float32),
                   jax.ShapeDtypeStruct((B, N, hid), jnp.float32)),
        in_specs=[
            # per-step input frame, streamed (double-buffered) from HBM
            pl.BlockSpec((None, Hp, Wp, Cin), lambda b, t: (t * B + b, 0, 0, 0)),
            # weights / bias: constant block index -> stay resident in VMEM
            pl.BlockSpec((K, G), lambda b, t: (0, 0)),
            pl.BlockSpec((1, G), lambda b, t: (0, 0)),
        ],
        out_specs=(
            # per-timestep hidden output
            pl.BlockSpec((None, N, hid), lambda b, t: (t * B + b, 0, 0)),
            # cell state: same block across t -> VMEM-resident accumulator
            pl.BlockSpec((None, N, hid), lambda b, t: (b, 0, 0)),
        ),
        scratch_shapes=[
            pltpu.VMEM((N, K), jnp.float32),          # im2col patch buffer
            pltpu.VMEM((Hp, Wp, hid), jnp.float32),   # zero-padded carried h
        ],
        compiler_params=pltpu.CompilerParams(
            dimension_semantics=("parallel", "arbitrary")),
    )(x_pad, w_all, b_row)

    h_seq = h_seq.reshape(T, B, H, W, hid)
    c_last = c_last.reshape(B, H, W, hid)
    return h_seq, c_last


# ----------------------------------------------------------------------------
# Parameters (PyTorch Conv2d layout + one-time re-layout to im2col matrices)
# ----------------------------------------------------------------------------
def init_convlstm_params(key, input_dim, hidden_dims, kernel_sizes):
    """PyTorch nn.Conv2d default init, weights kept in OIHW like the module."""
    params = []
    cur = input_dim
    for hid, (kh, kw) in zip(hidden_dims, kernel_sizes):
        cin = cur + hid
        fan_in = cin * kh * kw
        bound = 1.0 / math.sqrt(fan_in)
        key, k_w, k_b = jax.random.split(key, 3)
        w = jax.random.uniform(k_w, (4 * hid, cin, kh, kw), jnp.float32,
                               -bound, bound)
        b = jax.random.uniform(k_b, (4 * hid,), jnp.float32, -bound, bound)
        params.append((w, b))
        cur = hid
    return params


def prepare_convlstm_params(params, compute_dtype=jnp.float32):
    """One-time re-layout: OIHW conv weight -> im2col matrix (K, 4*hid)."""
    prepared = []
    for (w, b) in params:
        out_ch, c, kh, kw = w.shape
        w_all = jnp.transpose(w, (2, 3, 1, 0)).reshape(kh * kw * c, out_ch)
        prepared.append((w_all.astype(compute_dtype),
                         b.reshape(1, out_ch).astype(jnp.float32)))
    return prepared


# ----------------------------------------------------------------------------
# ConvLSTM module forward (mirrors the PyTorch reference semantics)
# ----------------------------------------------------------------------------
def convlstm_forward(x, prepared_params, hidden_dims, kernel_sizes,
                     batch_first=True, return_all_layers=False,
                     compute_dtype=jnp.float32):
    """Matches ConvLSTM.forward: returns (layer_output_list, last_state_list).

    x: (B, T, C, H, W) if batch_first else (T, B, C, H, W), NCHW frames.
    Each layer output: (B, T, hid, H, W).  Each last state: (h, c) in NCHW.
    """
    if not batch_first:
        x = jnp.transpose(x, (1, 0, 2, 3, 4))
    # single boundary transpose: (B,T,C,H,W) -> (T,B,H,W,C) channels-last
    cur = jnp.transpose(x.astype(jnp.float32), (1, 0, 3, 4, 2))

    layer_outputs, last_states = [], []
    for hid, (kh, kw), (w_all, b_row) in zip(hidden_dims, kernel_sizes,
                                             prepared_params):
        h_seq, c_last = _convlstm_layer(cur, w_all, b_row, hid, kh, kw,
                                        compute_dtype)
        layer_outputs.append(h_seq)
        last_states.append((h_seq[-1], c_last))
        cur = h_seq

    to_btchw = lambda s: jnp.transpose(s, (1, 0, 4, 2, 3))  # (T,B,H,W,C)->(B,T,C,H,W)
    to_bchw = lambda f: jnp.transpose(f, (0, 3, 1, 2))      # (B,H,W,C)->(B,C,H,W)
    layer_output_list = [to_btchw(o) for o in layer_outputs]
    last_state_list = [(to_bchw(h), to_bchw(c)) for (h, c) in last_states]
    if not return_all_layers:
        layer_output_list = layer_output_list[-1:]
        last_state_list = last_state_list[-1:]
    return layer_output_list, last_state_list


# ----------------------------------------------------------------------------
# Pure-JAX reference (for correctness checks).  compute_dtype lets us build a
# precision-matched reference for the bf16-MXU configuration.
# ----------------------------------------------------------------------------
def _ref_forward(x, params, hidden_dims, kernel_sizes, return_all_layers=False,
                 compute_dtype=jnp.float32):
    B, T, _, H, W = x.shape
    cur_layer_input = x.astype(jnp.float32)
    layer_outputs, last_states = [], []
    for (hid, (kh, kw), (w, b)) in zip(hidden_dims, kernel_sizes, params):
        h = jnp.zeros((B, hid, H, W), jnp.float32)
        c = jnp.zeros((B, hid, H, W), jnp.float32)
        outs = []
        for t in range(T):
            comb = jnp.concatenate([cur_layer_input[:, t], h], axis=1)
            z = lax.conv_general_dilated(
                comb.astype(compute_dtype), w.astype(compute_dtype),
                window_strides=(1, 1),
                padding=((kh // 2, kh // 2), (kw // 2, kw // 2)),
                dimension_numbers=('NCHW', 'OIHW', 'NCHW'),
                preferred_element_type=jnp.float32)
            z = z + b[None, :, None, None]
            i = jax.nn.sigmoid(z[:, 0 * hid:1 * hid])
            f = jax.nn.sigmoid(z[:, 1 * hid:2 * hid])
            o = jax.nn.sigmoid(z[:, 2 * hid:3 * hid])
            g = jnp.tanh(z[:, 3 * hid:4 * hid])
            c = f * c + i * g
            h = o * jnp.tanh(c)
            outs.append(h)
        layer_out = jnp.stack(outs, axis=1)
        cur_layer_input = layer_out
        layer_outputs.append(layer_out)
        last_states.append((h, c))
    if not return_all_layers:
        layer_outputs, last_states = layer_outputs[-1:], last_states[-1:]
    return layer_outputs, last_states


# ----------------------------------------------------------------------------
if __name__ == "__main__":
    # ConvLSTM(input_dim=4, hidden_dim=8, kernel_size=(3,3), num_layers=2,
    #          batch_first=True, bias=True, return_all_layers=False)
    B, T, Cin, H, W = 2, 8, 4, 16, 16
    hidden_dims = [8, 8]
    kernel_sizes = [(3, 3), (3, 3)]

    key = jax.random.PRNGKey(0)
    key, xk = jax.random.split(key)
    x = jax.random.normal(xk, (B, T, Cin, H, W), jnp.float32)
    params = init_convlstm_params(key, Cin, hidden_dims, kernel_sizes)

    # ---- float32 MXU operands (safe on all generations incl. v5e): strict check
    prep_f32 = prepare_convlstm_params(params, jnp.float32)
    fwd_f32 = jax.jit(lambda xx, pp: convlstm_forward(
        xx, pp, hidden_dims, kernel_sizes, batch_first=True,
        return_all_layers=False, compute_dtype=jnp.float32))
    layer_outputs, last_states = fwd_f32(x, prep_f32)
    out = layer_outputs[0]
    h_last, c_last = last_states[0]
    jax.block_until_ready(out)
    jax.block_until_ready(h_last)
    jax.block_until_ready(c_last)

    assert out.shape == (B, T, hidden_dims[-1], H, W)
    assert h_last.shape == (B, hidden_dims[-1], H, W)
    assert c_last.shape == (B, hidden_dims[-1], H, W)

    ref_outs, ref_states = _ref_forward(x, params, hidden_dims, kernel_sizes,
                                        compute_dtype=jnp.float32)
    assert jnp.allclose(out, ref_outs[0], rtol=1e-2, atol=1e-2)
    assert jnp.allclose(h_last, ref_states[0][0], rtol=1e-2, atol=1e-2)
    assert jnp.allclose(c_last, ref_states[0][1], rtol=1e-2, atol=1e-2)

    # ---- bfloat16 MXU operands (recommended on v6e/v7x), f32 accumulation,
    #      checked against a precision-matched reference.
    prep_bf16 = prepare_convlstm_params(params, jnp.bfloat16)
    fwd_bf16 = jax.jit(lambda xx, pp: convlstm_forward(
        xx, pp, hidden_dims, kernel_sizes, batch_first=True,
        return_all_layers=False, compute_dtype=jnp.bfloat16))
    outs_bf, states_bf = fwd_bf16(x, prep_bf16)
    jax.block_until_ready(outs_bf[0])
    ref_bf_outs, ref_bf_states = _ref_forward(x, params, hidden_dims,
                                              kernel_sizes,
                                              compute_dtype=jnp.bfloat16)
    assert jnp.allclose(outs_bf[0], ref_bf_outs[0], rtol=1e-2, atol=1e-2)
    assert jnp.allclose(states_bf[0][0], ref_bf_states[0][0], rtol=1e-2, atol=1e-2)
    assert jnp.allclose(states_bf[0][1], ref_bf_states[0][1], rtol=1e-2, atol=1e-2)

    print("KERNEL_OK")
</pallas_src>

<mosaic_0001>
module attributes {stable_mosaic.version = 11 : i64} {
  func.func @kernel(%arg0: i32, %arg1: i32, %arg2: memref<1x18x18x4xf32, #tpu.memory_space<vmem>>, %arg3: memref<108x32xf32, #tpu.memory_space<vmem>>, %arg4: memref<1x32xf32, #tpu.memory_space<vmem>>, %arg5: memref<1x256x8xf32, #tpu.memory_space<vmem>>, %arg6: memref<1x256x8xf32, #tpu.memory_space<vmem>>, %arg7: memref<256x108xf32, #tpu.memory_space<vmem>>, %arg8: memref<18x18x8xf32, #tpu.memory_space<vmem>>) attributes {dimension_semantics = [#tpu.dimension_semantics<parallel>, #tpu.dimension_semantics<arbitrary>], iteration_bounds = array<i64: 2, 8>, scalar_prefetch = 0 : i64, scratch_operands = 2 : i64, tpu.core_type = #tpu.core_type<tc>, window_params = [{transform_indices = @transform_0, window_bounds = array<i64: 1, 18, 18, 4>}, {pipeline_mode = #tpu.pipeline_mode<synchronous>, transform_indices = @transform_1, window_bounds = array<i64: 108, 32>}, {pipeline_mode = #tpu.pipeline_mode<synchronous>, transform_indices = @transform_2, window_bounds = array<i64: 1, 32>}, {transform_indices = @transform_3, window_bounds = array<i64: 1, 256, 8>}, {transform_indices = @transform_4, window_bounds = array<i64: 1, 256, 8>}]} {
    %c0_i32 = arith.constant 0 : i32
    %0 = arith.cmpi eq, %arg1, %c0_i32 : i32
    %1 = arith.extui %0 : i1 to i32
    %c0_i32_0 = arith.constant 0 : i32
    %2 = arith.cmpi ne, %1, %c0_i32_0 : i32
    scf.if %2 {
      %cst_44 = arith.constant 0.000000e+00 : f32
      %95 = vector.broadcast %cst_44 : f32 to vector<18x18x8xf32>
      %c0_45 = arith.constant 0 : index
      %c0_46 = arith.constant 0 : index
      %c0_47 = arith.constant 0 : index
      %96 = vector.load %arg8[%c0_45, %c0_46, %c0_47] : memref<18x18x8xf32, #tpu.memory_space<vmem>>, vector<18x18x8xf32>
      tpu.vector_store %arg8[%c0_45, %c0_46, %c0_47], %95 {strides = array<i32>} : memref<18x18x8xf32, #tpu.memory_space<vmem>>, vector<18x18x8xf32>,
      %cst_48 = arith.constant 0.000000e+00 : f32
      %97 = vector.broadcast %cst_48 : f32 to vector<256x8xf32>
      %c0_49 = arith.constant 0 : index
      %c0_50 = arith.constant 0 : index
      %c0_51 = arith.constant 0 : index
      %98 = vector.load %arg6[%c0_49, %c0_50, %c0_51] : memref<1x256x8xf32, #tpu.memory_space<vmem>>, vector<1x256x8xf32>
      %99 = vector.shape_cast %98 : vector<1x256x8xf32> to vector<256x8xf32>
      %100 = vector.shape_cast %97 : vector<256x8xf32> to vector<1x256x8xf32>
      tpu.vector_store %arg6[%c0_49, %c0_50, %c0_51], %100 {strides = array<i32>} : memref<1x256x8xf32, #tpu.memory_space<vmem>>, vector<1x256x8xf32>,
    } else {
    }
    %c0 = arith.constant 0 : index
    %c0_1 = arith.constant 0 : index
    %c0_2 = arith.constant 0 : index
    %c0_3 = arith.constant 0 : index
    %3 = vector.load %arg2[%c0, %c0_1, %c0_2, %c0_3] : memref<1x18x18x4xf32, #tpu.memory_space<vmem>>, vector<1x18x18x4xf32>
    %4 = vector.shape_cast %3 : vector<1x18x18x4xf32> to vector<18x18x4xf32>
    %c0_4 = arith.constant 0 : index
    %c0_5 = arith.constant 0 : index
    %c0_6 = arith.constant 0 : index
    %5 = vector.load %arg8[%c0_4, %c0_5, %c0_6] : memref<18x18x8xf32, #tpu.memory_space<vmem>>, vector<18x18x8xf32>
    %6 = vector.extract_strided_slice %4 {offsets = [0, 0, 0], sizes = [16, 16, 4], strides = [1, 1, 1]} : vector<18x18x4xf32> to vector<16x16x4xf32>
    %7 = vector.shape_cast %6 : vector<16x16x4xf32> to vector<256x4xf32>
    %c0_7 = arith.constant 0 : index
    %c0_8 = arith.constant 0 : index
    %8 = vector.load %arg7[%c0_7, %c0_8] : memref<256x108xf32, #tpu.memory_space<vmem>>, vector<256x4xf32>
    tpu.vector_store %arg7[%c0_7, %c0_8], %7 {strides = array<i32>} : memref<256x108xf32, #tpu.memory_space<vmem>>, vector<256x4xf32>,
    %9 = vector.extract_strided_slice %5 {offsets = [0, 0, 0], sizes = [16, 16, 8], strides = [1, 1, 1]} : vector<18x18x8xf32> to vector<16x16x8xf32>
    %10 = vector.shape_cast %9 : vector<16x16x8xf32> to vector<256x8xf32>
    %c0_9 = arith.constant 0 : index
    %c4 = arith.constant 4 : index
    %11 = vector.load %arg7[%c0_9, %c4] : memref<256x108xf32, #tpu.memory_space<vmem>>, vector<256x8xf32>
    tpu.vector_store %arg7[%c0_9, %c4], %10 {strides = array<i32>} : memref<256x108xf32, #tpu.memory_space<vmem>>, vector<256x8xf32>,
    %12 = vector.extract_strided_slice %4 {offsets = [0, 1, 0], sizes = [16, 16, 4], strides = [1, 1, 1]} : vector<18x18x4xf32> to vector<16x16x4xf32>
    %13 = vector.shape_cast %12 : vector<16x16x4xf32> to vector<256x4xf32>
    %c0_10 = arith.constant 0 : index
    %c12 = arith.constant 12 : index
    %14 = vector.load %arg7[%c0_10, %c12] : memref<256x108xf32, #tpu.memory_space<vmem>>, vector<256x4xf32>
    tpu.vector_store %arg7[%c0_10, %c12], %13 {strides = array<i32>} : memref<256x108xf32, #tpu.memory_space<vmem>>, vector<256x4xf32>,
    %15 = vector.extract_strided_slice %5 {offsets = [0, 1, 0], sizes = [16, 16, 8], strides = [1, 1, 1]} : vector<18x18x8xf32> to vector<16x16x8xf32>
    %16 = vector.shape_cast %15 : vector<16x16x8xf32> to vector<256x8xf32>
    %c0_11 = arith.constant 0 : index
    %c16 = arith.constant 16 : index
    %17 = vector.load %arg7[%c0_11, %c16] : memref<256x108xf32, #tpu.memory_space<vmem>>, vector<256x8xf32>
    tpu.vector_store %arg7[%c0_11, %c16], %16 {strides = array<i32>} : memref<256x108xf32, #tpu.memory_space<vmem>>, vector<256x8xf32>,
    %18 = vector.extract_strided_slice %4 {offsets = [0, 2, 0], sizes = [16, 16, 4], strides = [1, 1, 1]} : vector<18x18x4xf32> to vector<16x16x4xf32>
    %19 = vector.shape_cast %18 : vector<16x16x4xf32> to vector<256x4xf32>
    %c0_12 = arith.constant 0 : index
    %c24 = arith.constant 24 : index
    %20 = vector.load %arg7[%c0_12, %c24] : memref<256x108xf32, #tpu.memory_space<vmem>>, vector<256x4xf32>
    tpu.vector_store %arg7[%c0_12, %c24], %19 {strides = array<i32>} : memref<256x108xf32, #tpu.memory_space<vmem>>, vector<256x4xf32>,
    %21 = vector.extract_strided_slice %5 {offsets = [0, 2, 0], sizes = [16, 16, 8], strides = [1, 1, 1]} : vector<18x18x8xf32> to vector<16x16x8xf32>
    %22 = vector.shape_cast %21 : vector<16x16x8xf32> to vector<256x8xf32>
    %c0_13 = arith.constant 0 : index
    %c28 = arith.constant 28 : index
    %23 = vector.load %arg7[%c0_13, %c28] : memref<256x108xf32, #tpu.memory_space<vmem>>, vector<256x8xf32>
    tpu.vector_store %arg7[%c0_13, %c28], %22 {strides = array<i32>} : memref<256x108xf32, #tpu.memory_space<vmem>>, vector<256x8xf32>,
    %24 = vector.extract_strided_slice %4 {offsets = [1, 0, 0], sizes = [16, 16, 4], strides = [1, 1, 1]} : vector<18x18x4xf32> to vector<16x16x4xf32>
    %25 = vector.shape_cast %24 : vector<16x16x4xf32> to vector<256x4xf32>
    %c0_14 = arith.constant 0 : index
    %c36 = arith.constant 36 : index
    %26 = vector.load %arg7[%c0_14, %c36] : memref<256x108xf32, #tpu.memory_space<vmem>>, vector<256x4xf32>
    tpu.vector_store %arg7[%c0_14, %c36], %25 {strides = array<i32>} : memref<256x108xf32, #tpu.memory_space<vmem>>, vector<256x4xf32>,
    %27 = vector.extract_strided_slice %5 {offsets = [1, 0, 0], sizes = [16, 16, 8], strides = [1, 1, 1]} : vector<18x18x8xf32> to vector<16x16x8xf32>
    %28 = vector.shape_cast %27 : vector<16x16x8xf32> to vector<256x8xf32>
    %c0_15 = arith.constant 0 : index
    %c40 = arith.constant 40 : index
    %29 = vector.load %arg7[%c0_15, %c40] : memref<256x108xf32, #tpu.memory_space<vmem>>, vector<256x8xf32>
    tpu.vector_store %arg7[%c0_15, %c40], %28 {strides = array<i32>} : memref<256x108xf32, #tpu.memory_space<vmem>>, vector<256x8xf32>,
    %30 = vector.extract_strided_slice %4 {offsets = [1, 1, 0], sizes = [16, 16, 4], strides = [1, 1, 1]} : vector<18x18x4xf32> to vector<16x16x4xf32>
    %31 = vector.shape_cast %30 : vector<16x16x4xf32> to vector<256x4xf32>
    %c0_16 = arith.constant 0 : index
    %c48 = arith.constant 48 : index
    %32 = vector.load %arg7[%c0_16, %c48] : memref<256x108xf32, #tpu.memory_space<vmem>>, vector<256x4xf32>
    tpu.vector_store %arg7[%c0_16, %c48], %31 {strides = array<i32>} : memref<256x108xf32, #tpu.memory_space<vmem>>, vector<256x4xf32>,
    %33 = vector.extract_strided_slice %5 {offsets = [1, 1, 0], sizes = [16, 16, 8], strides = [1, 1, 1]} : vector<18x18x8xf32> to vector<16x16x8xf32>
    %34 = vector.shape_cast %33 : vector<16x16x8xf32> to vector<256x8xf32>
    %c0_17 = arith.constant 0 : index
    %c52 = arith.constant 52 : index
    %35 = vector.load %arg7[%c0_17, %c52] : memref<256x108xf32, #tpu.memory_space<vmem>>, vector<256x8xf32>
    tpu.vector_store %arg7[%c0_17, %c52], %34 {strides = array<i32>} : memref<256x108xf32, #tpu.memory_space<vmem>>, vector<256x8xf32>,
    %36 = vector.extract_strided_slice %4 {offsets = [1, 2, 0], sizes = [16, 16, 4], strides = [1, 1, 1]} : vector<18x18x4xf32> to vector<16x16x4xf32>
    %37 = vector.shape_cast %36 : vector<16x16x4xf32> to vector<256x4xf32>
    %c0_18 = arith.constant 0 : index
    %c60 = arith.constant 60 : index
    %38 = vector.load %arg7[%c0_18, %c60] : memref<256x108xf32, #tpu.memory_space<vmem>>, vector<256x4xf32>
    tpu.vector_store %arg7[%c0_18, %c60], %37 {strides = array<i32>} : memref<256x108xf32, #tpu.memory_space<vmem>>, vector<256x4xf32>,
    %39 = vector.extract_strided_slice %5 {offsets = [1, 2, 0], sizes = [16, 16, 8], strides = [1, 1, 1]} : vector<18x18x8xf32> to vector<16x16x8xf32>
    %40 = vector.shape_cast %39 : vector<16x16x8xf32> to vector<256x8xf32>
    %c0_19 = arith.constant 0 : index
    %c64 = arith.constant 64 : index
    %41 = vector.load %arg7[%c0_19, %c64] : memref<256x108xf32, #tpu.memory_space<vmem>>, vector<256x8xf32>
    tpu.vector_store %arg7[%c0_19, %c64], %40 {strides = array<i32>} : memref<256x108xf32, #tpu.memory_space<vmem>>, vector<256x8xf32>,
    %42 = vector.extract_strided_slice %4 {offsets = [2, 0, 0], sizes = [16, 16, 4], strides = [1, 1, 1]} : vector<18x18x4xf32> to vector<16x16x4xf32>
    %43 = vector.shape_cast %42 : vector<16x16x4xf32> to vector<256x4xf32>
    %c0_20 = arith.constant 0 : index
    %c72 = arith.constant 72 : index
    %44 = vector.load %arg7[%c0_20, %c72] : memref<256x108xf32, #tpu.memory_space<vmem>>, vector<256x4xf32>
    tpu.vector_store %arg7[%c0_20, %c72], %43 {strides = array<i32>} : memref<256x108xf32, #tpu.memory_space<vmem>>, vector<256x4xf32>,
    %45 = vector.extract_strided_slice %5 {offsets = [2, 0, 0], sizes = [16, 16, 8], strides = [1, 1, 1]} : vector<18x18x8xf32> to vector<16x16x8xf32>
    %46 = vector.shape_cast %45 : vector<16x16x8xf32> to vector<256x8xf32>
    %c0_21 = arith.constant 0 : index
    %c76 = arith.constant 76 : index
    %47 = vector.load %arg7[%c0_21, %c76] : memref<256x108xf32, #tpu.memory_space<vmem>>, vector<256x8xf32>
    tpu.vector_store %arg7[%c0_21, %c76], %46 {strides = array<i32>} : memref<256x108xf32, #tpu.memory_space<vmem>>, vector<256x8xf32>,
    %48 = vector.extract_strided_slice %4 {offsets = [2, 1, 0], sizes = [16, 16, 4], strides = [1, 1, 1]} : vector<18x18x4xf32> to vector<16x16x4xf32>
    %49 = vector.shape_cast %48 : vector<16x16x4xf32> to vector<256x4xf32>
    %c0_22 = arith.constant 0 : index
    %c84 = arith.constant 84 : index
    %50 = vector.load %arg7[%c0_22, %c84] : memref<256x108xf32, #tpu.memory_space<vmem>>, vector<256x4xf32>
    tpu.vector_store %arg7[%c0_22, %c84], %49 {strides = array<i32>} : memref<256x108xf32, #tpu.memory_space<vmem>>, vector<256x4xf32>,
    %51 = vector.extract_strided_slice %5 {offsets = [2, 1, 0], sizes = [16, 16, 8], strides = [1, 1, 1]} : vector<18x18x8xf32> to vector<16x16x8xf32>
    %52 = vector.shape_cast %51 : vector<16x16x8xf32> to vector<256x8xf32>
    %c0_23 = arith.constant 0 : index
    %c88 = arith.constant 88 : index
    %53 = vector.load %arg7[%c0_23, %c88] : memref<256x108xf32, #tpu.memory_space<vmem>>, vector<256x8xf32>
    tpu.vector_store %arg7[%c0_23, %c88], %52 {strides = array<i32>} : memref<256x108xf32, #tpu.memory_space<vmem>>, vector<256x8xf32>,
    %54 = vector.extract_strided_slice %4 {offsets = [2, 2, 0], sizes = [16, 16, 4], strides = [1, 1, 1]} : vector<18x18x4xf32> to vector<16x16x4xf32>
    %55 = vector.shape_cast %54 : vector<16x16x4xf32> to vector<256x4xf32>
    %c0_24 = arith.constant 0 : index
    %c96 = arith.constant 96 : index
    %56 = vector.load %arg7[%c0_24, %c96] : memref<256x108xf32, #tpu.memory_space<vmem>>, vector<256x4xf32>
    tpu.vector_store %arg7[%c0_24, %c96], %55 {strides = array<i32>} : memref<256x108xf32, #tpu.memory_space<vmem>>, vector<256x4xf32>,
    %57 = vector.extract_strided_slice %5 {offsets = [2, 2, 0], sizes = [16, 16, 8], strides = [1, 1, 1]} : vector<18x18x8xf32> to vector<16x16x8xf32>
    %58 = vector.shape_cast %57 : vector<16x16x8xf32> to vector<256x8xf32>
    %c0_25 = arith.constant 0 : index
    %c100 = arith.constant 100 : index
    %59 = vector.load %arg7[%c0_25, %c100] : memref<256x108xf32, #tpu.memory_space<vmem>>, vector<256x8xf32>
    tpu.vector_store %arg7[%c0_25, %c100], %58 {strides = array<i32>} : memref<256x108xf32, #tpu.memory_space<vmem>>, vector<256x8xf32>,
    %c0_26 = arith.constant 0 : index
    %c0_27 = arith.constant 0 : index
    %60 = vector.load %arg7[%c0_26, %c0_27] : memref<256x108xf32, #tpu.memory_space<vmem>>, vector<256x108xf32>
    %c0_28 = arith.constant 0 : index
    %c0_29 = arith.constant 0 : index
    %61 = vector.load %arg3[%c0_28, %c0_29] : memref<108x32xf32, #tpu.memory_space<vmem>>, vector<108x32xf32>
    %cst = arith.constant dense<0.000000e+00> : vector<256x32xf32>
    %62 = tpu.matmul %60, %61, %cst {dimension_numbers = #tpu.dot_dimension_numbers<[1], [0], [0], [1], [0, 0, 1, 1], [], []>} : vector<256x108xf32>, vector<108x32xf32>, vector<256x32xf32> -> vector<256x32xf32>
    %c0_30 = arith.constant 0 : index
    %c0_31 = arith.constant 0 : index
    %63 = vector.load %arg4[%c0_30, %c0_31] : memref<1x32xf32, #tpu.memory_space<vmem>>, vector<1x32xf32>
    %64 = vector.broadcast %63 : vector<1x32xf32> to vector<256x32xf32>
    %65 = arith.addf %62, %64 : vector<256x32xf32>
    %66 = tpu.iota {dimensions = array<i32: 1>} : vector<256x32xi32>
    %c24_i32 = arith.constant 24 : i32
    %67 = vector.broadcast %c24_i32 : i32 to vector<256x32xi32>
    %68 = arith.cmpi slt, %66, %67 : vector<256x32xi32>
    %69 = arith.negf %65 : vector<256x32xf32>
    %70 = math.exp %69 : vector<256x32xf32>
    %cst_32 = arith.constant 1.000000e+00 : f32
    %71 = vector.broadcast %cst_32 : f32 to vector<256x32xf32>
    %72 = arith.addf %71, %70 : vector<256x32xf32>
    %73 = arith.divf %71, %72 : vector<256x32xf32>
    %74 = math.tanh %65 : vector<256x32xf32>
    %75 = arith.select %68, %73, %74 : vector<256x32xi1>, vector<256x32xf32>
    %76 = vector.extract_strided_slice %75 {offsets = [0, 0], sizes = [256, 8], strides = [1, 1]} : vector<256x32xf32> to vector<256x8xf32>
    %77 = vector.extract_strided_slice %75 {offsets = [0, 8], sizes = [256, 8], strides = [1, 1]} : vector<256x32xf32> to vector<256x8xf32>
    %78 = vector.extract_strided_slice %75 {offsets = [0, 16], sizes = [256, 8], strides = [1, 1]} : vector<256x32xf32> to vector<256x8xf32>
    %79 = vector.extract_strided_slice %75 {offsets = [0, 24], sizes = [256, 8], strides = [1, 1]} : vector<256x32xf32> to vector<256x8xf32>
    %c0_33 = arith.constant 0 : index
    %c0_34 = arith.constant 0 : index
    %c0_35 = arith.constant 0 : index
    %80 = vector.load %arg6[%c0_33, %c0_34, %c0_35] : memref<1x256x8xf32, #tpu.memory_space<vmem>>, vector<1x256x8xf32>
    %81 = vector.shape_cast %80 : vector<1x256x8xf32> to vector<256x8xf32>
    %82 = arith.mulf %77, %81 : vector<256x8xf32>
    %83 = arith.mulf %76, %79 : vector<256x8xf32>
    %84 = arith.addf %82, %83 : vector<256x8xf32>
    %85 = math.tanh %84 : vector<256x8xf32>
    %86 = arith.mulf %78, %85 : vector<256x8xf32>
    %c0_36 = arith.constant 0 : index
    %c0_37 = arith.constant 0 : index
    %c0_38 = arith.constant 0 : index
    %87 = vector.load %arg6[%c0_36, %c0_37, %c0_38] : memref<1x256x8xf32, #tpu.memory_space<vmem>>, vector<1x256x8xf32>
    %88 = vector.shape_cast %87 : vector<1x256x8xf32> to vector<256x8xf32>
    %89 = vector.shape_cast %84 : vector<256x8xf32> to vector<1x256x8xf32>
    tpu.vector_store %arg6[%c0_36, %c0_37, %c0_38], %89 {strides = array<i32>} : memref<1x256x8xf32, #tpu.memory_space<vmem>>, vector<1x256x8xf32>,
    %c0_39 = arith.constant 0 : index
    %c0_40 = arith.constant 0 : index
    %c0_41 = arith.constant 0 : index
    %90 = vector.load %arg5[%c0_39, %c0_40, %c0_41] : memref<1x256x8xf32, #tpu.memory_space<vmem>>, vector<1x256x8xf32>
    %91 = vector.shape_cast %90 : vector<1x256x8xf32> to vector<256x8xf32>
    %92 = vector.shape_cast %86 : vector<256x8xf32> to vector<1x256x8xf32>
    tpu.vector_store %arg5[%c0_39, %c0_40, %c0_41], %92 {strides = array<i32>} : memref<1x256x8xf32, #tpu.memory_space<vmem>>, vector<1x256x8xf32>,
    %93 = vector.shape_cast %86 : vector<256x8xf32> to vector<16x16x8xf32>
    %c1 = arith.constant 1 : index
    %c1_42 = arith.constant 1 : index
    %c0_43 = arith.constant 0 : index
    %94 = vector.load %arg8[%c1, %c1_42, %c0_43] : memref<18x18x8xf32, #tpu.memory_space<vmem>>, vector<16x16x8xf32>
    tpu.vector_store %arg8[%c1, %c1_42, %c0_43], %93 {strides = array<i32>} : memref<18x18x8xf32, #tpu.memory_space<vmem>>, vector<16x16x8xf32>,
    return
  }
  func.func @transform_0(%arg0: i32, %arg1: i32) -> (i32, i32, i32, i32) {
    %c2_i32 = arith.constant 2 : i32
    %0 = arith.muli %arg1, %c2_i32 : i32
    %1 = arith.addi %0, %arg0 : i32
    %c0_i32 = arith.constant 0 : i32
    %c0_i32_0 = arith.constant 0 : i32
    %c0_i32_1 = arith.constant 0 : i32
    %c0_i32_2 = arith.constant 0 : i32
    return %1, %c0_i32, %c0_i32_0, %c0_i32_1 : i32, i32, i32, i32
  }
  func.func @transform_1(%arg0: i32, %arg1: i32) -> (i32, i32) {
    %c0_i32 = arith.constant 0 : i32
    %c0_i32_0 = arith.constant 0 : i32
    %c0_i32_1 = arith.constant 0 : i32
    return %c0_i32, %c0_i32_0 : i32, i32
  }
  func.func @transform_2(%arg0: i32, %arg1: i32) -> (i32, i32) {
    %c0_i32 = arith.constant 0 : i32
    %c0_i32_0 = arith.constant 0 : i32
    %c0_i32_1 = arith.constant 0 : i32
    return %c0_i32, %c0_i32_0 : i32, i32
  }
  func.func @transform_3(%arg0: i32, %arg1: i32) -> (i32, i32, i32) {
    %c2_i32 = arith.constant 2 : i32
    %0 = arith.muli %arg1, %c2_i32 : i32
    %1 = arith.addi %0, %arg0 : i32
    %c0_i32 = arith.constant 0 : i32
    %c0_i32_0 = arith.constant 0 : i32
    %c0_i32_1 = arith.constant 0 : i32
    return %1, %c0_i32, %c0_i32_0 : i32, i32, i32
  }
  func.func @transform_4(%arg0: i32, %arg1: i32) -> (i32, i32, i32) {
    %c0_i32 = arith.constant 0 : i32
    %c0_i32_0 = arith.constant 0 : i32
    %c0_i32_1 = arith.constant 0 : i32
    return %arg0, %c0_i32, %c0_i32_0 : i32, i32, i32
  }
}

module attributes {stable_mosaic.version = 11 : i64} {
  func.func @kernel(%arg0: i32, %arg1: i32, %arg2: memref<1x18x18x8xf32, #tpu.memory_space<vmem>>, %arg3: memref<144x32xf32, #tpu.memory_space<vmem>>, %arg4: memref<1x32xf32, #tpu.memory_space<vmem>>, %arg5: memref<1x256x8xf32, #tpu.memory_space<vmem>>, %arg6: memref<1x256x8xf32, #tpu.memory_space<vmem>>, %arg7: memref<256x144xf32, #tpu.memory_space<vmem>>, %arg8: memref<18x18x8xf32, #tpu.memory_space<vmem>>) attributes {dimension_semantics = [#tpu.dimension_semantics<parallel>, #tpu.dimension_semantics<arbitrary>], iteration_bounds = array<i64: 2, 8>, scalar_prefetch = 0 : i64, scratch_operands = 2 : i64, tpu.core_type = #tpu.core_type<tc>, window_params = [{transform_indices = @transform_0, window_bounds = array<i64: 1, 18, 18, 8>}, {pipeline_mode = #tpu.pipeline_mode<synchronous>, transform_indices = @transform_1, window_bounds = array<i64: 144, 32>}, {pipeline_mode = #tpu.pipeline_mode<synchronous>, transform_indices = @transform_2, window_bounds = array<i64: 1, 32>}, {transform_indices = @transform_3, window_bounds = array<i64: 1, 256, 8>}, {transform_indices = @transform_4, window_bounds = array<i64: 1, 256, 8>}]} {
    %c0_i32 = arith.constant 0 : i32
    %0 = arith.cmpi eq, %arg1, %c0_i32 : i32
    %1 = arith.extui %0 : i1 to i32
    %c0_i32_0 = arith.constant 0 : i32
    %2 = arith.cmpi ne, %1, %c0_i32_0 : i32
    scf.if %2 {
      %cst_44 = arith.constant 0.000000e+00 : f32
      %95 = vector.broadcast %cst_44 : f32 to vector<18x18x8xf32>
      %c0_45 = arith.constant 0 : index
      %c0_46 = arith.constant 0 : index
      %c0_47 = arith.constant 0 : index
      %96 = vector.load %arg8[%c0_45, %c0_46, %c0_47] : memref<18x18x8xf32, #tpu.memory_space<vmem>>, vector<18x18x8xf32>
      tpu.vector_store %arg8[%c0_45, %c0_46, %c0_47], %95 {strides = array<i32>} : memref<18x18x8xf32, #tpu.memory_space<vmem>>, vector<18x18x8xf32>,
      %cst_48 = arith.constant 0.000000e+00 : f32
      %97 = vector.broadcast %cst_48 : f32 to vector<256x8xf32>
      %c0_49 = arith.constant 0 : index
      %c0_50 = arith.constant 0 : index
      %c0_51 = arith.constant 0 : index
      %98 = vector.load %arg6[%c0_49, %c0_50, %c0_51] : memref<1x256x8xf32, #tpu.memory_space<vmem>>, vector<1x256x8xf32>
      %99 = vector.shape_cast %98 : vector<1x256x8xf32> to vector<256x8xf32>
      %100 = vector.shape_cast %97 : vector<256x8xf32> to vector<1x256x8xf32>
      tpu.vector_store %arg6[%c0_49, %c0_50, %c0_51], %100 {strides = array<i32>} : memref<1x256x8xf32, #tpu.memory_space<vmem>>, vector<1x256x8xf32>,
    } else {
    }
    %c0 = arith.constant 0 : index
    %c0_1 = arith.constant 0 : index
    %c0_2 = arith.constant 0 : index
    %c0_3 = arith.constant 0 : index
    %3 = vector.load %arg2[%c0, %c0_1, %c0_2, %c0_3] : memref<1x18x18x8xf32, #tpu.memory_space<vmem>>, vector<1x18x18x8xf32>
    %4 = vector.shape_cast %3 : vector<1x18x18x8xf32> to vector<18x18x8xf32>
    %c0_4 = arith.constant 0 : index
    %c0_5 = arith.constant 0 : index
    %c0_6 = arith.constant 0 : index
    %5 = vector.load %arg8[%c0_4, %c0_5, %c0_6] : memref<18x18x8xf32, #tpu.memory_space<vmem>>, vector<18x18x8xf32>
    %6 = vector.extract_strided_slice %4 {offsets = [0, 0, 0], sizes = [16, 16, 8], strides = [1, 1, 1]} : vector<18x18x8xf32> to vector<16x16x8xf32>
    %7 = vector.shape_cast %6 : vector<16x16x8xf32> to vector<256x8xf32>
    %c0_7 = arith.constant 0 : index
    %c0_8 = arith.constant 0 : index
    %8 = vector.load %arg7[%c0_7, %c0_8] : memref<256x144xf32, #tpu.memory_space<vmem>>, vector<256x8xf32>
    tpu.vector_store %arg7[%c0_7, %c0_8], %7 {strides = array<i32>} : memref<256x144xf32, #tpu.memory_space<vmem>>, vector<256x8xf32>,
    %9 = vector.extract_strided_slice %5 {offsets = [0, 0, 0], sizes = [16, 16, 8], strides = [1, 1, 1]} : vector<18x18x8xf32> to vector<16x16x8xf32>
    %10 = vector.shape_cast %9 : vector<16x16x8xf32> to vector<256x8xf32>
    %c0_9 = arith.constant 0 : index
    %c8 = arith.constant 8 : index
    %11 = vector.load %arg7[%c0_9, %c8] : memref<256x144xf32, #tpu.memory_space<vmem>>, vector<256x8xf32>
    tpu.vector_store %arg7[%c0_9, %c8], %10 {strides = array<i32>} : memref<256x144xf32, #tpu.memory_space<vmem>>, vector<256x8xf32>,
    %12 = vector.extract_strided_slice %4 {offsets = [0, 1, 0], sizes = [16, 16, 8], strides = [1, 1, 1]} : vector<18x18x8xf32> to vector<16x16x8xf32>
    %13 = vector.shape_cast %12 : vector<16x16x8xf32> to vector<256x8xf32>
    %c0_10 = arith.constant 0 : index
    %c16 = arith.constant 16 : index
    %14 = vector.load %arg7[%c0_10, %c16] : memref<256x144xf32, #tpu.memory_space<vmem>>, vector<256x8xf32>
    tpu.vector_store %arg7[%c0_10, %c16], %13 {strides = array<i32>} : memref<256x144xf32, #tpu.memory_space<vmem>>, vector<256x8xf32>,
    %15 = vector.extract_strided_slice %5 {offsets = [0, 1, 0], sizes = [16, 16, 8], strides = [1, 1, 1]} : vector<18x18x8xf32> to vector<16x16x8xf32>
    %16 = vector.shape_cast %15 : vector<16x16x8xf32> to vector<256x8xf32>
    %c0_11 = arith.constant 0 : index
    %c24 = arith.constant 24 : index
    %17 = vector.load %arg7[%c0_11, %c24] : memref<256x144xf32, #tpu.memory_space<vmem>>, vector<256x8xf32>
    tpu.vector_store %arg7[%c0_11, %c24], %16 {strides = array<i32>} : memref<256x144xf32, #tpu.memory_space<vmem>>, vector<256x8xf32>,
    %18 = vector.extract_strided_slice %4 {offsets = [0, 2, 0], sizes = [16, 16, 8], strides = [1, 1, 1]} : vector<18x18x8xf32> to vector<16x16x8xf32>
    %19 = vector.shape_cast %18 : vector<16x16x8xf32> to vector<256x8xf32>
    %c0_12 = arith.constant 0 : index
    %c32 = arith.constant 32 : index
    %20 = vector.load %arg7[%c0_12, %c32] : memref<256x144xf32, #tpu.memory_space<vmem>>, vector<256x8xf32>
    tpu.vector_store %arg7[%c0_12, %c32], %19 {strides = array<i32>} : memref<256x144xf32, #tpu.memory_space<vmem>>, vector<256x8xf32>,
    %21 = vector.extract_strided_slice %5 {offsets = [0, 2, 0], sizes = [16, 16, 8], strides = [1, 1, 1]} : vector<18x18x8xf32> to vector<16x16x8xf32>
    %22 = vector.shape_cast %21 : vector<16x16x8xf32> to vector<256x8xf32>
    %c0_13 = arith.constant 0 : index
    %c40 = arith.constant 40 : index
    %23 = vector.load %arg7[%c0_13, %c40] : memref<256x144xf32, #tpu.memory_space<vmem>>, vector<256x8xf32>
    tpu.vector_store %arg7[%c0_13, %c40], %22 {strides = array<i32>} : memref<256x144xf32, #tpu.memory_space<vmem>>, vector<256x8xf32>,
    %24 = vector.extract_strided_slice %4 {offsets = [1, 0, 0], sizes = [16, 16, 8], strides = [1, 1, 1]} : vector<18x18x8xf32> to vector<16x16x8xf32>
    %25 = vector.shape_cast %24 : vector<16x16x8xf32> to vector<256x8xf32>
    %c0_14 = arith.constant 0 : index
    %c48 = arith.constant 48 : index
    %26 = vector.load %arg7[%c0_14, %c48] : memref<256x144xf32, #tpu.memory_space<vmem>>, vector<256x8xf32>
    tpu.vector_store %arg7[%c0_14, %c48], %25 {strides = array<i32>} : memref<256x144xf32, #tpu.memory_space<vmem>>, vector<256x8xf32>,
    %27 = vector.extract_strided_slice %5 {offsets = [1, 0, 0], sizes = [16, 16, 8], strides = [1, 1, 1]} : vector<18x18x8xf32> to vector<16x16x8xf32>
    %28 = vector.shape_cast %27 : vector<16x16x8xf32> to vector<256x8xf32>
    %c0_15 = arith.constant 0 : index
    %c56 = arith.constant 56 : index
    %29 = vector.load %arg7[%c0_15, %c56] : memref<256x144xf32, #tpu.memory_space<vmem>>, vector<256x8xf32>
    tpu.vector_store %arg7[%c0_15, %c56], %28 {strides = array<i32>} : memref<256x144xf32, #tpu.memory_space<vmem>>, vector<256x8xf32>,
    %30 = vector.extract_strided_slice %4 {offsets = [1, 1, 0], sizes = [16, 16, 8], strides = [1, 1, 1]} : vector<18x18x8xf32> to vector<16x16x8xf32>
    %31 = vector.shape_cast %30 : vector<16x16x8xf32> to vector<256x8xf32>
    %c0_16 = arith.constant 0 : index
    %c64 = arith.constant 64 : index
    %32 = vector.load %arg7[%c0_16, %c64] : memref<256x144xf32, #tpu.memory_space<vmem>>, vector<256x8xf32>
    tpu.vector_store %arg7[%c0_16, %c64], %31 {strides = array<i32>} : memref<256x144xf32, #tpu.memory_space<vmem>>, vector<256x8xf32>,
    %33 = vector.extract_strided_slice %5 {offsets = [1, 1, 0], sizes = [16, 16, 8], strides = [1, 1, 1]} : vector<18x18x8xf32> to vector<16x16x8xf32>
    %34 = vector.shape_cast %33 : vector<16x16x8xf32> to vector<256x8xf32>
    %c0_17 = arith.constant 0 : index
    %c72 = arith.constant 72 : index
    %35 = vector.load %arg7[%c0_17, %c72] : memref<256x144xf32, #tpu.memory_space<vmem>>, vector<256x8xf32>
    tpu.vector_store %arg7[%c0_17, %c72], %34 {strides = array<i32>} : memref<256x144xf32, #tpu.memory_space<vmem>>, vector<256x8xf32>,
    %36 = vector.extract_strided_slice %4 {offsets = [1, 2, 0], sizes = [16, 16, 8], strides = [1, 1, 1]} : vector<18x18x8xf32> to vector<16x16x8xf32>
    %37 = vector.shape_cast %36 : vector<16x16x8xf32> to vector<256x8xf32>
    %c0_18 = arith.constant 0 : index
    %c80 = arith.constant 80 : index
    %38 = vector.load %arg7[%c0_18, %c80] : memref<256x144xf32, #tpu.memory_space<vmem>>, vector<256x8xf32>
    tpu.vector_store %arg7[%c0_18, %c80], %37 {strides = array<i32>} : memref<256x144xf32, #tpu.memory_space<vmem>>, vector<256x8xf32>,
    %39 = vector.extract_strided_slice %5 {offsets = [1, 2, 0], sizes = [16, 16, 8], strides = [1, 1, 1]} : vector<18x18x8xf32> to vector<16x16x8xf32>
    %40 = vector.shape_cast %39 : vector<16x16x8xf32> to vector<256x8xf32>
    %c0_19 = arith.constant 0 : index
    %c88 = arith.constant 88 : index
    %41 = vector.load %arg7[%c0_19, %c88] : memref<256x144xf32, #tpu.memory_space<vmem>>, vector<256x8xf32>
    tpu.vector_store %arg7[%c0_19, %c88], %40 {strides = array<i32>} : memref<256x144xf32, #tpu.memory_space<vmem>>, vector<256x8xf32>,
    %42 = vector.extract_strided_slice %4 {offsets = [2, 0, 0], sizes = [16, 16, 8], strides = [1, 1, 1]} : vector<18x18x8xf32> to vector<16x16x8xf32>
    %43 = vector.shape_cast %42 : vector<16x16x8xf32> to vector<256x8xf32>
    %c0_20 = arith.constant 0 : index
    %c96 = arith.constant 96 : index
    %44 = vector.load %arg7[%c0_20, %c96] : memref<256x144xf32, #tpu.memory_space<vmem>>, vector<256x8xf32>
    tpu.vector_store %arg7[%c0_20, %c96], %43 {strides = array<i32>} : memref<256x144xf32, #tpu.memory_space<vmem>>, vector<256x8xf32>,
    %45 = vector.extract_strided_slice %5 {offsets = [2, 0, 0], sizes = [16, 16, 8], strides = [1, 1, 1]} : vector<18x18x8xf32> to vector<16x16x8xf32>
    %46 = vector.shape_cast %45 : vector<16x16x8xf32> to vector<256x8xf32>
    %c0_21 = arith.constant 0 : index
    %c104 = arith.constant 104 : index
    %47 = vector.load %arg7[%c0_21, %c104] : memref<256x144xf32, #tpu.memory_space<vmem>>, vector<256x8xf32>
    tpu.vector_store %arg7[%c0_21, %c104], %46 {strides = array<i32>} : memref<256x144xf32, #tpu.memory_space<vmem>>, vector<256x8xf32>,
    %48 = vector.extract_strided_slice %4 {offsets = [2, 1, 0], sizes = [16, 16, 8], strides = [1, 1, 1]} : vector<18x18x8xf32> to vector<16x16x8xf32>
    %49 = vector.shape_cast %48 : vector<16x16x8xf32> to vector<256x8xf32>
    %c0_22 = arith.constant 0 : index
    %c112 = arith.constant 112 : index
    %50 = vector.load %arg7[%c0_22, %c112] : memref<256x144xf32, #tpu.memory_space<vmem>>, vector<256x8xf32>
    tpu.vector_store %arg7[%c0_22, %c112], %49 {strides = array<i32>} : memref<256x144xf32, #tpu.memory_space<vmem>>, vector<256x8xf32>,
    %51 = vector.extract_strided_slice %5 {offsets = [2, 1, 0], sizes = [16, 16, 8], strides = [1, 1, 1]} : vector<18x18x8xf32> to vector<16x16x8xf32>
    %52 = vector.shape_cast %51 : vector<16x16x8xf32> to vector<256x8xf32>
    %c0_23 = arith.constant 0 : index
    %c120 = arith.constant 120 : index
    %53 = vector.load %arg7[%c0_23, %c120] : memref<256x144xf32, #tpu.memory_space<vmem>>, vector<256x8xf32>
    tpu.vector_store %arg7[%c0_23, %c120], %52 {strides = array<i32>} : memref<256x144xf32, #tpu.memory_space<vmem>>, vector<256x8xf32>,
    %54 = vector.extract_strided_slice %4 {offsets = [2, 2, 0], sizes = [16, 16, 8], strides = [1, 1, 1]} : vector<18x18x8xf32> to vector<16x16x8xf32>
    %55 = vector.shape_cast %54 : vector<16x16x8xf32> to vector<256x8xf32>
    %c0_24 = arith.constant 0 : index
    %c128 = arith.constant 128 : index
    %56 = vector.load %arg7[%c0_24, %c128] : memref<256x144xf32, #tpu.memory_space<vmem>>, vector<256x8xf32>
    tpu.vector_store %arg7[%c0_24, %c128], %55 {strides = array<i32>} : memref<256x144xf32, #tpu.memory_space<vmem>>, vector<256x8xf32>,
    %57 = vector.extract_strided_slice %5 {offsets = [2, 2, 0], sizes = [16, 16, 8], strides = [1, 1, 1]} : vector<18x18x8xf32> to vector<16x16x8xf32>
    %58 = vector.shape_cast %57 : vector<16x16x8xf32> to vector<256x8xf32>
    %c0_25 = arith.constant 0 : index
    %c136 = arith.constant 136 : index
    %59 = vector.load %arg7[%c0_25, %c136] : memref<256x144xf32, #tpu.memory_space<vmem>>, vector<256x8xf32>
    tpu.vector_store %arg7[%c0_25, %c136], %58 {strides = array<i32>} : memref<256x144xf32, #tpu.memory_space<vmem>>, vector<256x8xf32>,
    %c0_26 = arith.constant 0 : index
    %c0_27 = arith.constant 0 : index
    %60 = vector.load %arg7[%c0_26, %c0_27] : memref<256x144xf32, #tpu.memory_space<vmem>>, vector<256x144xf32>
    %c0_28 = arith.constant 0 : index
    %c0_29 = arith.constant 0 : index
    %61 = vector.load %arg3[%c0_28, %c0_29] : memref<144x32xf32, #tpu.memory_space<vmem>>, vector<144x32xf32>
    %cst = arith.constant dense<0.000000e+00> : vector<256x32xf32>
    %62 = tpu.matmul %60, %61, %cst {dimension_numbers = #tpu.dot_dimension_numbers<[1], [0], [0], [1], [0, 0, 1, 1], [], []>} : vector<256x144xf32>, vector<144x32xf32>, vector<256x32xf32> -> vector<256x32xf32>
    %c0_30 = arith.constant 0 : index
    %c0_31 = arith.constant 0 : index
    %63 = vector.load %arg4[%c0_30, %c0_31] : memref<1x32xf32, #tpu.memory_space<vmem>>, vector<1x32xf32>
    %64 = vector.broadcast %63 : vector<1x32xf32> to vector<256x32xf32>
    %65 = arith.addf %62, %64 : vector<256x32xf32>
    %66 = tpu.iota {dimensions = array<i32: 1>} : vector<256x32xi32>
    %c24_i32 = arith.constant 24 : i32
    %67 = vector.broadcast %c24_i32 : i32 to vector<256x32xi32>
    %68 = arith.cmpi slt, %66, %67 : vector<256x32xi32>
    %69 = arith.negf %65 : vector<256x32xf32>
    %70 = math.exp %69 : vector<256x32xf32>
    %cst_32 = arith.constant 1.000000e+00 : f32
    %71 = vector.broadcast %cst_32 : f32 to vector<256x32xf32>
    %72 = arith.addf %71, %70 : vector<256x32xf32>
    %73 = arith.divf %71, %72 : vector<256x32xf32>
    %74 = math.tanh %65 : vector<256x32xf32>
    %75 = arith.select %68, %73, %74 : vector<256x32xi1>, vector<256x32xf32>
    %76 = vector.extract_strided_slice %75 {offsets = [0, 0], sizes = [256, 8], strides = [1, 1]} : vector<256x32xf32> to vector<256x8xf32>
    %77 = vector.extract_strided_slice %75 {offsets = [0, 8], sizes = [256, 8], strides = [1, 1]} : vector<256x32xf32> to vector<256x8xf32>
    %78 = vector.extract_strided_slice %75 {offsets = [0, 16], sizes = [256, 8], strides = [1, 1]} : vector<256x32xf32> to vector<256x8xf32>
    %79 = vector.extract_strided_slice %75 {offsets = [0, 24], sizes = [256, 8], strides = [1, 1]} : vector<256x32xf32> to vector<256x8xf32>
    %c0_33 = arith.constant 0 : index
    %c0_34 = arith.constant 0 : index
    %c0_35 = arith.constant 0 : index
    %80 = vector.load %arg6[%c0_33, %c0_34, %c0_35] : memref<1x256x8xf32, #tpu.memory_space<vmem>>, vector<1x256x8xf32>
    %81 = vector.shape_cast %80 : vector<1x256x8xf32> to vector<256x8xf32>
    %82 = arith.mulf %77, %81 : vector<256x8xf32>
    %83 = arith.mulf %76, %79 : vector<256x8xf32>
    %84 = arith.addf %82, %83 : vector<256x8xf32>
    %85 = math.tanh %84 : vector<256x8xf32>
    %86 = arith.mulf %78, %85 : vector<256x8xf32>
    %c0_36 = arith.constant 0 : index
    %c0_37 = arith.constant 0 : index
    %c0_38 = arith.constant 0 : index
    %87 = vector.load %arg6[%c0_36, %c0_37, %c0_38] : memref<1x256x8xf32, #tpu.memory_space<vmem>>, vector<1x256x8xf32>
    %88 = vector.shape_cast %87 : vector<1x256x8xf32> to vector<256x8xf32>
    %89 = vector.shape_cast %84 : vector<256x8xf32> to vector<1x256x8xf32>
    tpu.vector_store %arg6[%c0_36, %c0_37, %c0_38], %89 {strides = array<i32>} : memref<1x256x8xf32, #tpu.memory_space<vmem>>, vector<1x256x8xf32>,
    %c0_39 = arith.constant 0 : index
    %c0_40 = arith.constant 0 : index
    %c0_41 = arith.constant 0 : index
    %90 = vector.load %arg5[%c0_39, %c0_40, %c0_41] : memref<1x256x8xf32, #tpu.memory_space<vmem>>, vector<1x256x8xf32>
    %91 = vector.shape_cast %90 : vector<1x256x8xf32> to vector<256x8xf32>
    %92 = vector.shape_cast %86 : vector<256x8xf32> to vector<1x256x8xf32>
    tpu.vector_store %arg5[%c0_39, %c0_40, %c0_41], %92 {strides = array<i32>} : memref<1x256x8xf32, #tpu.memory_space<vmem>>, vector<1x256x8xf32>,
    %93 = vector.shape_cast %86 : vector<256x8xf32> to vector<16x16x8xf32>
    %c1 = arith.constant 1 : index
    %c1_42 = arith.constant 1 : index
    %c0_43 = arith.constant 0 : index
    %94 = vector.load %arg8[%c1, %c1_42, %c0_43] : memref<18x18x8xf32, #tpu.memory_space<vmem>>, vector<16x16x8xf32>
    tpu.vector_store %arg8[%c1, %c1_42, %c0_43], %93 {strides = array<i32>} : memref<18x18x8xf32, #tpu.memory_space<vmem>>, vector<16x16x8xf32>,
    return
  }
  func.func @transform_0(%arg0: i32, %arg1: i32) -> (i32, i32, i32, i32) {
    %c2_i32 = arith.constant 2 : i32
    %0 = arith.muli %arg1, %c2_i32 : i32
    %1 = arith.addi %0, %arg0 : i32
    %c0_i32 = arith.constant 0 : i32
    %c0_i32_0 = arith.constant 0 : i32
    %c0_i32_1 = arith.constant 0 : i32
    %c0_i32_2 = arith.constant 0 : i32
    return %1, %c0_i32, %c0_i32_0, %c0_i32_1 : i32, i32, i32, i32
  }
  func.func @transform_1(%arg0: i32, %arg1: i32) -> (i32, i32) {
    %c0_i32 = arith.constant 0 : i32
    %c0_i32_0 = arith.constant 0 : i32
    %c0_i32_1 = arith.constant 0 : i32
    return %c0_i32, %c0_i32_0 : i32, i32
  }
  func.func @transform_2(%arg0: i32, %arg1: i32) -> (i32, i32) {
    %c0_i32 = arith.constant 0 : i32
    %c0_i32_0 = arith.constant 0 : i32
    %c0_i32_1 = arith.constant 0 : i32
    return %c0_i32, %c0_i32_0 : i32, i32
  }
  func.func @transform_3(%arg0: i32, %arg1: i32) -> (i32, i32, i32) {
    %c2_i32 = arith.constant 2 : i32
    %0 = arith.muli %arg1, %c2_i32 : i32
    %1 = arith.addi %0, %arg0 : i32
    %c0_i32 = arith.constant 0 : i32
    %c0_i32_0 = arith.constant 0 : i32
    %c0_i32_1 = arith.constant 0 : i32
    return %1, %c0_i32, %c0_i32_0 : i32, i32, i32
  }
  func.func @transform_4(%arg0: i32, %arg1: i32) -> (i32, i32, i32) {
    %c0_i32 = arith.constant 0 : i32
    %c0_i32_0 = arith.constant 0 : i32
    %c0_i32_1 = arith.constant 0 : i32
    return %arg0, %c0_i32, %c0_i32_0 : i32, i32, i32
  }
}

</mosaic_0001>

<llo_original>
// kernel: _lambda_.2
$region0: #{_lambda_.2}
  #allocation0 [shape = 'u32[]', space=smem, size = 0x4, offset = 0x4, fixed_abs, tag = 'smem constant byte address 0x4 - core index']
  #allocation1 [shape = 'u32[72,128]{1,0:T(1,128)}', space=vmem, size = 0x9000, scoped, tag = 'internal scratch']
  #allocation2 [shape = 'f32[256,108]{1,0:T(8,128)}', space=vmem, size = 0x20000, scoped, tag = 'scratch operand']
  #allocation3 [shape = 'f32[18,18,8]{2,1,0:T(8,128)}', space=vmem, size = 0x36000, scoped, tag = 'scratch operand']
  %s0 = inlined_call_operand.vmem [shape: f32[16,18,18,4], index: 0, kind: input, shape index: {}]
  %s1 = inlined_call_operand.vmem [shape: f32[108,32], index: 1, kind: input, shape index: {}]
  %s2 = inlined_call_operand.vmem [shape: f32[1,32], index: 2, kind: input, shape index: {}]
  %s3 = inlined_call_operand.vmem [shape: f32[16,256,8], index: 3, kind: output, shape index: {0}]
  %s4 = inlined_call_operand.hbm [shape: f32[2,256,8], index: 4, kind: output, shape index: {1}]
  %5 = xla_tuple %s3, %s4
  %s6 = sld [smem:[#allocation0]]
  $region57: #{_lambda_.2} parent=0
    _
  %s8 = ssub.s32 1, %s6
  %s9 = scalar_select 0, %s8, %s6
  $region1: #{_lambda_.2} parent=0
    #allocation4 [shape = 'u8[262144]{0}', space=vmem, size = 0x40000, scoped, tag = 'output window, operand 1']
    #allocation5 [shape = 's32[2]{0}', space=sflag, size = 0x8, scoped, tag = 'scoped memory for _lambda_.2']
    %10 = vsyncpa [#allocation5], 0
    %s11 = scalar_lea.sflag [#allocation5], 1
    %12 = vsyncpa %s11, 0
    loop: start=0, step=1, limit=18
    $region2: #{_lambda_.2} parent=1 // loop_pre_header
      _
    $region3: #{_lambda_.2} parent=1 // loop_header
      %s14 = sphi 0, %s18
      %p15 = scmp.ge.s32.totalorder %s14, 18
      %s21 = sphi 0, %s33
      %s22 = sphi 0, %s29
      %s23 = sphi 0, %s21
      %s24 = sphi 0, %s22
      %s25 = sphi 0, %s23
      %s26 = sphi 0, %s24
      %s40 = sphi 0, %s42
      %s43 = sphi 0, %s40
      %s44 = sphi 0, %s43
      %s60 = sphi 0, %s44
      %s64 = sphi 0, %s64
      %s66 = sphi 0, %s64
      %s67 = sphi 0, %s66
      %s81 = sphi 0, %s67
      %s85 = sphi 0, %s85
      %s87 = sphi 0, %s85
      %s88 = sphi 0, %s87
      %s102 = sphi 0, %s88
      %s112 = sphi 0, %s114
      %s115 = sphi 0, %s112
      %s116 = sphi 0, %s115
      %s132 = sphi 0, %s116
      %s138 = sphi 0, %s140
      %s141 = sphi 0, %s138
      %s142 = sphi 0, %s141
      %s158 = sphi 0, %s142
    $region4: #{_lambda_.2} parent=1 // loop_header_branch
      %17 = sbr.rel (%p15) target = $region8
    $region5: #{_lambda_.2} parent=1 // loop_body
      %s19 = ssub.s32 %s14, 1
      %s20 = ssub.s32 %s14, 2
      %s27 = sadd.s32 1, %s22
      %p28 = scmp.ge.s32.totalorder %s27, 8
      %s29 = scalar_select %p28, 0, %s27
      %s30 = sadd.s32 1, %s21
      %s31 = scalar_select %p28, %s30, %s21
      %p32 = scmp.ge.s32.totalorder %s31, 2
      %s33 = scalar_select %p32, 0, %s31
      %s34 = smul.u32 %s22, 2
      %s35 = sadd.s32 %s34, %s21
      %s36 = smul.u32 %s29, 2
      %s37 = sadd.s32 %s36, %s33
      %s38 = ssub.s32 %s35, %s37
      %p39 = scmp.eq.s32.totalorder %s38, 0
      %s41 = sadd.s32 %s40, 1
      %s42 = scalar_select %p39, %s40, %s41
      %p45 = pneg %p39
      %p46 = scmp.eq.s32.totalorder %s14, 15
      %p47 = por %p45, %p46
      %p48 = scmp.ne.s32.totalorder %s40, %s43
      %p49 = scmp.eq.s32.totalorder %s14, 0
      %p50 = por %p48, %p49
      %p51 = scmp.ne.s32.totalorder %s40, %s43
      %p52 = scmp.eq.s32.totalorder %s19, 15
      %p53 = por %p51, %p52
      %p54 = scmp.ne.s32.totalorder %s43, %s44
      %p55 = scmp.eq.s32.totalorder %s19, 0
      %p56 = por %p54, %p55
      %p57 = scmp.ne.s32.totalorder %s43, %s44
      %p58 = scmp.eq.s32.totalorder %s20, 15
      %p59 = por %p57, %p58
      %p61 = scmp.ne.s32.totalorder %s44, %s60
      %p62 = scmp.eq.s32.totalorder %s20, 0
      %p63 = por %p61, %p62
      %s65 = sadd.s32 %s64, 1
      %p68 = scmp.eq.s32.totalorder %s14, 15
      %p69 = scmp.ne.s32.totalorder %s64, %s66
      %p70 = scmp.eq.s32.totalorder %s14, 0
      %p71 = por %p69, %p70
      %p72 = scmp.ne.s32.totalorder %s64, %s66
      %p73 = scmp.eq.s32.totalorder %s19, 15
      %p74 = por %p72, %p73
      %p75 = scmp.ne.s32.totalorder %s66, %s67
      %p76 = scmp.eq.s32.totalorder %s19, 0
      %p77 = por %p75, %p76
      %p78 = scmp.ne.s32.totalorder %s66, %s67
      %p79 = scmp.eq.s32.totalorder %s20, 15
      %p80 = por %p78, %p79
      %p82 = scmp.ne.s32.totalorder %s67, %s81
      %p83 = scmp.eq.s32.totalorder %s20, 0
      %p84 = por %p82, %p83
      %s86 = sadd.s32 %s85, 1
      %p89 = scmp.eq.s32.totalorder %s14, 15
      %p90 = scmp.ne.s32.totalorder %s85, %s87
      %p91 = scmp.eq.s32.totalorder %s14, 0
      %p92 = por %p90, %p91
      %p93 = scmp.ne.s32.totalorder %s85, %s87
      %p94 = scmp.eq.s32.totalorder %s19, 15
      %p95 = por %p93, %p94
      %p96 = scmp.ne.s32.totalorder %s87, %s88
      %p97 = scmp.eq.s32.totalorder %s19, 0
      %p98 = por %p96, %p97
      %p99 = scmp.ne.s32.totalorder %s87, %s88
      %p100 = scmp.eq.s32.totalorder %s20, 15
      %p101 = por %p99, %p100
      %p103 = scmp.ne.s32.totalorder %s88, %s102
      %p104 = scmp.eq.s32.totalorder %s20, 0
      %p105 = por %p103, %p104
      %s106 = smul.u32 %s22, 2
      %s107 = sadd.s32 %s106, %s21
      %s108 = smul.u32 %s29, 2
      %s109 = sadd.s32 %s108, %s33
      %s110 = ssub.s32 %s107, %s109
      %p111 = scmp.eq.s32.totalorder %s110, 0
      %s113 = sadd.s32 %s112, 1
      %s114 = scalar_select %p111, %s112, %s113
      %p117 = pneg %p111
      %p118 = scmp.eq.s32.totalorder %s14, 15
      %p119 = por %p117, %p118
      %p120 = scmp.ne.s32.totalorder %s112, %s115
      %p121 = scmp.eq.s32.totalorder %s14, 0
      %p122 = por %p120, %p121
      %p123 = scmp.ne.s32.totalorder %s112, %s115
      %p124 = scmp.eq.s32.totalorder %s19, 15
      %p125 = por %p123, %p124
      %p126 = scmp.ne.s32.totalorder %s115, %s116
      %p127 = scmp.eq.s32.totalorder %s19, 0
      %p128 = por %p126, %p127
      %p129 = scmp.ne.s32.totalorder %s115, %s116
      %p130 = scmp.eq.s32.totalorder %s20, 15
      %p131 = por %p129, %p130
      %p133 = scmp.ne.s32.totalorder %s116, %s132
      %p134 = scmp.eq.s32.totalorder %s20, 0
      %p135 = por %p133, %p134
      %s136 = ssub.s32 %s21, %s33
      %p137 = scmp.eq.s32.totalorder %s136, 0
      %s139 = sadd.s32 %s138, 1
      %s140 = scalar_select %p137, %s138, %s139
      %p143 = pneg %p137
      %p144 = scmp.eq.s32.totalorder %s14, 15
      %p145 = por %p143, %p144
      %p146 = scmp.ne.s32.totalorder %s138, %s141
      %p147 = scmp.eq.s32.totalorder %s14, 0
      %p148 = por %p146, %p147
      %p149 = scmp.ne.s32.totalorder %s138, %s141
      %p150 = scmp.eq.s32.totalorder %s19, 15
      %p151 = por %p149, %p150
      %p152 = scmp.ne.s32.totalorder %s141, %s142
      %p153 = scmp.eq.s32.totalorder %s19, 0
      %p154 = por %p152, %p153
      %p155 = scmp.ne.s32.totalorder %s141, %s142
      %p156 = scmp.eq.s32.totalorder %s20, 15
      %p157 = por %p155, %p156
      %p159 = scmp.ne.s32.totalorder %s142, %s158
      %p160 = scmp.eq.s32.totalorder %s20, 0
      %p161 = por %p159, %p160
      %p162 = scmp.le.s32.totalorder 1, %s14
      %p163 = scmp.lt.s32.totalorder %s14, 17
      %p164 = pnand %p162, %p163
      %p165 = pneg %p164
      // Predicated region
      $region9: #{_lambda_.2} parent=5 // pred_check
        _
      $region10: #{_lambda_.2} parent=5 // pred_check_branch
        %167 = sbr.rel (%p164) target = $region12
      $region11: #{_lambda_.2} parent=5 // pred_region
        %s168 = ssub.s32 %s14, 1
        // Predicated region
        $region13: #{_lambda_.2} parent=11 // pred_check
          %p169 = pneg %p77
        $region14: #{_lambda_.2} parent=11 // pred_check_branch
          %171 = sbr.rel (%p169) target = $region16
        $region15: #{_lambda_.2} parent=11 // pred_region
          _
        $region16: #{_lambda_.2} parent=11 // pred_fallthru
          _
        // Predicated region
        $region17: #{_lambda_.2} parent=11 // pred_check
          %p172 = pneg %p98
        $region18: #{_lambda_.2} parent=11 // pred_check_branch
          %174 = sbr.rel (%p172) target = $region20
        $region19: #{_lambda_.2} parent=11 // pred_region
          _
        $region20: #{_lambda_.2} parent=11 // pred_fallthru
          _
      $region12: #{_lambda_.2} parent=5 // pred_fallthru
        _
      %p175 = scmp.lt.s32.totalorder %s14, 16
      // Predicated region
      $region21: #{_lambda_.2} parent=5 // pred_check
        %p176 = pneg %p175
      $region22: #{_lambda_.2} parent=5 // pred_check_branch
        %178 = sbr.rel (%p176) target = $region24
      $region23: #{_lambda_.2} parent=5 // pred_region
        // Predicated region
        $region25: #{_lambda_.2} parent=23 // pred_check
          %p179 = pneg %p50
        $region26: #{_lambda_.2} parent=23 // pred_check_branch
          %181 = sbr.rel (%p179) target = $region28
        $region27: #{_lambda_.2} parent=23 // pred_region
          %s182 = smul.u32 %s22, 2
          %s183 = sadd.s32 %s182, %s21
          %p184 = scmp.lt.s32.totalorder %s183, 15
          %s185 = scalar_select %p184, %s183, 15
          %s186 = smul.addr %s185, 54
          %s187 = smul.addr %s186, 8
          %s188 = scalar_lea.vmem %s0, %s187
          %s189 = smul.u32 %s22, 2
          %s190 = sadd.s32 %s189, %s21
        $region28: #{_lambda_.2} parent=23 // pred_fallthru
          _
      $region24: #{_lambda_.2} parent=5 // pred_fallthru
        _
      %p191 = scmp.le.s32.totalorder 1, %s14
      %p192 = scmp.lt.s32.totalorder %s14, 17
      %p193 = pnand %p191, %p192
      %p194 = pneg %p193
      // Predicated region
      $region29: #{_lambda_.2} parent=5 // pred_check
        _
      $region30: #{_lambda_.2} parent=5 // pred_check_branch
        %196 = sbr.rel (%p193) target = $region32
      $region31: #{_lambda_.2} parent=5 // pred_region
        %s197 = ssub.s32 %s14, 1
        %s198 = smul.u32 %s24, 2
        %s199 = sadd.s32 %s198, %s23
        %p200 = scmp.lt.s32.totalorder %s199, 15
        %s201 = scalar_select %p200, %s199, 15
        %s202 = smul.addr %s201, 54
        %s203 = smul.addr %s202, 8
        %s204 = scalar_lea.vmem %s0, %s203
        %p205 = pneg %p56
        %p206 = pneg %p53
        %p207 = pneg %p77
        %p208 = pneg %p74
        %p209 = pneg %p98
        %p210 = pneg %p95
        %p211 = pneg %p128
        %p212 = pneg %p125
        %s213 = smul.u32 %s24, 2
        %s214 = sadd.s32 %s213, %s23
        %p215 = scmp.lt.s32.totalorder %s214, 15
        %s216 = scalar_select %p215, %s214, 15
        %s217 = smul.addr %s216, 32
        %s218 = smul.addr %s217, 8
        %s219 = scalar_lea.vmem %s3, %s218
        %p220 = pneg %p154
        %p221 = pneg %p151
        %s222 = sand.u32 %s141, 1
        %s223 = scalar_lea.sflag [#allocation5], %s222
        %s224 = sand.u32 %s141, 1
        %s225 = smul.addr %s224, 256
        %s226 = scalar_lea.vmem [#allocation4], %s225
        %s227 = smul.u32 %s24, 2
        %s228 = sadd.s32 %s227, %s23
        %p229 = scmp.lt.s32.totalorder %s228, 15
        %s230 = scalar_select %p229, %s228, 15
        %s231 = smul.addr %s230, 54
        %s232 = smul.addr %s231, 8
        %s233 = scalar_lea.vmem %s0, %s232
        %s234 = smul.u32 %s24, 2
        %s235 = sadd.s32 %s234, %s23
        %s236 = smul.u32 %s24, 2
        %s237 = sadd.s32 %s236, %s23
        %p238 = scmp.lt.s32.totalorder %s237, 15
        %s239 = scalar_select %p238, %s237, 15
        %s240 = smul.addr %s239, 32
        %s241 = smul.addr %s240, 8
        %s242 = scalar_lea.vmem %s3, %s241
        %s243 = smul.u32 %s24, 2
        %s244 = sadd.s32 %s243, %s23
        %p245 = scmp.eq.s32.totalorder %s24, 0
        // Predicated region
        $region33: #{_lambda_.2} parent=31 // pred_check
          %p246 = pneg %p245
        $region34: #{_lambda_.2} parent=31 // pred_check_branch
          %248 = sbr.rel (%p246) target = $region36
        $region35: #{_lambda_.2} parent=31 // pred_region
          %vm249 = vcmask 64512
          %250 = vst.msk [vmem:[#allocation3] sm:$0xff] %vm249, 0.0
          %251 = vst.msk [vmem:[#allocation3 + $0x8] sm:$0xff] %vm249, 0.0
          %vm252 = vcmask 58368
          %253 = vst.msk [vmem:[#allocation3 + $0x10] sm:$0x3] %vm252, 0.0
          %254 = vst.msk [vmem:[#allocation3 + $0x18] sm:$0xff] %vm249, 0.0
          %255 = vst.msk [vmem:[#allocation3 + $0x20] sm:$0xff] %vm249, 0.0
          %256 = vst.msk [vmem:[#allocation3 + $0x28] sm:$0x3] %vm252, 0.0
          %257 = vst.msk [vmem:[#allocation3 + $0x30] sm:$0xff] %vm249, 0.0
          %258 = vst.msk [vmem:[#allocation3 + $0x38] sm:$0xff] %vm249, 0.0
          %259 = vst.msk [vmem:[#allocation3 + $0x40] sm:$0x3] %vm252, 0.0
          %260 = vst.msk [vmem:[#allocation3 + $0x48] sm:$0xff] %vm249, 0.0
          %261 = vst.msk [vmem:[#allocation3 + $0x50] sm:$0xff] %vm249, 0.0
          %262 = vst.msk [vmem:[#allocation3 + $0x58] sm:$0x3] %vm252, 0.0
          %263 = vst.msk [vmem:[#allocation3 + $0x60] sm:$0xff] %vm249, 0.0
          %264 = vst.msk [vmem:[#allocation3 + $0x68] sm:$0xff] %vm249, 0.0
          %265 = vst.msk [vmem:[#allocation3 + $0x70] sm:$0x3] %vm252, 0.0
          %266 = vst.msk [vmem:[#allocation3 + $0x78] sm:$0xff] %vm249, 0.0
          %267 = vst.msk [vmem:[#allocation3 + $0x80] sm:$0xff] %vm249, 0.0
          %268 = vst.msk [vmem:[#allocation3 + $0x88] sm:$0x3] %vm252, 0.0
          %269 = vst.msk [vmem:[#allocation3 + $0x90] sm:$0xff] %vm249, 0.0
          %270 = vst.msk [vmem:[#allocation3 + $0x98] sm:$0xff] %vm249, 0.0
          %271 = vst.msk [vmem:[#allocation3 + $0xa0] sm:$0x3] %vm252, 0.0
          %272 = vst.msk [vmem:[#allocation3 + $0xa8] sm:$0xff] %vm249, 0.0
          %273 = vst.msk [vmem:[#allocation3 + $0xb0] sm:$0xff] %vm249, 0.0
          %274 = vst.msk [vmem:[#allocation3 + $0xb8] sm:$0x3] %vm252, 0.0
          %275 = vst.msk [vmem:[#allocation3 + $0xc0] sm:$0xff] %vm249, 0.0
          %276 = vst.msk [vmem:[#allocation3 + $0xc8] sm:$0xff] %vm249, 0.0
          %277 = vst.msk [vmem:[#allocation3 + $0xd0] sm:$0x3] %vm252, 0.0
          %278 = vst.msk [vmem:[#allocation3 + $0xd8] sm:$0xff] %vm249, 0.0
          %279 = vst.msk [vmem:[#allocation3 + $0xe0] sm:$0xff] %vm249, 0.0
          %280 = vst.msk [vmem:[#allocation3 + $0xe8] sm:$0x3] %vm252, 0.0
          %281 = vst.msk [vmem:[#allocation3 + $0xf0] sm:$0xff] %vm249, 0.0
          %282 = vst.msk [vmem:[#allocation3 + $0xf8] sm:$0xff] %vm249, 0.0
          %283 = vst.msk [vmem:[#allocation3 + $0x100] sm:$0x3] %vm252, 0.0
          %284 = vst.msk [vmem:[#allocation3 + $0x108] sm:$0xff] %vm249, 0.0
          %285 = vst.msk [vmem:[#allocation3 + $0x110] sm:$0xff] %vm249, 0.0
          %286 = vst.msk [vmem:[#allocation3 + $0x118] sm:$0x3] %vm252, 0.0
          %287 = vst.msk [vmem:[#allocation3 + $0x120] sm:$0xff] %vm249, 0.0
          %288 = vst.msk [vmem:[#allocation3 + $0x128] sm:$0xff] %vm249, 0.0
          %289 = vst.msk [vmem:[#allocation3 + $0x130] sm:$0x3] %vm252, 0.0
          %290 = vst.msk [vmem:[#allocation3 + $0x138] sm:$0xff] %vm249, 0.0
          %291 = vst.msk [vmem:[#allocation3 + $0x140] sm:$0xff] %vm249, 0.0
          %292 = vst.msk [vmem:[#allocation3 + $0x148] sm:$0x3] %vm252, 0.0
          %293 = vst.msk [vmem:[#allocation3 + $0x150] sm:$0xff] %vm249, 0.0
          %294 = vst.msk [vmem:[#allocation3 + $0x158] sm:$0xff] %vm249, 0.0
          %295 = vst.msk [vmem:[#allocation3 + $0x160] sm:$0x3] %vm252, 0.0
          %296 = vst.msk [vmem:[#allocation3 + $0x168] sm:$0xff] %vm249, 0.0
          %297 = vst.msk [vmem:[#allocation3 + $0x170] sm:$0xff] %vm249, 0.0
          %298 = vst.msk [vmem:[#allocation3 + $0x178] sm:$0x3] %vm252, 0.0
          %299 = vst.msk [vmem:[#allocation3 + $0x180] sm:$0xff] %vm249, 0.0
          %300 = vst.msk [vmem:[#allocation3 + $0x188] sm:$0xff] %vm249, 0.0
          %301 = vst.msk [vmem:[#allocation3 + $0x190] sm:$0x3] %vm252, 0.0
          %302 = vst.msk [vmem:[#allocation3 + $0x198] sm:$0xff] %vm249, 0.0
          %303 = vst.msk [vmem:[#allocation3 + $0x1a0] sm:$0xff] %vm249, 0.0
          %304 = vst.msk [vmem:[#allocation3 + $0x1a8] sm:$0x3] %vm252, 0.0
          %305 = vst.msk [vmem:[%s226] sm:$0xff] %vm249, 0.0
          %306 = vst.msk [vmem:[%s226 + $0x8] sm:$0xff] %vm249, 0.0
          %307 = vst.msk [vmem:[%s226 + $0x10] sm:$0xff] %vm249, 0.0
          %308 = vst.msk [vmem:[%s226 + $0x18] sm:$0xff] %vm249, 0.0
          %309 = vst.msk [vmem:[%s226 + $0x20] sm:$0xff] %vm249, 0.0
          %310 = vst.msk [vmem:[%s226 + $0x28] sm:$0xff] %vm249, 0.0
          %311 = vst.msk [vmem:[%s226 + $0x30] sm:$0xff] %vm249, 0.0
          %312 = vst.msk [vmem:[%s226 + $0x38] sm:$0xff] %vm249, 0.0
          %313 = vst.msk [vmem:[%s226 + $0x40] sm:$0xff] %vm249, 0.0
          %314 = vst.msk [vmem:[%s226 + $0x48] sm:$0xff] %vm249, 0.0
          %315 = vst.msk [vmem:[%s226 + $0x50] sm:$0xff] %vm249, 0.0
          %316 = vst.msk [vmem:[%s226 + $0x58] sm:$0xff] %vm249, 0.0
          %317 = vst.msk [vmem:[%s226 + $0x60] sm:$0xff] %vm249, 0.0
          %318 = vst.msk [vmem:[%s226 + $0x68] sm:$0xff] %vm249, 0.0
          %319 = vst.msk [vmem:[%s226 + $0x70] sm:$0xff] %vm249, 0.0
          %320 = vst.msk [vmem:[%s226 + $0x78] sm:$0xff] %vm249, 0.0
          %321 = vst.msk [vmem:[%s226 + $0x80] sm:$0xff] %vm249, 0.0
          %322 = vst.msk [vmem:[%s226 + $0x88] sm:$0xff] %vm249, 0.0
          %323 = vst.msk [vmem:[%s226 + $0x90] sm:$0xff] %vm249, 0.0
          %324 = vst.msk [vmem:[%s226 + $0x98] sm:$0xff] %vm249, 0.0
          %325 = vst.msk [vmem:[%s226 + $0xa0] sm:$0xff] %vm249, 0.0
          %326 = vst.msk [vmem:[%s226 + $0xa8] sm:$0xff] %vm249, 0.0
          %327 = vst.msk [vmem:[%s226 + $0xb0] sm:$0xff] %vm249, 0.0
          %328 = vst.msk [vmem:[%s226 + $0xb8] sm:$0xff] %vm249, 0.0
          %329 = vst.msk [vmem:[%s226 + $0xc0] sm:$0xff] %vm249, 0.0
          %330 = vst.msk [vmem:[%s226 + $0xc8] sm:$0xff] %vm249, 0.0
          %331 = vst.msk [vmem:[%s226 + $0xd0] sm:$0xff] %vm249, 0.0
          %332 = vst.msk [vmem:[%s226 + $0xd8] sm:$0xff] %vm249, 0.0
          %333 = vst.msk [vmem:[%s226 + $0xe0] sm:$0xff] %vm249, 0.0
          %334 = vst.msk [vmem:[%s226 + $0xe8] sm:$0xff] %vm249, 0.0
          %335 = vst.msk [vmem:[%s226 + $0xf0] sm:$0xff] %vm249, 0.0
          %336 = vst.msk [vmem:[%s226 + $0xf8] sm:$0xff] %vm249, 0.0
        $region36: #{_lambda_.2} parent=31 // pred_fallthru
          _
        %v337 = vld [vmem:[%s233] sm:$0xff]
        %v338 = vld [vmem:[%s233 + $0x8] sm:$0xff]
        %v339 = vld [vmem:[%s233 + $0x10] sm:$0x3]
        %v340 = vld [vmem:[%s233 + $0x18] sm:$0xff]
        %v341 = vld [vmem:[%s233 + $0x20] sm:$0xff]
        %v342 = vld [vmem:[%s233 + $0x28] sm:$0x3]
        %v343 = vld [vmem:[%s233 + $0x30] sm:$0xff]
        %v344 = vld [vmem:[%s233 + $0x38] sm:$0xff]
        %v345 = vld [vmem:[%s233 + $0x40] sm:$0x3]
        %v346 = vld [vmem:[%s233 + $0x48] sm:$0xff]
        %v347 = vld [vmem:[%s233 + $0x50] sm:$0xff]
        %v348 = vld [vmem:[%s233 + $0x58] sm:$0x3]
        %v349 = vld [vmem:[%s233 + $0x60] sm:$0xff]
        %v350 = vld [vmem:[%s233 + $0x68] sm:$0xff]
        %v351 = vld [vmem:[%s233 + $0x70] sm:$0x3]
        %v352 = vld [vmem:[%s233 + $0x78] sm:$0xff]
        %v353 = vld [vmem:[%s233 + $0x80] sm:$0xff]
        %v354 = vld [vmem:[%s233 + $0x88] sm:$0x3]
        %v355 = vld [vmem:[%s233 + $0x90] sm:$0xff]
        %v356 = vld [vmem:[%s233 + $0x98] sm:$0xff]
        %v357 = vld [vmem:[%s233 + $0xa0] sm:$0x3]
        %v358 = vld [vmem:[%s233 + $0xa8] sm:$0xff]
        %v359 = vld [vmem:[%s233 + $0xb0] sm:$0xff]
        %v360 = vld [vmem:[%s233 + $0xb8] sm:$0x3]
        %v361 = vld [vmem:[%s233 + $0xc0] sm:$0xff]
        %v362 = vld [vmem:[%s233 + $0xc8] sm:$0xff]
        %v363 = vld [vmem:[%s233 + $0xd0] sm:$0x3]
        %v364 = vld [vmem:[%s233 + $0xd8] sm:$0xff]
        %v365 = vld [vmem:[%s233 + $0xe0] sm:$0xff]
        %v366 = vld [vmem:[%s233 + $0xe8] sm:$0x3]
        %v367 = vld [vmem:[%s233 + $0xf0] sm:$0xff]
        %v368 = vld [vmem:[%s233 + $0xf8] sm:$0xff]
        %v369 = vld [vmem:[%s233 + $0x100] sm:$0x3]
        %v370 = vld [vmem:[%s233 + $0x108] sm:$0xff]
        %v371 = vld [vmem:[%s233 + $0x110] sm:$0xff]
        %v372 = vld [vmem:[%s233 + $0x118] sm:$0x3]
        %v373 = vld [vmem:[%s233 + $0x120] sm:$0xff]
        %v374 = vld [vmem:[%s233 + $0x128] sm:$0xff]
        %v375 = vld [vmem:[%s233 + $0x130] sm:$0x3]
        %v376 = vld [vmem:[%s233 + $0x138] sm:$0xff]
        %v377 = vld [vmem:[%s233 + $0x140] sm:$0xff]
        %v378 = vld [vmem:[%s233 + $0x148] sm:$0x3]
        %v379 = vld [vmem:[%s233 + $0x150] sm:$0xff]
        %v380 = vld [vmem:[%s233 + $0x158] sm:$0xff]
        %v381 = vld [vmem:[%s233 + $0x160] sm:$0x3]
        %v382 = vld [vmem:[%s233 + $0x168] sm:$0xff]
        %v383 = vld [vmem:[%s233 + $0x170] sm:$0xff]
        %v384 = vld [vmem:[%s233 + $0x178] sm:$0x3]
        %v385 = vld [vmem:[%s233 + $0x180] sm:$0xff]
        %v386 = vld [vmem:[%s233 + $0x188] sm:$0xff]
        %v387 = vld [vmem:[%s233 + $0x190] sm:$0x3]
        %v388 = vld [vmem:[%s233 + $0x198] sm:$0xff]
        %v389 = vld [vmem:[%s233 + $0x1a0] sm:$0xff]
        %v390 = vld [vmem:[%s233 + $0x1a8] sm:$0x3]
        %v391 = vld [vmem:[#allocation3] sm:$0xff]
        %v392 = vld [vmem:[#allocation3 + $0x8] sm:$0xff]
        %v393 = vld [vmem:[#allocation3 + $0x10] sm:$0x3]
        %v394 = vld [vmem:[#allocation3 + $0x18] sm:$0xff]
        %v395 = vld [vmem:[#allocation3 + $0x20] sm:$0xff]
        %v396 = vld [vmem:[#allocation3 + $0x28] sm:$0x3]
        %v397 = vld [vmem:[#allocation3 + $0x30] sm:$0xff]
        %v398 = vld [vmem:[#allocation3 + $0x38] sm:$0xff]
        %v399 = vld [vmem:[#allocation3 + $0x40] sm:$0x3]
        %v400 = vld [vmem:[#allocation3 + $0x48] sm:$0xff]
        %v401 = vld [vmem:[#allocation3 + $0x50] sm:$0xff]
        %v402 = vld [vmem:[#allocation3 + $0x58] sm:$0x3]
        %v403 = vld [vmem:[#allocation3 + $0x60] sm:$0xff]
        %v404 = vld [vmem:[#allocation3 + $0x68] sm:$0xff]
        %v405 = vld [vmem:[#allocation3 + $0x70] sm:$0x3]
        %v406 = vld [vmem:[#allocation3 + $0x78] sm:$0xff]
        %v407 = vld [vmem:[#allocation3 + $0x80] sm:$0xff]
        %v408 = vld [vmem:[#allocation3 + $0x88] sm:$0x3]
        %v409 = vld [vmem:[#allocation3 + $0x90] sm:$0xff]
        %v410 = vld [vmem:[#allocation3 + $0x98] sm:$0xff]
        %v411 = vld [vmem:[#allocation3 + $0xa0] sm:$0x3]
        %v412 = vld [vmem:[#allocation3 + $0xa8] sm:$0xff]
        %v413 = vld [vmem:[#allocation3 + $0xb0] sm:$0xff]
        %v414 = vld [vmem:[#allocation3 + $0xb8] sm:$0x3]
        %v415 = vld [vmem:[#allocation3 + $0xc0] sm:$0xff]
        %v416 = vld [vmem:[#allocation3 + $0xc8] sm:$0xff]
        %v417 = vld [vmem:[#allocation3 + $0xd0] sm:$0x3]
        %v418 = vld [vmem:[#allocation3 + $0xd8] sm:$0xff]
        %v419 = vld [vmem:[#allocation3 + $0xe0] sm:$0xff]
        %v420 = vld [vmem:[#allocation3 + $0xe8] sm:$0x3]
        %v421 = vld [vmem:[#allocation3 + $0xf0] sm:$0xff]
        %v422 = vld [vmem:[#allocation3 + $0xf8] sm:$0xff]
        %v423 = vld [vmem:[#allocation3 + $0x100] sm:$0x3]
        %v424 = vld [vmem:[#allocation3 + $0x108] sm:$0xff]
        %v425 = vld [vmem:[#allocation3 + $0x110] sm:$0xff]
        %v426 = vld [vmem:[#allocation3 + $0x118] sm:$0x3]
        %v427 = vld [vmem:[#allocation3 + $0x120] sm:$0xff]
        %v428 = vld [vmem:[#allocation3 + $0x128] sm:$0xff]
        %v429 = vld [vmem:[#allocation3 + $0x130] sm:$0x3]
        %v430 = vld [vmem:[#allocation3 + $0x138] sm:$0xff]
        %v431 = vld [vmem:[#allocation3 + $0x140] sm:$0xff]
        %v432 = vld [vmem:[#allocation3 + $0x148] sm:$0x3]
        %v433 = vld [vmem:[#allocation3 + $0x150] sm:$0xff]
        %v434 = vld [vmem:[#allocation3 + $0x158] sm:$0xff]
        %v435 = vld [vmem:[#allocation3 + $0x160] sm:$0x3]
        %v436 = vld [vmem:[#allocation3 + $0x168] sm:$0xff]
        %v437 = vld [vmem:[#allocation3 + $0x170] sm:$0xff]
        %v438 = vld [vmem:[#allocation3 + $0x178] sm:$0x3]
        %v439 = vld [vmem:[#allocation3 + $0x180] sm:$0xff]
        %v440 = vld [vmem:[#allocation3 + $0x188] sm:$0xff]
        %v441 = vld [vmem:[#allocation3 + $0x190] sm:$0x3]
        %v442 = vld [vmem:[#allocation3 + $0x198] sm:$0xff]
        %v443 = vld [vmem:[#allocation3 + $0x1a0] sm:$0xff]
        %v444 = vld [vmem:[#allocation3 + $0x1a8] sm:$0x3]
        %vm445 = vcmask 31744
        %446 = vst.msk [vmem:[#allocation2] sm:$0xff] %vm445, %v337
        %447 = vst.msk [vmem:[#allocation2 + $0x8] sm:$0xff] %vm445, %v338
        %448 = vst.msk [vmem:[#allocation2 + $0x10] sm:$0xff] %vm445, %v340
        %449 = vst.msk [vmem:[#allocation2 + $0x18] sm:$0xff] %vm445, %v341
        %450 = vst.msk [vmem:[#allocation2 + $0x20] sm:$0xff] %vm445, %v343
        %451 = vst.msk [vmem:[#allocation2 + $0x28] sm:$0xff] %vm445, %v344
        %452 = vst.msk [vmem:[#allocation2 + $0x30] sm:$0xff] %vm445, %v346
        %453 = vst.msk [vmem:[#allocation2 + $0x38] sm:$0xff] %vm445, %v347
        %454 = vst.msk [vmem:[#allocation2 + $0x40] sm:$0xff] %vm445, %v349
        %455 = vst.msk [vmem:[#allocation2 + $0x48] sm:$0xff] %vm445, %v350
        %456 = vst.msk [vmem:[#allocation2 + $0x50] sm:$0xff] %vm445, %v352
        %457 = vst.msk [vmem:[#allocation2 + $0x58] sm:$0xff] %vm445, %v353
        %458 = vst.msk [vmem:[#allocation2 + $0x60] sm:$0xff] %vm445, %v355
        %459 = vst.msk [vmem:[#allocation2 + $0x68] sm:$0xff] %vm445, %v356
        %460 = vst.msk [vmem:[#allocation2 + $0x70] sm:$0xff] %vm445, %v358
        %461 = vst.msk [vmem:[#allocation2 + $0x78] sm:$0xff] %vm445, %v359
        %462 = vst.msk [vmem:[#allocation2 + $0x80] sm:$0xff] %vm445, %v361
        %463 = vst.msk [vmem:[#allocation2 + $0x88] sm:$0xff] %vm445, %v362
        %464 = vst.msk [vmem:[#allocation2 + $0x90] sm:$0xff] %vm445, %v364
        %465 = vst.msk [vmem:[#allocation2 + $0x98] sm:$0xff] %vm445, %v365
        %466 = vst.msk [vmem:[#allocation2 + $0xa0] sm:$0xff] %vm445, %v367
        %467 = vst.msk [vmem:[#allocation2 + $0xa8] sm:$0xff] %vm445, %v368
        %468 = vst.msk [vmem:[#allocation2 + $0xb0] sm:$0xff] %vm445, %v370
        %469 = vst.msk [vmem:[#allocation2 + $0xb8] sm:$0xff] %vm445, %v371
        %470 = vst.msk [vmem:[#allocation2 + $0xc0] sm:$0xff] %vm445, %v373
        %471 = vst.msk [vmem:[#allocation2 + $0xc8] sm:$0xff] %vm445, %v374
        %472 = vst.msk [vmem:[#allocation2 + $0xd0] sm:$0xff] %vm445, %v376
        %473 = vst.msk [vmem:[#allocation2 + $0xd8] sm:$0xff] %vm445, %v377
        %474 = vst.msk [vmem:[#allocation2 + $0xe0] sm:$0xff] %vm445, %v379
        %475 = vst.msk [vmem:[#allocation2 + $0xe8] sm:$0xff] %vm445, %v380
        %476 = vst.msk [vmem:[#allocation2 + $0xf0] sm:$0xff] %vm445, %v382
        %477 = vst.msk [vmem:[#allocation2 + $0xf8] sm:$0xff] %vm445, %v383
        %510 = vrot.lane.b32.xlu0 %v391, 4
        %v511 = vpop.permute.xlu0 %510
        %512 = vrot.lane.b32.xlu0 %v392, 4
        %v513 = vpop.permute.xlu0 %512
        %514 = vrot.lane.b32.xlu0 %v394, 4
        %v515 = vpop.permute.xlu0 %514
        %516 = vrot.lane.b32.xlu0 %v395, 4
        %v517 = vpop.permute.xlu0 %516
        %518 = vrot.lane.b32.xlu0 %v397, 4
        %v519 = vpop.permute.xlu0 %518
        %520 = vrot.lane.b32.xlu0 %v398, 4
        %v521 = vpop.permute.xlu0 %520
        %522 = vrot.lane.b32.xlu0 %v400, 4
        %v523 = vpop.permute.xlu0 %522
        %524 = vrot.lane.b32.xlu0 %v401, 4
        %v525 = vpop.permute.xlu0 %524
        %526 = vrot.lane.b32.xlu0 %v403, 4
        %v527 = vpop.permute.xlu0 %526
        %528 = vrot.lane.b32.xlu0 %v404, 4
        %v529 = vpop.permute.xlu0 %528
        %530 = vrot.lane.b32.xlu0 %v406, 4
        %v531 = vpop.permute.xlu0 %530
        %532 = vrot.lane.b32.xlu0 %v407, 4
        %v533 = vpop.permute.xlu0 %532
        %534 = vrot.lane.b32.xlu0 %v409, 4
        %v535 = vpop.permute.xlu0 %534
        %536 = vrot.lane.b32.xlu0 %v410, 4
        %v537 = vpop.permute.xlu0 %536
        %538 = vrot.lane.b32.xlu0 %v412, 4
        %v539 = vpop.permute.xlu0 %538
        %540 = vrot.lane.b32.xlu0 %v413, 4
        %v541 = vpop.permute.xlu0 %540
        %542 = vrot.lane.b32.xlu0 %v415, 4
        %v543 = vpop.permute.xlu0 %542
        %544 = vrot.lane.b32.xlu0 %v416, 4
        %v545 = vpop.permute.xlu0 %544
        %546 = vrot.lane.b32.xlu0 %v418, 4
        %v547 = vpop.permute.xlu0 %546
        %548 = vrot.lane.b32.xlu0 %v419, 4
        %v549 = vpop.permute.xlu0 %548
        %550 = vrot.lane.b32.xlu0 %v421, 4
        %v551 = vpop.permute.xlu0 %550
        %552 = vrot.lane.b32.xlu0 %v422, 4
        %v553 = vpop.permute.xlu0 %552
        %554 = vrot.lane.b32.xlu0 %v424, 4
        %v555 = vpop.permute.xlu0 %554
        %556 = vrot.lane.b32.xlu0 %v425, 4
        %v557 = vpop.permute.xlu0 %556
        %558 = vrot.lane.b32.xlu0 %v427, 4
        %v559 = vpop.permute.xlu0 %558
        %560 = vrot.lane.b32.xlu0 %v428, 4
        %v561 = vpop.permute.xlu0 %560
        %562 = vrot.lane.b32.xlu0 %v430, 4
        %v563 = vpop.permute.xlu0 %562
        %564 = vrot.lane.b32.xlu0 %v431, 4
        %v565 = vpop.permute.xlu0 %564
        %566 = vrot.lane.b32.xlu0 %v433, 4
        %v567 = vpop.permute.xlu0 %566
        %568 = vrot.lane.b32.xlu0 %v434, 4
        %v569 = vpop.permute.xlu0 %568
        %570 = vrot.lane.b32.xlu0 %v436, 4
        %v571 = vpop.permute.xlu0 %570
        %572 = vrot.lane.b32.xlu0 %v437, 4
        %v573 = vpop.permute.xlu0 %572
        %vm606 = vcmask 97312
        %607 = vst.msk [vmem:[#allocation2] sm:$0xff] %vm606, %v511
        %608 = vst.msk [vmem:[#allocation2 + $0x8] sm:$0xff] %vm606, %v513
        %609 = vst.msk [vmem:[#allocation2 + $0x10] sm:$0xff] %vm606, %v515
        %610 = vst.msk [vmem:[#allocation2 + $0x18] sm:$0xff] %vm606, %v517
        %611 = vst.msk [vmem:[#allocation2 + $0x20] sm:$0xff] %vm606, %v519
        %612 = vst.msk [vmem:[#allocation2 + $0x28] sm:$0xff] %vm606, %v521
        %613 = vst.msk [vmem:[#allocation2 + $0x30] sm:$0xff] %vm606, %v523
        %614 = vst.msk [vmem:[#allocation2 + $0x38] sm:$0xff] %vm606, %v525
        %615 = vst.msk [vmem:[#allocation2 + $0x40] sm:$0xff] %vm606, %v527
        %616 = vst.msk [vmem:[#allocation2 + $0x48] sm:$0xff] %vm606, %v529
        %617 = vst.msk [vmem:[#allocation2 + $0x50] sm:$0xff] %vm606, %v531
        %618 = vst.msk [vmem:[#allocation2 + $0x58] sm:$0xff] %vm606, %v533
        %619 = vst.msk [vmem:[#allocation2 + $0x60] sm:$0xff] %vm606, %v535
        %620 = vst.msk [vmem:[#allocation2 + $0x68] sm:$0xff] %vm606, %v537
        %621 = vst.msk [vmem:[#allocation2 + $0x70] sm:$0xff] %vm606, %v539
        %622 = vst.msk [vmem:[#allocation2 + $0x78] sm:$0xff] %vm606, %v541
        %623 = vst.msk [vmem:[#allocation2 + $0x80] sm:$0xff] %vm606, %v543
        %624 = vst.msk [vmem:[#allocation2 + $0x88] sm:$0xff] %vm606, %v545
        %625 = vst.msk [vmem:[#allocation2 + $0x90] sm:$0xff] %vm606, %v547
        %626 = vst.msk [vmem:[#allocation2 + $0x98] sm:$0xff] %vm606, %v549
        %627 = vst.msk [vmem:[#allocation2 + $0xa0] sm:$0xff] %vm606, %v551
        %628 = vst.msk [vmem:[#allocation2 + $0xa8] sm:$0xff] %vm606, %v553
        %629 = vst.msk [vmem:[#allocation2 + $0xb0] sm:$0xff] %vm606, %v555
        %630 = vst.msk [vmem:[#allocation2 + $0xb8] sm:$0xff] %vm606, %v557
        %631 = vst.msk [vmem:[#allocation2 + $0xc0] sm:$0xff] %vm606, %v559
        %632 = vst.msk [vmem:[#allocation2 + $0xc8] sm:$0xff] %vm606, %v561
        %633 = vst.msk [vmem:[#allocation2 + $0xd0] sm:$0xff] %vm606, %v563
        %634 = vst.msk [vmem:[#allocation2 + $0xd8] sm:$0xff] %vm606, %v565
        %635 = vst.msk [vmem:[#allocation2 + $0xe0] sm:$0xff] %vm606, %v567
        %636 = vst.msk [vmem:[#allocation2 + $0xe8] sm:$0xff] %vm606, %v569
        %637 = vst.msk [vmem:[#allocation2 + $0xf0] sm:$0xff] %vm606, %v571
        %638 = vst.msk [vmem:[#allocation2 + $0xf8] sm:$0xff] %vm606, %v573
        %vm687 = vcmask 1046528
        %v688 = vrot.slane %v337, 1
        %v689 = vrot.slane %v338, 1
        %v690 = vsel %vm687, %v688, %v689
        %v691 = vrot.slane %v339, 1
        %v692 = vsel %vm687, %v689, %v691
        %v693 = vrot.slane %v340, 1
        %v694 = vrot.slane %v341, 1
        %v695 = vsel %vm687, %v693, %v694
        %v696 = vrot.slane %v342, 1
        %v697 = vsel %vm687, %v694, %v696
        %v698 = vrot.slane %v343, 1
        %v699 = vrot.slane %v344, 1
        %v700 = vsel %vm687, %v698, %v699
        %v701 = vrot.slane %v345, 1
        %v702 = vsel %vm687, %v699, %v701
        %v703 = vrot.slane %v346, 1
        %v704 = vrot.slane %v347, 1
        %v705 = vsel %vm687, %v703, %v704
        %v706 = vrot.slane %v348, 1
        %v707 = vsel %vm687, %v704, %v706
        %v708 = vrot.slane %v349, 1
        %v709 = vrot.slane %v350, 1
        %v710 = vsel %vm687, %v708, %v709
        %v711 = vrot.slane %v351, 1
        %v712 = vsel %vm687, %v709, %v711
        %v713 = vrot.slane %v352, 1
        %v714 = vrot.slane %v353, 1
        %v715 = vsel %vm687, %v713, %v714
        %v716 = vrot.slane %v354, 1
        %v717 = vsel %vm687, %v714, %v716
        %v718 = vrot.slane %v355, 1
        %v719 = vrot.slane %v356, 1
        %v720 = vsel %vm687, %v718, %v719
        %v721 = vrot.slane %v357, 1
        %v722 = vsel %vm687, %v719, %v721
        %v723 = vrot.slane %v358, 1
        %v724 = vrot.slane %v359, 1
        %v725 = vsel %vm687, %v723, %v724
        %v726 = vrot.slane %v360, 1
        %v727 = vsel %vm687, %v724, %v726
        %v728 = vrot.slane %v361, 1
        %v729 = vrot.slane %v362, 1
        %v730 = vsel %vm687, %v728, %v729
        %v731 = vrot.slane %v363, 1
        %v732 = vsel %vm687, %v729, %v731
        %v733 = vrot.slane %v364, 1
        %v734 = vrot.slane %v365, 1
        %v735 = vsel %vm687, %v733, %v734
        %v736 = vrot.slane %v366, 1
        %v737 = vsel %vm687, %v734, %v736
        %v738 = vrot.slane %v367, 1
        %v739 = vrot.slane %v368, 1
        %v740 = vsel %vm687, %v738, %v739
        %v741 = vrot.slane %v369, 1
        %v742 = vsel %vm687, %v739, %v741
        %v743 = vrot.slane %v370, 1
        %v744 = vrot.slane %v371, 1
        %v745 = vsel %vm687, %v743, %v744
        %v746 = vrot.slane %v372, 1
        %v747 = vsel %vm687, %v744, %v746
        %v748 = vrot.slane %v373, 1
        %v749 = vrot.slane %v374, 1
        %v750 = vsel %vm687, %v748, %v749
        %v751 = vrot.slane %v375, 1
        %v752 = vsel %vm687, %v749, %v751
        %v753 = vrot.slane %v376, 1
        %v754 = vrot.slane %v377, 1
        %v755 = vsel %vm687, %v753, %v754
        %v756 = vrot.slane %v378, 1
        %v757 = vsel %vm687, %v754, %v756
        %v758 = vrot.slane %v379, 1
        %v759 = vrot.slane %v380, 1
        %v760 = vsel %vm687, %v758, %v759
        %v761 = vrot.slane %v381, 1
        %v762 = vsel %vm687, %v759, %v761
        %v763 = vrot.slane %v382, 1
        %v764 = vrot.slane %v383, 1
        %v765 = vsel %vm687, %v763, %v764
        %v766 = vrot.slane %v384, 1
        %v767 = vsel %vm687, %v764, %v766
        %768 = vrot.lane.b32.xlu0 %v690, 12
        %v769 = vpop.permute.xlu0 %768
        %770 = vrot.lane.b32.xlu0 %v692, 12
        %v771 = vpop.permute.xlu0 %770
        %772 = vrot.lane.b32.xlu0 %v695, 12
        %v773 = vpop.permute.xlu0 %772
        %774 = vrot.lane.b32.xlu0 %v697, 12
        %v775 = vpop.permute.xlu0 %774
        %776 = vrot.lane.b32.xlu0 %v700, 12
        %v777 = vpop.permute.xlu0 %776
        %778 = vrot.lane.b32.xlu0 %v702, 12
        %v779 = vpop.permute.xlu0 %778
        %780 = vrot.lane.b32.xlu0 %v705, 12
        %v781 = vpop.permute.xlu0 %780
        %782 = vrot.lane.b32.xlu0 %v707, 12
        %v783 = vpop.permute.xlu0 %782
        %784 = vrot.lane.b32.xlu0 %v710, 12
        %v785 = vpop.permute.xlu0 %784
        %786 = vrot.lane.b32.xlu0 %v712, 12
        %v787 = vpop.permute.xlu0 %786
        %788 = vrot.lane.b32.xlu0 %v715, 12
        %v789 = vpop.permute.xlu0 %788
        %790 = vrot.lane.b32.xlu0 %v717, 12
        %v791 = vpop.permute.xlu0 %790
        %792 = vrot.lane.b32.xlu0 %v720, 12
        %v793 = vpop.permute.xlu0 %792
        %794 = vrot.lane.b32.xlu0 %v722, 12
        %v795 = vpop.permute.xlu0 %794
        %796 = vrot.lane.b32.xlu0 %v725, 12
        %v797 = vpop.permute.xlu0 %796
        %798 = vrot.lane.b32.xlu0 %v727, 12
        %v799 = vpop.permute.xlu0 %798
        %800 = vrot.lane.b32.xlu0 %v730, 12
        %v801 = vpop.permute.xlu0 %800
        %802 = vrot.lane.b32.xlu0 %v732, 12
        %v803 = vpop.permute.xlu0 %802
        %804 = vrot.lane.b32.xlu0 %v735, 12
        %v805 = vpop.permute.xlu0 %804
        %806 = vrot.lane.b32.xlu0 %v737, 12
        %v807 = vpop.permute.xlu0 %806
        %808 = vrot.lane.b32.xlu0 %v740, 12
        %v809 = vpop.permute.xlu0 %808
        %810 = vrot.lane.b32.xlu0 %v742, 12
        %v811 = vpop.permute.xlu0 %810
        %812 = vrot.lane.b32.xlu0 %v745, 12
        %v813 = vpop.permute.xlu0 %812
        %814 = vrot.lane.b32.xlu0 %v747, 12
        %v815 = vpop.permute.xlu0 %814
        %816 = vrot.lane.b32.xlu0 %v750, 12
        %v817 = vpop.permute.xlu0 %816
        %818 = vrot.lane.b32.xlu0 %v752, 12
        %v819 = vpop.permute.xlu0 %818
        %820 = vrot.lane.b32.xlu0 %v755, 12
        %v821 = vpop.permute.xlu0 %820
        %822 = vrot.lane.b32.xlu0 %v757, 12
        %v823 = vpop.permute.xlu0 %822
        %824 = vrot.lane.b32.xlu0 %v760, 12
        %v825 = vpop.permute.xlu0 %824
        %826 = vrot.lane.b32.xlu0 %v762, 12
        %v827 = vpop.permute.xlu0 %826
        %828 = vrot.lane.b32.xlu0 %v765, 12
        %v829 = vpop.permute.xlu0 %828
        %830 = vrot.lane.b32.xlu0 %v767, 12
        %v831 = vpop.permute.xlu0 %830
        %vm864 = vcmask 130144
        %865 = vst.msk [vmem:[#allocation2] sm:$0xff] %vm864, %v769
        %866 = vst.msk [vmem:[#allocation2 + $0x8] sm:$0xff] %vm864, %v771
        %867 = vst.msk [vmem:[#allocation2 + $0x10] sm:$0xff] %vm864, %v773
        %868 = vst.msk [vmem:[#allocation2 + $0x18] sm:$0xff] %vm864, %v775
        %869 = vst.msk [vmem:[#allocation2 + $0x20] sm:$0xff] %vm864, %v777
        %870 = vst.msk [vmem:[#allocation2 + $0x28] sm:$0xff] %vm864, %v779
        %871 = vst.msk [vmem:[#allocation2 + $0x30] sm:$0xff] %vm864, %v781
        %872 = vst.msk [vmem:[#allocation2 + $0x38] sm:$0xff] %vm864, %v783
        %873 = vst.msk [vmem:[#allocation2 + $0x40] sm:$0xff] %vm864, %v785
        %874 = vst.msk [vmem:[#allocation2 + $0x48] sm:$0xff] %vm864, %v787
        %875 = vst.msk [vmem:[#allocation2 + $0x50] sm:$0xff] %vm864, %v789
        %876 = vst.msk [vmem:[#allocation2 + $0x58] sm:$0xff] %vm864, %v791
        %877 = vst.msk [vmem:[#allocation2 + $0x60] sm:$0xff] %vm864, %v793
        %878 = vst.msk [vmem:[#allocation2 + $0x68] sm:$0xff] %vm864, %v795
        %879 = vst.msk [vmem:[#allocation2 + $0x70] sm:$0xff] %vm864, %v797
        %880 = vst.msk [vmem:[#allocation2 + $0x78] sm:$0xff] %vm864, %v799
        %881 = vst.msk [vmem:[#allocation2 + $0x80] sm:$0xff] %vm864, %v801
        %882 = vst.msk [vmem:[#allocation2 + $0x88] sm:$0xff] %vm864, %v803
        %883 = vst.msk [vmem:[#allocation2 + $0x90] sm:$0xff] %vm864, %v805
        %884 = vst.msk [vmem:[#allocation2 + $0x98] sm:$0xff] %vm864, %v807
        %885 = vst.msk [vmem:[#allocation2 + $0xa0] sm:$0xff] %vm864, %v809
        %886 = vst.msk [vmem:[#allocation2 + $0xa8] sm:$0xff] %vm864, %v811
        %887 = vst.msk [vmem:[#allocation2 + $0xb0] sm:$0xff] %vm864, %v813
        %888 = vst.msk [vmem:[#allocation2 + $0xb8] sm:$0xff] %vm864, %v815
        %889 = vst.msk [vmem:[#allocation2 + $0xc0] sm:$0xff] %vm864, %v817
        %890 = vst.msk [vmem:[#allocation2 + $0xc8] sm:$0xff] %vm864, %v819
        %891 = vst.msk [vmem:[#allocation2 + $0xd0] sm:$0xff] %vm864, %v821
        %892 = vst.msk [vmem:[#allocation2 + $0xd8] sm:$0xff] %vm864, %v823
        %893 = vst.msk [vmem:[#allocation2 + $0xe0] sm:$0xff] %vm864, %v825
        %894 = vst.msk [vmem:[#allocation2 + $0xe8] sm:$0xff] %vm864, %v827
        %895 = vst.msk [vmem:[#allocation2 + $0xf0] sm:$0xff] %vm864, %v829
        %896 = vst.msk [vmem:[#allocation2 + $0xf8] sm:$0xff] %vm864, %v831
        %v913 = vrot.slane %v391, 1
        %v914 = vrot.slane %v392, 1
        %v915 = vsel %vm687, %v913, %v914
        %v916 = vrot.slane %v393, 1
        %v917 = vsel %vm687, %v914, %v916
        %v918 = vrot.slane %v394, 1
        %v919 = vrot.slane %v395, 1
        %v920 = vsel %vm687, %v918, %v919
        %v921 = vrot.slane %v396, 1
        %v922 = vsel %vm687, %v919, %v921
        %v923 = vrot.slane %v397, 1
        %v924 = vrot.slane %v398, 1
        %v925 = vsel %vm687, %v923, %v924
        %v926 = vrot.slane %v399, 1
        %v927 = vsel %vm687, %v924, %v926
        %v928 = vrot.slane %v400, 1
        %v929 = vrot.slane %v401, 1
        %v930 = vsel %vm687, %v928, %v929
        %v931 = vrot.slane %v402, 1
        %v932 = vsel %vm687, %v929, %v931
        %v933 = vrot.slane %v403, 1
        %v934 = vrot.slane %v404, 1
        %v935 = vsel %vm687, %v933, %v934
        %v936 = vrot.slane %v405, 1
        %v937 = vsel %vm687, %v934, %v936
        %v938 = vrot.slane %v406, 1
        %v939 = vrot.slane %v407, 1
        %v940 = vsel %vm687, %v938, %v939
        %v941 = vrot.slane %v408, 1
        %v942 = vsel %vm687, %v939, %v941
        %v943 = vrot.slane %v409, 1
        %v944 = vrot.slane %v410, 1
        %v945 = vsel %vm687, %v943, %v944
        %v946 = vrot.slane %v411, 1
        %v947 = vsel %vm687, %v944, %v946
        %v948 = vrot.slane %v412, 1
        %v949 = vrot.slane %v413, 1
        %v950 = vsel %vm687, %v948, %v949
        %v951 = vrot.slane %v414, 1
        %v952 = vsel %vm687, %v949, %v951
        %v953 = vrot.slane %v415, 1
        %v954 = vrot.slane %v416, 1
        %v955 = vsel %vm687, %v953, %v954
        %v956 = vrot.slane %v417, 1
        %v957 = vsel %vm687, %v954, %v956
        %v958 = vrot.slane %v418, 1
        %v959 = vrot.slane %v419, 1
        %v960 = vsel %vm687, %v958, %v959
        %v961 = vrot.slane %v420, 1
        %v962 = vsel %vm687, %v959, %v961
        %v963 = vrot.slane %v421, 1
        %v964 = vrot.slane %v422, 1
        %v965 = vsel %vm687, %v963, %v964
        %v966 = vrot.slane %v423, 1
        %v967 = vsel %vm687, %v964, %v966
        %v968 = vrot.slane %v424, 1
        %v969 = vrot.slane %v425, 1
        %v970 = vsel %vm687, %v968, %v969
        %v971 = vrot.slane %v426, 1
        %v972 = vsel %vm687, %v969, %v971
        %v973 = vrot.slane %v427, 1
        %v974 = vrot.slane %v428, 1
        %v975 = vsel %vm687, %v973, %v974
        %v976 = vrot.slane %v429, 1
        %v977 = vsel %vm687, %v974, %v976
        %v978 = vrot.slane %v430, 1
        %v979 = vrot.slane %v431, 1
        %v980 = vsel %vm687, %v978, %v979
        %v981 = vrot.slane %v432, 1
        %v982 = vsel %vm687, %v979, %v981
        %v983 = vrot.slane %v433, 1
        %v984 = vrot.slane %v434, 1
        %v985 = vsel %vm687, %v983, %v984
        %v986 = vrot.slane %v435, 1
        %v987 = vsel %vm687, %v984, %v986
        %v988 = vrot.slane %v436, 1
        %v989 = vrot.slane %v437, 1
        %v990 = vsel %vm687, %v988, %v989
        %v991 = vrot.slane %v438, 1
        %v992 = vsel %vm687, %v989, %v991
        %993 = vrot.lane.b32.xlu0 %v915, 16
        %v994 = vpop.permute.xlu0 %993
        %995 = vrot.lane.b32.xlu0 %v917, 16
        %v996 = vpop.permute.xlu0 %995
        %997 = vrot.lane.b32.xlu0 %v920, 16
        %v998 = vpop.permute.xlu0 %997
        %999 = vrot.lane.b32.xlu0 %v922, 16
        %v1000 = vpop.permute.xlu0 %999
        %1001 = vrot.lane.b32.xlu0 %v925, 16
        %v1002 = vpop.permute.xlu0 %1001
        %1003 = vrot.lane.b32.xlu0 %v927, 16
        %v1004 = vpop.permute.xlu0 %1003
        %1005 = vrot.lane.b32.xlu0 %v930, 16
        %v1006 = vpop.permute.xlu0 %1005
        %1007 = vrot.lane.b32.xlu0 %v932, 16
        %v1008 = vpop.permute.xlu0 %1007
        %1009 = vrot.lane.b32.xlu0 %v935, 16
        %v1010 = vpop.permute.xlu0 %1009
        %1011 = vrot.lane.b32.xlu0 %v937, 16
        %v1012 = vpop.permute.xlu0 %1011
        %1013 = vrot.lane.b32.xlu0 %v940, 16
        %v1014 = vpop.permute.xlu0 %1013
        %1015 = vrot.lane.b32.xlu0 %v942, 16
        %v1016 = vpop.permute.xlu0 %1015
        %1017 = vrot.lane.b32.xlu0 %v945, 16
        %v1018 = vpop.permute.xlu0 %1017
        %1019 = vrot.lane.b32.xlu0 %v947, 16
        %v1020 = vpop.permute.xlu0 %1019
        %1021 = vrot.lane.b32.xlu0 %v950, 16
        %v1022 = vpop.permute.xlu0 %1021
        %1023 = vrot.lane.b32.xlu0 %v952, 16
        %v1024 = vpop.permute.xlu0 %1023
        %1025 = vrot.lane.b32.xlu0 %v955, 16
        %v1026 = vpop.permute.xlu0 %1025
        %1027 = vrot.lane.b32.xlu0 %v957, 16
        %v1028 = vpop.permute.xlu0 %1027
        %1029 = vrot.lane.b32.xlu0 %v960, 16
        %v1030 = vpop.permute.xlu0 %1029
        %1031 = vrot.lane.b32.xlu0 %v962, 16
        %v1032 = vpop.permute.xlu0 %1031
        %1033 = vrot.lane.b32.xlu0 %v965, 16
        %v1034 = vpop.permute.xlu0 %1033
        %1035 = vrot.lane.b32.xlu0 %v967, 16
        %v1036 = vpop.permute.xlu0 %1035
        %1037 = vrot.lane.b32.xlu0 %v970, 16
        %v1038 = vpop.permute.xlu0 %1037
        %1039 = vrot.lane.b32.xlu0 %v972, 16
        %v1040 = vpop.permute.xlu0 %1039
        %1041 = vrot.lane.b32.xlu0 %v975, 16
        %v1042 = vpop.permute.xlu0 %1041
        %1043 = vrot.lane.b32.xlu0 %v977, 16
        %v1044 = vpop.permute.xlu0 %1043
        %1045 = vrot.lane.b32.xlu0 %v980, 16
        %v1046 = vpop.permute.xlu0 %1045
        %1047 = vrot.lane.b32.xlu0 %v982, 16
        %v1048 = vpop.permute.xlu0 %1047
        %1049 = vrot.lane.b32.xlu0 %v985, 16
        %v1050 = vpop.permute.xlu0 %1049
        %1051 = vrot.lane.b32.xlu0 %v987, 16
        %v1052 = vpop.permute.xlu0 %1051
        %1053 = vrot.lane.b32.xlu0 %v990, 16
        %v1054 = vpop.permute.xlu0 %1053
        %1055 = vrot.lane.b32.xlu0 %v992, 16
        %v1056 = vpop.permute.xlu0 %1055
        %vm1089 = vcmask 195712
        %1090 = vst.msk [vmem:[#allocation2] sm:$0xff] %vm1089, %v994
        %1091 = vst.msk [vmem:[#allocation2 + $0x8] sm:$0xff] %vm1089, %v996
        %1092 = vst.msk [vmem:[#allocation2 + $0x10] sm:$0xff] %vm1089, %v998
        %1093 = vst.msk [vmem:[#allocation2 + $0x18] sm:$0xff] %vm1089, %v1000
        %1094 = vst.msk [vmem:[#allocation2 + $0x20] sm:$0xff] %vm1089, %v1002
        %1095 = vst.msk [vmem:[#allocation2 + $0x28] sm:$0xff] %vm1089, %v1004
        %1096 = vst.msk [vmem:[#allocation2 + $0x30] sm:$0xff] %vm1089, %v1006
        %1097 = vst.msk [vmem:[#allocation2 + $0x38] sm:$0xff] %vm1089, %v1008
        %1098 = vst.msk [vmem:[#allocation2 + $0x40] sm:$0xff] %vm1089, %v1010
        %1099 = vst.msk [vmem:[#allocation2 + $0x48] sm:$0xff] %vm1089, %v1012
        %1100 = vst.msk [vmem:[#allocation2 + $0x50] sm:$0xff] %vm1089, %v1014
        %1101 = vst.msk [vmem:[#allocation2 + $0x58] sm:$0xff] %vm1089, %v1016
        %1102 = vst.msk [vmem:[#allocation2 + $0x60] sm:$0xff] %vm1089, %v1018
        %1103 = vst.msk [vmem:[#allocation2 + $0x68] sm:$0xff] %vm1089, %v1020
        %1104 = vst.msk [vmem:[#allocation2 + $0x70] sm:$0xff] %vm1089, %v1022
        %1105 = vst.msk [vmem:[#allocation2 + $0x78] sm:$0xff] %vm1089, %v1024
        %1106 = vst.msk [vmem:[#allocation2 + $0x80] sm:$0xff] %vm1089, %v1026
        %1107 = vst.msk [vmem:[#allocation2 + $0x88] sm:$0xff] %vm1089, %v1028
        %1108 = vst.msk [vmem:[#allocation2 + $0x90] sm:$0xff] %vm1089, %v1030
        %1109 = vst.msk [vmem:[#allocation2 + $0x98] sm:$0xff] %vm1089, %v1032
        %1110 = vst.msk [vmem:[#allocation2 + $0xa0] sm:$0xff] %vm1089, %v1034
        %1111 = vst.msk [vmem:[#allocation2 + $0xa8] sm:$0xff] %vm1089, %v1036
        %1112 = vst.msk [vmem:[#allocation2 + $0xb0] sm:$0xff] %vm1089, %v1038
        %1113 = vst.msk [vmem:[#allocation2 + $0xb8] sm:$0xff] %vm1089, %v1040
        %1114 = vst.msk [vmem:[#allocation2 + $0xc0] sm:$0xff] %vm1089, %v1042
        %1115 = vst.msk [vmem:[#allocation2 + $0xc8] sm:$0xff] %vm1089, %v1044
        %1116 = vst.msk [vmem:[#allocation2 + $0xd0] sm:$0xff] %vm1089, %v1046
        %1117 = vst.msk [vmem:[#allocation2 + $0xd8] sm:$0xff] %vm1089, %v1048
        %1118 = vst.msk [vmem:[#allocation2 + $0xe0] sm:$0xff] %vm1089, %v1050
        %1119 = vst.msk [vmem:[#allocation2 + $0xe8] sm:$0xff] %vm1089, %v1052
        %1120 = vst.msk [vmem:[#allocation2 + $0xf0] sm:$0xff] %vm1089, %v1054
        %1121 = vst.msk [vmem:[#allocation2 + $0xf8] sm:$0xff] %vm1089, %v1056
        %vm1122 = vcmask 1045504
        %v1123 = vrot.slane %v337, 2
        %v1124 = vrot.slane %v338, 2
        %v1125 = vsel %vm1122, %v1123, %v1124
        %v1126 = vrot.slane %v339, 2
        %v1127 = vsel %vm1122, %v1124, %v1126
        %v1128 = vrot.slane %v340, 2
        %v1129 = vrot.slane %v341, 2
        %v1130 = vsel %vm1122, %v1128, %v1129
        %v1131 = vrot.slane %v342, 2
        %v1132 = vsel %vm1122, %v1129, %v1131
        %v1133 = vrot.slane %v343, 2
        %v1134 = vrot.slane %v344, 2
        %v1135 = vsel %vm1122, %v1133, %v1134
        %v1136 = vrot.slane %v345, 2
        %v1137 = vsel %vm1122, %v1134, %v1136
        %v1138 = vrot.slane %v346, 2
        %v1139 = vrot.slane %v347, 2
        %v1140 = vsel %vm1122, %v1138, %v1139
        %v1141 = vrot.slane %v348, 2
        %v1142 = vsel %vm1122, %v1139, %v1141
        %v1143 = vrot.slane %v349, 2
        %v1144 = vrot.slane %v350, 2
        %v1145 = vsel %vm1122, %v1143, %v1144
        %v1146 = vrot.slane %v351, 2
        %v1147 = vsel %vm1122, %v1144, %v1146
        %v1148 = vrot.slane %v352, 2
        %v1149 = vrot.slane %v353, 2
        %v1150 = vsel %vm1122, %v1148, %v1149
        %v1151 = vrot.slane %v354, 2
        %v1152 = vsel %vm1122, %v1149, %v1151
        %v1153 = vrot.slane %v355, 2
        %v1154 = vrot.slane %v356, 2
        %v1155 = vsel %vm1122, %v1153, %v1154
        %v1156 = vrot.slane %v357, 2
        %v1157 = vsel %vm1122, %v1154, %v1156
        %v1158 = vrot.slane %v358, 2
        %v1159 = vrot.slane %v359, 2
        %v1160 = vsel %vm1122, %v1158, %v1159
        %v1161 = vrot.slane %v360, 2
        %v1162 = vsel %vm1122, %v1159, %v1161
        %v1163 = vrot.slane %v361, 2
        %v1164 = vrot.slane %v362, 2
        %v1165 = vsel %vm1122, %v1163, %v1164
        %v1166 = vrot.slane %v363, 2
        %v1167 = vsel %vm1122, %v1164, %v1166
        %v1168 = vrot.slane %v364, 2
        %v1169 = vrot.slane %v365, 2
        %v1170 = vsel %vm1122, %v1168, %v1169
        %v1171 = vrot.slane %v366, 2
        %v1172 = vsel %vm1122, %v1169, %v1171
        %v1173 = vrot.slane %v367, 2
        %v1174 = vrot.slane %v368, 2
        %v1175 = vsel %vm1122, %v1173, %v1174
        %v1176 = vrot.slane %v369, 2
        %v1177 = vsel %vm1122, %v1174, %v1176
        %v1178 = vrot.slane %v370, 2
        %v1179 = vrot.slane %v371, 2
        %v1180 = vsel %vm1122, %v1178, %v1179
        %v1181 = vrot.slane %v372, 2
        %v1182 = vsel %vm1122, %v1179, %v1181
        %v1183 = vrot.slane %v373, 2
        %v1184 = vrot.slane %v374, 2
        %v1185 = vsel %vm1122, %v1183, %v1184
        %v1186 = vrot.slane %v375, 2
        %v1187 = vsel %vm1122, %v1184, %v1186
        %v1188 = vrot.slane %v376, 2
        %v1189 = vrot.slane %v377, 2
        %v1190 = vsel %vm1122, %v1188, %v1189
        %v1191 = vrot.slane %v378, 2
        %v1192 = vsel %vm1122, %v1189, %v1191
        %v1193 = vrot.slane %v379, 2
        %v1194 = vrot.slane %v380, 2
        %v1195 = vsel %vm1122, %v1193, %v1194
        %v1196 = vrot.slane %v381, 2
        %v1197 = vsel %vm1122, %v1194, %v1196
        %v1198 = vrot.slane %v382, 2
        %v1199 = vrot.slane %v383, 2
        %v1200 = vsel %vm1122, %v1198, %v1199
        %v1201 = vrot.slane %v384, 2
        %v1202 = vsel %vm1122, %v1199, %v1201
        %1203 = vrot.lane.b32.xlu0 %v1125, 24
        %v1204 = vpop.permute.xlu0 %1203
        %1205 = vrot.lane.b32.xlu0 %v1127, 24
        %v1206 = vpop.permute.xlu0 %1205
        %1207 = vrot.lane.b32.xlu0 %v1130, 24
        %v1208 = vpop.permute.xlu0 %1207
        %1209 = vrot.lane.b32.xlu0 %v1132, 24
        %v1210 = vpop.permute.xlu0 %1209
        %1211 = vrot.lane.b32.xlu0 %v1135, 24
        %v1212 = vpop.permute.xlu0 %1211
        %1213 = vrot.lane.b32.xlu0 %v1137, 24
        %v1214 = vpop.permute.xlu0 %1213
        %1215 = vrot.lane.b32.xlu0 %v1140, 24
        %v1216 = vpop.permute.xlu0 %1215
        %1217 = vrot.lane.b32.xlu0 %v1142, 24
        %v1218 = vpop.permute.xlu0 %1217
        %1219 = vrot.lane.b32.xlu0 %v1145, 24
        %v1220 = vpop.permute.xlu0 %1219
        %1221 = vrot.lane.b32.xlu0 %v1147, 24
        %v1222 = vpop.permute.xlu0 %1221
        %1223 = vrot.lane.b32.xlu0 %v1150, 24
        %v1224 = vpop.permute.xlu0 %1223
        %1225 = vrot.lane.b32.xlu0 %v1152, 24
        %v1226 = vpop.permute.xlu0 %1225
        %1227 = vrot.lane.b32.xlu0 %v1155, 24
        %v1228 = vpop.permute.xlu0 %1227
        %1229 = vrot.lane.b32.xlu0 %v1157, 24
        %v1230 = vpop.permute.xlu0 %1229
        %1231 = vrot.lane.b32.xlu0 %v1160, 24
        %v1232 = vpop.permute.xlu0 %1231
        %1233 = vrot.lane.b32.xlu0 %v1162, 24
        %v1234 = vpop.permute.xlu0 %1233
        %1235 = vrot.lane.b32.xlu0 %v1165, 24
        %v1236 = vpop.permute.xlu0 %1235
        %1237 = vrot.lane.b32.xlu0 %v1167, 24
        %v1238 = vpop.permute.xlu0 %1237
        %1239 = vrot.lane.b32.xlu0 %v1170, 24
        %v1240 = vpop.permute.xlu0 %1239
        %1241 = vrot.lane.b32.xlu0 %v1172, 24
        %v1242 = vpop.permute.xlu0 %1241
        %1243 = vrot.lane.b32.xlu0 %v1175, 24
        %v1244 = vpop.permute.xlu0 %1243
        %1245 = vrot.lane.b32.xlu0 %v1177, 24
        %v1246 = vpop.permute.xlu0 %1245
        %1247 = vrot.lane.b32.xlu0 %v1180, 24
        %v1248 = vpop.permute.xlu0 %1247
        %1249 = vrot.lane.b32.xlu0 %v1182, 24
        %v1250 = vpop.permute.xlu0 %1249
        %1251 = vrot.lane.b32.xlu0 %v1185, 24
        %v1252 = vpop.permute.xlu0 %1251
        %1253 = vrot.lane.b32.xlu0 %v1187, 24
        %v1254 = vpop.permute.xlu0 %1253
        %1255 = vrot.lane.b32.xlu0 %v1190, 24
        %v1256 = vpop.permute.xlu0 %1255
        %1257 = vrot.lane.b32.xlu0 %v1192, 24
        %v1258 = vpop.permute.xlu0 %1257
        %1259 = vrot.lane.b32.xlu0 %v1195, 24
        %v1260 = vpop.permute.xlu0 %1259
        %1261 = vrot.lane.b32.xlu0 %v1197, 24
        %v1262 = vpop.permute.xlu0 %1261
        %1263 = vrot.lane.b32.xlu0 %v1200, 24
        %v1264 = vpop.permute.xlu0 %1263
        %1265 = vrot.lane.b32.xlu0 %v1202, 24
        %v1266 = vpop.permute.xlu0 %1265
        %vm1299 = vcmask 228544
        %1300 = vst.msk [vmem:[#allocation2] sm:$0xff] %vm1299, %v1204
        %1301 = vst.msk [vmem:[#allocation2 + $0x8] sm:$0xff] %vm1299, %v1206
        %1302 = vst.msk [vmem:[#allocation2 + $0x10] sm:$0xff] %vm1299, %v1208
        %1303 = vst.msk [vmem:[#allocation2 + $0x18] sm:$0xff] %vm1299, %v1210
        %1304 = vst.msk [vmem:[#allocation2 + $0x20] sm:$0xff] %vm1299, %v1212
        %1305 = vst.msk [vmem:[#allocation2 + $0x28] sm:$0xff] %vm1299, %v1214
        %1306 = vst.msk [vmem:[#allocation2 + $0x30] sm:$0xff] %vm1299, %v1216
        %1307 = vst.msk [vmem:[#allocation2 + $0x38] sm:$0xff] %vm1299, %v1218
        %1308 = vst.msk [vmem:[#allocation2 + $0x40] sm:$0xff] %vm1299, %v1220
        %1309 = vst.msk [vmem:[#allocation2 + $0x48] sm:$0xff] %vm1299, %v1222
        %1310 = vst.msk [vmem:[#allocation2 + $0x50] sm:$0xff] %vm1299, %v1224
        %1311 = vst.msk [vmem:[#allocation2 + $0x58] sm:$0xff] %vm1299, %v1226
        %1312 = vst.msk [vmem:[#allocation2 + $0x60] sm:$0xff] %vm1299, %v1228
        %1313 = vst.msk [vmem:[#allocation2 + $0x68] sm:$0xff] %vm1299, %v1230
        %1314 = vst.msk [vmem:[#allocation2 + $0x70] sm:$0xff] %vm1299, %v1232
        %1315 = vst.msk [vmem:[#allocation2 + $0x78] sm:$0xff] %vm1299, %v1234
        %1316 = vst.msk [vmem:[#allocation2 + $0x80] sm:$0xff] %vm1299, %v1236
        %1317 = vst.msk [vmem:[#allocation2 + $0x88] sm:$0xff] %vm1299, %v1238
        %1318 = vst.msk [vmem:[#allocation2 + $0x90] sm:$0xff] %vm1299, %v1240
        %1319 = vst.msk [vmem:[#allocation2 + $0x98] sm:$0xff] %vm1299, %v1242
        %1320 = vst.msk [vmem:[#allocation2 + $0xa0] sm:$0xff] %vm1299, %v1244
        %1321 = vst.msk [vmem:[#allocation2 + $0xa8] sm:$0xff] %vm1299, %v1246
        %1322 = vst.msk [vmem:[#allocation2 + $0xb0] sm:$0xff] %vm1299, %v1248
        %1323 = vst.msk [vmem:[#allocation2 + $0xb8] sm:$0xff] %vm1299, %v1250
        %1324 = vst.msk [vmem:[#allocation2 + $0xc0] sm:$0xff] %vm1299, %v1252
        %1325 = vst.msk [vmem:[#allocation2 + $0xc8] sm:$0xff] %vm1299, %v1254
        %1326 = vst.msk [vmem:[#allocation2 + $0xd0] sm:$0xff] %vm1299, %v1256
        %1327 = vst.msk [vmem:[#allocation2 + $0xd8] sm:$0xff] %vm1299, %v1258
        %1328 = vst.msk [vmem:[#allocation2 + $0xe0] sm:$0xff] %vm1299, %v1260
        %1329 = vst.msk [vmem:[#allocation2 + $0xe8] sm:$0xff] %vm1299, %v1262
        %1330 = vst.msk [vmem:[#allocation2 + $0xf0] sm:$0xff] %vm1299, %v1264
        %1331 = vst.msk [vmem:[#allocation2 + $0xf8] sm:$0xff] %vm1299, %v1266
        %v1332 = vrot.slane %v391, 2
        %v1333 = vrot.slane %v392, 2
        %v1334 = vsel %vm1122, %v1332, %v1333
        %v1335 = vrot.slane %v393, 2
        %v1336 = vsel %vm1122, %v1333, %v1335
        %v1337 = vrot.slane %v394, 2
        %v1338 = vrot.slane %v395, 2
        %v1339 = vsel %vm1122, %v1337, %v1338
        %v1340 = vrot.slane %v396, 2
        %v1341 = vsel %vm1122, %v1338, %v1340
        %v1342 = vrot.slane %v397, 2
        %v1343 = vrot.slane %v398, 2
        %v1344 = vsel %vm1122, %v1342, %v1343
        %v1345 = vrot.slane %v399, 2
        %v1346 = vsel %vm1122, %v1343, %v1345
        %v1347 = vrot.slane %v400, 2
        %v1348 = vrot.slane %v401, 2
        %v1349 = vsel %vm1122, %v1347, %v1348
        %v1350 = vrot.slane %v402, 2
        %v1351 = vsel %vm1122, %v1348, %v1350
        %v1352 = vrot.slane %v403, 2
        %v1353 = vrot.slane %v404, 2
        %v1354 = vsel %vm1122, %v1352, %v1353
        %v1355 = vrot.slane %v405, 2
        %v1356 = vsel %vm1122, %v1353, %v1355
        %v1357 = vrot.slane %v406, 2
        %v1358 = vrot.slane %v407, 2
        %v1359 = vsel %vm1122, %v1357, %v1358
        %v1360 = vrot.slane %v408, 2
        %v1361 = vsel %vm1122, %v1358, %v1360
        %v1362 = vrot.slane %v409, 2
        %v1363 = vrot.slane %v410, 2
        %v1364 = vsel %vm1122, %v1362, %v1363
        %v1365 = vrot.slane %v411, 2
        %v1366 = vsel %vm1122, %v1363, %v1365
        %v1367 = vrot.slane %v412, 2
        %v1368 = vrot.slane %v413, 2
        %v1369 = vsel %vm1122, %v1367, %v1368
        %v1370 = vrot.slane %v414, 2
        %v1371 = vsel %vm1122, %v1368, %v1370
        %v1372 = vrot.slane %v415, 2
        %v1373 = vrot.slane %v416, 2
        %v1374 = vsel %vm1122, %v1372, %v1373
        %v1375 = vrot.slane %v417, 2
        %v1376 = vsel %vm1122, %v1373, %v1375
        %v1377 = vrot.slane %v418, 2
        %v1378 = vrot.slane %v419, 2
        %v1379 = vsel %vm1122, %v1377, %v1378
        %v1380 = vrot.slane %v420, 2
        %v1381 = vsel %vm1122, %v1378, %v1380
        %v1382 = vrot.slane %v421, 2
        %v1383 = vrot.slane %v422, 2
        %v1384 = vsel %vm1122, %v1382, %v1383
        %v1385 = vrot.slane %v423, 2
        %v1386 = vsel %vm1122, %v1383, %v1385
        %v1387 = vrot.slane %v424, 2
        %v1388 = vrot.slane %v425, 2
        %v1389 = vsel %vm1122, %v1387, %v1388
        %v1390 = vrot.slane %v426, 2
        %v1391 = vsel %vm1122, %v1388, %v1390
        %v1392 = vrot.slane %v427, 2
        %v1393 = vrot.slane %v428, 2
        %v1394 = vsel %vm1122, %v1392, %v1393
        %v1395 = vrot.slane %v429, 2
        %v1396 = vsel %vm1122, %v1393, %v1395
        %v1397 = vrot.slane %v430, 2
        %v1398 = vrot.slane %v431, 2
        %v1399 = vsel %vm1122, %v1397, %v1398
        %v1400 = vrot.slane %v432, 2
        %v1401 = vsel %vm1122, %v1398, %v1400
        %v1402 = vrot.slane %v433, 2
        %v1403 = vrot.slane %v434, 2
        %v1404 = vsel %vm1122, %v1402, %v1403
        %v1405 = vrot.slane %v435, 2
        %v1406 = vsel %vm1122, %v1403, %v1405
        %v1407 = vrot.slane %v436, 2
        %v1408 = vrot.slane %v437, 2
        %v1409 = vsel %vm1122, %v1407, %v1408
        %v1410 = vrot.slane %v438, 2
        %v1411 = vsel %vm1122, %v1408, %v1410
        %1412 = vrot.lane.b32.xlu0 %v1334, 28
        %v1413 = vpop.permute.xlu0 %1412
        %1414 = vrot.lane.b32.xlu0 %v1336, 28
        %v1415 = vpop.permute.xlu0 %1414
        %1416 = vrot.lane.b32.xlu0 %v1339, 28
        %v1417 = vpop.permute.xlu0 %1416
        %1418 = vrot.lane.b32.xlu0 %v1341, 28
        %v1419 = vpop.permute.xlu0 %1418
        %1420 = vrot.lane.b32.xlu0 %v1344, 28
        %v1421 = vpop.permute.xlu0 %1420
        %1422 = vrot.lane.b32.xlu0 %v1346, 28
        %v1423 = vpop.permute.xlu0 %1422
        %1424 = vrot.lane.b32.xlu0 %v1349, 28
        %v1425 = vpop.permute.xlu0 %1424
        %1426 = vrot.lane.b32.xlu0 %v1351, 28
        %v1427 = vpop.permute.xlu0 %1426
        %1428 = vrot.lane.b32.xlu0 %v1354, 28
        %v1429 = vpop.permute.xlu0 %1428
        %1430 = vrot.lane.b32.xlu0 %v1356, 28
        %v1431 = vpop.permute.xlu0 %1430
        %1432 = vrot.lane.b32.xlu0 %v1359, 28
        %v1433 = vpop.permute.xlu0 %1432
        %1434 = vrot.lane.b32.xlu0 %v1361, 28
        %v1435 = vpop.permute.xlu0 %1434
        %1436 = vrot.lane.b32.xlu0 %v1364, 28
        %v1437 = vpop.permute.xlu0 %1436
        %1438 = vrot.lane.b32.xlu0 %v1366, 28
        %v1439 = vpop.permute.xlu0 %1438
        %1440 = vrot.lane.b32.xlu0 %v1369, 28
        %v1441 = vpop.permute.xlu0 %1440
        %1442 = vrot.lane.b32.xlu0 %v1371, 28
        %v1443 = vpop.permute.xlu0 %1442
        %1444 = vrot.lane.b32.xlu0 %v1374, 28
        %v1445 = vpop.permute.xlu0 %1444
        %1446 = vrot.lane.b32.xlu0 %v1376, 28
        %v1447 = vpop.permute.xlu0 %1446
        %1448 = vrot.lane.b32.xlu0 %v1379, 28
        %v1449 = vpop.permute.xlu0 %1448
        %1450 = vrot.lane.b32.xlu0 %v1381, 28
        %v1451 = vpop.permute.xlu0 %1450
        %1452 = vrot.lane.b32.xlu0 %v1384, 28
        %v1453 = vpop.permute.xlu0 %1452
        %1454 = vrot.lane.b32.xlu0 %v1386, 28
        %v1455 = vpop.permute.xlu0 %1454
        %1456 = vrot.lane.b32.xlu0 %v1389, 28
        %v1457 = vpop.permute.xlu0 %1456
        %1458 = vrot.lane.b32.xlu0 %v1391, 28
        %v1459 = vpop.permute.xlu0 %1458
        %1460 = vrot.lane.b32.xlu0 %v1394, 28
        %v1461 = vpop.permute.xlu0 %1460
        %1462 = vrot.lane.b32.xlu0 %v1396, 28
        %v1463 = vpop.permute.xlu0 %1462
        %1464 = vrot.lane.b32.xlu0 %v1399, 28
        %v1465 = vpop.permute.xlu0 %1464
        %1466 = vrot.lane.b32.xlu0 %v1401, 28
        %v1467 = vpop.permute.xlu0 %1466
        %1468 = vrot.lane.b32.xlu0 %v1404, 28
        %v1469 = vpop.permute.xlu0 %1468
        %1470 = vrot.lane.b32.xlu0 %v1406, 28
        %v1471 = vpop.permute.xlu0 %1470
        %1472 = vrot.lane.b32.xlu0 %v1409, 28
        %v1473 = vpop.permute.xlu0 %1472
        %1474 = vrot.lane.b32.xlu0 %v1411, 28
        %v1475 = vpop.permute.xlu0 %1474
        %vm1508 = vcmask 294112
        %1509 = vst.msk [vmem:[#allocation2] sm:$0xff] %vm1508, %v1413
        %1510 = vst.msk [vmem:[#allocation2 + $0x8] sm:$0xff] %vm1508, %v1415
        %1511 = vst.msk [vmem:[#allocation2 + $0x10] sm:$0xff] %vm1508, %v1417
        %1512 = vst.msk [vmem:[#allocation2 + $0x18] sm:$0xff] %vm1508, %v1419
        %1513 = vst.msk [vmem:[#allocation2 + $0x20] sm:$0xff] %vm1508, %v1421
        %1514 = vst.msk [vmem:[#allocation2 + $0x28] sm:$0xff] %vm1508, %v1423
        %1515 = vst.msk [vmem:[#allocation2 + $0x30] sm:$0xff] %vm1508, %v1425
        %1516 = vst.msk [vmem:[#allocation2 + $0x38] sm:$0xff] %vm1508, %v1427
        %1517 = vst.msk [vmem:[#allocation2 + $0x40] sm:$0xff] %vm1508, %v1429
        %1518 = vst.msk [vmem:[#allocation2 + $0x48] sm:$0xff] %vm1508, %v1431
        %1519 = vst.msk [vmem:[#allocation2 + $0x50] sm:$0xff] %vm1508, %v1433
        %1520 = vst.msk [vmem:[#allocation2 + $0x58] sm:$0xff] %vm1508, %v1435
        %1521 = vst.msk [vmem:[#allocation2 + $0x60] sm:$0xff] %vm1508, %v1437
        %1522 = vst.msk [vmem:[#allocation2 + $0x68] sm:$0xff] %vm1508, %v1439
        %1523 = vst.msk [vmem:[#allocation2 + $0x70] sm:$0xff] %vm1508, %v1441
        %1524 = vst.msk [vmem:[#allocation2 + $0x78] sm:$0xff] %vm1508, %v1443
        %1525 = vst.msk [vmem:[#allocation2 + $0x80] sm:$0xff] %vm1508, %v1445
        %1526 = vst.msk [vmem:[#allocation2 + $0x88] sm:$0xff] %vm1508, %v1447
        %1527 = vst.msk [vmem:[#allocation2 + $0x90] sm:$0xff] %vm1508, %v1449
        %1528 = vst.msk [vmem:[#allocation2 + $0x98] sm:$0xff] %vm1508, %v1451
        %1529 = vst.msk [vmem:[#allocation2 + $0xa0] sm:$0xff] %vm1508, %v1453
        %1530 = vst.msk [vmem:[#allocation2 + $0xa8] sm:$0xff] %vm1508, %v1455
        %1531 = vst.msk [vmem:[#allocation2 + $0xb0] sm:$0xff] %vm1508, %v1457
        %1532 = vst.msk [vmem:[#allocation2 + $0xb8] sm:$0xff] %vm1508, %v1459
        %1533 = vst.msk [vmem:[#allocation2 + $0xc0] sm:$0xff] %vm1508, %v1461
        %1534 = vst.msk [vmem:[#allocation2 + $0xc8] sm:$0xff] %vm1508, %v1463
        %1535 = vst.msk [vmem:[#allocation2 + $0xd0] sm:$0xff] %vm1508, %v1465
        %1536 = vst.msk [vmem:[#allocation2 + $0xd8] sm:$0xff] %vm1508, %v1467
        %1537 = vst.msk [vmem:[#allocation2 + $0xe0] sm:$0xff] %vm1508, %v1469
        %1538 = vst.msk [vmem:[#allocation2 + $0xe8] sm:$0xff] %vm1508, %v1471
        %1539 = vst.msk [vmem:[#allocation2 + $0xf0] sm:$0xff] %vm1508, %v1473
        %1540 = vst.msk [vmem:[#allocation2 + $0xf8] sm:$0xff] %vm1508, %v1475
        %1543 = vrot.lane.b32.xlu0 %v340, 36
        %v1544 = vpop.permute.xlu0 %1543
        %1545 = vrot.lane.b32.xlu0 %v341, 36
        %v1546 = vpop.permute.xlu0 %1545
        %1547 = vrot.lane.b32.xlu0 %v343, 36
        %v1548 = vpop.permute.xlu0 %1547
        %1549 = vrot.lane.b32.xlu0 %v344, 36
        %v1550 = vpop.permute.xlu0 %1549
        %1551 = vrot.lane.b32.xlu0 %v346, 36
        %v1552 = vpop.permute.xlu0 %1551
        %1553 = vrot.lane.b32.xlu0 %v347, 36
        %v1554 = vpop.permute.xlu0 %1553
        %1555 = vrot.lane.b32.xlu0 %v349, 36
        %v1556 = vpop.permute.xlu0 %1555
        %1557 = vrot.lane.b32.xlu0 %v350, 36
        %v1558 = vpop.permute.xlu0 %1557
        %1559 = vrot.lane.b32.xlu0 %v352, 36
        %v1560 = vpop.permute.xlu0 %1559
        %1561 = vrot.lane.b32.xlu0 %v353, 36
        %v1562 = vpop.permute.xlu0 %1561
        %1563 = vrot.lane.b32.xlu0 %v355, 36
        %v1564 = vpop.permute.xlu0 %1563
        %1565 = vrot.lane.b32.xlu0 %v356, 36
        %v1566 = vpop.permute.xlu0 %1565
        %1567 = vrot.lane.b32.xlu0 %v358, 36
        %v1568 = vpop.permute.xlu0 %1567
        %1569 = vrot.lane.b32.xlu0 %v359, 36
        %v1570 = vpop.permute.xlu0 %1569
        %1571 = vrot.lane.b32.xlu0 %v361, 36
        %v1572 = vpop.permute.xlu0 %1571
        %1573 = vrot.lane.b32.xlu0 %v362, 36
        %v1574 = vpop.permute.xlu0 %1573
        %1575 = vrot.lane.b32.xlu0 %v364, 36
        %v1576 = vpop.permute.xlu0 %1575
        %1577 = vrot.lane.b32.xlu0 %v365, 36
        %v1578 = vpop.permute.xlu0 %1577
        %1579 = vrot.lane.b32.xlu0 %v367, 36
        %v1580 = vpop.permute.xlu0 %1579
        %1581 = vrot.lane.b32.xlu0 %v368, 36
        %v1582 = vpop.permute.xlu0 %1581
        %1583 = vrot.lane.b32.xlu0 %v370, 36
        %v1584 = vpop.permute.xlu0 %1583
        %1585 = vrot.lane.b32.xlu0 %v371, 36
        %v1586 = vpop.permute.xlu0 %1585
        %1587 = vrot.lane.b32.xlu0 %v373, 36
        %v1588 = vpop.permute.xlu0 %1587
        %1589 = vrot.lane.b32.xlu0 %v374, 36
        %v1590 = vpop.permute.xlu0 %1589
        %1591 = vrot.lane.b32.xlu0 %v376, 36
        %v1592 = vpop.permute.xlu0 %1591
        %1593 = vrot.lane.b32.xlu0 %v377, 36
        %v1594 = vpop.permute.xlu0 %1593
        %1595 = vrot.lane.b32.xlu0 %v379, 36
        %v1596 = vpop.permute.xlu0 %1595
        %1597 = vrot.lane.b32.xlu0 %v380, 36
        %v1598 = vpop.permute.xlu0 %1597
        %1599 = vrot.lane.b32.xlu0 %v382, 36
        %v1600 = vpop.permute.xlu0 %1599
        %1601 = vrot.lane.b32.xlu0 %v383, 36
        %v1602 = vpop.permute.xlu0 %1601
        %1603 = vrot.lane.b32.xlu0 %v385, 36
        %v1604 = vpop.permute.xlu0 %1603
        %1605 = vrot.lane.b32.xlu0 %v386, 36
        %v1606 = vpop.permute.xlu0 %1605
        %vm1639 = vcmask 326944
        %1640 = vst.msk [vmem:[#allocation2] sm:$0xff] %vm1639, %v1544
        %1641 = vst.msk [vmem:[#allocation2 + $0x8] sm:$0xff] %vm1639, %v1546
        %1642 = vst.msk [vmem:[#allocation2 + $0x10] sm:$0xff] %vm1639, %v1548
        %1643 = vst.msk [vmem:[#allocation2 + $0x18] sm:$0xff] %vm1639, %v1550
        %1644 = vst.msk [vmem:[#allocation2 + $0x20] sm:$0xff] %vm1639, %v1552
        %1645 = vst.msk [vmem:[#allocation2 + $0x28] sm:$0xff] %vm1639, %v1554
        %1646 = vst.msk [vmem:[#allocation2 + $0x30] sm:$0xff] %vm1639, %v1556
        %1647 = vst.msk [vmem:[#allocation2 + $0x38] sm:$0xff] %vm1639, %v1558
        %1648 = vst.msk [vmem:[#allocation2 + $0x40] sm:$0xff] %vm1639, %v1560
        %1649 = vst.msk [vmem:[#allocation2 + $0x48] sm:$0xff] %vm1639, %v1562
        %1650 = vst.msk [vmem:[#allocation2 + $0x50] sm:$0xff] %vm1639, %v1564
        %1651 = vst.msk [vmem:[#allocation2 + $0x58] sm:$0xff] %vm1639, %v1566
        %1652 = vst.msk [vmem:[#allocation2 + $0x60] sm:$0xff] %vm1639, %v1568
        %1653 = vst.msk [vmem:[#allocation2 + $0x68] sm:$0xff] %vm1639, %v1570
        %1654 = vst.msk [vmem:[#allocation2 + $0x70] sm:$0xff] %vm1639, %v1572
        %1655 = vst.msk [vmem:[#allocation2 + $0x78] sm:$0xff] %vm1639, %v1574
        %1656 = vst.msk [vmem:[#allocation2 + $0x80] sm:$0xff] %vm1639, %v1576
        %1657 = vst.msk [vmem:[#allocation2 + $0x88] sm:$0xff] %vm1639, %v1578
        %1658 = vst.msk [vmem:[#allocation2 + $0x90] sm:$0xff] %vm1639, %v1580
        %1659 = vst.msk [vmem:[#allocation2 + $0x98] sm:$0xff] %vm1639, %v1582
        %1660 = vst.msk [vmem:[#allocation2 + $0xa0] sm:$0xff] %vm1639, %v1584
        %1661 = vst.msk [vmem:[#allocation2 + $0xa8] sm:$0xff] %vm1639, %v1586
        %1662 = vst.msk [vmem:[#allocation2 + $0xb0] sm:$0xff] %vm1639, %v1588
        %1663 = vst.msk [vmem:[#allocation2 + $0xb8] sm:$0xff] %vm1639, %v1590
        %1664 = vst.msk [vmem:[#allocation2 + $0xc0] sm:$0xff] %vm1639, %v1592
        %1665 = vst.msk [vmem:[#allocation2 + $0xc8] sm:$0xff] %vm1639, %v1594
        %1666 = vst.msk [vmem:[#allocation2 + $0xd0] sm:$0xff] %vm1639, %v1596
        %1667 = vst.msk [vmem:[#allocation2 + $0xd8] sm:$0xff] %vm1639, %v1598
        %1668 = vst.msk [vmem:[#allocation2 + $0xe0] sm:$0xff] %vm1639, %v1600
        %1669 = vst.msk [vmem:[#allocation2 + $0xe8] sm:$0xff] %vm1639, %v1602
        %1670 = vst.msk [vmem:[#allocation2 + $0xf0] sm:$0xff] %vm1639, %v1604
        %1671 = vst.msk [vmem:[#allocation2 + $0xf8] sm:$0xff] %vm1639, %v1606
        %1674 = vrot.lane.b32.xlu0 %v394, 40
        %v1675 = vpop.permute.xlu0 %1674
        %1676 = vrot.lane.b32.xlu0 %v395, 40
        %v1677 = vpop.permute.xlu0 %1676
        %1678 = vrot.lane.b32.xlu0 %v397, 40
        %v1679 = vpop.permute.xlu0 %1678
        %1680 = vrot.lane.b32.xlu0 %v398, 40
        %v1681 = vpop.permute.xlu0 %1680
        %1682 = vrot.lane.b32.xlu0 %v400, 40
        %v1683 = vpop.permute.xlu0 %1682
        %1684 = vrot.lane.b32.xlu0 %v401, 40
        %v1685 = vpop.permute.xlu0 %1684
        %1686 = vrot.lane.b32.xlu0 %v403, 40
        %v1687 = vpop.permute.xlu0 %1686
        %1688 = vrot.lane.b32.xlu0 %v404, 40
        %v1689 = vpop.permute.xlu0 %1688
        %1690 = vrot.lane.b32.xlu0 %v406, 40
        %v1691 = vpop.permute.xlu0 %1690
        %1692 = vrot.lane.b32.xlu0 %v407, 40
        %v1693 = vpop.permute.xlu0 %1692
        %1694 = vrot.lane.b32.xlu0 %v409, 40
        %v1695 = vpop.permute.xlu0 %1694
        %1696 = vrot.lane.b32.xlu0 %v410, 40
        %v1697 = vpop.permute.xlu0 %1696
        %1698 = vrot.lane.b32.xlu0 %v412, 40
        %v1699 = vpop.permute.xlu0 %1698
        %1700 = vrot.lane.b32.xlu0 %v413, 40
        %v1701 = vpop.permute.xlu0 %1700
        %1702 = vrot.lane.b32.xlu0 %v415, 40
        %v1703 = vpop.permute.xlu0 %1702
        %1704 = vrot.lane.b32.xlu0 %v416, 40
        %v1705 = vpop.permute.xlu0 %1704
        %1706 = vrot.lane.b32.xlu0 %v418, 40
        %v1707 = vpop.permute.xlu0 %1706
        %1708 = vrot.lane.b32.xlu0 %v419, 40
        %v1709 = vpop.permute.xlu0 %1708
        %1710 = vrot.lane.b32.xlu0 %v421, 40
        %v1711 = vpop.permute.xlu0 %1710
        %1712 = vrot.lane.b32.xlu0 %v422, 40
        %v1713 = vpop.permute.xlu0 %1712
        %1714 = vrot.lane.b32.xlu0 %v424, 40
        %v1715 = vpop.permute.xlu0 %1714
        %1716 = vrot.lane.b32.xlu0 %v425, 40
        %v1717 = vpop.permute.xlu0 %1716
        %1718 = vrot.lane.b32.xlu0 %v427, 40
        %v1719 = vpop.permute.xlu0 %1718
        %1720 = vrot.lane.b32.xlu0 %v428, 40
        %v1721 = vpop.permute.xlu0 %1720
        %1722 = vrot.lane.b32.xlu0 %v430, 40
        %v1723 = vpop.permute.xlu0 %1722
        %1724 = vrot.lane.b32.xlu0 %v431, 40
        %v1725 = vpop.permute.xlu0 %1724
        %1726 = vrot.lane.b32.xlu0 %v433, 40
        %v1727 = vpop.permute.xlu0 %1726
        %1728 = vrot.lane.b32.xlu0 %v434, 40
        %v1729 = vpop.permute.xlu0 %1728
        %1730 = vrot.lane.b32.xlu0 %v436, 40
        %v1731 = vpop.permute.xlu0 %1730
        %1732 = vrot.lane.b32.xlu0 %v437, 40
        %v1733 = vpop.permute.xlu0 %1732
        %1734 = vrot.lane.b32.xlu0 %v439, 40
        %v1735 = vpop.permute.xlu0 %1734
        %1736 = vrot.lane.b32.xlu0 %v440, 40
        %v1737 = vpop.permute.xlu0 %1736
        %vm1770 = vcmask 392512
        %1771 = vst.msk [vmem:[#allocation2] sm:$0xff] %vm1770, %v1675
        %1772 = vst.msk [vmem:[#allocation2 + $0x8] sm:$0xff] %vm1770, %v1677
        %1773 = vst.msk [vmem:[#allocation2 + $0x10] sm:$0xff] %vm1770, %v1679
        %1774 = vst.msk [vmem:[#allocation2 + $0x18] sm:$0xff] %vm1770, %v1681
        %1775 = vst.msk [vmem:[#allocation2 + $0x20] sm:$0xff] %vm1770, %v1683
        %1776 = vst.msk [vmem:[#allocation2 + $0x28] sm:$0xff] %vm1770, %v1685
        %1777 = vst.msk [vmem:[#allocation2 + $0x30] sm:$0xff] %vm1770, %v1687
        %1778 = vst.msk [vmem:[#allocation2 + $0x38] sm:$0xff] %vm1770, %v1689
        %1779 = vst.msk [vmem:[#allocation2 + $0x40] sm:$0xff] %vm1770, %v1691
        %1780 = vst.msk [vmem:[#allocation2 + $0x48] sm:$0xff] %vm1770, %v1693
        %1781 = vst.msk [vmem:[#allocation2 + $0x50] sm:$0xff] %vm1770, %v1695
        %1782 = vst.msk [vmem:[#allocation2 + $0x58] sm:$0xff] %vm1770, %v1697
        %1783 = vst.msk [vmem:[#allocation2 + $0x60] sm:$0xff] %vm1770, %v1699
        %1784 = vst.msk [vmem:[#allocation2 + $0x68] sm:$0xff] %vm1770, %v1701
        %1785 = vst.msk [vmem:[#allocation2 + $0x70] sm:$0xff] %vm1770, %v1703
        %1786 = vst.msk [vmem:[#allocation2 + $0x78] sm:$0xff] %vm1770, %v1705
        %1787 = vst.msk [vmem:[#allocation2 + $0x80] sm:$0xff] %vm1770, %v1707
        %1788 = vst.msk [vmem:[#allocation2 + $0x88] sm:$0xff] %vm1770, %v1709
        %1789 = vst.msk [vmem:[#allocation2 + $0x90] sm:$0xff] %vm1770, %v1711
        %1790 = vst.msk [vmem:[#allocation2 + $0x98] sm:$0xff] %vm1770, %v1713
        %1791 = vst.msk [vmem:[#allocation2 + $0xa0] sm:$0xff] %vm1770, %v1715
        %1792 = vst.msk [vmem:[#allocation2 + $0xa8] sm:$0xff] %vm1770, %v1717
        %1793 = vst.msk [vmem:[#allocation2 + $0xb0] sm:$0xff] %vm1770, %v1719
        %1794 = vst.msk [vmem:[#allocation2 + $0xb8] sm:$0xff] %vm1770, %v1721
        %1795 = vst.msk [vmem:[#allocation2 + $0xc0] sm:$0xff] %vm1770, %v1723
        %1796 = vst.msk [vmem:[#allocation2 + $0xc8] sm:$0xff] %vm1770, %v1725
        %1797 = vst.msk [vmem:[#allocation2 + $0xd0] sm:$0xff] %vm1770, %v1727
        %1798 = vst.msk [vmem:[#allocation2 + $0xd8] sm:$0xff] %vm1770, %v1729
        %1799 = vst.msk [vmem:[#allocation2 + $0xe0] sm:$0xff] %vm1770, %v1731
        %1800 = vst.msk [vmem:[#allocation2 + $0xe8] sm:$0xff] %vm1770, %v1733
        %1801 = vst.msk [vmem:[#allocation2 + $0xf0] sm:$0xff] %vm1770, %v1735
        %1802 = vst.msk [vmem:[#allocation2 + $0xf8] sm:$0xff] %vm1770, %v1737
        %v1804 = vrot.slane %v385, 1
        %v1805 = vrot.slane %v386, 1
        %v1806 = vsel %vm687, %v1804, %v1805
        %v1807 = vrot.slane %v387, 1
        %v1808 = vsel %vm687, %v1805, %v1807
        %1809 = vrot.lane.b32.xlu0 %v695, 48
        %v1810 = vpop.permute.xlu0 %1809
        %1811 = vrot.lane.b32.xlu0 %v697, 48
        %v1812 = vpop.permute.xlu0 %1811
        %1813 = vrot.lane.b32.xlu0 %v700, 48
        %v1814 = vpop.permute.xlu0 %1813
        %1815 = vrot.lane.b32.xlu0 %v702, 48
        %v1816 = vpop.permute.xlu0 %1815
        %1817 = vrot.lane.b32.xlu0 %v705, 48
        %v1818 = vpop.permute.xlu0 %1817
        %1819 = vrot.lane.b32.xlu0 %v707, 48
        %v1820 = vpop.permute.xlu0 %1819
        %1821 = vrot.lane.b32.xlu0 %v710, 48
        %v1822 = vpop.permute.xlu0 %1821
        %1823 = vrot.lane.b32.xlu0 %v712, 48
        %v1824 = vpop.permute.xlu0 %1823
        %1825 = vrot.lane.b32.xlu0 %v715, 48
        %v1826 = vpop.permute.xlu0 %1825
        %1827 = vrot.lane.b32.xlu0 %v717, 48
        %v1828 = vpop.permute.xlu0 %1827
        %1829 = vrot.lane.b32.xlu0 %v720, 48
        %v1830 = vpop.permute.xlu0 %1829
        %1831 = vrot.lane.b32.xlu0 %v722, 48
        %v1832 = vpop.permute.xlu0 %1831
        %1833 = vrot.lane.b32.xlu0 %v725, 48
        %v1834 = vpop.permute.xlu0 %1833
        %1835 = vrot.lane.b32.xlu0 %v727, 48
        %v1836 = vpop.permute.xlu0 %1835
        %1837 = vrot.lane.b32.xlu0 %v730, 48
        %v1838 = vpop.permute.xlu0 %1837
        %1839 = vrot.lane.b32.xlu0 %v732, 48
        %v1840 = vpop.permute.xlu0 %1839
        %1841 = vrot.lane.b32.xlu0 %v735, 48
        %v1842 = vpop.permute.xlu0 %1841
        %1843 = vrot.lane.b32.xlu0 %v737, 48
        %v1844 = vpop.permute.xlu0 %1843
        %1845 = vrot.lane.b32.xlu0 %v740, 48
        %v1846 = vpop.permute.xlu0 %1845
        %1847 = vrot.lane.b32.xlu0 %v742, 48
        %v1848 = vpop.permute.xlu0 %1847
        %1849 = vrot.lane.b32.xlu0 %v745, 48
        %v1850 = vpop.permute.xlu0 %1849
        %1851 = vrot.lane.b32.xlu0 %v747, 48
        %v1852 = vpop.permute.xlu0 %1851
        %1853 = vrot.lane.b32.xlu0 %v750, 48
        %v1854 = vpop.permute.xlu0 %1853
        %1855 = vrot.lane.b32.xlu0 %v752, 48
        %v1856 = vpop.permute.xlu0 %1855
        %1857 = vrot.lane.b32.xlu0 %v755, 48
        %v1858 = vpop.permute.xlu0 %1857
        %1859 = vrot.lane.b32.xlu0 %v757, 48
        %v1860 = vpop.permute.xlu0 %1859
        %1861 = vrot.lane.b32.xlu0 %v760, 48
        %v1862 = vpop.permute.xlu0 %1861
        %1863 = vrot.lane.b32.xlu0 %v762, 48
        %v1864 = vpop.permute.xlu0 %1863
        %1865 = vrot.lane.b32.xlu0 %v765, 48
        %v1866 = vpop.permute.xlu0 %1865
        %1867 = vrot.lane.b32.xlu0 %v767, 48
        %v1868 = vpop.permute.xlu0 %1867
        %1869 = vrot.lane.b32.xlu0 %v1806, 48
        %v1870 = vpop.permute.xlu0 %1869
        %1871 = vrot.lane.b32.xlu0 %v1808, 48
        %v1872 = vpop.permute.xlu0 %1871
        %vm1905 = vcmask 425344
        %1906 = vst.msk [vmem:[#allocation2] sm:$0xff] %vm1905, %v1810
        %1907 = vst.msk [vmem:[#allocation2 + $0x8] sm:$0xff] %vm1905, %v1812
        %1908 = vst.msk [vmem:[#allocation2 + $0x10] sm:$0xff] %vm1905, %v1814
        %1909 = vst.msk [vmem:[#allocation2 + $0x18] sm:$0xff] %vm1905, %v1816
        %1910 = vst.msk [vmem:[#allocation2 + $0x20] sm:$0xff] %vm1905, %v1818
        %1911 = vst.msk [vmem:[#allocation2 + $0x28] sm:$0xff] %vm1905, %v1820
        %1912 = vst.msk [vmem:[#allocation2 + $0x30] sm:$0xff] %vm1905, %v1822
        %1913 = vst.msk [vmem:[#allocation2 + $0x38] sm:$0xff] %vm1905, %v1824
        %1914 = vst.msk [vmem:[#allocation2 + $0x40] sm:$0xff] %vm1905, %v1826
        %1915 = vst.msk [vmem:[#allocation2 + $0x48] sm:$0xff] %vm1905, %v1828
        %1916 = vst.msk [vmem:[#allocation2 + $0x50] sm:$0xff] %vm1905, %v1830
        %1917 = vst.msk [vmem:[#allocation2 + $0x58] sm:$0xff] %vm1905, %v1832
        %1918 = vst.msk [vmem:[#allocation2 + $0x60] sm:$0xff] %vm1905, %v1834
        %1919 = vst.msk [vmem:[#allocation2 + $0x68] sm:$0xff] %vm1905, %v1836
        %1920 = vst.msk [vmem:[#allocation2 + $0x70] sm:$0xff] %vm1905, %v1838
        %1921 = vst.msk [vmem:[#allocation2 + $0x78] sm:$0xff] %vm1905, %v1840
        %1922 = vst.msk [vmem:[#allocation2 + $0x80] sm:$0xff] %vm1905, %v1842
        %1923 = vst.msk [vmem:[#allocation2 + $0x88] sm:$0xff] %vm1905, %v1844
        %1924 = vst.msk [vmem:[#allocation2 + $0x90] sm:$0xff] %vm1905, %v1846
        %1925 = vst.msk [vmem:[#allocation2 + $0x98] sm:$0xff] %vm1905, %v1848
        %1926 = vst.msk [vmem:[#allocation2 + $0xa0] sm:$0xff] %vm1905, %v1850
        %1927 = vst.msk [vmem:[#allocation2 + $0xa8] sm:$0xff] %vm1905, %v1852
        %1928 = vst.msk [vmem:[#allocation2 + $0xb0] sm:$0xff] %vm1905, %v1854
        %1929 = vst.msk [vmem:[#allocation2 + $0xb8] sm:$0xff] %vm1905, %v1856
        %1930 = vst.msk [vmem:[#allocation2 + $0xc0] sm:$0xff] %vm1905, %v1858
        %1931 = vst.msk [vmem:[#allocation2 + $0xc8] sm:$0xff] %vm1905, %v1860
        %1932 = vst.msk [vmem:[#allocation2 + $0xd0] sm:$0xff] %vm1905, %v1862
        %1933 = vst.msk [vmem:[#allocation2 + $0xd8] sm:$0xff] %vm1905, %v1864
        %1934 = vst.msk [vmem:[#allocation2 + $0xe0] sm:$0xff] %vm1905, %v1866
        %1935 = vst.msk [vmem:[#allocation2 + $0xe8] sm:$0xff] %vm1905, %v1868
        %1936 = vst.msk [vmem:[#allocation2 + $0xf0] sm:$0xff] %vm1905, %v1870
        %1937 = vst.msk [vmem:[#allocation2 + $0xf8] sm:$0xff] %vm1905, %v1872
        %v1939 = vrot.slane %v439, 1
        %v1940 = vrot.slane %v440, 1
        %v1941 = vsel %vm687, %v1939, %v1940
        %v1942 = vrot.slane %v441, 1
        %v1943 = vsel %vm687, %v1940, %v1942
        %1944 = vrot.lane.b32.xlu0 %v920, 52
        %v1945 = vpop.permute.xlu0 %1944
        %1946 = vrot.lane.b32.xlu0 %v922, 52
        %v1947 = vpop.permute.xlu0 %1946
        %1948 = vrot.lane.b32.xlu0 %v925, 52
        %v1949 = vpop.permute.xlu0 %1948
        %1950 = vrot.lane.b32.xlu0 %v927, 52
        %v1951 = vpop.permute.xlu0 %1950
        %1952 = vrot.lane.b32.xlu0 %v930, 52
        %v1953 = vpop.permute.xlu0 %1952
        %1954 = vrot.lane.b32.xlu0 %v932, 52
        %v1955 = vpop.permute.xlu0 %1954
        %1956 = vrot.lane.b32.xlu0 %v935, 52
        %v1957 = vpop.permute.xlu0 %1956
        %1958 = vrot.lane.b32.xlu0 %v937, 52
        %v1959 = vpop.permute.xlu0 %1958
        %1960 = vrot.lane.b32.xlu0 %v940, 52
        %v1961 = vpop.permute.xlu0 %1960
        %1962 = vrot.lane.b32.xlu0 %v942, 52
        %v1963 = vpop.permute.xlu0 %1962
        %1964 = vrot.lane.b32.xlu0 %v945, 52
        %v1965 = vpop.permute.xlu0 %1964
        %1966 = vrot.lane.b32.xlu0 %v947, 52
        %v1967 = vpop.permute.xlu0 %1966
        %1968 = vrot.lane.b32.xlu0 %v950, 52
        %v1969 = vpop.permute.xlu0 %1968
        %1970 = vrot.lane.b32.xlu0 %v952, 52
        %v1971 = vpop.permute.xlu0 %1970
        %1972 = vrot.lane.b32.xlu0 %v955, 52
        %v1973 = vpop.permute.xlu0 %1972
        %1974 = vrot.lane.b32.xlu0 %v957, 52
        %v1975 = vpop.permute.xlu0 %1974
        %1976 = vrot.lane.b32.xlu0 %v960, 52
        %v1977 = vpop.permute.xlu0 %1976
        %1978 = vrot.lane.b32.xlu0 %v962, 52
        %v1979 = vpop.permute.xlu0 %1978
        %1980 = vrot.lane.b32.xlu0 %v965, 52
        %v1981 = vpop.permute.xlu0 %1980
        %1982 = vrot.lane.b32.xlu0 %v967, 52
        %v1983 = vpop.permute.xlu0 %1982
        %1984 = vrot.lane.b32.xlu0 %v970, 52
        %v1985 = vpop.permute.xlu0 %1984
        %1986 = vrot.lane.b32.xlu0 %v972, 52
        %v1987 = vpop.permute.xlu0 %1986
        %1988 = vrot.lane.b32.xlu0 %v975, 52
        %v1989 = vpop.permute.xlu0 %1988
        %1990 = vrot.lane.b32.xlu0 %v977, 52
        %v1991 = vpop.permute.xlu0 %1990
        %1992 = vrot.lane.b32.xlu0 %v980, 52
        %v1993 = vpop.permute.xlu0 %1992
        %1994 = vrot.lane.b32.xlu0 %v982, 52
        %v1995 = vpop.permute.xlu0 %1994
        %1996 = vrot.lane.b32.xlu0 %v985, 52
        %v1997 = vpop.permute.xlu0 %1996
        %1998 = vrot.lane.b32.xlu0 %v987, 52
        %v1999 = vpop.permute.xlu0 %1998
        %2000 = vrot.lane.b32.xlu0 %v990, 52
        %v2001 = vpop.permute.xlu0 %2000
        %2002 = vrot.lane.b32.xlu0 %v992, 52
        %v2003 = vpop.permute.xlu0 %2002
        %2004 = vrot.lane.b32.xlu0 %v1941, 52
        %v2005 = vpop.permute.xlu0 %2004
        %2006 = vrot.lane.b32.xlu0 %v1943, 52
        %v2007 = vpop.permute.xlu0 %2006
        %vm2040 = vcmask 490912
        %2041 = vst.msk [vmem:[#allocation2] sm:$0xff] %vm2040, %v1945
        %2042 = vst.msk [vmem:[#allocation2 + $0x8] sm:$0xff] %vm2040, %v1947
        %2043 = vst.msk [vmem:[#allocation2 + $0x10] sm:$0xff] %vm2040, %v1949
        %2044 = vst.msk [vmem:[#allocation2 + $0x18] sm:$0xff] %vm2040, %v1951
        %2045 = vst.msk [vmem:[#allocation2 + $0x20] sm:$0xff] %vm2040, %v1953
        %2046 = vst.msk [vmem:[#allocation2 + $0x28] sm:$0xff] %vm2040, %v1955
        %2047 = vst.msk [vmem:[#allocation2 + $0x30] sm:$0xff] %vm2040, %v1957
        %2048 = vst.msk [vmem:[#allocation2 + $0x38] sm:$0xff] %vm2040, %v1959
        %2049 = vst.msk [vmem:[#allocation2 + $0x40] sm:$0xff] %vm2040, %v1961
        %2050 = vst.msk [vmem:[#allocation2 + $0x48] sm:$0xff] %vm2040, %v1963
        %2051 = vst.msk [vmem:[#allocation2 + $0x50] sm:$0xff] %vm2040, %v1965
        %2052 = vst.msk [vmem:[#allocation2 + $0x58] sm:$0xff] %vm2040, %v1967
        %2053 = vst.msk [vmem:[#allocation2 + $0x60] sm:$0xff] %vm2040, %v1969
        %2054 = vst.msk [vmem:[#allocation2 + $0x68] sm:$0xff] %vm2040, %v1971
        %2055 = vst.msk [vmem:[#allocation2 + $0x70] sm:$0xff] %vm2040, %v1973
        %2056 = vst.msk [vmem:[#allocation2 + $0x78] sm:$0xff] %vm2040, %v1975
        %2057 = vst.msk [vmem:[#allocation2 + $0x80] sm:$0xff] %vm2040, %v1977
        %2058 = vst.msk [vmem:[#allocation2 + $0x88] sm:$0xff] %vm2040, %v1979
        %2059 = vst.msk [vmem:[#allocation2 + $0x90] sm:$0xff] %vm2040, %v1981
        %2060 = vst.msk [vmem:[#allocation2 + $0x98] sm:$0xff] %vm2040, %v1983
        %2061 = vst.msk [vmem:[#allocation2 + $0xa0] sm:$0xff] %vm2040, %v1985
        %2062 = vst.msk [vmem:[#allocation2 + $0xa8] sm:$0xff] %vm2040, %v1987
        %2063 = vst.msk [vmem:[#allocation2 + $0xb0] sm:$0xff] %vm2040, %v1989
        %2064 = vst.msk [vmem:[#allocation2 + $0xb8] sm:$0xff] %vm2040, %v1991
        %2065 = vst.msk [vmem:[#allocation2 + $0xc0] sm:$0xff] %vm2040, %v1993
        %2066 = vst.msk [vmem:[#allocation2 + $0xc8] sm:$0xff] %vm2040, %v1995
        %2067 = vst.msk [vmem:[#allocation2 + $0xd0] sm:$0xff] %vm2040, %v1997
        %2068 = vst.msk [vmem:[#allocation2 + $0xd8] sm:$0xff] %vm2040, %v1999
        %2069 = vst.msk [vmem:[#allocation2 + $0xe0] sm:$0xff] %vm2040, %v2001
        %2070 = vst.msk [vmem:[#allocation2 + $0xe8] sm:$0xff] %vm2040, %v2003
        %2071 = vst.msk [vmem:[#allocation2 + $0xf0] sm:$0xff] %vm2040, %v2005
        %2072 = vst.msk [vmem:[#allocation2 + $0xf8] sm:$0xff] %vm2040, %v2007
        %v2073 = vrot.slane %v385, 2
        %v2074 = vrot.slane %v386, 2
        %v2075 = vsel %vm1122, %v2073, %v2074
        %v2076 = vrot.slane %v387, 2
        %v2077 = vsel %vm1122, %v2074, %v2076
        %2078 = vrot.lane.b32.xlu0 %v1130, 60
        %v2079 = vpop.permute.xlu0 %2078
        %2080 = vrot.lane.b32.xlu0 %v1132, 60
        %v2081 = vpop.permute.xlu0 %2080
        %2082 = vrot.lane.b32.xlu0 %v1135, 60
        %v2083 = vpop.permute.xlu0 %2082
        %2084 = vrot.lane.b32.xlu0 %v1137, 60
        %v2085 = vpop.permute.xlu0 %2084
        %2086 = vrot.lane.b32.xlu0 %v1140, 60
        %v2087 = vpop.permute.xlu0 %2086
        %2088 = vrot.lane.b32.xlu0 %v1142, 60
        %v2089 = vpop.permute.xlu0 %2088
        %2090 = vrot.lane.b32.xlu0 %v1145, 60
        %v2091 = vpop.permute.xlu0 %2090
        %2092 = vrot.lane.b32.xlu0 %v1147, 60
        %v2093 = vpop.permute.xlu0 %2092
        %2094 = vrot.lane.b32.xlu0 %v1150, 60
        %v2095 = vpop.permute.xlu0 %2094
        %2096 = vrot.lane.b32.xlu0 %v1152, 60
        %v2097 = vpop.permute.xlu0 %2096
        %2098 = vrot.lane.b32.xlu0 %v1155, 60
        %v2099 = vpop.permute.xlu0 %2098
        %2100 = vrot.lane.b32.xlu0 %v1157, 60
        %v2101 = vpop.permute.xlu0 %2100
        %2102 = vrot.lane.b32.xlu0 %v1160, 60
        %v2103 = vpop.permute.xlu0 %2102
        %2104 = vrot.lane.b32.xlu0 %v1162, 60
        %v2105 = vpop.permute.xlu0 %2104
        %2106 = vrot.lane.b32.xlu0 %v1165, 60
        %v2107 = vpop.permute.xlu0 %2106
        %2108 = vrot.lane.b32.xlu0 %v1167, 60
        %v2109 = vpop.permute.xlu0 %2108
        %2110 = vrot.lane.b32.xlu0 %v1170, 60
        %v2111 = vpop.permute.xlu0 %2110
        %2112 = vrot.lane.b32.xlu0 %v1172, 60
        %v2113 = vpop.permute.xlu0 %2112
        %2114 = vrot.lane.b32.xlu0 %v1175, 60
        %v2115 = vpop.permute.xlu0 %2114
        %2116 = vrot.lane.b32.xlu0 %v1177, 60
        %v2117 = vpop.permute.xlu0 %2116
        %2118 = vrot.lane.b32.xlu0 %v1180, 60
        %v2119 = vpop.permute.xlu0 %2118
        %2120 = vrot.lane.b32.xlu0 %v1182, 60
        %v2121 = vpop.permute.xlu0 %2120
        %2122 = vrot.lane.b32.xlu0 %v1185, 60
        %v2123 = vpop.permute.xlu0 %2122
        %2124 = vrot.lane.b32.xlu0 %v1187, 60
        %v2125 = vpop.permute.xlu0 %2124
        %2126 = vrot.lane.b32.xlu0 %v1190, 60
        %v2127 = vpop.permute.xlu0 %2126
        %2128 = vrot.lane.b32.xlu0 %v1192, 60
        %v2129 = vpop.permute.xlu0 %2128
        %2130 = vrot.lane.b32.xlu0 %v1195, 60
        %v2131 = vpop.permute.xlu0 %2130
        %2132 = vrot.lane.b32.xlu0 %v1197, 60
        %v2133 = vpop.permute.xlu0 %2132
        %2134 = vrot.lane.b32.xlu0 %v1200, 60
        %v2135 = vpop.permute.xlu0 %2134
        %2136 = vrot.lane.b32.xlu0 %v1202, 60
        %v2137 = vpop.permute.xlu0 %2136
        %2138 = vrot.lane.b32.xlu0 %v2075, 60
        %v2139 = vpop.permute.xlu0 %2138
        %2140 = vrot.lane.b32.xlu0 %v2077, 60
        %v2141 = vpop.permute.xlu0 %2140
        %vm2174 = vcmask 523744
        %2175 = vst.msk [vmem:[#allocation2] sm:$0xff] %vm2174, %v2079
        %2176 = vst.msk [vmem:[#allocation2 + $0x8] sm:$0xff] %vm2174, %v2081
        %2177 = vst.msk [vmem:[#allocation2 + $0x10] sm:$0xff] %vm2174, %v2083
        %2178 = vst.msk [vmem:[#allocation2 + $0x18] sm:$0xff] %vm2174, %v2085
        %2179 = vst.msk [vmem:[#allocation2 + $0x20] sm:$0xff] %vm2174, %v2087
        %2180 = vst.msk [vmem:[#allocation2 + $0x28] sm:$0xff] %vm2174, %v2089
        %2181 = vst.msk [vmem:[#allocation2 + $0x30] sm:$0xff] %vm2174, %v2091
        %2182 = vst.msk [vmem:[#allocation2 + $0x38] sm:$0xff] %vm2174, %v2093
        %2183 = vst.msk [vmem:[#allocation2 + $0x40] sm:$0xff] %vm2174, %v2095
        %2184 = vst.msk [vmem:[#allocation2 + $0x48] sm:$0xff] %vm2174, %v2097
        %2185 = vst.msk [vmem:[#allocation2 + $0x50] sm:$0xff] %vm2174, %v2099
        %2186 = vst.msk [vmem:[#allocation2 + $0x58] sm:$0xff] %vm2174, %v2101
        %2187 = vst.msk [vmem:[#allocation2 + $0x60] sm:$0xff] %vm2174, %v2103
        %2188 = vst.msk [vmem:[#allocation2 + $0x68] sm:$0xff] %vm2174, %v2105
        %2189 = vst.msk [vmem:[#allocation2 + $0x70] sm:$0xff] %vm2174, %v2107
        %2190 = vst.msk [vmem:[#allocation2 + $0x78] sm:$0xff] %vm2174, %v2109
        %2191 = vst.msk [vmem:[#allocation2 + $0x80] sm:$0xff] %vm2174, %v2111
        %2192 = vst.msk [vmem:[#allocation2 + $0x88] sm:$0xff] %vm2174, %v2113
        %2193 = vst.msk [vmem:[#allocation2 + $0x90] sm:$0xff] %vm2174, %v2115
        %2194 = vst.msk [vmem:[#allocation2 + $0x98] sm:$0xff] %vm2174, %v2117
        %2195 = vst.msk [vmem:[#allocation2 + $0xa0] sm:$0xff] %vm2174, %v2119
        %2196 = vst.msk [vmem:[#allocation2 + $0xa8] sm:$0xff] %vm2174, %v2121
        %2197 = vst.msk [vmem:[#allocation2 + $0xb0] sm:$0xff] %vm2174, %v2123
        %2198 = vst.msk [vmem:[#allocation2 + $0xb8] sm:$0xff] %vm2174, %v2125
        %2199 = vst.msk [vmem:[#allocation2 + $0xc0] sm:$0xff] %vm2174, %v2127
        %2200 = vst.msk [vmem:[#allocation2 + $0xc8] sm:$0xff] %vm2174, %v2129
        %2201 = vst.msk [vmem:[#allocation2 + $0xd0] sm:$0xff] %vm2174, %v2131
        %2202 = vst.msk [vmem:[#allocation2 + $0xd8] sm:$0xff] %vm2174, %v2133
        %2203 = vst.msk [vmem:[#allocation2 + $0xe0] sm:$0xff] %vm2174, %v2135
        %2204 = vst.msk [vmem:[#allocation2 + $0xe8] sm:$0xff] %vm2174, %v2137
        %2205 = vst.msk [vmem:[#allocation2 + $0xf0] sm:$0xff] %vm2174, %v2139
        %2206 = vst.msk [vmem:[#allocation2 + $0xf8] sm:$0xff] %vm2174, %v2141
        %v2207 = vrot.slane %v439, 2
        %v2208 = vrot.slane %v440, 2
        %v2209 = vsel %vm1122, %v2207, %v2208
        %v2210 = vrot.slane %v441, 2
        %v2211 = vsel %vm1122, %v2208, %v2210
        %2212 = vrot.lane.b32.xlu0 %v1339, 64
        %v2213 = vpop.permute.xlu0 %2212
        %2214 = vrot.lane.b32.xlu0 %v1341, 64
        %v2215 = vpop.permute.xlu0 %2214
        %2216 = vrot.lane.b32.xlu0 %v1344, 64
        %v2217 = vpop.permute.xlu0 %2216
        %2218 = vrot.lane.b32.xlu0 %v1346, 64
        %v2219 = vpop.permute.xlu0 %2218
        %2220 = vrot.lane.b32.xlu0 %v1349, 64
        %v2221 = vpop.permute.xlu0 %2220
        %2222 = vrot.lane.b32.xlu0 %v1351, 64
        %v2223 = vpop.permute.xlu0 %2222
        %2224 = vrot.lane.b32.xlu0 %v1354, 64
        %v2225 = vpop.permute.xlu0 %2224
        %2226 = vrot.lane.b32.xlu0 %v1356, 64
        %v2227 = vpop.permute.xlu0 %2226
        %2228 = vrot.lane.b32.xlu0 %v1359, 64
        %v2229 = vpop.permute.xlu0 %2228
        %2230 = vrot.lane.b32.xlu0 %v1361, 64
        %v2231 = vpop.permute.xlu0 %2230
        %2232 = vrot.lane.b32.xlu0 %v1364, 64
        %v2233 = vpop.permute.xlu0 %2232
        %2234 = vrot.lane.b32.xlu0 %v1366, 64
        %v2235 = vpop.permute.xlu0 %2234
        %2236 = vrot.lane.b32.xlu0 %v1369, 64
        %v2237 = vpop.permute.xlu0 %2236
        %2238 = vrot.lane.b32.xlu0 %v1371, 64
        %v2239 = vpop.permute.xlu0 %2238
        %2240 = vrot.lane.b32.xlu0 %v1374, 64
        %v2241 = vpop.permute.xlu0 %2240
        %2242 = vrot.lane.b32.xlu0 %v1376, 64
        %v2243 = vpop.permute.xlu0 %2242
        %2244 = vrot.lane.b32.xlu0 %v1379, 64
        %v2245 = vpop.permute.xlu0 %2244
        %2246 = vrot.lane.b32.xlu0 %v1381, 64
        %v2247 = vpop.permute.xlu0 %2246
        %2248 = vrot.lane.b32.xlu0 %v1384, 64
        %v2249 = vpop.permute.xlu0 %2248
        %2250 = vrot.lane.b32.xlu0 %v1386, 64
        %v2251 = vpop.permute.xlu0 %2250
        %2252 = vrot.lane.b32.xlu0 %v1389, 64
        %v2253 = vpop.permute.xlu0 %2252
        %2254 = vrot.lane.b32.xlu0 %v1391, 64
        %v2255 = vpop.permute.xlu0 %2254
        %2256 = vrot.lane.b32.xlu0 %v1394, 64
        %v2257 = vpop.permute.xlu0 %2256
        %2258 = vrot.lane.b32.xlu0 %v1396, 64
        %v2259 = vpop.permute.xlu0 %2258
        %2260 = vrot.lane.b32.xlu0 %v1399, 64
        %v2261 = vpop.permute.xlu0 %2260
        %2262 = vrot.lane.b32.xlu0 %v1401, 64
        %v2263 = vpop.permute.xlu0 %2262
        %2264 = vrot.lane.b32.xlu0 %v1404, 64
        %v2265 = vpop.permute.xlu0 %2264
        %2266 = vrot.lane.b32.xlu0 %v1406, 64
        %v2267 = vpop.permute.xlu0 %2266
        %2268 = vrot.lane.b32.xlu0 %v1409, 64
        %v2269 = vpop.permute.xlu0 %2268
        %2270 = vrot.lane.b32.xlu0 %v1411, 64
        %v2271 = vpop.permute.xlu0 %2270
        %2272 = vrot.lane.b32.xlu0 %v2209, 64
        %v2273 = vpop.permute.xlu0 %2272
        %2274 = vrot.lane.b32.xlu0 %v2211, 64
        %v2275 = vpop.permute.xlu0 %2274
        %vm2308 = vcmask 589312
        %2309 = vst.msk [vmem:[#allocation2] sm:$0xff] %vm2308, %v2213
        %2310 = vst.msk [vmem:[#allocation2 + $0x8] sm:$0xff] %vm2308, %v2215
        %2311 = vst.msk [vmem:[#allocation2 + $0x10] sm:$0xff] %vm2308, %v2217
        %2312 = vst.msk [vmem:[#allocation2 + $0x18] sm:$0xff] %vm2308, %v2219
        %2313 = vst.msk [vmem:[#allocation2 + $0x20] sm:$0xff] %vm2308, %v2221
        %2314 = vst.msk [vmem:[#allocation2 + $0x28] sm:$0xff] %vm2308, %v2223
        %2315 = vst.msk [vmem:[#allocation2 + $0x30] sm:$0xff] %vm2308, %v2225
        %2316 = vst.msk [vmem:[#allocation2 + $0x38] sm:$0xff] %vm2308, %v2227
        %2317 = vst.msk [vmem:[#allocation2 + $0x40] sm:$0xff] %vm2308, %v2229
        %2318 = vst.msk [vmem:[#allocation2 + $0x48] sm:$0xff] %vm2308, %v2231
        %2319 = vst.msk [vmem:[#allocation2 + $0x50] sm:$0xff] %vm2308, %v2233
        %2320 = vst.msk [vmem:[#allocation2 + $0x58] sm:$0xff] %vm2308, %v2235
        %2321 = vst.msk [vmem:[#allocation2 + $0x60] sm:$0xff] %vm2308, %v2237
        %2322 = vst.msk [vmem:[#allocation2 + $0x68] sm:$0xff] %vm2308, %v2239
        %2323 = vst.msk [vmem:[#allocation2 + $0x70] sm:$0xff] %vm2308, %v2241
        %2324 = vst.msk [vmem:[#allocation2 + $0x78] sm:$0xff] %vm2308, %v2243
        %2325 = vst.msk [vmem:[#allocation2 + $0x80] sm:$0xff] %vm2308, %v2245
        %2326 = vst.msk [vmem:[#allocation2 + $0x88] sm:$0xff] %vm2308, %v2247
        %2327 = vst.msk [vmem:[#allocation2 + $0x90] sm:$0xff] %vm2308, %v2249
        %2328 = vst.msk [vmem:[#allocation2 + $0x98] sm:$0xff] %vm2308, %v2251
        %2329 = vst.msk [vmem:[#allocation2 + $0xa0] sm:$0xff] %vm2308, %v2253
        %2330 = vst.msk [vmem:[#allocation2 + $0xa8] sm:$0xff] %vm2308, %v2255
        %2331 = vst.msk [vmem:[#allocation2 + $0xb0] sm:$0xff] %vm2308, %v2257
        %2332 = vst.msk [vmem:[#allocation2 + $0xb8] sm:$0xff] %vm2308, %v2259
        %2333 = vst.msk [vmem:[#allocation2 + $0xc0] sm:$0xff] %vm2308, %v2261
        %2334 = vst.msk [vmem:[#allocation2 + $0xc8] sm:$0xff] %vm2308, %v2263
        %2335 = vst.msk [vmem:[#allocation2 + $0xd0] sm:$0xff] %vm2308, %v2265
        %2336 = vst.msk [vmem:[#allocation2 + $0xd8] sm:$0xff] %vm2308, %v2267
        %2337 = vst.msk [vmem:[#allocation2 + $0xe0] sm:$0xff] %vm2308, %v2269
        %2338 = vst.msk [vmem:[#allocation2 + $0xe8] sm:$0xff] %vm2308, %v2271
        %2339 = vst.msk [vmem:[#allocation2 + $0xf0] sm:$0xff] %vm2308, %v2273
        %2340 = vst.msk [vmem:[#allocation2 + $0xf8] sm:$0xff] %vm2308, %v2275
        %2343 = vrot.lane.b32.xlu0 %v343, 72
        %v2344 = vpop.permute.xlu0 %2343
        %2345 = vrot.lane.b32.xlu0 %v344, 72
        %v2346 = vpop.permute.xlu0 %2345
        %2347 = vrot.lane.b32.xlu0 %v346, 72
        %v2348 = vpop.permute.xlu0 %2347
        %2349 = vrot.lane.b32.xlu0 %v347, 72
        %v2350 = vpop.permute.xlu0 %2349
        %2351 = vrot.lane.b32.xlu0 %v349, 72
        %v2352 = vpop.permute.xlu0 %2351
        %2353 = vrot.lane.b32.xlu0 %v350, 72
        %v2354 = vpop.permute.xlu0 %2353
        %2355 = vrot.lane.b32.xlu0 %v352, 72
        %v2356 = vpop.permute.xlu0 %2355
        %2357 = vrot.lane.b32.xlu0 %v353, 72
        %v2358 = vpop.permute.xlu0 %2357
        %2359 = vrot.lane.b32.xlu0 %v355, 72
        %v2360 = vpop.permute.xlu0 %2359
        %2361 = vrot.lane.b32.xlu0 %v356, 72
        %v2362 = vpop.permute.xlu0 %2361
        %2363 = vrot.lane.b32.xlu0 %v358, 72
        %v2364 = vpop.permute.xlu0 %2363
        %2365 = vrot.lane.b32.xlu0 %v359, 72
        %v2366 = vpop.permute.xlu0 %2365
        %2367 = vrot.lane.b32.xlu0 %v361, 72
        %v2368 = vpop.permute.xlu0 %2367
        %2369 = vrot.lane.b32.xlu0 %v362, 72
        %v2370 = vpop.permute.xlu0 %2369
        %2371 = vrot.lane.b32.xlu0 %v364, 72
        %v2372 = vpop.permute.xlu0 %2371
        %2373 = vrot.lane.b32.xlu0 %v365, 72
        %v2374 = vpop.permute.xlu0 %2373
        %2375 = vrot.lane.b32.xlu0 %v367, 72
        %v2376 = vpop.permute.xlu0 %2375
        %2377 = vrot.lane.b32.xlu0 %v368, 72
        %v2378 = vpop.permute.xlu0 %2377
        %2379 = vrot.lane.b32.xlu0 %v370, 72
        %v2380 = vpop.permute.xlu0 %2379
        %2381 = vrot.lane.b32.xlu0 %v371, 72
        %v2382 = vpop.permute.xlu0 %2381
        %2383 = vrot.lane.b32.xlu0 %v373, 72
        %v2384 = vpop.permute.xlu0 %2383
        %2385 = vrot.lane.b32.xlu0 %v374, 72
        %v2386 = vpop.permute.xlu0 %2385
        %2387 = vrot.lane.b32.xlu0 %v376, 72
        %v2388 = vpop.permute.xlu0 %2387
        %2389 = vrot.lane.b32.xlu0 %v377, 72
        %v2390 = vpop.permute.xlu0 %2389
        %2391 = vrot.lane.b32.xlu0 %v379, 72
        %v2392 = vpop.permute.xlu0 %2391
        %2393 = vrot.lane.b32.xlu0 %v380, 72
        %v2394 = vpop.permute.xlu0 %2393
        %2395 = vrot.lane.b32.xlu0 %v382, 72
        %v2396 = vpop.permute.xlu0 %2395
        %2397 = vrot.lane.b32.xlu0 %v383, 72
        %v2398 = vpop.permute.xlu0 %2397
        %2399 = vrot.lane.b32.xlu0 %v385, 72
        %v2400 = vpop.permute.xlu0 %2399
        %2401 = vrot.lane.b32.xlu0 %v386, 72
        %v2402 = vpop.permute.xlu0 %2401
        %2403 = vrot.lane.b32.xlu0 %v388, 72
        %v2404 = vpop.permute.xlu0 %2403
        %2405 = vrot.lane.b32.xlu0 %v389, 72
        %v2406 = vpop.permute.xlu0 %2405
        %vm2439 = vcmask 622144
        %2440 = vst.msk [vmem:[#allocation2] sm:$0xff] %vm2439, %v2344
        %2441 = vst.msk [vmem:[#allocation2 + $0x8] sm:$0xff] %vm2439, %v2346
        %2442 = vst.msk [vmem:[#allocation2 + $0x10] sm:$0xff] %vm2439, %v2348
        %2443 = vst.msk [vmem:[#allocation2 + $0x18] sm:$0xff] %vm2439, %v2350
        %2444 = vst.msk [vmem:[#allocation2 + $0x20] sm:$0xff] %vm2439, %v2352
        %2445 = vst.msk [vmem:[#allocation2 + $0x28] sm:$0xff] %vm2439, %v2354
        %2446 = vst.msk [vmem:[#allocation2 + $0x30] sm:$0xff] %vm2439, %v2356
        %2447 = vst.msk [vmem:[#allocation2 + $0x38] sm:$0xff] %vm2439, %v2358
        %2448 = vst.msk [vmem:[#allocation2 + $0x40] sm:$0xff] %vm2439, %v2360
        %2449 = vst.msk [vmem:[#allocation2 + $0x48] sm:$0xff] %vm2439, %v2362
        %2450 = vst.msk [vmem:[#allocation2 + $0x50] sm:$0xff] %vm2439, %v2364
        %2451 = vst.msk [vmem:[#allocation2 + $0x58] sm:$0xff] %vm2439, %v2366
        %2452 = vst.msk [vmem:[#allocation2 + $0x60] sm:$0xff] %vm2439, %v2368
        %2453 = vst.msk [vmem:[#allocation2 + $0x68] sm:$0xff] %vm2439, %v2370
        %2454 = vst.msk [vmem:[#allocation2 + $0x70] sm:$0xff] %vm2439, %v2372
        %2455 = vst.msk [vmem:[#allocation2 + $0x78] sm:$0xff] %vm2439, %v2374
        %2456 = vst.msk [vmem:[#allocation2 + $0x80] sm:$0xff] %vm2439, %v2376
        %2457 = vst.msk [vmem:[#allocation2 + $0x88] sm:$0xff] %vm2439, %v2378
        %2458 = vst.msk [vmem:[#allocation2 + $0x90] sm:$0xff] %vm2439, %v2380
        %2459 = vst.msk [vmem:[#allocation2 + $0x98] sm:$0xff] %vm2439, %v2382
        %2460 = vst.msk [vmem:[#allocation2 + $0xa0] sm:$0xff] %vm2439, %v2384
        %2461 = vst.msk [vmem:[#allocation2 + $0xa8] sm:$0xff] %vm2439, %v2386
        %2462 = vst.msk [vmem:[#allocation2 + $0xb0] sm:$0xff] %vm2439, %v2388
        %2463 = vst.msk [vmem:[#allocation2 + $0xb8] sm:$0xff] %vm2439, %v2390
        %2464 = vst.msk [vmem:[#allocation2 + $0xc0] sm:$0xff] %vm2439, %v2392
        %2465 = vst.msk [vmem:[#allocation2 + $0xc8] sm:$0xff] %vm2439, %v2394
        %2466 = vst.msk [vmem:[#allocation2 + $0xd0] sm:$0xff] %vm2439, %v2396
        %2467 = vst.msk [vmem:[#allocation2 + $0xd8] sm:$0xff] %vm2439, %v2398
        %2468 = vst.msk [vmem:[#allocation2 + $0xe0] sm:$0xff] %vm2439, %v2400
        %2469 = vst.msk [vmem:[#allocation2 + $0xe8] sm:$0xff] %vm2439, %v2402
        %2470 = vst.msk [vmem:[#allocation2 + $0xf0] sm:$0xff] %vm2439, %v2404
        %2471 = vst.msk [vmem:[#allocation2 + $0xf8] sm:$0xff] %vm2439, %v2406
        %2474 = vrot.lane.b32.xlu0 %v397, 76
        %v2475 = vpop.permute.xlu0 %2474
        %2476 = vrot.lane.b32.xlu0 %v398, 76
        %v2477 = vpop.permute.xlu0 %2476
        %2478 = vrot.lane.b32.xlu0 %v400, 76
        %v2479 = vpop.permute.xlu0 %2478
        %2480 = vrot.lane.b32.xlu0 %v401, 76
        %v2481 = vpop.permute.xlu0 %2480
        %2482 = vrot.lane.b32.xlu0 %v403, 76
        %v2483 = vpop.permute.xlu0 %2482
        %2484 = vrot.lane.b32.xlu0 %v404, 76
        %v2485 = vpop.permute.xlu0 %2484
        %2486 = vrot.lane.b32.xlu0 %v406, 76
        %v2487 = vpop.permute.xlu0 %2486
        %2488 = vrot.lane.b32.xlu0 %v407, 76
        %v2489 = vpop.permute.xlu0 %2488
        %2490 = vrot.lane.b32.xlu0 %v409, 76
        %v2491 = vpop.permute.xlu0 %2490
        %2492 = vrot.lane.b32.xlu0 %v410, 76
        %v2493 = vpop.permute.xlu0 %2492
        %2494 = vrot.lane.b32.xlu0 %v412, 76
        %v2495 = vpop.permute.xlu0 %2494
        %2496 = vrot.lane.b32.xlu0 %v413, 76
        %v2497 = vpop.permute.xlu0 %2496
        %2498 = vrot.lane.b32.xlu0 %v415, 76
        %v2499 = vpop.permute.xlu0 %2498
        %2500 = vrot.lane.b32.xlu0 %v416, 76
        %v2501 = vpop.permute.xlu0 %2500
        %2502 = vrot.lane.b32.xlu0 %v418, 76
        %v2503 = vpop.permute.xlu0 %2502
        %2504 = vrot.lane.b32.xlu0 %v419, 76
        %v2505 = vpop.permute.xlu0 %2504
        %2506 = vrot.lane.b32.xlu0 %v421, 76
        %v2507 = vpop.permute.xlu0 %2506
        %2508 = vrot.lane.b32.xlu0 %v422, 76
        %v2509 = vpop.permute.xlu0 %2508
        %2510 = vrot.lane.b32.xlu0 %v424, 76
        %v2511 = vpop.permute.xlu0 %2510
        %2512 = vrot.lane.b32.xlu0 %v425, 76
        %v2513 = vpop.permute.xlu0 %2512
        %2514 = vrot.lane.b32.xlu0 %v427, 76
        %v2515 = vpop.permute.xlu0 %2514
        %2516 = vrot.lane.b32.xlu0 %v428, 76
        %v2517 = vpop.permute.xlu0 %2516
        %2518 = vrot.lane.b32.xlu0 %v430, 76
        %v2519 = vpop.permute.xlu0 %2518
        %2520 = vrot.lane.b32.xlu0 %v431, 76
        %v2521 = vpop.permute.xlu0 %2520
        %2522 = vrot.lane.b32.xlu0 %v433, 76
        %v2523 = vpop.permute.xlu0 %2522
        %2524 = vrot.lane.b32.xlu0 %v434, 76
        %v2525 = vpop.permute.xlu0 %2524
        %2526 = vrot.lane.b32.xlu0 %v436, 76
        %v2527 = vpop.permute.xlu0 %2526
        %2528 = vrot.lane.b32.xlu0 %v437, 76
        %v2529 = vpop.permute.xlu0 %2528
        %2530 = vrot.lane.b32.xlu0 %v439, 76
        %v2531 = vpop.permute.xlu0 %2530
        %2532 = vrot.lane.b32.xlu0 %v440, 76
        %v2533 = vpop.permute.xlu0 %2532
        %2534 = vrot.lane.b32.xlu0 %v442, 76
        %v2535 = vpop.permute.xlu0 %2534
        %2536 = vrot.lane.b32.xlu0 %v443, 76
        %v2537 = vpop.permute.xlu0 %2536
        %vm2570 = vcmask 687712
        %2571 = vst.msk [vmem:[#allocation2] sm:$0xff] %vm2570, %v2475
        %2572 = vst.msk [vmem:[#allocation2 + $0x8] sm:$0xff] %vm2570, %v2477
        %2573 = vst.msk [vmem:[#allocation2 + $0x10] sm:$0xff] %vm2570, %v2479
        %2574 = vst.msk [vmem:[#allocation2 + $0x18] sm:$0xff] %vm2570, %v2481
        %2575 = vst.msk [vmem:[#allocation2 + $0x20] sm:$0xff] %vm2570, %v2483
        %2576 = vst.msk [vmem:[#allocation2 + $0x28] sm:$0xff] %vm2570, %v2485
        %2577 = vst.msk [vmem:[#allocation2 + $0x30] sm:$0xff] %vm2570, %v2487
        %2578 = vst.msk [vmem:[#allocation2 + $0x38] sm:$0xff] %vm2570, %v2489
        %2579 = vst.msk [vmem:[#allocation2 + $0x40] sm:$0xff] %vm2570, %v2491
        %2580 = vst.msk [vmem:[#allocation2 + $0x48] sm:$0xff] %vm2570, %v2493
        %2581 = vst.msk [vmem:[#allocation2 + $0x50] sm:$0xff] %vm2570, %v2495
        %2582 = vst.msk [vmem:[#allocation2 + $0x58] sm:$0xff] %vm2570, %v2497
        %2583 = vst.msk [vmem:[#allocation2 + $0x60] sm:$0xff] %vm2570, %v2499
        %2584 = vst.msk [vmem:[#allocation2 + $0x68] sm:$0xff] %vm2570, %v2501
        %2585 = vst.msk [vmem:[#allocation2 + $0x70] sm:$0xff] %vm2570, %v2503
        %2586 = vst.msk [vmem:[#allocation2 + $0x78] sm:$0xff] %vm2570, %v2505
        %2587 = vst.msk [vmem:[#allocation2 + $0x80] sm:$0xff] %vm2570, %v2507
        %2588 = vst.msk [vmem:[#allocation2 + $0x88] sm:$0xff] %vm2570, %v2509
        %2589 = vst.msk [vmem:[#allocation2 + $0x90] sm:$0xff] %vm2570, %v2511
        %2590 = vst.msk [vmem:[#allocation2 + $0x98] sm:$0xff] %vm2570, %v2513
        %2591 = vst.msk [vmem:[#allocation2 + $0xa0] sm:$0xff] %vm2570, %v2515
        %2592 = vst.msk [vmem:[#allocation2 + $0xa8] sm:$0xff] %vm2570, %v2517
        %2593 = vst.msk [vmem:[#allocation2 + $0xb0] sm:$0xff] %vm2570, %v2519
        %2594 = vst.msk [vmem:[#allocation2 + $0xb8] sm:$0xff] %vm2570, %v2521
        %2595 = vst.msk [vmem:[#allocation2 + $0xc0] sm:$0xff] %vm2570, %v2523
        %2596 = vst.msk [vmem:[#allocation2 + $0xc8] sm:$0xff] %vm2570, %v2525
        %2597 = vst.msk [vmem:[#allocation2 + $0xd0] sm:$0xff] %vm2570, %v2527
        %2598 = vst.msk [vmem:[#allocation2 + $0xd8] sm:$0xff] %vm2570, %v2529
        %2599 = vst.msk [vmem:[#allocation2 + $0xe0] sm:$0xff] %vm2570, %v2531
        %2600 = vst.msk [vmem:[#allocation2 + $0xe8] sm:$0xff] %vm2570, %v2533
        %2601 = vst.msk [vmem:[#allocation2 + $0xf0] sm:$0xff] %vm2570, %v2535
        %2602 = vst.msk [vmem:[#allocation2 + $0xf8] sm:$0xff] %vm2570, %v2537
        %v2604 = vrot.slane %v388, 1
        %v2605 = vrot.slane %v389, 1
        %v2606 = vsel %vm687, %v2604, %v2605
        %v2607 = vrot.slane %v390, 1
        %v2608 = vsel %vm687, %v2605, %v2607
        %2609 = vrot.lane.b32.xlu0 %v700, 84
        %v2610 = vpop.permute.xlu0 %2609
        %2611 = vrot.lane.b32.xlu0 %v702, 84
        %v2612 = vpop.permute.xlu0 %2611
        %2613 = vrot.lane.b32.xlu0 %v705, 84
        %v2614 = vpop.permute.xlu0 %2613
        %2615 = vrot.lane.b32.xlu0 %v707, 84
        %v2616 = vpop.permute.xlu0 %2615
        %2617 = vrot.lane.b32.xlu0 %v710, 84
        %v2618 = vpop.permute.xlu0 %2617
        %2619 = vrot.lane.b32.xlu0 %v712, 84
        %v2620 = vpop.permute.xlu0 %2619
        %2621 = vrot.lane.b32.xlu0 %v715, 84
        %v2622 = vpop.permute.xlu0 %2621
        %2623 = vrot.lane.b32.xlu0 %v717, 84
        %v2624 = vpop.permute.xlu0 %2623
        %2625 = vrot.lane.b32.xlu0 %v720, 84
        %v2626 = vpop.permute.xlu0 %2625
        %2627 = vrot.lane.b32.xlu0 %v722, 84
        %v2628 = vpop.permute.xlu0 %2627
        %2629 = vrot.lane.b32.xlu0 %v725, 84
        %v2630 = vpop.permute.xlu0 %2629
        %2631 = vrot.lane.b32.xlu0 %v727, 84
        %v2632 = vpop.permute.xlu0 %2631
        %2633 = vrot.lane.b32.xlu0 %v730, 84
        %v2634 = vpop.permute.xlu0 %2633
        %2635 = vrot.lane.b32.xlu0 %v732, 84
        %v2636 = vpop.permute.xlu0 %2635
        %2637 = vrot.lane.b32.xlu0 %v735, 84
        %v2638 = vpop.permute.xlu0 %2637
        %2639 = vrot.lane.b32.xlu0 %v737, 84
        %v2640 = vpop.permute.xlu0 %2639
        %2641 = vrot.lane.b32.xlu0 %v740, 84
        %v2642 = vpop.permute.xlu0 %2641
        %2643 = vrot.lane.b32.xlu0 %v742, 84
        %v2644 = vpop.permute.xlu0 %2643
        %2645 = vrot.lane.b32.xlu0 %v745, 84
        %v2646 = vpop.permute.xlu0 %2645
        %2647 = vrot.lane.b32.xlu0 %v747, 84
        %v2648 = vpop.permute.xlu0 %2647
        %2649 = vrot.lane.b32.xlu0 %v750, 84
        %v2650 = vpop.permute.xlu0 %2649
        %2651 = vrot.lane.b32.xlu0 %v752, 84
        %v2652 = vpop.permute.xlu0 %2651
        %2653 = vrot.lane.b32.xlu0 %v755, 84
        %v2654 = vpop.permute.xlu0 %2653
        %2655 = vrot.lane.b32.xlu0 %v757, 84
        %v2656 = vpop.permute.xlu0 %2655
        %2657 = vrot.lane.b32.xlu0 %v760, 84
        %v2658 = vpop.permute.xlu0 %2657
        %2659 = vrot.lane.b32.xlu0 %v762, 84
        %v2660 = vpop.permute.xlu0 %2659
        %2661 = vrot.lane.b32.xlu0 %v765, 84
        %v2662 = vpop.permute.xlu0 %2661
        %2663 = vrot.lane.b32.xlu0 %v767, 84
        %v2664 = vpop.permute.xlu0 %2663
        %2665 = vrot.lane.b32.xlu0 %v1806, 84
        %v2666 = vpop.permute.xlu0 %2665
        %2667 = vrot.lane.b32.xlu0 %v1808, 84
        %v2668 = vpop.permute.xlu0 %2667
        %2669 = vrot.lane.b32.xlu0 %v2606, 84
        %v2670 = vpop.permute.xlu0 %2669
        %2671 = vrot.lane.b32.xlu0 %v2608, 84
        %v2672 = vpop.permute.xlu0 %2671
        %vm2705 = vcmask 720544
        %2706 = vst.msk [vmem:[#allocation2] sm:$0xff] %vm2705, %v2610
        %2707 = vst.msk [vmem:[#allocation2 + $0x8] sm:$0xff] %vm2705, %v2612
        %2708 = vst.msk [vmem:[#allocation2 + $0x10] sm:$0xff] %vm2705, %v2614
        %2709 = vst.msk [vmem:[#allocation2 + $0x18] sm:$0xff] %vm2705, %v2616
        %2710 = vst.msk [vmem:[#allocation2 + $0x20] sm:$0xff] %vm2705, %v2618
        %2711 = vst.msk [vmem:[#allocation2 + $0x28] sm:$0xff] %vm2705, %v2620
        %2712 = vst.msk [vmem:[#allocation2 + $0x30] sm:$0xff] %vm2705, %v2622
        %2713 = vst.msk [vmem:[#allocation2 + $0x38] sm:$0xff] %vm2705, %v2624
        %2714 = vst.msk [vmem:[#allocation2 + $0x40] sm:$0xff] %vm2705, %v2626
        %2715 = vst.msk [vmem:[#allocation2 + $0x48] sm:$0xff] %vm2705, %v2628
        %2716 = vst.msk [vmem:[#allocation2 + $0x50] sm:$0xff] %vm2705, %v2630
        %2717 = vst.msk [vmem:[#allocation2 + $0x58] sm:$0xff] %vm2705, %v2632
        %2718 = vst.msk [vmem:[#allocation2 + $0x60] sm:$0xff] %vm2705, %v2634
        %2719 = vst.msk [vmem:[#allocation2 + $0x68] sm:$0xff] %vm2705, %v2636
        %2720 = vst.msk [vmem:[#allocation2 + $0x70] sm:$0xff] %vm2705, %v2638
        %2721 = vst.msk [vmem:[#allocation2 + $0x78] sm:$0xff] %vm2705, %v2640
        %2722 = vst.msk [vmem:[#allocation2 + $0x80] sm:$0xff] %vm2705, %v2642
        %2723 = vst.msk [vmem:[#allocation2 + $0x88] sm:$0xff] %vm2705, %v2644
        %2724 = vst.msk [vmem:[#allocation2 + $0x90] sm:$0xff] %vm2705, %v2646
        %2725 = vst.msk [vmem:[#allocation2 + $0x98] sm:$0xff] %vm2705, %v2648
        %2726 = vst.msk [vmem:[#allocation2 + $0xa0] sm:$0xff] %vm2705, %v2650
        %2727 = vst.msk [vmem:[#allocation2 + $0xa8] sm:$0xff] %vm2705, %v2652
        %2728 = vst.msk [vmem:[#allocation2 + $0xb0] sm:$0xff] %vm2705, %v2654
        %2729 = vst.msk [vmem:[#allocation2 + $0xb8] sm:$0xff] %vm2705, %v2656
        %2730 = vst.msk [vmem:[#allocation2 + $0xc0] sm:$0xff] %vm2705, %v2658
        %2731 = vst.msk [vmem:[#allocation2 + $0xc8] sm:$0xff] %vm2705, %v2660
        %2732 = vst.msk [vmem:[#allocation2 + $0xd0] sm:$0xff] %vm2705, %v2662
        %2733 = vst.msk [vmem:[#allocation2 + $0xd8] sm:$0xff] %vm2705, %v2664
        %2734 = vst.msk [vmem:[#allocation2 + $0xe0] sm:$0xff] %vm2705, %v2666
        %2735 = vst.msk [vmem:[#allocation2 + $0xe8] sm:$0xff] %vm2705, %v2668
        %2736 = vst.msk [vmem:[#allocation2 + $0xf0] sm:$0xff] %vm2705, %v2670
        %2737 = vst.msk [vmem:[#allocation2 + $0xf8] sm:$0xff] %vm2705, %v2672
        %v2739 = vrot.slane %v442, 1
        %v2740 = vrot.slane %v443, 1
        %v2741 = vsel %vm687, %v2739, %v2740
        %v2742 = vrot.slane %v444, 1
        %v2743 = vsel %vm687, %v2740, %v2742
        %2744 = vrot.lane.b32.xlu0 %v925, 88
        %v2745 = vpop.permute.xlu0 %2744
        %2746 = vrot.lane.b32.xlu0 %v927, 88
        %v2747 = vpop.permute.xlu0 %2746
        %2748 = vrot.lane.b32.xlu0 %v930, 88
        %v2749 = vpop.permute.xlu0 %2748
        %2750 = vrot.lane.b32.xlu0 %v932, 88
        %v2751 = vpop.permute.xlu0 %2750
        %2752 = vrot.lane.b32.xlu0 %v935, 88
        %v2753 = vpop.permute.xlu0 %2752
        %2754 = vrot.lane.b32.xlu0 %v937, 88
        %v2755 = vpop.permute.xlu0 %2754
        %2756 = vrot.lane.b32.xlu0 %v940, 88
        %v2757 = vpop.permute.xlu0 %2756
        %2758 = vrot.lane.b32.xlu0 %v942, 88
        %v2759 = vpop.permute.xlu0 %2758
        %2760 = vrot.lane.b32.xlu0 %v945, 88
        %v2761 = vpop.permute.xlu0 %2760
        %2762 = vrot.lane.b32.xlu0 %v947, 88
        %v2763 = vpop.permute.xlu0 %2762
        %2764 = vrot.lane.b32.xlu0 %v950, 88
        %v2765 = vpop.permute.xlu0 %2764
        %2766 = vrot.lane.b32.xlu0 %v952, 88
        %v2767 = vpop.permute.xlu0 %2766
        %2768 = vrot.lane.b32.xlu0 %v955, 88
        %v2769 = vpop.permute.xlu0 %2768
        %2770 = vrot.lane.b32.xlu0 %v957, 88
        %v2771 = vpop.permute.xlu0 %2770
        %2772 = vrot.lane.b32.xlu0 %v960, 88
        %v2773 = vpop.permute.xlu0 %2772
        %2774 = vrot.lane.b32.xlu0 %v962, 88
        %v2775 = vpop.permute.xlu0 %2774
        %2776 = vrot.lane.b32.xlu0 %v965, 88
        %v2777 = vpop.permute.xlu0 %2776
        %2778 = vrot.lane.b32.xlu0 %v967, 88
        %v2779 = vpop.permute.xlu0 %2778
        %2780 = vrot.lane.b32.xlu0 %v970, 88
        %v2781 = vpop.permute.xlu0 %2780
        %2782 = vrot.lane.b32.xlu0 %v972, 88
        %v2783 = vpop.permute.xlu0 %2782
        %2784 = vrot.lane.b32.xlu0 %v975, 88
        %v2785 = vpop.permute.xlu0 %2784
        %2786 = vrot.lane.b32.xlu0 %v977, 88
        %v2787 = vpop.permute.xlu0 %2786
        %2788 = vrot.lane.b32.xlu0 %v980, 88
        %v2789 = vpop.permute.xlu0 %2788
        %2790 = vrot.lane.b32.xlu0 %v982, 88
        %v2791 = vpop.permute.xlu0 %2790
        %2792 = vrot.lane.b32.xlu0 %v985, 88
        %v2793 = vpop.permute.xlu0 %2792
        %2794 = vrot.lane.b32.xlu0 %v987, 88
        %v2795 = vpop.permute.xlu0 %2794
        %2796 = vrot.lane.b32.xlu0 %v990, 88
        %v2797 = vpop.permute.xlu0 %2796
        %2798 = vrot.lane.b32.xlu0 %v992, 88
        %v2799 = vpop.permute.xlu0 %2798
        %2800 = vrot.lane.b32.xlu0 %v1941, 88
        %v2801 = vpop.permute.xlu0 %2800
        %2802 = vrot.lane.b32.xlu0 %v1943, 88
        %v2803 = vpop.permute.xlu0 %2802
        %2804 = vrot.lane.b32.xlu0 %v2741, 88
        %v2805 = vpop.permute.xlu0 %2804
        %2806 = vrot.lane.b32.xlu0 %v2743, 88
        %v2807 = vpop.permute.xlu0 %2806
        %vm2840 = vcmask 786112
        %2841 = vst.msk [vmem:[#allocation2] sm:$0xff] %vm2840, %v2745
        %2842 = vst.msk [vmem:[#allocation2 + $0x8] sm:$0xff] %vm2840, %v2747
        %2843 = vst.msk [vmem:[#allocation2 + $0x10] sm:$0xff] %vm2840, %v2749
        %2844 = vst.msk [vmem:[#allocation2 + $0x18] sm:$0xff] %vm2840, %v2751
        %2845 = vst.msk [vmem:[#allocation2 + $0x20] sm:$0xff] %vm2840, %v2753
        %2846 = vst.msk [vmem:[#allocation2 + $0x28] sm:$0xff] %vm2840, %v2755
        %2847 = vst.msk [vmem:[#allocation2 + $0x30] sm:$0xff] %vm2840, %v2757
        %2848 = vst.msk [vmem:[#allocation2 + $0x38] sm:$0xff] %vm2840, %v2759
        %2849 = vst.msk [vmem:[#allocation2 + $0x40] sm:$0xff] %vm2840, %v2761
        %2850 = vst.msk [vmem:[#allocation2 + $0x48] sm:$0xff] %vm2840, %v2763
        %2851 = vst.msk [vmem:[#allocation2 + $0x50] sm:$0xff] %vm2840, %v2765
        %2852 = vst.msk [vmem:[#allocation2 + $0x58] sm:$0xff] %vm2840, %v2767
        %2853 = vst.msk [vmem:[#allocation2 + $0x60] sm:$0xff] %vm2840, %v2769
        %2854 = vst.msk [vmem:[#allocation2 + $0x68] sm:$0xff] %vm2840, %v2771
        %2855 = vst.msk [vmem:[#allocation2 + $0x70] sm:$0xff] %vm2840, %v2773
        %2856 = vst.msk [vmem:[#allocation2 + $0x78] sm:$0xff] %vm2840, %v2775
        %2857 = vst.msk [vmem:[#allocation2 + $0x80] sm:$0xff] %vm2840, %v2777
        %2858 = vst.msk [vmem:[#allocation2 + $0x88] sm:$0xff] %vm2840, %v2779
        %2859 = vst.msk [vmem:[#allocation2 + $0x90] sm:$0xff] %vm2840, %v2781
        %2860 = vst.msk [vmem:[#allocation2 + $0x98] sm:$0xff] %vm2840, %v2783
        %2861 = vst.msk [vmem:[#allocation2 + $0xa0] sm:$0xff] %vm2840, %v2785
        %2862 = vst.msk [vmem:[#allocation2 + $0xa8] sm:$0xff] %vm2840, %v2787
        %2863 = vst.msk [vmem:[#allocation2 + $0xb0] sm:$0xff] %vm2840, %v2789
        %2864 = vst.msk [vmem:[#allocation2 + $0xb8] sm:$0xff] %vm2840, %v2791
        %2865 = vst.msk [vmem:[#allocation2 + $0xc0] sm:$0xff] %vm2840, %v2793
        %2866 = vst.msk [vmem:[#allocation2 + $0xc8] sm:$0xff] %vm2840, %v2795
        %2867 = vst.msk [vmem:[#allocation2 + $0xd0] sm:$0xff] %vm2840, %v2797
        %2868 = vst.msk [vmem:[#allocation2 + $0xd8] sm:$0xff] %vm2840, %v2799
        %2869 = vst.msk [vmem:[#allocation2 + $0xe0] sm:$0xff] %vm2840, %v2801
        %2870 = vst.msk [vmem:[#allocation2 + $0xe8] sm:$0xff] %vm2840, %v2803
        %2871 = vst.msk [vmem:[#allocation2 + $0xf0] sm:$0xff] %vm2840, %v2805
        %2872 = vst.msk [vmem:[#allocation2 + $0xf8] sm:$0xff] %vm2840, %v2807
        %v2873 = vrot.slane %v388, 2
        %v2874 = vrot.slane %v389, 2
        %v2875 = vsel %vm1122, %v2873, %v2874
        %v2876 = vrot.slane %v390, 2
        %v2877 = vsel %vm1122, %v2874, %v2876
        %2878 = vrot.lane.b32.xlu0 %v1135, 96
        %v2879 = vpop.permute.xlu0 %2878
        %2880 = vrot.lane.b32.xlu0 %v1137, 96
        %v2881 = vpop.permute.xlu0 %2880
        %2882 = vrot.lane.b32.xlu0 %v1140, 96
        %v2883 = vpop.permute.xlu0 %2882
        %2884 = vrot.lane.b32.xlu0 %v1142, 96
        %v2885 = vpop.permute.xlu0 %2884
        %2886 = vrot.lane.b32.xlu0 %v1145, 96
        %v2887 = vpop.permute.xlu0 %2886
        %2888 = vrot.lane.b32.xlu0 %v1147, 96
        %v2889 = vpop.permute.xlu0 %2888
        %2890 = vrot.lane.b32.xlu0 %v1150, 96
        %v2891 = vpop.permute.xlu0 %2890
        %2892 = vrot.lane.b32.xlu0 %v1152, 96
        %v2893 = vpop.permute.xlu0 %2892
        %2894 = vrot.lane.b32.xlu0 %v1155, 96
        %v2895 = vpop.permute.xlu0 %2894
        %2896 = vrot.lane.b32.xlu0 %v1157, 96
        %v2897 = vpop.permute.xlu0 %2896
        %2898 = vrot.lane.b32.xlu0 %v1160, 96
        %v2899 = vpop.permute.xlu0 %2898
        %2900 = vrot.lane.b32.xlu0 %v1162, 96
        %v2901 = vpop.permute.xlu0 %2900
        %2902 = vrot.lane.b32.xlu0 %v1165, 96
        %v2903 = vpop.permute.xlu0 %2902
        %2904 = vrot.lane.b32.xlu0 %v1167, 96
        %v2905 = vpop.permute.xlu0 %2904
        %2906 = vrot.lane.b32.xlu0 %v1170, 96
        %v2907 = vpop.permute.xlu0 %2906
        %2908 = vrot.lane.b32.xlu0 %v1172, 96
        %v2909 = vpop.permute.xlu0 %2908
        %2910 = vrot.lane.b32.xlu0 %v1175, 96
        %v2911 = vpop.permute.xlu0 %2910
        %2912 = vrot.lane.b32.xlu0 %v1177, 96
        %v2913 = vpop.permute.xlu0 %2912
        %2914 = vrot.lane.b32.xlu0 %v1180, 96
        %v2915 = vpop.permute.xlu0 %2914
        %2916 = vrot.lane.b32.xlu0 %v1182, 96
        %v2917 = vpop.permute.xlu0 %2916
        %2918 = vrot.lane.b32.xlu0 %v1185, 96
        %v2919 = vpop.permute.xlu0 %2918
        %2920 = vrot.lane.b32.xlu0 %v1187, 96
        %v2921 = vpop.permute.xlu0 %2920
        %2922 = vrot.lane.b32.xlu0 %v1190, 96
        %v2923 = vpop.permute.xlu0 %2922
        %2924 = vrot.lane.b32.xlu0 %v1192, 96
        %v2925 = vpop.permute.xlu0 %2924
        %2926 = vrot.lane.b32.xlu0 %v1195, 96
        %v2927 = vpop.permute.xlu0 %2926
        %2928 = vrot.lane.b32.xlu0 %v1197, 96
        %v2929 = vpop.permute.xlu0 %2928
        %2930 = vrot.lane.b32.xlu0 %v1200, 96
        %v2931 = vpop.permute.xlu0 %2930
        %2932 = vrot.lane.b32.xlu0 %v1202, 96
        %v2933 = vpop.permute.xlu0 %2932
        %2934 = vrot.lane.b32.xlu0 %v2075, 96
        %v2935 = vpop.permute.xlu0 %2934
        %2936 = vrot.lane.b32.xlu0 %v2077, 96
        %v2937 = vpop.permute.xlu0 %2936
        %2938 = vrot.lane.b32.xlu0 %v2875, 96
        %v2939 = vpop.permute.xlu0 %2938
        %2940 = vrot.lane.b32.xlu0 %v2877, 96
        %v2941 = vpop.permute.xlu0 %2940
        %vm2974 = vcmask 818944
        %2975 = vst.msk [vmem:[#allocation2] sm:$0xff] %vm2974, %v2879
        %2976 = vst.msk [vmem:[#allocation2 + $0x8] sm:$0xff] %vm2974, %v2881
        %2977 = vst.msk [vmem:[#allocation2 + $0x10] sm:$0xff] %vm2974, %v2883
        %2978 = vst.msk [vmem:[#allocation2 + $0x18] sm:$0xff] %vm2974, %v2885
        %2979 = vst.msk [vmem:[#allocation2 + $0x20] sm:$0xff] %vm2974, %v2887
        %2980 = vst.msk [vmem:[#allocation2 + $0x28] sm:$0xff] %vm2974, %v2889
        %2981 = vst.msk [vmem:[#allocation2 + $0x30] sm:$0xff] %vm2974, %v2891
        %2982 = vst.msk [vmem:[#allocation2 + $0x38] sm:$0xff] %vm2974, %v2893
        %2983 = vst.msk [vmem:[#allocation2 + $0x40] sm:$0xff] %vm2974, %v2895
        %2984 = vst.msk [vmem:[#allocation2 + $0x48] sm:$0xff] %vm2974, %v2897
        %2985 = vst.msk [vmem:[#allocation2 + $0x50] sm:$0xff] %vm2974, %v2899
        %2986 = vst.msk [vmem:[#allocation2 + $0x58] sm:$0xff] %vm2974, %v2901
        %2987 = vst.msk [vmem:[#allocation2 + $0x60] sm:$0xff] %vm2974, %v2903
        %2988 = vst.msk [vmem:[#allocation2 + $0x68] sm:$0xff] %vm2974, %v2905
        %2989 = vst.msk [vmem:[#allocation2 + $0x70] sm:$0xff] %vm2974, %v2907
        %2990 = vst.msk [vmem:[#allocation2 + $0x78] sm:$0xff] %vm2974, %v2909
        %2991 = vst.msk [vmem:[#allocation2 + $0x80] sm:$0xff] %vm2974, %v2911
        %2992 = vst.msk [vmem:[#allocation2 + $0x88] sm:$0xff] %vm2974, %v2913
        %2993 = vst.msk [vmem:[#allocation2 + $0x90] sm:$0xff] %vm2974, %v2915
        %2994 = vst.msk [vmem:[#allocation2 + $0x98] sm:$0xff] %vm2974, %v2917
        %2995 = vst.msk [vmem:[#allocation2 + $0xa0] sm:$0xff] %vm2974, %v2919
        %2996 = vst.msk [vmem:[#allocation2 + $0xa8] sm:$0xff] %vm2974, %v2921
        %2997 = vst.msk [vmem:[#allocation2 + $0xb0] sm:$0xff] %vm2974, %v2923
        %2998 = vst.msk [vmem:[#allocation2 + $0xb8] sm:$0xff] %vm2974, %v2925
        %2999 = vst.msk [vmem:[#allocation2 + $0xc0] sm:$0xff] %vm2974, %v2927
        %3000 = vst.msk [vmem:[#allocation2 + $0xc8] sm:$0xff] %vm2974, %v2929
        %3001 = vst.msk [vmem:[#allocation2 + $0xd0] sm:$0xff] %vm2974, %v2931
        %3002 = vst.msk [vmem:[#allocation2 + $0xd8] sm:$0xff] %vm2974, %v2933
        %3003 = vst.msk [vmem:[#allocation2 + $0xe0] sm:$0xff] %vm2974, %v2935
        %3004 = vst.msk [vmem:[#allocation2 + $0xe8] sm:$0xff] %vm2974, %v2937
        %3005 = vst.msk [vmem:[#allocation2 + $0xf0] sm:$0xff] %vm2974, %v2939
        %3006 = vst.msk [vmem:[#allocation2 + $0xf8] sm:$0xff] %vm2974, %v2941
        %v3007 = vrot.slane %v442, 2
        %v3008 = vrot.slane %v443, 2
        %v3009 = vsel %vm1122, %v3007, %v3008
        %v3010 = vrot.slane %v444, 2
        %v3011 = vsel %vm1122, %v3008, %v3010
        %3012 = vrot.lane.b32.xlu0 %v1344, 100
        %v3013 = vpop.permute.xlu0 %3012
        %3014 = vrot.lane.b32.xlu0 %v1346, 100
        %v3015 = vpop.permute.xlu0 %3014
        %3016 = vrot.lane.b32.xlu0 %v1349, 100
        %v3017 = vpop.permute.xlu0 %3016
        %3018 = vrot.lane.b32.xlu0 %v1351, 100
        %v3019 = vpop.permute.xlu0 %3018
        %3020 = vrot.lane.b32.xlu0 %v1354, 100
        %v3021 = vpop.permute.xlu0 %3020
        %3022 = vrot.lane.b32.xlu0 %v1356, 100
        %v3023 = vpop.permute.xlu0 %3022
        %3024 = vrot.lane.b32.xlu0 %v1359, 100
        %v3025 = vpop.permute.xlu0 %3024
        %3026 = vrot.lane.b32.xlu0 %v1361, 100
        %v3027 = vpop.permute.xlu0 %3026
        %3028 = vrot.lane.b32.xlu0 %v1364, 100
        %v3029 = vpop.permute.xlu0 %3028
        %3030 = vrot.lane.b32.xlu0 %v1366, 100
        %v3031 = vpop.permute.xlu0 %3030
        %3032 = vrot.lane.b32.xlu0 %v1369, 100
        %v3033 = vpop.permute.xlu0 %3032
        %3034 = vrot.lane.b32.xlu0 %v1371, 100
        %v3035 = vpop.permute.xlu0 %3034
        %3036 = vrot.lane.b32.xlu0 %v1374, 100
        %v3037 = vpop.permute.xlu0 %3036
        %3038 = vrot.lane.b32.xlu0 %v1376, 100
        %v3039 = vpop.permute.xlu0 %3038
        %3040 = vrot.lane.b32.xlu0 %v1379, 100
        %v3041 = vpop.permute.xlu0 %3040
        %3042 = vrot.lane.b32.xlu0 %v1381, 100
        %v3043 = vpop.permute.xlu0 %3042
        %3044 = vrot.lane.b32.xlu0 %v1384, 100
        %v3045 = vpop.permute.xlu0 %3044
        %3046 = vrot.lane.b32.xlu0 %v1386, 100
        %v3047 = vpop.permute.xlu0 %3046
        %3048 = vrot.lane.b32.xlu0 %v1389, 100
        %v3049 = vpop.permute.xlu0 %3048
        %3050 = vrot.lane.b32.xlu0 %v1391, 100
        %v3051 = vpop.permute.xlu0 %3050
        %3052 = vrot.lane.b32.xlu0 %v1394, 100
        %v3053 = vpop.permute.xlu0 %3052
        %3054 = vrot.lane.b32.xlu0 %v1396, 100
        %v3055 = vpop.permute.xlu0 %3054
        %3056 = vrot.lane.b32.xlu0 %v1399, 100
        %v3057 = vpop.permute.xlu0 %3056
        %3058 = vrot.lane.b32.xlu0 %v1401, 100
        %v3059 = vpop.permute.xlu0 %3058
        %3060 = vrot.lane.b32.xlu0 %v1404, 100
        %v3061 = vpop.permute.xlu0 %3060
        %3062 = vrot.lane.b32.xlu0 %v1406, 100
        %v3063 = vpop.permute.xlu0 %3062
        %3064 = vrot.lane.b32.xlu0 %v1409, 100
        %v3065 = vpop.permute.xlu0 %3064
        %3066 = vrot.lane.b32.xlu0 %v1411, 100
        %v3067 = vpop.permute.xlu0 %3066
        %3068 = vrot.lane.b32.xlu0 %v2209, 100
        %v3069 = vpop.permute.xlu0 %3068
        %3070 = vrot.lane.b32.xlu0 %v2211, 100
        %v3071 = vpop.permute.xlu0 %3070
        %3072 = vrot.lane.b32.xlu0 %v3009, 100
        %v3073 = vpop.permute.xlu0 %3072
        %3074 = vrot.lane.b32.xlu0 %v3011, 100
        %v3075 = vpop.permute.xlu0 %3074
        %vm3108 = vcmask 884512
        %3109 = vst.msk [vmem:[#allocation2] sm:$0xff] %vm3108, %v3013
        %3110 = vst.msk [vmem:[#allocation2 + $0x8] sm:$0xff] %vm3108, %v3015
        %3111 = vst.msk [vmem:[#allocation2 + $0x10] sm:$0xff] %vm3108, %v3017
        %3112 = vst.msk [vmem:[#allocation2 + $0x18] sm:$0xff] %vm3108, %v3019
        %3113 = vst.msk [vmem:[#allocation2 + $0x20] sm:$0xff] %vm3108, %v3021
        %3114 = vst.msk [vmem:[#allocation2 + $0x28] sm:$0xff] %vm3108, %v3023
        %3115 = vst.msk [vmem:[#allocation2 + $0x30] sm:$0xff] %vm3108, %v3025
        %3116 = vst.msk [vmem:[#allocation2 + $0x38] sm:$0xff] %vm3108, %v3027
        %3117 = vst.msk [vmem:[#allocation2 + $0x40] sm:$0xff] %vm3108, %v3029
        %3118 = vst.msk [vmem:[#allocation2 + $0x48] sm:$0xff] %vm3108, %v3031
        %3119 = vst.msk [vmem:[#allocation2 + $0x50] sm:$0xff] %vm3108, %v3033
        %3120 = vst.msk [vmem:[#allocation2 + $0x58] sm:$0xff] %vm3108, %v3035
        %3121 = vst.msk [vmem:[#allocation2 + $0x60] sm:$0xff] %vm3108, %v3037
        %3122 = vst.msk [vmem:[#allocation2 + $0x68] sm:$0xff] %vm3108, %v3039
        %3123 = vst.msk [vmem:[#allocation2 + $0x70] sm:$0xff] %vm3108, %v3041
        %3124 = vst.msk [vmem:[#allocation2 + $0x78] sm:$0xff] %vm3108, %v3043
        %3125 = vst.msk [vmem:[#allocation2 + $0x80] sm:$0xff] %vm3108, %v3045
        %3126 = vst.msk [vmem:[#allocation2 + $0x88] sm:$0xff] %vm3108, %v3047
        %3127 = vst.msk [vmem:[#allocation2 + $0x90] sm:$0xff] %vm3108, %v3049
        %3128 = vst.msk [vmem:[#allocation2 + $0x98] sm:$0xff] %vm3108, %v3051
        %3129 = vst.msk [vmem:[#allocation2 + $0xa0] sm:$0xff] %vm3108, %v3053
        %3130 = vst.msk [vmem:[#allocation2 + $0xa8] sm:$0xff] %vm3108, %v3055
        %3131 = vst.msk [vmem:[#allocation2 + $0xb0] sm:$0xff] %vm3108, %v3057
        %3132 = vst.msk [vmem:[#allocation2 + $0xb8] sm:$0xff] %vm3108, %v3059
        %3133 = vst.msk [vmem:[#allocation2 + $0xc0] sm:$0xff] %vm3108, %v3061
        %3134 = vst.msk [vmem:[#allocation2 + $0xc8] sm:$0xff] %vm3108, %v3063
        %3135 = vst.msk [vmem:[#allocation2 + $0xd0] sm:$0xff] %vm3108, %v3065
        %3136 = vst.msk [vmem:[#allocation2 + $0xd8] sm:$0xff] %vm3108, %v3067
        %3137 = vst.msk [vmem:[#allocation2 + $0xe0] sm:$0xff] %vm3108, %v3069
        %3138 = vst.msk [vmem:[#allocation2 + $0xe8] sm:$0xff] %vm3108, %v3071
        %3139 = vst.msk [vmem:[#allocation2 + $0xf0] sm:$0xff] %vm3108, %v3073
        %3140 = vst.msk [vmem:[#allocation2 + $0xf8] sm:$0xff] %vm3108, %v3075
        %v3141 = vld [vmem:[#allocation2] sm:$0xff]
        %v3142 = vld [vmem:[#allocation2 + $0x8] sm:$0xff]
        %v3143 = vld [vmem:[#allocation2 + $0x10] sm:$0xff]
        %v3144 = vld [vmem:[#allocation2 + $0x18] sm:$0xff]
        %v3145 = vld [vmem:[#allocation2 + $0x20] sm:$0xff]
        %v3146 = vld [vmem:[#allocation2 + $0x28] sm:$0xff]
        %v3147 = vld [vmem:[#allocation2 + $0x30] sm:$0xff]
        %v3148 = vld [vmem:[#allocation2 + $0x38] sm:$0xff]
        %v3149 = vld [vmem:[#allocation2 + $0x40] sm:$0xff]
        %v3150 = vld [vmem:[#allocation2 + $0x48] sm:$0xff]
        %v3151 = vld [vmem:[#allocation2 + $0x50] sm:$0xff]
        %v3152 = vld [vmem:[#allocation2 + $0x58] sm:$0xff]
        %v3153 = vld [vmem:[#allocation2 + $0x60] sm:$0xff]
        %v3154 = vld [vmem:[#allocation2 + $0x68] sm:$0xff]
        %v3155 = vld [vmem:[#allocation2 + $0x70] sm:$0xff]
        %v3156 = vld [vmem:[#allocation2 + $0x78] sm:$0xff]
        %v3157 = vld [vmem:[#allocation2 + $0x80] sm:$0xff]
        %v3158 = vld [vmem:[#allocation2 + $0x88] sm:$0xff]
        %v3159 = vld [vmem:[#allocation2 + $0x90] sm:$0xff]
        %v3160 = vld [vmem:[#allocation2 + $0x98] sm:$0xff]
        %v3161 = vld [vmem:[#allocation2 + $0xa0] sm:$0xff]
        %v3162 = vld [vmem:[#allocation2 + $0xa8] sm:$0xff]
        %v3163 = vld [vmem:[#allocation2 + $0xb0] sm:$0xff]
        %v3164 = vld [vmem:[#allocation2 + $0xb8] sm:$0xff]
        %v3165 = vld [vmem:[#allocation2 + $0xc0] sm:$0xff]
        %v3166 = vld [vmem:[#allocation2 + $0xc8] sm:$0xff]
        %v3167 = vld [vmem:[#allocation2 + $0xd0] sm:$0xff]
        %v3168 = vld [vmem:[#allocation2 + $0xd8] sm:$0xff]
        %v3169 = vld [vmem:[#allocation2 + $0xe0] sm:$0xff]
        %v3170 = vld [vmem:[#allocation2 + $0xe8] sm:$0xff]
        %v3171 = vld [vmem:[#allocation2 + $0xf0] sm:$0xff]
        %v3172 = vld [vmem:[#allocation2 + $0xf8] sm:$0xff]
        %v3173 = vld [vmem:[%s1] sm:$0xff]
        %v3174 = vld [vmem:[%s1 + $0x8] sm:$0xff]
        %v3175 = vld [vmem:[%s1 + $0x10] sm:$0xff]
        %v3176 = vld [vmem:[%s1 + $0x18] sm:$0xff]
        %v3177 = vld [vmem:[%s1 + $0x20] sm:$0xff]
        %v3178 = vld [vmem:[%s1 + $0x28] sm:$0xff]
        %v3179 = vld [vmem:[%s1 + $0x30] sm:$0xff]
        %v3180 = vld [vmem:[%s1 + $0x38] sm:$0xff]
        %v3181 = vld [vmem:[%s1 + $0x40] sm:$0xff]
        %v3182 = vld [vmem:[%s1 + $0x48] sm:$0xff]
        %v3183 = vld [vmem:[%s1 + $0x50] sm:$0xff]
        %v3184 = vld [vmem:[%s1 + $0x58] sm:$0xff]
        %v3185 = vld [vmem:[%s1 + $0x60] sm:$0xff]
        %v3186 = vld [vmem:[%s1 + $0x68] sm:$0xf]
        %v3187 = vld [vmem:[%s2] sm:$0x1]
        %v3189 = vperm.slane %v3187, 0
        %vm3191 = vcmask 883712
        %v3193 = vsel %vm3191, %v3141, 0
        %v3196 = vsel %vm3191, %v3142, 0
        %v3199 = vsel %vm3191, %v3143, 0
        %v3202 = vsel %vm3191, %v3144, 0
        %v3205 = vsel %vm3191, %v3145, 0
        %v3208 = vsel %vm3191, %v3146, 0
        %v3211 = vsel %vm3191, %v3147, 0
        %v3214 = vsel %vm3191, %v3148, 0
        %v3217 = vsel %vm3191, %v3149, 0
        %v3220 = vsel %vm3191, %v3150, 0
        %v3223 = vsel %vm3191, %v3151, 0
        %v3226 = vsel %vm3191, %v3152, 0
        %v3229 = vsel %vm3191, %v3153, 0
        %v3232 = vsel %vm3191, %v3154, 0
        %v3235 = vsel %vm3191, %v3155, 0
        %v3238 = vsel %vm3191, %v3156, 0
        %v3241 = vsel %vm3191, %v3157, 0
        %v3244 = vsel %vm3191, %v3158, 0
        %v3247 = vsel %vm3191, %v3159, 0
        %v3250 = vsel %vm3191, %v3160, 0
        %v3253 = vsel %vm3191, %v3161, 0
        %v3256 = vsel %vm3191, %v3162, 0
        %v3259 = vsel %vm3191, %v3163, 0
        %v3262 = vsel %vm3191, %v3164, 0
        %v3265 = vsel %vm3191, %v3165, 0
        %v3268 = vsel %vm3191, %v3166, 0
        %v3271 = vsel %vm3191, %v3167, 0
        %v3274 = vsel %vm3191, %v3168, 0
        %v3277 = vsel %vm3191, %v3169, 0
        %v3280 = vsel %vm3191, %v3170, 0
        %v3283 = vsel %vm3191, %v3171, 0
        %v3286 = vsel %vm3191, %v3172, 0
        %vm3288 = vcmask 1043456
        %v3290 = vsel %vm3288, %v3186, 0
        %3292 = vmatpush.msra.mxu0 0.0
        %3293 = vmatpush.msra.mxu0 0.0
        %3294 = vmatpush.msra.mxu0 %v3290
        %3295 = vmatpush.msra.mxu0 %v3185
        %3296 = vmatpush.msra.mxu0 %v3184
        %3297 = vmatpush.msra.mxu0 %v3183
        %3298 = vmatpush.msra.mxu0 %v3182
        %3299 = vmatpush.msra.mxu0 %v3181
        %3300 = vmatpush.msra.mxu0 %v3180
        %3301 = vmatpush.msra.mxu0 %v3179
        %3302 = vmatpush.msra.mxu0 %v3178
        %3303 = vmatpush.msra.mxu0 %v3177
        %3304 = vmatpush.msra.mxu0 %v3176
        %3305 = vmatpush.msra.mxu0 %v3175
        %3306 = vmatpush.msra.mxu0 %v3174
        %3307 = vmatpush.msra.mxu0 %v3173
        %3308 = vmatmul.f32.gmra.mxu0 %v3193
        %v3309 = vpop.f32.mrf.mxu0
        %v3310 = vadd.f32 %v3189, %v3309
        %3311 = vmatmul.f32.gmra.mxu0 %v3196
        %v3312 = vpop.f32.mrf.mxu0
        %v3313 = vadd.f32 %v3189, %v3312
        %3314 = vmatmul.f32.gmra.mxu0 %v3199
        %v3315 = vpop.f32.mrf.mxu0
        %v3316 = vadd.f32 %v3189, %v3315
        %3317 = vmatmul.f32.gmra.mxu0 %v3202
        %v3318 = vpop.f32.mrf.mxu0
        %v3319 = vadd.f32 %v3189, %v3318
        %3320 = vmatmul.f32.gmra.mxu0 %v3205
        %v3321 = vpop.f32.mrf.mxu0
        %v3322 = vadd.f32 %v3189, %v3321
        %3323 = vmatmul.f32.gmra.mxu0 %v3208
        %v3324 = vpop.f32.mrf.mxu0
        %v3325 = vadd.f32 %v3189, %v3324
        %3326 = vmatmul.f32.gmra.mxu0 %v3211
        %v3327 = vpop.f32.mrf.mxu0
        %v3328 = vadd.f32 %v3189, %v3327
        %3329 = vmatmul.f32.gmra.mxu0 %v3214
        %v3330 = vpop.f32.mrf.mxu0
        %v3331 = vadd.f32 %v3189, %v3330
        %3332 = vmatmul.f32.gmra.mxu0 %v3217
        %v3333 = vpop.f32.mrf.mxu0
        %v3334 = vadd.f32 %v3189, %v3333
        %3335 = vmatmul.f32.gmra.mxu0 %v3220
        %v3336 = vpop.f32.mrf.mxu0
        %v3337 = vadd.f32 %v3189, %v3336
        %3338 = vmatmul.f32.gmra.mxu0 %v3223
        %v3339 = vpop.f32.mrf.mxu0
        %v3340 = vadd.f32 %v3189, %v3339
        %3341 = vmatmul.f32.gmra.mxu0 %v3226
        %v3342 = vpop.f32.mrf.mxu0
        %v3343 = vadd.f32 %v3189, %v3342
        %3344 = vmatmul.f32.gmra.mxu0 %v3229
        %v3345 = vpop.f32.mrf.mxu0
        %v3346 = vadd.f32 %v3189, %v3345
        %3347 = vmatmul.f32.gmra.mxu0 %v3232
        %v3348 = vpop.f32.mrf.mxu0
        %v3349 = vadd.f32 %v3189, %v3348
        %3350 = vmatmul.f32.gmra.mxu0 %v3235
        %v3351 = vpop.f32.mrf.mxu0
        %v3352 = vadd.f32 %v3189, %v3351
        %3353 = vmatmul.f32.gmra.mxu0 %v3238
        %v3354 = vpop.f32.mrf.mxu0
        %v3355 = vadd.f32 %v3189, %v3354
        %3356 = vmatmul.f32.gmra.mxu0 %v3241
        %v3357 = vpop.f32.mrf.mxu0
        %v3358 = vadd.f32 %v3189, %v3357
        %3359 = vmatmul.f32.gmra.mxu0 %v3244
        %v3360 = vpop.f32.mrf.mxu0
        %v3361 = vadd.f32 %v3189, %v3360
        %3362 = vmatmul.f32.gmra.mxu0 %v3247
        %v3363 = vpop.f32.mrf.mxu0
        %v3364 = vadd.f32 %v3189, %v3363
        %3365 = vmatmul.f32.gmra.mxu0 %v3250
        %v3366 = vpop.f32.mrf.mxu0
        %v3367 = vadd.f32 %v3189, %v3366
        %3368 = vmatmul.f32.gmra.mxu0 %v3253
        %v3369 = vpop.f32.mrf.mxu0
        %v3370 = vadd.f32 %v3189, %v3369
        %3371 = vmatmul.f32.gmra.mxu0 %v3256
        %v3372 = vpop.f32.mrf.mxu0
        %v3373 = vadd.f32 %v3189, %v3372
        %3374 = vmatmul.f32.gmra.mxu0 %v3259
        %v3375 = vpop.f32.mrf.mxu0
        %v3376 = vadd.f32 %v3189, %v3375
        %3377 = vmatmul.f32.gmra.mxu0 %v3262
        %v3378 = vpop.f32.mrf.mxu0
        %v3379 = vadd.f32 %v3189, %v3378
        %3380 = vmatmul.f32.gmra.mxu0 %v3265
        %v3381 = vpop.f32.mrf.mxu0
        %v3382 = vadd.f32 %v3189, %v3381
        %3383 = vmatmul.f32.gmra.mxu0 %v3268
        %v3384 = vpop.f32.mrf.mxu0
        %v3385 = vadd.f32 %v3189, %v3384
        %3386 = vmatmul.f32.gmra.mxu0 %v3271
        %v3387 = vpop.f32.mrf.mxu0
        %v3388 = vadd.f32 %v3189, %v3387
        %3389 = vmatmul.f32.gmra.mxu0 %v3274
        %v3390 = vpop.f32.mrf.mxu0
        %v3391 = vadd.f32 %v3189, %v3390
        %3392 = vmatmul.f32.gmra.mxu0 %v3277
        %v3393 = vpop.f32.mrf.mxu0
        %v3394 = vadd.f32 %v3189, %v3393
        %3395 = vmatmul.f32.gmra.mxu0 %v3280
        %v3396 = vpop.f32.mrf.mxu0
        %v3397 = vadd.f32 %v3189, %v3396
        %3398 = vmatmul.f32.gmra.mxu0 %v3283
        %v3399 = vpop.f32.mrf.mxu0
        %v3400 = vadd.f32 %v3189, %v3399
        %3401 = vmatmul.f32.gmra.mxu0 %v3286
        %v3402 = vpop.f32.mrf.mxu0
        %v3403 = vadd.f32 %v3189, %v3402
        %3404 = vdwg.mxu0
        %v3405 = vlaneseq
        %v3406 = vand.u32 %v3405, 127
        %vm3407 = vcmp.lt.s32.totalorder %v3406, 24
        %v3408 = vxor.u32 %v3310, 2147483648
        %v3409 = vxor.u32 %v3313, 2147483648
        %v3410 = vxor.u32 %v3316, 2147483648
        %v3411 = vxor.u32 %v3319, 2147483648
        %v3412 = vxor.u32 %v3322, 2147483648
        %v3413 = vxor.u32 %v3325, 2147483648
        %v3414 = vxor.u32 %v3328, 2147483648
        %v3415 = vxor.u32 %v3331, 2147483648
        %v3416 = vxor.u32 %v3334, 2147483648
        %v3417 = vxor.u32 %v3337, 2147483648
        %v3418 = vxor.u32 %v3340, 2147483648
        %v3419 = vxor.u32 %v3343, 2147483648
        %v3420 = vxor.u32 %v3346, 2147483648
        %v3421 = vxor.u32 %v3349, 2147483648
        %v3422 = vxor.u32 %v3352, 2147483648
        %v3423 = vxor.u32 %v3355, 2147483648
        %v3424 = vxor.u32 %v3358, 2147483648
        %v3425 = vxor.u32 %v3361, 2147483648
        %v3426 = vxor.u32 %v3364, 2147483648
        %v3427 = vxor.u32 %v3367, 2147483648
        %v3428 = vxor.u32 %v3370, 2147483648
        %v3429 = vxor.u32 %v3373, 2147483648
        %v3430 = vxor.u32 %v3376, 2147483648
        %v3431 = vxor.u32 %v3379, 2147483648
        %v3432 = vxor.u32 %v3382, 2147483648
        %v3433 = vxor.u32 %v3385, 2147483648
        %v3434 = vxor.u32 %v3388, 2147483648
        %v3435 = vxor.u32 %v3391, 2147483648
        %v3436 = vxor.u32 %v3394, 2147483648
        %v3437 = vxor.u32 %v3397, 2147483648
        %v3438 = vxor.u32 %v3400, 2147483648
        %v3439 = vxor.u32 %v3403, 2147483648
        %v3440 = vmul.f32 %v3408, 1.442695
        %v3441 = vpow.pop %v3440
        %v3442 = vmul.f32 %v3409, 1.442695
        %v3443 = vpow.pop %v3442
        %v3444 = vmul.f32 %v3410, 1.442695
        %v3445 = vpow.pop %v3444
        %v3446 = vmul.f32 %v3411, 1.442695
        %v3447 = vpow.pop %v3446
        %v3448 = vmul.f32 %v3412, 1.442695
        %v3449 = vpow.pop %v3448
        %v3450 = vmul.f32 %v3413, 1.442695
        %v3451 = vpow.pop %v3450
        %v3452 = vmul.f32 %v3414, 1.442695
        %v3453 = vpow.pop %v3452
        %v3454 = vmul.f32 %v3415, 1.442695
        %v3455 = vpow.pop %v3454
        %v3456 = vmul.f32 %v3416, 1.442695
        %v3457 = vpow.pop %v3456
        %v3458 = vmul.f32 %v3417, 1.442695
        %v3459 = vpow.pop %v3458
        %v3460 = vmul.f32 %v3418, 1.442695
        %v3461 = vpow.pop %v3460
        %v3462 = vmul.f32 %v3419, 1.442695
        %v3463 = vpow.pop %v3462
        %v3464 = vmul.f32 %v3420, 1.442695
        %v3465 = vpow.pop %v3464
        %v3466 = vmul.f32 %v3421, 1.442695
        %v3467 = vpow.pop %v3466
        %v3468 = vmul.f32 %v3422, 1.442695
        %v3469 = vpow.pop %v3468
        %v3470 = vmul.f32 %v3423, 1.442695
        %v3471 = vpow.pop %v3470
        %v3472 = vmul.f32 %v3424, 1.442695
        %v3473 = vpow.pop %v3472
        %v3474 = vmul.f32 %v3425, 1.442695
        %v3475 = vpow.pop %v3474
        %v3476 = vmul.f32 %v3426, 1.442695
        %v3477 = vpow.pop %v3476
        %v3478 = vmul.f32 %v3427, 1.442695
        %v3479 = vpow.pop %v3478
        %v3480 = vmul.f32 %v3428, 1.442695
        %v3481 = vpow.pop %v3480
        %v3482 = vmul.f32 %v3429, 1.442695
        %v3483 = vpow.pop %v3482
        %v3484 = vmul.f32 %v3430, 1.442695
        %v3485 = vpow.pop %v3484
        %v3486 = vmul.f32 %v3431, 1.442695
        %v3487 = vpow.pop %v3486
        %v3488 = vmul.f32 %v3432, 1.442695
        %v3489 = vpow.pop %v3488
        %v3490 = vmul.f32 %v3433, 1.442695
        %v3491 = vpow.pop %v3490
        %v3492 = vmul.f32 %v3434, 1.442695
        %v3493 = vpow.pop %v3492
        %v3494 = vmul.f32 %v3435, 1.442695
        %v3495 = vpow.pop %v3494
        %v3496 = vmul.f32 %v3436, 1.442695
        %v3497 = vpow.pop %v3496
        %v3498 = vmul.f32 %v3437, 1.442695
        %v3499 = vpow.pop %v3498
        %v3500 = vmul.f32 %v3438, 1.442695
        %v3501 = vpow.pop %v3500
        %v3502 = vmul.f32 %v3439, 1.442695
        %v3503 = vpow.pop %v3502
        %v3504 = vadd.f32 %v3441, 1.0
        %v3505 = vadd.f32 %v3443, 1.0
        %v3506 = vadd.f32 %v3445, 1.0
        %v3507 = vadd.f32 %v3447, 1.0
        %v3508 = vadd.f32 %v3449, 1.0
        %v3509 = vadd.f32 %v3451, 1.0
        %v3510 = vadd.f32 %v3453, 1.0
        %v3511 = vadd.f32 %v3455, 1.0
        %v3512 = vadd.f32 %v3457, 1.0
        %v3513 = vadd.f32 %v3459, 1.0
        %v3514 = vadd.f32 %v3461, 1.0
        %v3515 = vadd.f32 %v3463, 1.0
        %v3516 = vadd.f32 %v3465, 1.0
        %v3517 = vadd.f32 %v3467, 1.0
        %v3518 = vadd.f32 %v3469, 1.0
        %v3519 = vadd.f32 %v3471, 1.0
        %v3520 = vadd.f32 %v3473, 1.0
        %v3521 = vadd.f32 %v3475, 1.0
        %v3522 = vadd.f32 %v3477, 1.0
        %v3523 = vadd.f32 %v3479, 1.0
        %v3524 = vadd.f32 %v3481, 1.0
        %v3525 = vadd.f32 %v3483, 1.0
        %v3526 = vadd.f32 %v3485, 1.0
        %v3527 = vadd.f32 %v3487, 1.0
        %v3528 = vadd.f32 %v3489, 1.0
        %v3529 = vadd.f32 %v3491, 1.0
        %v3530 = vadd.f32 %v3493, 1.0
        %v3531 = vadd.f32 %v3495, 1.0
        %v3532 = vadd.f32 %v3497, 1.0
        %v3533 = vadd.f32 %v3499, 1.0
        %v3534 = vadd.f32 %v3501, 1.0
        %v3535 = vadd.f32 %v3503, 1.0
        %v3536 = vrcp.pop %v3504
        %v3537 = vmul.f32 %v3504, %v3536
        %v3538 = vsub.f32 1.0, %v3537
        %v3539 = vmul.f32 %v3536, %v3538
        %v3540 = vadd.f32 %v3536, %v3539
        %vm3541 = vweird.f32 %v3504
        %vm3542 = vweird.f32 %v3536
        %vm3543 = vmor %vm3541, %vm3542
        %v3544 = vsel %vm3543, %v3536, %v3540
        %v3545 = vand.u32 2147483647, %v3504
        %vm3546 = vcmp.eq.f32.partialorder %v3545, 8.507059e+37
        %v3547 = vand.u32 %v3504, 2147483648
        %v3548 = vor.u32 1.1754944e-38, %v3547
        %v3549 = vsel %vm3546, %v3548, %v3544
        %v3550 = vmul.f32 1.0, %v3549
        %v3551 = vrcp.pop %v3505
        %v3552 = vmul.f32 %v3505, %v3551
        %v3553 = vsub.f32 1.0, %v3552
        %v3554 = vmul.f32 %v3551, %v3553
        %v3555 = vadd.f32 %v3551, %v3554
        %vm3556 = vweird.f32 %v3505
        %vm3557 = vweird.f32 %v3551
        %vm3558 = vmor %vm3556, %vm3557
        %v3559 = vsel %vm3558, %v3551, %v3555
        %v3560 = vand.u32 2147483647, %v3505
        %vm3561 = vcmp.eq.f32.partialorder %v3560, 8.507059e+37
        %v3562 = vand.u32 %v3505, 2147483648
        %v3563 = vor.u32 1.1754944e-38, %v3562
        %v3564 = vsel %vm3561, %v3563, %v3559
        %v3565 = vmul.f32 1.0, %v3564
        %v3566 = vrcp.pop %v3506
        %v3567 = vmul.f32 %v3506, %v3566
        %v3568 = vsub.f32 1.0, %v3567
        %v3569 = vmul.f32 %v3566, %v3568
        %v3570 = vadd.f32 %v3566, %v3569
        %vm3571 = vweird.f32 %v3506
        %vm3572 = vweird.f32 %v3566
        %vm3573 = vmor %vm3571, %vm3572
        %v3574 = vsel %vm3573, %v3566, %v3570
        %v3575 = vand.u32 2147483647, %v3506
        %vm3576 = vcmp.eq.f32.partialorder %v3575, 8.507059e+37
        %v3577 = vand.u32 %v3506, 2147483648
        %v3578 = vor.u32 1.1754944e-38, %v3577
        %v3579 = vsel %vm3576, %v3578, %v3574
        %v3580 = vmul.f32 1.0, %v3579
        %v3581 = vrcp.pop %v3507
        %v3582 = vmul.f32 %v3507, %v3581
        %v3583 = vsub.f32 1.0, %v3582
        %v3584 = vmul.f32 %v3581, %v3583
        %v3585 = vadd.f32 %v3581, %v3584
        %vm3586 = vweird.f32 %v3507
        %vm3587 = vweird.f32 %v3581
        %vm3588 = vmor %vm3586, %vm3587
        %v3589 = vsel %vm3588, %v3581, %v3585
        %v3590 = vand.u32 2147483647, %v3507
        %vm3591 = vcmp.eq.f32.partialorder %v3590, 8.507059e+37
        %v3592 = vand.u32 %v3507, 2147483648
        %v3593 = vor.u32 1.1754944e-38, %v3592
        %v3594 = vsel %vm3591, %v3593, %v3589
        %v3595 = vmul.f32 1.0, %v3594
        %v3596 = vrcp.pop %v3508
        %v3597 = vmul.f32 %v3508, %v3596
        %v3598 = vsub.f32 1.0, %v3597
        %v3599 = vmul.f32 %v3596, %v3598
        %v3600 = vadd.f32 %v3596, %v3599
        %vm3601 = vweird.f32 %v3508
        %vm3602 = vweird.f32 %v3596
        %vm3603 = vmor %vm3601, %vm3602
        %v3604 = vsel %vm3603, %v3596, %v3600
        %v3605 = vand.u32 2147483647, %v3508
        %vm3606 = vcmp.eq.f32.partialorder %v3605, 8.507059e+37
        %v3607 = vand.u32 %v3508, 2147483648
        %v3608 = vor.u32 1.1754944e-38, %v3607
        %v3609 = vsel %vm3606, %v3608, %v3604
        %v3610 = vmul.f32 1.0, %v3609
        %v3611 = vrcp.pop %v3509
        %v3612 = vmul.f32 %v3509, %v3611
        %v3613 = vsub.f32 1.0, %v3612
        %v3614 = vmul.f32 %v3611, %v3613
        %v3615 = vadd.f32 %v3611, %v3614
        %vm3616 = vweird.f32 %v3509
        %vm3617 = vweird.f32 %v3611
        %vm3618 = vmor %vm3616, %vm3617
        %v3619 = vsel %vm3618, %v3611, %v3615
        %v3620 = vand.u32 2147483647, %v3509
        %vm3621 = vcmp.eq.f32.partialorder %v3620, 8.507059e+37
        %v3622 = vand.u32 %v3509, 2147483648
        %v3623 = vor.u32 1.1754944e-38, %v3622
        %v3624 = vsel %vm3621, %v3623, %v3619
        %v3625 = vmul.f32 1.0, %v3624
        %v3626 = vrcp.pop %v3510
        %v3627 = vmul.f32 %v3510, %v3626
        %v3628 = vsub.f32 1.0, %v3627
        %v3629 = vmul.f32 %v3626, %v3628
        %v3630 = vadd.f32 %v3626, %v3629
        %vm3631 = vweird.f32 %v3510
        %vm3632 = vweird.f32 %v3626
        %vm3633 = vmor %vm3631, %vm3632
        %v3634 = vsel %vm3633, %v3626, %v3630
        %v3635 = vand.u32 2147483647, %v3510
        %vm3636 = vcmp.eq.f32.partialorder %v3635, 8.507059e+37
        %v3637 = vand.u32 %v3510, 2147483648
        %v3638 = vor.u32 1.1754944e-38, %v3637
        %v3639 = vsel %vm3636, %v3638, %v3634
        %v3640 = vmul.f32 1.0, %v3639
        %v3641 = vrcp.pop %v3511
        %v3642 = vmul.f32 %v3511, %v3641
        %v3643 = vsub.f32 1.0, %v3642
        %v3644 = vmul.f32 %v3641, %v3643
        %v3645 = vadd.f32 %v3641, %v3644
        %vm3646 = vweird.f32 %v3511
        %vm3647 = vweird.f32 %v3641
        %vm3648 = vmor %vm3646, %vm3647
        %v3649 = vsel %vm3648, %v3641, %v3645
        %v3650 = vand.u32 2147483647, %v3511
        %vm3651 = vcmp.eq.f32.partialorder %v3650, 8.507059e+37
        %v3652 = vand.u32 %v3511, 2147483648
        %v3653 = vor.u32 1.1754944e-38, %v3652
        %v3654 = vsel %vm3651, %v3653, %v3649
        %v3655 = vmul.f32 1.0, %v3654
        %v3656 = vrcp.pop %v3512
        %v3657 = vmul.f32 %v3512, %v3656
        %v3658 = vsub.f32 1.0, %v3657
        %v3659 = vmul.f32 %v3656, %v3658
        %v3660 = vadd.f32 %v3656, %v3659
        %vm3661 = vweird.f32 %v3512
        %vm3662 = vweird.f32 %v3656
        %vm3663 = vmor %vm3661, %vm3662
        %v3664 = vsel %vm3663, %v3656, %v3660
        %v3665 = vand.u32 2147483647, %v3512
        %vm3666 = vcmp.eq.f32.partialorder %v3665, 8.507059e+37
        %v3667 = vand.u32 %v3512, 2147483648
        %v3668 = vor.u32 1.1754944e-38, %v3667
        %v3669 = vsel %vm3666, %v3668, %v3664
        %v3670 = vmul.f32 1.0, %v3669
        %v3671 = vrcp.pop %v3513
        %v3672 = vmul.f32 %v3513, %v3671
        %v3673 = vsub.f32 1.0, %v3672
        %v3674 = vmul.f32 %v3671, %v3673
        %v3675 = vadd.f32 %v3671, %v3674
        %vm3676 = vweird.f32 %v3513
        %vm3677 = vweird.f32 %v3671
        %vm3678 = vmor %vm3676, %vm3677
        %v3679 = vsel %vm3678, %v3671, %v3675
        %v3680 = vand.u32 2147483647, %v3513
        %vm3681 = vcmp.eq.f32.partialorder %v3680, 8.507059e+37
        %v3682 = vand.u32 %v3513, 2147483648
        %v3683 = vor.u32 1.1754944e-38, %v3682
        %v3684 = vsel %vm3681, %v3683, %v3679
        %v3685 = vmul.f32 1.0, %v3684
        %v3686 = vrcp.pop %v3514
        %v3687 = vmul.f32 %v3514, %v3686
        %v3688 = vsub.f32 1.0, %v3687
        %v3689 = vmul.f32 %v3686, %v3688
        %v3690 = vadd.f32 %v3686, %v3689
        %vm3691 = vweird.f32 %v3514
        %vm3692 = vweird.f32 %v3686
        %vm3693 = vmor %vm3691, %vm3692
        %v3694 = vsel %vm3693, %v3686, %v3690
        %v3695 = vand.u32 2147483647, %v3514
        %vm3696 = vcmp.eq.f32.partialorder %v3695, 8.507059e+37
        %v3697 = vand.u32 %v3514, 2147483648
        %v3698 = vor.u32 1.1754944e-38, %v3697
        %v3699 = vsel %vm3696, %v3698, %v3694
        %v3700 = vmul.f32 1.0, %v3699
        %v3701 = vrcp.pop %v3515
        %v3702 = vmul.f32 %v3515, %v3701
        %v3703 = vsub.f32 1.0, %v3702
        %v3704 = vmul.f32 %v3701, %v3703
        %v3705 = vadd.f32 %v3701, %v3704
        %vm3706 = vweird.f32 %v3515
        %vm3707 = vweird.f32 %v3701
        %vm3708 = vmor %vm3706, %vm3707
        %v3709 = vsel %vm3708, %v3701, %v3705
        %v3710 = vand.u32 2147483647, %v3515
        %vm3711 = vcmp.eq.f32.partialorder %v3710, 8.507059e+37
        %v3712 = vand.u32 %v3515, 2147483648
        %v3713 = vor.u32 1.1754944e-38, %v3712
        %v3714 = vsel %vm3711, %v3713, %v3709
        %v3715 = vmul.f32 1.0, %v3714
        %v3716 = vrcp.pop %v3516
        %v3717 = vmul.f32 %v3516, %v3716
        %v3718 = vsub.f32 1.0, %v3717
        %v3719 = vmul.f32 %v3716, %v3718
        %v3720 = vadd.f32 %v3716, %v3719
        %vm3721 = vweird.f32 %v3516
        %vm3722 = vweird.f32 %v3716
        %vm3723 = vmor %vm3721, %vm3722
        %v3724 = vsel %vm3723, %v3716, %v3720
        %v3725 = vand.u32 2147483647, %v3516
        %vm3726 = vcmp.eq.f32.partialorder %v3725, 8.507059e+37
        %v3727 = vand.u32 %v3516, 2147483648
        %v3728 = vor.u32 1.1754944e-38, %v3727
        %v3729 = vsel %vm3726, %v3728, %v3724
        %v3730 = vmul.f32 1.0, %v3729
        %v3731 = vrcp.pop %v3517
        %v3732 = vmul.f32 %v3517, %v3731
        %v3733 = vsub.f32 1.0, %v3732
        %v3734 = vmul.f32 %v3731, %v3733
        %v3735 = vadd.f32 %v3731, %v3734
        %vm3736 = vweird.f32 %v3517
        %vm3737 = vweird.f32 %v3731
        %vm3738 = vmor %vm3736, %vm3737
        %v3739 = vsel %vm3738, %v3731, %v3735
        %v3740 = vand.u32 2147483647, %v3517
        %vm3741 = vcmp.eq.f32.partialorder %v3740, 8.507059e+37
        %v3742 = vand.u32 %v3517, 2147483648
        %v3743 = vor.u32 1.1754944e-38, %v3742
        %v3744 = vsel %vm3741, %v3743, %v3739
        %v3745 = vmul.f32 1.0, %v3744
        %v3746 = vrcp.pop %v3518
        %v3747 = vmul.f32 %v3518, %v3746
        %v3748 = vsub.f32 1.0, %v3747
        %v3749 = vmul.f32 %v3746, %v3748
        %v3750 = vadd.f32 %v3746, %v3749
        %vm3751 = vweird.f32 %v3518
        %vm3752 = vweird.f32 %v3746
        %vm3753 = vmor %vm3751, %vm3752
        %v3754 = vsel %vm3753, %v3746, %v3750
        %v3755 = vand.u32 2147483647, %v3518
        %vm3756 = vcmp.eq.f32.partialorder %v3755, 8.507059e+37
        %v3757 = vand.u32 %v3518, 2147483648
        %v3758 = vor.u32 1.1754944e-38, %v3757
        %v3759 = vsel %vm3756, %v3758, %v3754
        %v3760 = vmul.f32 1.0, %v3759
        %v3761 = vrcp.pop %v3519
        %v3762 = vmul.f32 %v3519, %v3761
        %v3763 = vsub.f32 1.0, %v3762
        %v3764 = vmul.f32 %v3761, %v3763
        %v3765 = vadd.f32 %v3761, %v3764
        %vm3766 = vweird.f32 %v3519
        %vm3767 = vweird.f32 %v3761
        %vm3768 = vmor %vm3766, %vm3767
        %v3769 = vsel %vm3768, %v3761, %v3765
        %v3770 = vand.u32 2147483647, %v3519
        %vm3771 = vcmp.eq.f32.partialorder %v3770, 8.507059e+37
        %v3772 = vand.u32 %v3519, 2147483648
        %v3773 = vor.u32 1.1754944e-38, %v3772
        %v3774 = vsel %vm3771, %v3773, %v3769
        %v3775 = vmul.f32 1.0, %v3774
        %v3776 = vrcp.pop %v3520
        %v3777 = vmul.f32 %v3520, %v3776
        %v3778 = vsub.f32 1.0, %v3777
        %v3779 = vmul.f32 %v3776, %v3778
        %v3780 = vadd.f32 %v3776, %v3779
        %vm3781 = vweird.f32 %v3520
        %vm3782 = vweird.f32 %v3776
        %vm3783 = vmor %vm3781, %vm3782
        %v3784 = vsel %vm3783, %v3776, %v3780
        %v3785 = vand.u32 2147483647, %v3520
        %vm3786 = vcmp.eq.f32.partialorder %v3785, 8.507059e+37
        %v3787 = vand.u32 %v3520, 2147483648
        %v3788 = vor.u32 1.1754944e-38, %v3787
        %v3789 = vsel %vm3786, %v3788, %v3784
        %v3790 = vmul.f32 1.0, %v3789
        %v3791 = vrcp.pop %v3521
        %v3792 = vmul.f32 %v3521, %v3791
        %v3793 = vsub.f32 1.0, %v3792
        %v3794 = vmul.f32 %v3791, %v3793
        %v3795 = vadd.f32 %v3791, %v3794
        %vm3796 = vweird.f32 %v3521
        %vm3797 = vweird.f32 %v3791
        %vm3798 = vmor %vm3796, %vm3797
        %v3799 = vsel %vm3798, %v3791, %v3795
        %v3800 = vand.u32 2147483647, %v3521
        %vm3801 = vcmp.eq.f32.partialorder %v3800, 8.507059e+37
        %v3802 = vand.u32 %v3521, 2147483648
        %v3803 = vor.u32 1.1754944e-38, %v3802
        %v3804 = vsel %vm3801, %v3803, %v3799
        %v3805 = vmul.f32 1.0, %v3804
        %v3806 = vrcp.pop %v3522
        %v3807 = vmul.f32 %v3522, %v3806
        %v3808 = vsub.f32 1.0, %v3807
        %v3809 = vmul.f32 %v3806, %v3808
        %v3810 = vadd.f32 %v3806, %v3809
        %vm3811 = vweird.f32 %v3522
        %vm3812 = vweird.f32 %v3806
        %vm3813 = vmor %vm3811, %vm3812
        %v3814 = vsel %vm3813, %v3806, %v3810
        %v3815 = vand.u32 2147483647, %v3522
        %vm3816 = vcmp.eq.f32.partialorder %v3815, 8.507059e+37
        %v3817 = vand.u32 %v3522, 2147483648
        %v3818 = vor.u32 1.1754944e-38, %v3817
        %v3819 = vsel %vm3816, %v3818, %v3814
        %v3820 = vmul.f32 1.0, %v3819
        %v3821 = vrcp.pop %v3523
        %v3822 = vmul.f32 %v3523, %v3821
        %v3823 = vsub.f32 1.0, %v3822
        %v3824 = vmul.f32 %v3821, %v3823
        %v3825 = vadd.f32 %v3821, %v3824
        %vm3826 = vweird.f32 %v3523
        %vm3827 = vweird.f32 %v3821
        %vm3828 = vmor %vm3826, %vm3827
        %v3829 = vsel %vm3828, %v3821, %v3825
        %v3830 = vand.u32 2147483647, %v3523
        %vm3831 = vcmp.eq.f32.partialorder %v3830, 8.507059e+37
        %v3832 = vand.u32 %v3523, 2147483648
        %v3833 = vor.u32 1.1754944e-38, %v3832
        %v3834 = vsel %vm3831, %v3833, %v3829
        %v3835 = vmul.f32 1.0, %v3834
        %v3836 = vrcp.pop %v3524
        %v3837 = vmul.f32 %v3524, %v3836
        %v3838 = vsub.f32 1.0, %v3837
        %v3839 = vmul.f32 %v3836, %v3838
        %v3840 = vadd.f32 %v3836, %v3839
        %vm3841 = vweird.f32 %v3524
        %vm3842 = vweird.f32 %v3836
        %vm3843 = vmor %vm3841, %vm3842
        %v3844 = vsel %vm3843, %v3836, %v3840
        %v3845 = vand.u32 2147483647, %v3524
        %vm3846 = vcmp.eq.f32.partialorder %v3845, 8.507059e+37
        %v3847 = vand.u32 %v3524, 2147483648
        %v3848 = vor.u32 1.1754944e-38, %v3847
        %v3849 = vsel %vm3846, %v3848, %v3844
        %v3850 = vmul.f32 1.0, %v3849
        %v3851 = vrcp.pop %v3525
        %v3852 = vmul.f32 %v3525, %v3851
        %v3853 = vsub.f32 1.0, %v3852
        %v3854 = vmul.f32 %v3851, %v3853
        %v3855 = vadd.f32 %v3851, %v3854
        %vm3856 = vweird.f32 %v3525
        %vm3857 = vweird.f32 %v3851
        %vm3858 = vmor %vm3856, %vm3857
        %v3859 = vsel %vm3858, %v3851, %v3855
        %v3860 = vand.u32 2147483647, %v3525
        %vm3861 = vcmp.eq.f32.partialorder %v3860, 8.507059e+37
        %v3862 = vand.u32 %v3525, 2147483648
        %v3863 = vor.u32 1.1754944e-38, %v3862
        %v3864 = vsel %vm3861, %v3863, %v3859
        %v3865 = vmul.f32 1.0, %v3864
        %v3866 = vrcp.pop %v3526
        %v3867 = vmul.f32 %v3526, %v3866
        %v3868 = vsub.f32 1.0, %v3867
        %v3869 = vmul.f32 %v3866, %v3868
        %v3870 = vadd.f32 %v3866, %v3869
        %vm3871 = vweird.f32 %v3526
        %vm3872 = vweird.f32 %v3866
        %vm3873 = vmor %vm3871, %vm3872
        %v3874 = vsel %vm3873, %v3866, %v3870
        %v3875 = vand.u32 2147483647, %v3526
        %vm3876 = vcmp.eq.f32.partialorder %v3875, 8.507059e+37
        %v3877 = vand.u32 %v3526, 2147483648
        %v3878 = vor.u32 1.1754944e-38, %v3877
        %v3879 = vsel %vm3876, %v3878, %v3874
        %v3880 = vmul.f32 1.0, %v3879
        %v3881 = vrcp.pop %v3527
        %v3882 = vmul.f32 %v3527, %v3881
        %v3883 = vsub.f32 1.0, %v3882
        %v3884 = vmul.f32 %v3881, %v3883
        %v3885 = vadd.f32 %v3881, %v3884
        %vm3886 = vweird.f32 %v3527
        %vm3887 = vweird.f32 %v3881
        %vm3888 = vmor %vm3886, %vm3887
        %v3889 = vsel %vm3888, %v3881, %v3885
        %v3890 = vand.u32 2147483647, %v3527
        %vm3891 = vcmp.eq.f32.partialorder %v3890, 8.507059e+37
        %v3892 = vand.u32 %v3527, 2147483648
        %v3893 = vor.u32 1.1754944e-38, %v3892
        %v3894 = vsel %vm3891, %v3893, %v3889
        %v3895 = vmul.f32 1.0, %v3894
        %v3896 = vrcp.pop %v3528
        %v3897 = vmul.f32 %v3528, %v3896
        %v3898 = vsub.f32 1.0, %v3897
        %v3899 = vmul.f32 %v3896, %v3898
        %v3900 = vadd.f32 %v3896, %v3899
        %vm3901 = vweird.f32 %v3528
        %vm3902 = vweird.f32 %v3896
        %vm3903 = vmor %vm3901, %vm3902
        %v3904 = vsel %vm3903, %v3896, %v3900
        %v3905 = vand.u32 2147483647, %v3528
        %vm3906 = vcmp.eq.f32.partialorder %v3905, 8.507059e+37
        %v3907 = vand.u32 %v3528, 2147483648
        %v3908 = vor.u32 1.1754944e-38, %v3907
        %v3909 = vsel %vm3906, %v3908, %v3904
        %v3910 = vmul.f32 1.0, %v3909
        %v3911 = vrcp.pop %v3529
        %v3912 = vmul.f32 %v3529, %v3911
        %v3913 = vsub.f32 1.0, %v3912
        %v3914 = vmul.f32 %v3911, %v3913
        %v3915 = vadd.f32 %v3911, %v3914
        %vm3916 = vweird.f32 %v3529
        %vm3917 = vweird.f32 %v3911
        %vm3918 = vmor %vm3916, %vm3917
        %v3919 = vsel %vm3918, %v3911, %v3915
        %v3920 = vand.u32 2147483647, %v3529
        %vm3921 = vcmp.eq.f32.partialorder %v3920, 8.507059e+37
        %v3922 = vand.u32 %v3529, 2147483648
        %v3923 = vor.u32 1.1754944e-38, %v3922
        %v3924 = vsel %vm3921, %v3923, %v3919
        %v3925 = vmul.f32 1.0, %v3924
        %v3926 = vrcp.pop %v3530
        %v3927 = vmul.f32 %v3530, %v3926
        %v3928 = vsub.f32 1.0, %v3927
        %v3929 = vmul.f32 %v3926, %v3928
        %v3930 = vadd.f32 %v3926, %v3929
        %vm3931 = vweird.f32 %v3530
        %vm3932 = vweird.f32 %v3926
        %vm3933 = vmor %vm3931, %vm3932
        %v3934 = vsel %vm3933, %v3926, %v3930
        %v3935 = vand.u32 2147483647, %v3530
        %vm3936 = vcmp.eq.f32.partialorder %v3935, 8.507059e+37
        %v3937 = vand.u32 %v3530, 2147483648
        %v3938 = vor.u32 1.1754944e-38, %v3937
        %v3939 = vsel %vm3936, %v3938, %v3934
        %v3940 = vmul.f32 1.0, %v3939
        %v3941 = vrcp.pop %v3531
        %v3942 = vmul.f32 %v3531, %v3941
        %v3943 = vsub.f32 1.0, %v3942
        %v3944 = vmul.f32 %v3941, %v3943
        %v3945 = vadd.f32 %v3941, %v3944
        %vm3946 = vweird.f32 %v3531
        %vm3947 = vweird.f32 %v3941
        %vm3948 = vmor %vm3946, %vm3947
        %v3949 = vsel %vm3948, %v3941, %v3945
        %v3950 = vand.u32 2147483647, %v3531
        %vm3951 = vcmp.eq.f32.partialorder %v3950, 8.507059e+37
        %v3952 = vand.u32 %v3531, 2147483648
        %v3953 = vor.u32 1.1754944e-38, %v3952
        %v3954 = vsel %vm3951, %v3953, %v3949
        %v3955 = vmul.f32 1.0, %v3954
        %v3956 = vrcp.pop %v3532
        %v3957 = vmul.f32 %v3532, %v3956
        %v3958 = vsub.f32 1.0, %v3957
        %v3959 = vmul.f32 %v3956, %v3958
        %v3960 = vadd.f32 %v3956, %v3959
        %vm3961 = vweird.f32 %v3532
        %vm3962 = vweird.f32 %v3956
        %vm3963 = vmor %vm3961, %vm3962
        %v3964 = vsel %vm3963, %v3956, %v3960
        %v3965 = vand.u32 2147483647, %v3532
        %vm3966 = vcmp.eq.f32.partialorder %v3965, 8.507059e+37
        %v3967 = vand.u32 %v3532, 2147483648
        %v3968 = vor.u32 1.1754944e-38, %v3967
        %v3969 = vsel %vm3966, %v3968, %v3964
        %v3970 = vmul.f32 1.0, %v3969
        %v3971 = vrcp.pop %v3533
        %v3972 = vmul.f32 %v3533, %v3971
        %v3973 = vsub.f32 1.0, %v3972
        %v3974 = vmul.f32 %v3971, %v3973
        %v3975 = vadd.f32 %v3971, %v3974
        %vm3976 = vweird.f32 %v3533
        %vm3977 = vweird.f32 %v3971
        %vm3978 = vmor %vm3976, %vm3977
        %v3979 = vsel %vm3978, %v3971, %v3975
        %v3980 = vand.u32 2147483647, %v3533
        %vm3981 = vcmp.eq.f32.partialorder %v3980, 8.507059e+37
        %v3982 = vand.u32 %v3533, 2147483648
        %v3983 = vor.u32 1.1754944e-38, %v3982
        %v3984 = vsel %vm3981, %v3983, %v3979
        %v3985 = vmul.f32 1.0, %v3984
        %v3986 = vrcp.pop %v3534
        %v3987 = vmul.f32 %v3534, %v3986
        %v3988 = vsub.f32 1.0, %v3987
        %v3989 = vmul.f32 %v3986, %v3988
        %v3990 = vadd.f32 %v3986, %v3989
        %vm3991 = vweird.f32 %v3534
        %vm3992 = vweird.f32 %v3986
        %vm3993 = vmor %vm3991, %vm3992
        %v3994 = vsel %vm3993, %v3986, %v3990
        %v3995 = vand.u32 2147483647, %v3534
        %vm3996 = vcmp.eq.f32.partialorder %v3995, 8.507059e+37
        %v3997 = vand.u32 %v3534, 2147483648
        %v3998 = vor.u32 1.1754944e-38, %v3997
        %v3999 = vsel %vm3996, %v3998, %v3994
        %v4000 = vmul.f32 1.0, %v3999
        %v4001 = vrcp.pop %v3535
        %v4002 = vmul.f32 %v3535, %v4001
        %v4003 = vsub.f32 1.0, %v4002
        %v4004 = vmul.f32 %v4001, %v4003
        %v4005 = vadd.f32 %v4001, %v4004
        %vm4006 = vweird.f32 %v3535
        %vm4007 = vweird.f32 %v4001
        %vm4008 = vmor %vm4006, %vm4007
        %v4009 = vsel %vm4008, %v4001, %v4005
        %v4010 = vand.u32 2147483647, %v3535
        %vm4011 = vcmp.eq.f32.partialorder %v4010, 8.507059e+37
        %v4012 = vand.u32 %v3535, 2147483648
        %v4013 = vor.u32 1.1754944e-38, %v4012
        %v4014 = vsel %vm4011, %v4013, %v4009
        %v4015 = vmul.f32 1.0, %v4014
        %v4016 = vtanh.pop %v3310
        %v4017 = vtanh.pop %v3313
        %v4018 = vtanh.pop %v3316
        %v4019 = vtanh.pop %v3319
        %v4020 = vtanh.pop %v3322
        %v4021 = vtanh.pop %v3325
        %v4022 = vtanh.pop %v3328
        %v4023 = vtanh.pop %v3331
        %v4024 = vtanh.pop %v3334
        %v4025 = vtanh.pop %v3337
        %v4026 = vtanh.pop %v3340
        %v4027 = vtanh.pop %v3343
        %v4028 = vtanh.pop %v3346
        %v4029 = vtanh.pop %v3349
        %v4030 = vtanh.pop %v3352
        %v4031 = vtanh.pop %v3355
        %v4032 = vtanh.pop %v3358
        %v4033 = vtanh.pop %v3361
        %v4034 = vtanh.pop %v3364
        %v4035 = vtanh.pop %v3367
        %v4036 = vtanh.pop %v3370
        %v4037 = vtanh.pop %v3373
        %v4038 = vtanh.pop %v3376
        %v4039 = vtanh.pop %v3379
        %v4040 = vtanh.pop %v3382
        %v4041 = vtanh.pop %v3385
        %v4042 = vtanh.pop %v3388
        %v4043 = vtanh.pop %v3391
        %v4044 = vtanh.pop %v3394
        %v4045 = vtanh.pop %v3397
        %v4046 = vtanh.pop %v3400
        %v4047 = vtanh.pop %v3403
        %v4048 = vsel %vm3407, %v3550, %v4016
        %v4049 = vsel %vm3407, %v3565, %v4017
        %v4050 = vsel %vm3407, %v3580, %v4018
        %v4051 = vsel %vm3407, %v3595, %v4019
        %v4052 = vsel %vm3407, %v3610, %v4020
        %v4053 = vsel %vm3407, %v3625, %v4021
        %v4054 = vsel %vm3407, %v3640, %v4022
        %v4055 = vsel %vm3407, %v3655, %v4023
        %v4056 = vsel %vm3407, %v3670, %v4024
        %v4057 = vsel %vm3407, %v3685, %v4025
        %v4058 = vsel %vm3407, %v3700, %v4026
        %v4059 = vsel %vm3407, %v3715, %v4027
        %v4060 = vsel %vm3407, %v3730, %v4028
        %v4061 = vsel %vm3407, %v3745, %v4029
        %v4062 = vsel %vm3407, %v3760, %v4030
        %v4063 = vsel %vm3407, %v3775, %v4031
        %v4064 = vsel %vm3407, %v3790, %v4032
        %v4065 = vsel %vm3407, %v3805, %v4033
        %v4066 = vsel %vm3407, %v3820, %v4034
        %v4067 = vsel %vm3407, %v3835, %v4035
        %v4068 = vsel %vm3407, %v3850, %v4036
        %v4069 = vsel %vm3407, %v3865, %v4037
        %v4070 = vsel %vm3407, %v3880, %v4038
        %v4071 = vsel %vm3407, %v3895, %v4039
        %v4072 = vsel %vm3407, %v3910, %v4040
        %v4073 = vsel %vm3407, %v3925, %v4041
        %v4074 = vsel %vm3407, %v3940, %v4042
        %v4075 = vsel %vm3407, %v3955, %v4043
        %v4076 = vsel %vm3407, %v3970, %v4044
        %v4077 = vsel %vm3407, %v3985, %v4045
        %v4078 = vsel %vm3407, %v4000, %v4046
        %v4079 = vsel %vm3407, %v4015, %v4047
        %v4080 = vld [vmem:[%s226] sm:$0xff]
        %v4081 = vld [vmem:[%s226 + $0x8] sm:$0xff]
        %v4082 = vld [vmem:[%s226 + $0x10] sm:$0xff]
        %v4083 = vld [vmem:[%s226 + $0x18] sm:$0xff]
        %v4084 = vld [vmem:[%s226 + $0x20] sm:$0xff]
        %v4085 = vld [vmem:[%s226 + $0x28] sm:$0xff]
        %v4086 = vld [vmem:[%s226 + $0x30] sm:$0xff]
        %v4087 = vld [vmem:[%s226 + $0x38] sm:$0xff]
        %v4088 = vld [vmem:[%s226 + $0x40] sm:$0xff]
        %v4089 = vld [vmem:[%s226 + $0x48] sm:$0xff]
        %v4090 = vld [vmem:[%s226 + $0x50] sm:$0xff]
        %v4091 = vld [vmem:[%s226 + $0x58] sm:$0xff]
        %v4092 = vld [vmem:[%s226 + $0x60] sm:$0xff]
        %v4093 = vld [vmem:[%s226 + $0x68] sm:$0xff]
        %v4094 = vld [vmem:[%s226 + $0x70] sm:$0xff]
        %v4095 = vld [vmem:[%s226 + $0x78] sm:$0xff]
        %v4096 = vld [vmem:[%s226 + $0x80] sm:$0xff]
        %v4097 = vld [vmem:[%s226 + $0x88] sm:$0xff]
        %v4098 = vld [vmem:[%s226 + $0x90] sm:$0xff]
        %v4099 = vld [vmem:[%s226 + $0x98] sm:$0xff]
        %v4100 = vld [vmem:[%s226 + $0xa0] sm:$0xff]
        %v4101 = vld [vmem:[%s226 + $0xa8] sm:$0xff]
        %v4102 = vld [vmem:[%s226 + $0xb0] sm:$0xff]
        %v4103 = vld [vmem:[%s226 + $0xb8] sm:$0xff]
        %v4104 = vld [vmem:[%s226 + $0xc0] sm:$0xff]
        %v4105 = vld [vmem:[%s226 + $0xc8] sm:$0xff]
        %v4106 = vld [vmem:[%s226 + $0xd0] sm:$0xff]
        %v4107 = vld [vmem:[%s226 + $0xd8] sm:$0xff]
        %v4108 = vld [vmem:[%s226 + $0xe0] sm:$0xff]
        %v4109 = vld [vmem:[%s226 + $0xe8] sm:$0xff]
        %v4110 = vld [vmem:[%s226 + $0xf0] sm:$0xff]
        %v4111 = vld [vmem:[%s226 + $0xf8] sm:$0xff]
        %4144 = vrot.lane.b32.xlu0 %v4080, 8
        %v4145 = vpop.permute.xlu0 %4144
        %4146 = vrot.lane.b32.xlu0 %v4081, 8
        %v4147 = vpop.permute.xlu0 %4146
        %4148 = vrot.lane.b32.xlu0 %v4082, 8
        %v4149 = vpop.permute.xlu0 %4148
        %4150 = vrot.lane.b32.xlu0 %v4083, 8
        %v4151 = vpop.permute.xlu0 %4150
        %4152 = vrot.lane.b32.xlu0 %v4084, 8
        %v4153 = vpop.permute.xlu0 %4152
        %4154 = vrot.lane.b32.xlu0 %v4085, 8
        %v4155 = vpop.permute.xlu0 %4154
        %4156 = vrot.lane.b32.xlu0 %v4086, 8
        %v4157 = vpop.permute.xlu0 %4156
        %4158 = vrot.lane.b32.xlu0 %v4087, 8
        %v4159 = vpop.permute.xlu0 %4158
        %4160 = vrot.lane.b32.xlu0 %v4088, 8
        %v4161 = vpop.permute.xlu0 %4160
        %4162 = vrot.lane.b32.xlu0 %v4089, 8
        %v4163 = vpop.permute.xlu0 %4162
        %4164 = vrot.lane.b32.xlu0 %v4090, 8
        %v4165 = vpop.permute.xlu0 %4164
        %4166 = vrot.lane.b32.xlu0 %v4091, 8
        %v4167 = vpop.permute.xlu0 %4166
        %4168 = vrot.lane.b32.xlu0 %v4092, 8
        %v4169 = vpop.permute.xlu0 %4168
        %4170 = vrot.lane.b32.xlu0 %v4093, 8
        %v4171 = vpop.permute.xlu0 %4170
        %4172 = vrot.lane.b32.xlu0 %v4094, 8
        %v4173 = vpop.permute.xlu0 %4172
        %4174 = vrot.lane.b32.xlu0 %v4095, 8
        %v4175 = vpop.permute.xlu0 %4174
        %4176 = vrot.lane.b32.xlu0 %v4096, 8
        %v4177 = vpop.permute.xlu0 %4176
        %4178 = vrot.lane.b32.xlu0 %v4097, 8
        %v4179 = vpop.permute.xlu0 %4178
        %4180 = vrot.lane.b32.xlu0 %v4098, 8
        %v4181 = vpop.permute.xlu0 %4180
        %4182 = vrot.lane.b32.xlu0 %v4099, 8
        %v4183 = vpop.permute.xlu0 %4182
        %4184 = vrot.lane.b32.xlu0 %v4100, 8
        %v4185 = vpop.permute.xlu0 %4184
        %4186 = vrot.lane.b32.xlu0 %v4101, 8
        %v4187 = vpop.permute.xlu0 %4186
        %4188 = vrot.lane.b32.xlu0 %v4102, 8
        %v4189 = vpop.permute.xlu0 %4188
        %4190 = vrot.lane.b32.xlu0 %v4103, 8
        %v4191 = vpop.permute.xlu0 %4190
        %4192 = vrot.lane.b32.xlu0 %v4104, 8
        %v4193 = vpop.permute.xlu0 %4192
        %4194 = vrot.lane.b32.xlu0 %v4105, 8
        %v4195 = vpop.permute.xlu0 %4194
        %4196 = vrot.lane.b32.xlu0 %v4106, 8
        %v4197 = vpop.permute.xlu0 %4196
        %4198 = vrot.lane.b32.xlu0 %v4107, 8
        %v4199 = vpop.permute.xlu0 %4198
        %4200 = vrot.lane.b32.xlu0 %v4108, 8
        %v4201 = vpop.permute.xlu0 %4200
        %4202 = vrot.lane.b32.xlu0 %v4109, 8
        %v4203 = vpop.permute.xlu0 %4202
        %4204 = vrot.lane.b32.xlu0 %v4110, 8
        %v4205 = vpop.permute.xlu0 %4204
        %4206 = vrot.lane.b32.xlu0 %v4111, 8
        %v4207 = vpop.permute.xlu0 %4206
        %v4240 = vmul.f32 %v4048, %v4145
        %v4241 = vmul.f32 %v4049, %v4147
        %v4242 = vmul.f32 %v4050, %v4149
        %v4243 = vmul.f32 %v4051, %v4151
        %v4244 = vmul.f32 %v4052, %v4153
        %v4245 = vmul.f32 %v4053, %v4155
        %v4246 = vmul.f32 %v4054, %v4157
        %v4247 = vmul.f32 %v4055, %v4159
        %v4248 = vmul.f32 %v4056, %v4161
        %v4249 = vmul.f32 %v4057, %v4163
        %v4250 = vmul.f32 %v4058, %v4165
        %v4251 = vmul.f32 %v4059, %v4167
        %v4252 = vmul.f32 %v4060, %v4169
        %v4253 = vmul.f32 %v4061, %v4171
        %v4254 = vmul.f32 %v4062, %v4173
        %v4255 = vmul.f32 %v4063, %v4175
        %v4256 = vmul.f32 %v4064, %v4177
        %v4257 = vmul.f32 %v4065, %v4179
        %v4258 = vmul.f32 %v4066, %v4181
        %v4259 = vmul.f32 %v4067, %v4183
        %v4260 = vmul.f32 %v4068, %v4185
        %v4261 = vmul.f32 %v4069, %v4187
        %v4262 = vmul.f32 %v4070, %v4189
        %v4263 = vmul.f32 %v4071, %v4191
        %v4264 = vmul.f32 %v4072, %v4193
        %v4265 = vmul.f32 %v4073, %v4195
        %v4266 = vmul.f32 %v4074, %v4197
        %v4267 = vmul.f32 %v4075, %v4199
        %v4268 = vmul.f32 %v4076, %v4201
        %v4269 = vmul.f32 %v4077, %v4203
        %v4270 = vmul.f32 %v4078, %v4205
        %v4271 = vmul.f32 %v4079, %v4207
        %4304 = vrot.lane.b32.xlu0 %v4048, 104
        %v4305 = vpop.permute.xlu0 %4304
        %4306 = vrot.lane.b32.xlu0 %v4049, 104
        %v4307 = vpop.permute.xlu0 %4306
        %4308 = vrot.lane.b32.xlu0 %v4050, 104
        %v4309 = vpop.permute.xlu0 %4308
        %4310 = vrot.lane.b32.xlu0 %v4051, 104
        %v4311 = vpop.permute.xlu0 %4310
        %4312 = vrot.lane.b32.xlu0 %v4052, 104
        %v4313 = vpop.permute.xlu0 %4312
        %4314 = vrot.lane.b32.xlu0 %v4053, 104
        %v4315 = vpop.permute.xlu0 %4314
        %4316 = vrot.lane.b32.xlu0 %v4054, 104
        %v4317 = vpop.permute.xlu0 %4316
        %4318 = vrot.lane.b32.xlu0 %v4055, 104
        %v4319 = vpop.permute.xlu0 %4318
        %4320 = vrot.lane.b32.xlu0 %v4056, 104
        %v4321 = vpop.permute.xlu0 %4320
        %4322 = vrot.lane.b32.xlu0 %v4057, 104
        %v4323 = vpop.permute.xlu0 %4322
        %4324 = vrot.lane.b32.xlu0 %v4058, 104
        %v4325 = vpop.permute.xlu0 %4324
        %4326 = vrot.lane.b32.xlu0 %v4059, 104
        %v4327 = vpop.permute.xlu0 %4326
        %4328 = vrot.lane.b32.xlu0 %v4060, 104
        %v4329 = vpop.permute.xlu0 %4328
        %4330 = vrot.lane.b32.xlu0 %v4061, 104
        %v4331 = vpop.permute.xlu0 %4330
        %4332 = vrot.lane.b32.xlu0 %v4062, 104
        %v4333 = vpop.permute.xlu0 %4332
        %4334 = vrot.lane.b32.xlu0 %v4063, 104
        %v4335 = vpop.permute.xlu0 %4334
        %4336 = vrot.lane.b32.xlu0 %v4064, 104
        %v4337 = vpop.permute.xlu0 %4336
        %4338 = vrot.lane.b32.xlu0 %v4065, 104
        %v4339 = vpop.permute.xlu0 %4338
        %4340 = vrot.lane.b32.xlu0 %v4066, 104
        %v4341 = vpop.permute.xlu0 %4340
        %4342 = vrot.lane.b32.xlu0 %v4067, 104
        %v4343 = vpop.permute.xlu0 %4342
        %4344 = vrot.lane.b32.xlu0 %v4068, 104
        %v4345 = vpop.permute.xlu0 %4344
        %4346 = vrot.lane.b32.xlu0 %v4069, 104
        %v4347 = vpop.permute.xlu0 %4346
        %4348 = vrot.lane.b32.xlu0 %v4070, 104
        %v4349 = vpop.permute.xlu0 %4348
        %4350 = vrot.lane.b32.xlu0 %v4071, 104
        %v4351 = vpop.permute.xlu0 %4350
        %4352 = vrot.lane.b32.xlu0 %v4072, 104
        %v4353 = vpop.permute.xlu0 %4352
        %4354 = vrot.lane.b32.xlu0 %v4073, 104
        %v4355 = vpop.permute.xlu0 %4354
        %4356 = vrot.lane.b32.xlu0 %v4074, 104
        %v4357 = vpop.permute.xlu0 %4356
        %4358 = vrot.lane.b32.xlu0 %v4075, 104
        %v4359 = vpop.permute.xlu0 %4358
        %4360 = vrot.lane.b32.xlu0 %v4076, 104
        %v4361 = vpop.permute.xlu0 %4360
        %4362 = vrot.lane.b32.xlu0 %v4077, 104
        %v4363 = vpop.permute.xlu0 %4362
        %4364 = vrot.lane.b32.xlu0 %v4078, 104
        %v4365 = vpop.permute.xlu0 %4364
        %4366 = vrot.lane.b32.xlu0 %v4079, 104
        %v4367 = vpop.permute.xlu0 %4366
        %v4400 = vmul.f32 %v4048, %v4305
        %v4401 = vmul.f32 %v4049, %v4307
        %v4402 = vmul.f32 %v4050, %v4309
        %v4403 = vmul.f32 %v4051, %v4311
        %v4404 = vmul.f32 %v4052, %v4313
        %v4405 = vmul.f32 %v4053, %v4315
        %v4406 = vmul.f32 %v4054, %v4317
        %v4407 = vmul.f32 %v4055, %v4319
        %v4408 = vmul.f32 %v4056, %v4321
        %v4409 = vmul.f32 %v4057, %v4323
        %v4410 = vmul.f32 %v4058, %v4325
        %v4411 = vmul.f32 %v4059, %v4327
        %v4412 = vmul.f32 %v4060, %v4329
        %v4413 = vmul.f32 %v4061, %v4331
        %v4414 = vmul.f32 %v4062, %v4333
        %v4415 = vmul.f32 %v4063, %v4335
        %v4416 = vmul.f32 %v4064, %v4337
        %v4417 = vmul.f32 %v4065, %v4339
        %v4418 = vmul.f32 %v4066, %v4341
        %v4419 = vmul.f32 %v4067, %v4343
        %v4420 = vmul.f32 %v4068, %v4345
        %v4421 = vmul.f32 %v4069, %v4347
        %v4422 = vmul.f32 %v4070, %v4349
        %v4423 = vmul.f32 %v4071, %v4351
        %v4424 = vmul.f32 %v4072, %v4353
        %v4425 = vmul.f32 %v4073, %v4355
        %v4426 = vmul.f32 %v4074, %v4357
        %v4427 = vmul.f32 %v4075, %v4359
        %v4428 = vmul.f32 %v4076, %v4361
        %v4429 = vmul.f32 %v4077, %v4363
        %v4430 = vmul.f32 %v4078, %v4365
        %v4431 = vmul.f32 %v4079, %v4367
        %4464 = vrot.lane.b32.xlu0 %v4400, 8
        %v4465 = vpop.permute.xlu0 %4464
        %4466 = vrot.lane.b32.xlu0 %v4401, 8
        %v4467 = vpop.permute.xlu0 %4466
        %4468 = vrot.lane.b32.xlu0 %v4402, 8
        %v4469 = vpop.permute.xlu0 %4468
        %4470 = vrot.lane.b32.xlu0 %v4403, 8
        %v4471 = vpop.permute.xlu0 %4470
        %4472 = vrot.lane.b32.xlu0 %v4404, 8
        %v4473 = vpop.permute.xlu0 %4472
        %4474 = vrot.lane.b32.xlu0 %v4405, 8
        %v4475 = vpop.permute.xlu0 %4474
        %4476 = vrot.lane.b32.xlu0 %v4406, 8
        %v4477 = vpop.permute.xlu0 %4476
        %4478 = vrot.lane.b32.xlu0 %v4407, 8
        %v4479 = vpop.permute.xlu0 %4478
        %4480 = vrot.lane.b32.xlu0 %v4408, 8
        %v4481 = vpop.permute.xlu0 %4480
        %4482 = vrot.lane.b32.xlu0 %v4409, 8
        %v4483 = vpop.permute.xlu0 %4482
        %4484 = vrot.lane.b32.xlu0 %v4410, 8
        %v4485 = vpop.permute.xlu0 %4484
        %4486 = vrot.lane.b32.xlu0 %v4411, 8
        %v4487 = vpop.permute.xlu0 %4486
        %4488 = vrot.lane.b32.xlu0 %v4412, 8
        %v4489 = vpop.permute.xlu0 %4488
        %4490 = vrot.lane.b32.xlu0 %v4413, 8
        %v4491 = vpop.permute.xlu0 %4490
        %4492 = vrot.lane.b32.xlu0 %v4414, 8
        %v4493 = vpop.permute.xlu0 %4492
        %4494 = vrot.lane.b32.xlu0 %v4415, 8
        %v4495 = vpop.permute.xlu0 %4494
        %4496 = vrot.lane.b32.xlu0 %v4416, 8
        %v4497 = vpop.permute.xlu0 %4496
        %4498 = vrot.lane.b32.xlu0 %v4417, 8
        %v4499 = vpop.permute.xlu0 %4498
        %4500 = vrot.lane.b32.xlu0 %v4418, 8
        %v4501 = vpop.permute.xlu0 %4500
        %4502 = vrot.lane.b32.xlu0 %v4419, 8
        %v4503 = vpop.permute.xlu0 %4502
        %4504 = vrot.lane.b32.xlu0 %v4420, 8
        %v4505 = vpop.permute.xlu0 %4504
        %4506 = vrot.lane.b32.xlu0 %v4421, 8
        %v4507 = vpop.permute.xlu0 %4506
        %4508 = vrot.lane.b32.xlu0 %v4422, 8
        %v4509 = vpop.permute.xlu0 %4508
        %4510 = vrot.lane.b32.xlu0 %v4423, 8
        %v4511 = vpop.permute.xlu0 %4510
        %4512 = vrot.lane.b32.xlu0 %v4424, 8
        %v4513 = vpop.permute.xlu0 %4512
        %4514 = vrot.lane.b32.xlu0 %v4425, 8
        %v4515 = vpop.permute.xlu0 %4514
        %4516 = vrot.lane.b32.xlu0 %v4426, 8
        %v4517 = vpop.permute.xlu0 %4516
        %4518 = vrot.lane.b32.xlu0 %v4427, 8
        %v4519 = vpop.permute.xlu0 %4518
        %4520 = vrot.lane.b32.xlu0 %v4428, 8
        %v4521 = vpop.permute.xlu0 %4520
        %4522 = vrot.lane.b32.xlu0 %v4429, 8
        %v4523 = vpop.permute.xlu0 %4522
        %4524 = vrot.lane.b32.xlu0 %v4430, 8
        %v4525 = vpop.permute.xlu0 %4524
        %4526 = vrot.lane.b32.xlu0 %v4431, 8
        %v4527 = vpop.permute.xlu0 %4526
        %v4560 = vadd.f32 %v4240, %v4465
        %v4561 = vadd.f32 %v4241, %v4467
        %v4562 = vadd.f32 %v4242, %v4469
        %v4563 = vadd.f32 %v4243, %v4471
        %v4564 = vadd.f32 %v4244, %v4473
        %v4565 = vadd.f32 %v4245, %v4475
        %v4566 = vadd.f32 %v4246, %v4477
        %v4567 = vadd.f32 %v4247, %v4479
        %v4568 = vadd.f32 %v4248, %v4481
        %v4569 = vadd.f32 %v4249, %v4483
        %v4570 = vadd.f32 %v4250, %v4485
        %v4571 = vadd.f32 %v4251, %v4487
        %v4572 = vadd.f32 %v4252, %v4489
        %v4573 = vadd.f32 %v4253, %v4491
        %v4574 = vadd.f32 %v4254, %v4493
        %v4575 = vadd.f32 %v4255, %v4495
        %v4576 = vadd.f32 %v4256, %v4497
        %v4577 = vadd.f32 %v4257, %v4499
        %v4578 = vadd.f32 %v4258, %v4501
        %v4579 = vadd.f32 %v4259, %v4503
        %v4580 = vadd.f32 %v4260, %v4505
        %v4581 = vadd.f32 %v4261, %v4507
        %v4582 = vadd.f32 %v4262, %v4509
        %v4583 = vadd.f32 %v4263, %v4511
        %v4584 = vadd.f32 %v4264, %v4513
        %v4585 = vadd.f32 %v4265, %v4515
        %v4586 = vadd.f32 %v4266, %v4517
        %v4587 = vadd.f32 %v4267, %v4519
        %v4588 = vadd.f32 %v4268, %v4521
        %v4589 = vadd.f32 %v4269, %v4523
        %v4590 = vadd.f32 %v4270, %v4525
        %v4591 = vadd.f32 %v4271, %v4527
        %v4592 = vtanh.pop %v4560
        %v4593 = vtanh.pop %v4561
        %v4594 = vtanh.pop %v4562
        %v4595 = vtanh.pop %v4563
        %v4596 = vtanh.pop %v4564
        %v4597 = vtanh.pop %v4565
        %v4598 = vtanh.pop %v4566
        %v4599 = vtanh.pop %v4567
        %v4600 = vtanh.pop %v4568
        %v4601 = vtanh.pop %v4569
        %v4602 = vtanh.pop %v4570
        %v4603 = vtanh.pop %v4571
        %v4604 = vtanh.pop %v4572
        %v4605 = vtanh.pop %v4573
        %v4606 = vtanh.pop %v4574
        %v4607 = vtanh.pop %v4575
        %v4608 = vtanh.pop %v4576
        %v4609 = vtanh.pop %v4577
        %v4610 = vtanh.pop %v4578
        %v4611 = vtanh.pop %v4579
        %v4612 = vtanh.pop %v4580
        %v4613 = vtanh.pop %v4581
        %v4614 = vtanh.pop %v4582
        %v4615 = vtanh.pop %v4583
        %v4616 = vtanh.pop %v4584
        %v4617 = vtanh.pop %v4585
        %v4618 = vtanh.pop %v4586
        %v4619 = vtanh.pop %v4587
        %v4620 = vtanh.pop %v4588
        %v4621 = vtanh.pop %v4589
        %v4622 = vtanh.pop %v4590
        %v4623 = vtanh.pop %v4591
        %4656 = vrot.lane.b32.xlu0 %v4592, 8
        %v4657 = vpop.permute.xlu0 %4656
        %4658 = vrot.lane.b32.xlu0 %v4593, 8
        %v4659 = vpop.permute.xlu0 %4658
        %4660 = vrot.lane.b32.xlu0 %v4594, 8
        %v4661 = vpop.permute.xlu0 %4660
        %4662 = vrot.lane.b32.xlu0 %v4595, 8
        %v4663 = vpop.permute.xlu0 %4662
        %4664 = vrot.lane.b32.xlu0 %v4596, 8
        %v4665 = vpop.permute.xlu0 %4664
        %4666 = vrot.lane.b32.xlu0 %v4597, 8
        %v4667 = vpop.permute.xlu0 %4666
        %4668 = vrot.lane.b32.xlu0 %v4598, 8
        %v4669 = vpop.permute.xlu0 %4668
        %4670 = vrot.lane.b32.xlu0 %v4599, 8
        %v4671 = vpop.permute.xlu0 %4670
        %4672 = vrot.lane.b32.xlu0 %v4600, 8
        %v4673 = vpop.permute.xlu0 %4672
        %4674 = vrot.lane.b32.xlu0 %v4601, 8
        %v4675 = vpop.permute.xlu0 %4674
        %4676 = vrot.lane.b32.xlu0 %v4602, 8
        %v4677 = vpop.permute.xlu0 %4676
        %4678 = vrot.lane.b32.xlu0 %v4603, 8
        %v4679 = vpop.permute.xlu0 %4678
        %4680 = vrot.lane.b32.xlu0 %v4604, 8
        %v4681 = vpop.permute.xlu0 %4680
        %4682 = vrot.lane.b32.xlu0 %v4605, 8
        %v4683 = vpop.permute.xlu0 %4682
        %4684 = vrot.lane.b32.xlu0 %v4606, 8
        %v4685 = vpop.permute.xlu0 %4684
        %4686 = vrot.lane.b32.xlu0 %v4607, 8
        %v4687 = vpop.permute.xlu0 %4686
        %4688 = vrot.lane.b32.xlu0 %v4608, 8
        %v4689 = vpop.permute.xlu0 %4688
        %4690 = vrot.lane.b32.xlu0 %v4609, 8
        %v4691 = vpop.permute.xlu0 %4690
        %4692 = vrot.lane.b32.xlu0 %v4610, 8
        %v4693 = vpop.permute.xlu0 %4692
        %4694 = vrot.lane.b32.xlu0 %v4611, 8
        %v4695 = vpop.permute.xlu0 %4694
        %4696 = vrot.lane.b32.xlu0 %v4612, 8
        %v4697 = vpop.permute.xlu0 %4696
        %4698 = vrot.lane.b32.xlu0 %v4613, 8
        %v4699 = vpop.permute.xlu0 %4698
        %4700 = vrot.lane.b32.xlu0 %v4614, 8
        %v4701 = vpop.permute.xlu0 %4700
        %4702 = vrot.lane.b32.xlu0 %v4615, 8
        %v4703 = vpop.permute.xlu0 %4702
        %4704 = vrot.lane.b32.xlu0 %v4616, 8
        %v4705 = vpop.permute.xlu0 %4704
        %4706 = vrot.lane.b32.xlu0 %v4617, 8
        %v4707 = vpop.permute.xlu0 %4706
        %4708 = vrot.lane.b32.xlu0 %v4618, 8
        %v4709 = vpop.permute.xlu0 %4708
        %4710 = vrot.lane.b32.xlu0 %v4619, 8
        %v4711 = vpop.permute.xlu0 %4710
        %4712 = vrot.lane.b32.xlu0 %v4620, 8
        %v4713 = vpop.permute.xlu0 %4712
        %4714 = vrot.lane.b32.xlu0 %v4621, 8
        %v4715 = vpop.permute.xlu0 %4714
        %4716 = vrot.lane.b32.xlu0 %v4622, 8
        %v4717 = vpop.permute.xlu0 %4716
        %4718 = vrot.lane.b32.xlu0 %v4623, 8
        %v4719 = vpop.permute.xlu0 %4718
        %v4752 = vmul.f32 %v4048, %v4657
        %v4753 = vmul.f32 %v4049, %v4659
        %v4754 = vmul.f32 %v4050, %v4661
        %v4755 = vmul.f32 %v4051, %v4663
        %v4756 = vmul.f32 %v4052, %v4665
        %v4757 = vmul.f32 %v4053, %v4667
        %v4758 = vmul.f32 %v4054, %v4669
        %v4759 = vmul.f32 %v4055, %v4671
        %v4760 = vmul.f32 %v4056, %v4673
        %v4761 = vmul.f32 %v4057, %v4675
        %v4762 = vmul.f32 %v4058, %v4677
        %v4763 = vmul.f32 %v4059, %v4679
        %v4764 = vmul.f32 %v4060, %v4681
        %v4765 = vmul.f32 %v4061, %v4683
        %v4766 = vmul.f32 %v4062, %v4685
        %v4767 = vmul.f32 %v4063, %v4687
        %v4768 = vmul.f32 %v4064, %v4689
        %v4769 = vmul.f32 %v4065, %v4691
        %v4770 = vmul.f32 %v4066, %v4693
        %v4771 = vmul.f32 %v4067, %v4695
        %v4772 = vmul.f32 %v4068, %v4697
        %v4773 = vmul.f32 %v4069, %v4699
        %v4774 = vmul.f32 %v4070, %v4701
        %v4775 = vmul.f32 %v4071, %v4703
        %v4776 = vmul.f32 %v4072, %v4705
        %v4777 = vmul.f32 %v4073, %v4707
        %v4778 = vmul.f32 %v4074, %v4709
        %v4779 = vmul.f32 %v4075, %v4711
        %v4780 = vmul.f32 %v4076, %v4713
        %v4781 = vmul.f32 %v4077, %v4715
        %v4782 = vmul.f32 %v4078, %v4717
        %v4783 = vmul.f32 %v4079, %v4719
        %4816 = vrot.lane.b32.xlu0 %v4560, 120
        %v4817 = vpop.permute.xlu0 %4816
        %4818 = vrot.lane.b32.xlu0 %v4561, 120
        %v4819 = vpop.permute.xlu0 %4818
        %4820 = vrot.lane.b32.xlu0 %v4562, 120
        %v4821 = vpop.permute.xlu0 %4820
        %4822 = vrot.lane.b32.xlu0 %v4563, 120
        %v4823 = vpop.permute.xlu0 %4822
        %4824 = vrot.lane.b32.xlu0 %v4564, 120
        %v4825 = vpop.permute.xlu0 %4824
        %4826 = vrot.lane.b32.xlu0 %v4565, 120
        %v4827 = vpop.permute.xlu0 %4826
        %4828 = vrot.lane.b32.xlu0 %v4566, 120
        %v4829 = vpop.permute.xlu0 %4828
        %4830 = vrot.lane.b32.xlu0 %v4567, 120
        %v4831 = vpop.permute.xlu0 %4830
        %4832 = vrot.lane.b32.xlu0 %v4568, 120
        %v4833 = vpop.permute.xlu0 %4832
        %4834 = vrot.lane.b32.xlu0 %v4569, 120
        %v4835 = vpop.permute.xlu0 %4834
        %4836 = vrot.lane.b32.xlu0 %v4570, 120
        %v4837 = vpop.permute.xlu0 %4836
        %4838 = vrot.lane.b32.xlu0 %v4571, 120
        %v4839 = vpop.permute.xlu0 %4838
        %4840 = vrot.lane.b32.xlu0 %v4572, 120
        %v4841 = vpop.permute.xlu0 %4840
        %4842 = vrot.lane.b32.xlu0 %v4573, 120
        %v4843 = vpop.permute.xlu0 %4842
        %4844 = vrot.lane.b32.xlu0 %v4574, 120
        %v4845 = vpop.permute.xlu0 %4844
        %4846 = vrot.lane.b32.xlu0 %v4575, 120
        %v4847 = vpop.permute.xlu0 %4846
        %4848 = vrot.lane.b32.xlu0 %v4576, 120
        %v4849 = vpop.permute.xlu0 %4848
        %4850 = vrot.lane.b32.xlu0 %v4577, 120
        %v4851 = vpop.permute.xlu0 %4850
        %4852 = vrot.lane.b32.xlu0 %v4578, 120
        %v4853 = vpop.permute.xlu0 %4852
        %4854 = vrot.lane.b32.xlu0 %v4579, 120
        %v4855 = vpop.permute.xlu0 %4854
        %4856 = vrot.lane.b32.xlu0 %v4580, 120
        %v4857 = vpop.permute.xlu0 %4856
        %4858 = vrot.lane.b32.xlu0 %v4581, 120
        %v4859 = vpop.permute.xlu0 %4858
        %4860 = vrot.lane.b32.xlu0 %v4582, 120
        %v4861 = vpop.permute.xlu0 %4860
        %4862 = vrot.lane.b32.xlu0 %v4583, 120
        %v4863 = vpop.permute.xlu0 %4862
        %4864 = vrot.lane.b32.xlu0 %v4584, 120
        %v4865 = vpop.permute.xlu0 %4864
        %4866 = vrot.lane.b32.xlu0 %v4585, 120
        %v4867 = vpop.permute.xlu0 %4866
        %4868 = vrot.lane.b32.xlu0 %v4586, 120
        %v4869 = vpop.permute.xlu0 %4868
        %4870 = vrot.lane.b32.xlu0 %v4587, 120
        %v4871 = vpop.permute.xlu0 %4870
        %4872 = vrot.lane.b32.xlu0 %v4588, 120
        %v4873 = vpop.permute.xlu0 %4872
        %4874 = vrot.lane.b32.xlu0 %v4589, 120
        %v4875 = vpop.permute.xlu0 %4874
        %4876 = vrot.lane.b32.xlu0 %v4590, 120
        %v4877 = vpop.permute.xlu0 %4876
        %4878 = vrot.lane.b32.xlu0 %v4591, 120
        %v4879 = vpop.permute.xlu0 %4878
        %vm4912 = vcmask 64512
        %4913 = vst.msk [vmem:[%s226] sm:$0xff] %vm4912, %v4817
        %4914 = vst.msk [vmem:[%s226 + $0x8] sm:$0xff] %vm4912, %v4819
        %4915 = vst.msk [vmem:[%s226 + $0x10] sm:$0xff] %vm4912, %v4821
        %4916 = vst.msk [vmem:[%s226 + $0x18] sm:$0xff] %vm4912, %v4823
        %4917 = vst.msk [vmem:[%s226 + $0x20] sm:$0xff] %vm4912, %v4825
        %4918 = vst.msk [vmem:[%s226 + $0x28] sm:$0xff] %vm4912, %v4827
        %4919 = vst.msk [vmem:[%s226 + $0x30] sm:$0xff] %vm4912, %v4829
        %4920 = vst.msk [vmem:[%s226 + $0x38] sm:$0xff] %vm4912, %v4831
        %4921 = vst.msk [vmem:[%s226 + $0x40] sm:$0xff] %vm4912, %v4833
        %4922 = vst.msk [vmem:[%s226 + $0x48] sm:$0xff] %vm4912, %v4835
        %4923 = vst.msk [vmem:[%s226 + $0x50] sm:$0xff] %vm4912, %v4837
        %4924 = vst.msk [vmem:[%s226 + $0x58] sm:$0xff] %vm4912, %v4839
        %4925 = vst.msk [vmem:[%s226 + $0x60] sm:$0xff] %vm4912, %v4841
        %4926 = vst.msk [vmem:[%s226 + $0x68] sm:$0xff] %vm4912, %v4843
        %4927 = vst.msk [vmem:[%s226 + $0x70] sm:$0xff] %vm4912, %v4845
        %4928 = vst.msk [vmem:[%s226 + $0x78] sm:$0xff] %vm4912, %v4847
        %4929 = vst.msk [vmem:[%s226 + $0x80] sm:$0xff] %vm4912, %v4849
        %4930 = vst.msk [vmem:[%s226 + $0x88] sm:$0xff] %vm4912, %v4851
        %4931 = vst.msk [vmem:[%s226 + $0x90] sm:$0xff] %vm4912, %v4853
        %4932 = vst.msk [vmem:[%s226 + $0x98] sm:$0xff] %vm4912, %v4855
        %4933 = vst.msk [vmem:[%s226 + $0xa0] sm:$0xff] %vm4912, %v4857
        %4934 = vst.msk [vmem:[%s226 + $0xa8] sm:$0xff] %vm4912, %v4859
        %4935 = vst.msk [vmem:[%s226 + $0xb0] sm:$0xff] %vm4912, %v4861
        %4936 = vst.msk [vmem:[%s226 + $0xb8] sm:$0xff] %vm4912, %v4863
        %4937 = vst.msk [vmem:[%s226 + $0xc0] sm:$0xff] %vm4912, %v4865
        %4938 = vst.msk [vmem:[%s226 + $0xc8] sm:$0xff] %vm4912, %v4867
        %4939 = vst.msk [vmem:[%s226 + $0xd0] sm:$0xff] %vm4912, %v4869
        %4940 = vst.msk [vmem:[%s226 + $0xd8] sm:$0xff] %vm4912, %v4871
        %4941 = vst.msk [vmem:[%s226 + $0xe0] sm:$0xff] %vm4912, %v4873
        %4942 = vst.msk [vmem:[%s226 + $0xe8] sm:$0xff] %vm4912, %v4875
        %4943 = vst.msk [vmem:[%s226 + $0xf0] sm:$0xff] %vm4912, %v4877
        %4944 = vst.msk [vmem:[%s226 + $0xf8] sm:$0xff] %vm4912, %v4879
        %4977 = vrot.lane.b32.xlu0 %v4752, 112
        %v4978 = vpop.permute.xlu0 %4977
        %4979 = vrot.lane.b32.xlu0 %v4753, 112
        %v4980 = vpop.permute.xlu0 %4979
        %4981 = vrot.lane.b32.xlu0 %v4754, 112
        %v4982 = vpop.permute.xlu0 %4981
        %4983 = vrot.lane.b32.xlu0 %v4755, 112
        %v4984 = vpop.permute.xlu0 %4983
        %4985 = vrot.lane.b32.xlu0 %v4756, 112
        %v4986 = vpop.permute.xlu0 %4985
        %4987 = vrot.lane.b32.xlu0 %v4757, 112
        %v4988 = vpop.permute.xlu0 %4987
        %4989 = vrot.lane.b32.xlu0 %v4758, 112
        %v4990 = vpop.permute.xlu0 %4989
        %4991 = vrot.lane.b32.xlu0 %v4759, 112
        %v4992 = vpop.permute.xlu0 %4991
        %4993 = vrot.lane.b32.xlu0 %v4760, 112
        %v4994 = vpop.permute.xlu0 %4993
        %4995 = vrot.lane.b32.xlu0 %v4761, 112
        %v4996 = vpop.permute.xlu0 %4995
        %4997 = vrot.lane.b32.xlu0 %v4762, 112
        %v4998 = vpop.permute.xlu0 %4997
        %4999 = vrot.lane.b32.xlu0 %v4763, 112
        %v5000 = vpop.permute.xlu0 %4999
        %5001 = vrot.lane.b32.xlu0 %v4764, 112
        %v5002 = vpop.permute.xlu0 %5001
        %5003 = vrot.lane.b32.xlu0 %v4765, 112
        %v5004 = vpop.permute.xlu0 %5003
        %5005 = vrot.lane.b32.xlu0 %v4766, 112
        %v5006 = vpop.permute.xlu0 %5005
        %5007 = vrot.lane.b32.xlu0 %v4767, 112
        %v5008 = vpop.permute.xlu0 %5007
        %5009 = vrot.lane.b32.xlu0 %v4768, 112
        %v5010 = vpop.permute.xlu0 %5009
        %5011 = vrot.lane.b32.xlu0 %v4769, 112
        %v5012 = vpop.permute.xlu0 %5011
        %5013 = vrot.lane.b32.xlu0 %v4770, 112
        %v5014 = vpop.permute.xlu0 %5013
        %5015 = vrot.lane.b32.xlu0 %v4771, 112
        %v5016 = vpop.permute.xlu0 %5015
        %5017 = vrot.lane.b32.xlu0 %v4772, 112
        %v5018 = vpop.permute.xlu0 %5017
        %5019 = vrot.lane.b32.xlu0 %v4773, 112
        %v5020 = vpop.permute.xlu0 %5019
        %5021 = vrot.lane.b32.xlu0 %v4774, 112
        %v5022 = vpop.permute.xlu0 %5021
        %5023 = vrot.lane.b32.xlu0 %v4775, 112
        %v5024 = vpop.permute.xlu0 %5023
        %5025 = vrot.lane.b32.xlu0 %v4776, 112
        %v5026 = vpop.permute.xlu0 %5025
        %5027 = vrot.lane.b32.xlu0 %v4777, 112
        %v5028 = vpop.permute.xlu0 %5027
        %5029 = vrot.lane.b32.xlu0 %v4778, 112
        %v5030 = vpop.permute.xlu0 %5029
        %5031 = vrot.lane.b32.xlu0 %v4779, 112
        %v5032 = vpop.permute.xlu0 %5031
        %5033 = vrot.lane.b32.xlu0 %v4780, 112
        %v5034 = vpop.permute.xlu0 %5033
        %5035 = vrot.lane.b32.xlu0 %v4781, 112
        %v5036 = vpop.permute.xlu0 %5035
        %5037 = vrot.lane.b32.xlu0 %v4782, 112
        %v5038 = vpop.permute.xlu0 %5037
        %5039 = vrot.lane.b32.xlu0 %v4783, 112
        %v5040 = vpop.permute.xlu0 %5039
        %5073 = vst.msk [vmem:[%s242] sm:$0xff] %vm4912, %v4978
        %5074 = vst.msk [vmem:[%s242 + $0x8] sm:$0xff] %vm4912, %v4980
        %5075 = vst.msk [vmem:[%s242 + $0x10] sm:$0xff] %vm4912, %v4982
        %5076 = vst.msk [vmem:[%s242 + $0x18] sm:$0xff] %vm4912, %v4984
        %5077 = vst.msk [vmem:[%s242 + $0x20] sm:$0xff] %vm4912, %v4986
        %5078 = vst.msk [vmem:[%s242 + $0x28] sm:$0xff] %vm4912, %v4988
        %5079 = vst.msk [vmem:[%s242 + $0x30] sm:$0xff] %vm4912, %v4990
        %5080 = vst.msk [vmem:[%s242 + $0x38] sm:$0xff] %vm4912, %v4992
        %5081 = vst.msk [vmem:[%s242 + $0x40] sm:$0xff] %vm4912, %v4994
        %5082 = vst.msk [vmem:[%s242 + $0x48] sm:$0xff] %vm4912, %v4996
        %5083 = vst.msk [vmem:[%s242 + $0x50] sm:$0xff] %vm4912, %v4998
        %5084 = vst.msk [vmem:[%s242 + $0x58] sm:$0xff] %vm4912, %v5000
        %5085 = vst.msk [vmem:[%s242 + $0x60] sm:$0xff] %vm4912, %v5002
        %5086 = vst.msk [vmem:[%s242 + $0x68] sm:$0xff] %vm4912, %v5004
        %5087 = vst.msk [vmem:[%s242 + $0x70] sm:$0xff] %vm4912, %v5006
        %5088 = vst.msk [vmem:[%s242 + $0x78] sm:$0xff] %vm4912, %v5008
        %5089 = vst.msk [vmem:[%s242 + $0x80] sm:$0xff] %vm4912, %v5010
        %5090 = vst.msk [vmem:[%s242 + $0x88] sm:$0xff] %vm4912, %v5012
        %5091 = vst.msk [vmem:[%s242 + $0x90] sm:$0xff] %vm4912, %v5014
        %5092 = vst.msk [vmem:[%s242 + $0x98] sm:$0xff] %vm4912, %v5016
        %5093 = vst.msk [vmem:[%s242 + $0xa0] sm:$0xff] %vm4912, %v5018
        %5094 = vst.msk [vmem:[%s242 + $0xa8] sm:$0xff] %vm4912, %v5020
        %5095 = vst.msk [vmem:[%s242 + $0xb0] sm:$0xff] %vm4912, %v5022
        %5096 = vst.msk [vmem:[%s242 + $0xb8] sm:$0xff] %vm4912, %v5024
        %5097 = vst.msk [vmem:[%s242 + $0xc0] sm:$0xff] %vm4912, %v5026
        %5098 = vst.msk [vmem:[%s242 + $0xc8] sm:$0xff] %vm4912, %v5028
        %5099 = vst.msk [vmem:[%s242 + $0xd0] sm:$0xff] %vm4912, %v5030
        %5100 = vst.msk [vmem:[%s242 + $0xd8] sm:$0xff] %vm4912, %v5032
        %5101 = vst.msk [vmem:[%s242 + $0xe0] sm:$0xff] %vm4912, %v5034
        %5102 = vst.msk [vmem:[%s242 + $0xe8] sm:$0xff] %vm4912, %v5036
        %5103 = vst.msk [vmem:[%s242 + $0xf0] sm:$0xff] %vm4912, %v5038
        %5104 = vst.msk [vmem:[%s242 + $0xf8] sm:$0xff] %vm4912, %v5040
        %s5105 = scalar_lea.vmem [#allocation3], 24
        %5106 = vst.msk [vmem:[%s5105 + $0x1] sm:$0xff] %vm4912, %v4978
        %5107 = vst.msk [vmem:[%s5105 + $0x9] sm:$0xff] %vm4912, %v4980
        %5108 = vst.msk [vmem:[%s5105 + $0x19] sm:$0xff] %vm4912, %v4982
        %5109 = vst.msk [vmem:[%s5105 + $0x21] sm:$0xff] %vm4912, %v4984
        %5110 = vst.msk [vmem:[%s5105 + $0x31] sm:$0xff] %vm4912, %v4986
        %5111 = vst.msk [vmem:[%s5105 + $0x39] sm:$0xff] %vm4912, %v4988
        %5112 = vst.msk [vmem:[%s5105 + $0x49] sm:$0xff] %vm4912, %v4990
        %5113 = vst.msk [vmem:[%s5105 + $0x51] sm:$0xff] %vm4912, %v4992
        %5114 = vst.msk [vmem:[%s5105 + $0x61] sm:$0xff] %vm4912, %v4994
        %5115 = vst.msk [vmem:[%s5105 + $0x69] sm:$0xff] %vm4912, %v4996
        %5116 = vst.msk [vmem:[%s5105 + $0x79] sm:$0xff] %vm4912, %v4998
        %5117 = vst.msk [vmem:[%s5105 + $0x81] sm:$0xff] %vm4912, %v5000
        %5118 = vst.msk [vmem:[%s5105 + $0x91] sm:$0xff] %vm4912, %v5002
        %5119 = vst.msk [vmem:[%s5105 + $0x99] sm:$0xff] %vm4912, %v5004
        %5120 = vst.msk [vmem:[%s5105 + $0xa9] sm:$0xff] %vm4912, %v5006
        %5121 = vst.msk [vmem:[%s5105 + $0xb1] sm:$0xff] %vm4912, %v5008
        %5122 = vst.msk [vmem:[%s5105 + $0xc1] sm:$0xff] %vm4912, %v5010
        %5123 = vst.msk [vmem:[%s5105 + $0xc9] sm:$0xff] %vm4912, %v5012
        %5124 = vst.msk [vmem:[%s5105 + $0xd9] sm:$0xff] %vm4912, %v5014
        %5125 = vst.msk [vmem:[%s5105 + $0xe1] sm:$0xff] %vm4912, %v5016
        %5126 = vst.msk [vmem:[%s5105 + $0xf1] sm:$0xff] %vm4912, %v5018
        %5127 = vst.msk [vmem:[%s5105 + $0xf9] sm:$0xff] %vm4912, %v5020
        %5128 = vst.msk [vmem:[%s5105 + $0x109] sm:$0xff] %vm4912, %v5022
        %5129 = vst.msk [vmem:[%s5105 + $0x111] sm:$0xff] %vm4912, %v5024
        %5130 = vst.msk [vmem:[%s5105 + $0x121] sm:$0xff] %vm4912, %v5026
        %5131 = vst.msk [vmem:[%s5105 + $0x129] sm:$0xff] %vm4912, %v5028
        %5132 = vst.msk [vmem:[%s5105 + $0x139] sm:$0xff] %vm4912, %v5030
        %5133 = vst.msk [vmem:[%s5105 + $0x141] sm:$0xff] %vm4912, %v5032
        %5134 = vst.msk [vmem:[%s5105 + $0x151] sm:$0xff] %vm4912, %v5034
        %5135 = vst.msk [vmem:[%s5105 + $0x159] sm:$0xff] %vm4912, %v5036
        %5136 = vst.msk [vmem:[%s5105 + $0x169] sm:$0xff] %vm4912, %v5038
        %5137 = vst.msk [vmem:[%s5105 + $0x171] sm:$0xff] %vm4912, %v5040
        %s5138 = smul.u32 %s24, 2
        %s5139 = sadd.s32 %s5138, %s23
        %p5140 = scmp.lt.s32.totalorder %s5139, 15
        %s5141 = scalar_select %p5140, %s5139, 15
        %s5142 = smul.addr %s5141, 32
        %s5143 = smul.addr %s5142, 8
        %s5144 = scalar_lea.vmem %s3, %s5143
        %s5145 = sand.u32 %s141, 1
        %s5146 = scalar_lea.sflag [#allocation5], %s5145
        %s5147 = sand.u32 %s141, 1
        %s5148 = smul.addr %s5147, 256
        %s5149 = scalar_lea.vmem [#allocation4], %s5148
        // Predicated region
        $region37: #{_lambda_.2} parent=31 // pred_check
          %p5150 = pneg %p125
        $region38: #{_lambda_.2} parent=31 // pred_check_branch
          %5152 = sbr.rel (%p5150) target = $region40
        $region39: #{_lambda_.2} parent=31 // pred_region
          %s5153 = smul.u32 %s24, 2
          %s5154 = sadd.s32 %s5153, %s23
        $region40: #{_lambda_.2} parent=31 // pred_fallthru
          _
        // Predicated region
        $region41: #{_lambda_.2} parent=31 // pred_check
          %p5155 = pneg %p151
        $region42: #{_lambda_.2} parent=31 // pred_check_branch
          %5157 = sbr.rel (%p5155) target = $region44
        $region43: #{_lambda_.2} parent=31 // pred_region
          %5159 = vsyncadd %s5146, 0
          %s5160 = smul.addr %s23, 32
          %s5161 = smul.addr %s5160, 8
          %s5162 = scalar_lea.hbm %s4, %s5161
          %s5163 = sshll.u32 %s5149, 4
          %s5164 = int_to_ptr.vmem [resolvable:$true] %s5163
          %s5165 = sshll.u32 %s5162, 4
          %s5166 = int_to_ptr.hbm [resolvable:$true] %s5165
          %5171 = dma.vmem_to_hbm [thread:$0]  %s5164, 4096, %s5166, %s5146, 128, 128, 8
        $region44: #{_lambda_.2} parent=31 // pred_fallthru
          _
      $region32: #{_lambda_.2} parent=5 // pred_fallthru
        _
      %p5172 = scmp.le.s32.totalorder 2, %s14
      // Predicated region
      $region45: #{_lambda_.2} parent=5 // pred_check
        %p5173 = pneg %p5172
      $region46: #{_lambda_.2} parent=5 // pred_check_branch
        %5175 = sbr.rel (%p5173) target = $region48
      $region47: #{_lambda_.2} parent=5 // pred_region
        %s5176 = ssub.s32 %s14, 2
        // Predicated region
        $region49: #{_lambda_.2} parent=47 // pred_check
          %p5177 = pneg %p131
        $region50: #{_lambda_.2} parent=47 // pred_check_branch
          %5179 = sbr.rel (%p5177) target = $region52
        $region51: #{_lambda_.2} parent=47 // pred_region
          %s5180 = smul.u32 %s26, 2
          %s5181 = sadd.s32 %s5180, %s25
          %p5182 = scmp.lt.s32.totalorder %s5181, 15
          %s5183 = scalar_select %p5182, %s5181, 15
          %s5184 = smul.addr %s5183, 32
          %s5185 = smul.addr %s5184, 8
          %s5186 = scalar_lea.vmem %s3, %s5185
        $region52: #{_lambda_.2} parent=47 // pred_fallthru
          _
        // Predicated region
        $region53: #{_lambda_.2} parent=47 // pred_check
          %p5187 = pneg %p157
        $region54: #{_lambda_.2} parent=47 // pred_check_branch
          %5189 = sbr.rel (%p5187) target = $region56
        $region55: #{_lambda_.2} parent=47 // pred_region
          %s5190 = sand.u32 %s142, 1
          %s5191 = scalar_lea.sflag [#allocation5], %s5190
          %s5192 = sand.u32 %s142, 1
          %s5193 = smul.addr %s5192, 256
          %s5194 = scalar_lea.vmem [#allocation4], %s5193
          %5196 = dma.done %s5191, 4096
        $region56: #{_lambda_.2} parent=47 // pred_fallthru
          _
      $region48: #{_lambda_.2} parent=5 // pred_fallthru
        _
    $region6: #{_lambda_.2} parent=1 // loop_footer
      %s18 = sadd.s32 1, %s14
    $region7: #{_lambda_.2} parent=1 // loop_footer_branch
      %13 = sbr.rel target = $region3
    $region8: #{_lambda_.2} parent=1 // loop_exit
      _
    %5197 = vsyncpa [#allocation5], 1
    %s5198 = scalar_lea.sflag [#allocation5], 1
    %5199 = vsyncpa %s5198, 1

// kernel: _lambda_.3
$region0: #{_lambda_.3}
  #allocation0 [shape = 'u32[]', space=smem, size = 0x4, offset = 0x4, fixed_abs, tag = 'smem constant byte address 0x4 - core index']
  #allocation1 [shape = 'u32[72,128]{1,0:T(1,128)}', space=vmem, size = 0x9000, scoped, tag = 'internal scratch']
  #allocation2 [shape = 'f32[256,144]{1,0:T(8,128)}', space=vmem, size = 0x40000, scoped, tag = 'scratch operand']
  #allocation3 [shape = 'f32[18,18,8]{2,1,0:T(8,128)}', space=vmem, size = 0x36000, scoped, tag = 'scratch operand']
  %s0 = inlined_call_operand.vmem [shape: f32[16,18,18,8], index: 0, kind: input, shape index: {}]
  %s1 = inlined_call_operand.vmem [shape: f32[144,32], index: 1, kind: input, shape index: {}]
  %s2 = inlined_call_operand.vmem [shape: f32[1,32], index: 2, kind: input, shape index: {}]
  %s3 = inlined_call_operand.vmem [shape: f32[16,256,8], index: 3, kind: output, shape index: {0}]
  %s4 = inlined_call_operand.vmem [shape: f32[2,256,8], index: 4, kind: output, shape index: {1}]
  %5 = xla_tuple %s3, %s4
  %s6 = sld [smem:[#allocation0]]
  $region57: #{_lambda_.3} parent=0
    _
  %s8 = ssub.s32 1, %s6
  %s9 = scalar_select 0, %s8, %s6
  loop: start=0, step=1, limit=18
  $region2: #{_lambda_.3} parent=0 // loop_pre_header
    _
  $region3: #{_lambda_.3} parent=0 // loop_header
    %s11 = sphi 0, %s15
    %p12 = scmp.ge.s32.totalorder %s11, 18
    %s18 = sphi 0, %s30
    %s19 = sphi 0, %s26
    %s20 = sphi 0, %s18
    %s21 = sphi 0, %s19
    %s22 = sphi 0, %s20
    %s23 = sphi 0, %s21
    %s37 = sphi 0, %s39
    %s40 = sphi 0, %s37
    %s41 = sphi 0, %s40
    %s57 = sphi 0, %s41
    %s61 = sphi 0, %s61
    %s63 = sphi 0, %s61
    %s64 = sphi 0, %s63
    %s78 = sphi 0, %s64
    %s82 = sphi 0, %s82
    %s84 = sphi 0, %s82
    %s85 = sphi 0, %s84
    %s99 = sphi 0, %s85
    %s109 = sphi 0, %s111
    %s112 = sphi 0, %s109
    %s113 = sphi 0, %s112
    %s129 = sphi 0, %s113
    %s135 = sphi 0, %s137
    %s138 = sphi 0, %s135
    %s139 = sphi 0, %s138
    %s155 = sphi 0, %s139
  $region4: #{_lambda_.3} parent=0 // loop_header_branch
    %14 = sbr.rel (%p12) target = $region8
  $region5: #{_lambda_.3} parent=0 // loop_body
    %s16 = ssub.s32 %s11, 1
    %s17 = ssub.s32 %s11, 2
    %s24 = sadd.s32 1, %s19
    %p25 = scmp.ge.s32.totalorder %s24, 8
    %s26 = scalar_select %p25, 0, %s24
    %s27 = sadd.s32 1, %s18
    %s28 = scalar_select %p25, %s27, %s18
    %p29 = scmp.ge.s32.totalorder %s28, 2
    %s30 = scalar_select %p29, 0, %s28
    %s31 = smul.u32 %s19, 2
    %s32 = sadd.s32 %s31, %s18
    %s33 = smul.u32 %s26, 2
    %s34 = sadd.s32 %s33, %s30
    %s35 = ssub.s32 %s32, %s34
    %p36 = scmp.eq.s32.totalorder %s35, 0
    %s38 = sadd.s32 %s37, 1
    %s39 = scalar_select %p36, %s37, %s38
    %p42 = pneg %p36
    %p43 = scmp.eq.s32.totalorder %s11, 15
    %p44 = por %p42, %p43
    %p45 = scmp.ne.s32.totalorder %s37, %s40
    %p46 = scmp.eq.s32.totalorder %s11, 0
    %p47 = por %p45, %p46
    %p48 = scmp.ne.s32.totalorder %s37, %s40
    %p49 = scmp.eq.s32.totalorder %s16, 15
    %p50 = por %p48, %p49
    %p51 = scmp.ne.s32.totalorder %s40, %s41
    %p52 = scmp.eq.s32.totalorder %s16, 0
    %p53 = por %p51, %p52
    %p54 = scmp.ne.s32.totalorder %s40, %s41
    %p55 = scmp.eq.s32.totalorder %s17, 15
    %p56 = por %p54, %p55
    %p58 = scmp.ne.s32.totalorder %s41, %s57
    %p59 = scmp.eq.s32.totalorder %s17, 0
    %p60 = por %p58, %p59
    %s62 = sadd.s32 %s61, 1
    %p65 = scmp.eq.s32.totalorder %s11, 15
    %p66 = scmp.ne.s32.totalorder %s61, %s63
    %p67 = scmp.eq.s32.totalorder %s11, 0
    %p68 = por %p66, %p67
    %p69 = scmp.ne.s32.totalorder %s61, %s63
    %p70 = scmp.eq.s32.totalorder %s16, 15
    %p71 = por %p69, %p70
    %p72 = scmp.ne.s32.totalorder %s63, %s64
    %p73 = scmp.eq.s32.totalorder %s16, 0
    %p74 = por %p72, %p73
    %p75 = scmp.ne.s32.totalorder %s63, %s64
    %p76 = scmp.eq.s32.totalorder %s17, 15
    %p77 = por %p75, %p76
    %p79 = scmp.ne.s32.totalorder %s64, %s78
    %p80 = scmp.eq.s32.totalorder %s17, 0
    %p81 = por %p79, %p80
    %s83 = sadd.s32 %s82, 1
    %p86 = scmp.eq.s32.totalorder %s11, 15
    %p87 = scmp.ne.s32.totalorder %s82, %s84
    %p88 = scmp.eq.s32.totalorder %s11, 0
    %p89 = por %p87, %p88
    %p90 = scmp.ne.s32.totalorder %s82, %s84
    %p91 = scmp.eq.s32.totalorder %s16, 15
    %p92 = por %p90, %p91
    %p93 = scmp.ne.s32.totalorder %s84, %s85
    %p94 = scmp.eq.s32.totalorder %s16, 0
    %p95 = por %p93, %p94
    %p96 = scmp.ne.s32.totalorder %s84, %s85
    %p97 = scmp.eq.s32.totalorder %s17, 15
    %p98 = por %p96, %p97
    %p100 = scmp.ne.s32.totalorder %s85, %s99
    %p101 = scmp.eq.s32.totalorder %s17, 0
    %p102 = por %p100, %p101
    %s103 = smul.u32 %s19, 2
    %s104 = sadd.s32 %s103, %s18
    %s105 = smul.u32 %s26, 2
    %s106 = sadd.s32 %s105, %s30
    %s107 = ssub.s32 %s104, %s106
    %p108 = scmp.eq.s32.totalorder %s107, 0
    %s110 = sadd.s32 %s109, 1
    %s111 = scalar_select %p108, %s109, %s110
    %p114 = pneg %p108
    %p115 = scmp.eq.s32.totalorder %s11, 15
    %p116 = por %p114, %p115
    %p117 = scmp.ne.s32.totalorder %s109, %s112
    %p118 = scmp.eq.s32.totalorder %s11, 0
    %p119 = por %p117, %p118
    %p120 = scmp.ne.s32.totalorder %s109, %s112
    %p121 = scmp.eq.s32.totalorder %s16, 15
    %p122 = por %p120, %p121
    %p123 = scmp.ne.s32.totalorder %s112, %s113
    %p124 = scmp.eq.s32.totalorder %s16, 0
    %p125 = por %p123, %p124
    %p126 = scmp.ne.s32.totalorder %s112, %s113
    %p127 = scmp.eq.s32.totalorder %s17, 15
    %p128 = por %p126, %p127
    %p130 = scmp.ne.s32.totalorder %s113, %s129
    %p131 = scmp.eq.s32.totalorder %s17, 0
    %p132 = por %p130, %p131
    %s133 = ssub.s32 %s18, %s30
    %p134 = scmp.eq.s32.totalorder %s133, 0
    %s136 = sadd.s32 %s135, 1
    %s137 = scalar_select %p134, %s135, %s136
    %p140 = pneg %p134
    %p141 = scmp.eq.s32.totalorder %s11, 15
    %p142 = por %p140, %p141
    %p143 = scmp.ne.s32.totalorder %s135, %s138
    %p144 = scmp.eq.s32.totalorder %s11, 0
    %p145 = por %p143, %p144
    %p146 = scmp.ne.s32.totalorder %s135, %s138
    %p147 = scmp.eq.s32.totalorder %s16, 15
    %p148 = por %p146, %p147
    %p149 = scmp.ne.s32.totalorder %s138, %s139
    %p150 = scmp.eq.s32.totalorder %s16, 0
    %p151 = por %p149, %p150
    %p152 = scmp.ne.s32.totalorder %s138, %s139
    %p153 = scmp.eq.s32.totalorder %s17, 15
    %p154 = por %p152, %p153
    %p156 = scmp.ne.s32.totalorder %s139, %s155
    %p157 = scmp.eq.s32.totalorder %s17, 0
    %p158 = por %p156, %p157
    %p159 = scmp.le.s32.totalorder 1, %s11
    %p160 = scmp.lt.s32.totalorder %s11, 17
    %p161 = pnand %p159, %p160
    %p162 = pneg %p161
    // Predicated region
    $region9: #{_lambda_.3} parent=5 // pred_check
      _
    $region10: #{_lambda_.3} parent=5 // pred_check_branch
      %164 = sbr.rel (%p161) target = $region12
    $region11: #{_lambda_.3} parent=5 // pred_region
      %s165 = ssub.s32 %s11, 1
      // Predicated region
      $region13: #{_lambda_.3} parent=11 // pred_check
        %p166 = pneg %p74
      $region14: #{_lambda_.3} parent=11 // pred_check_branch
        %168 = sbr.rel (%p166) target = $region16
      $region15: #{_lambda_.3} parent=11 // pred_region
        _
      $region16: #{_lambda_.3} parent=11 // pred_fallthru
        _
      // Predicated region
      $region17: #{_lambda_.3} parent=11 // pred_check
        %p169 = pneg %p95
      $region18: #{_lambda_.3} parent=11 // pred_check_branch
        %171 = sbr.rel (%p169) target = $region20
      $region19: #{_lambda_.3} parent=11 // pred_region
        _
      $region20: #{_lambda_.3} parent=11 // pred_fallthru
        _
    $region12: #{_lambda_.3} parent=5 // pred_fallthru
      _
    %p172 = scmp.lt.s32.totalorder %s11, 16
    // Predicated region
    $region21: #{_lambda_.3} parent=5 // pred_check
      %p173 = pneg %p172
    $region22: #{_lambda_.3} parent=5 // pred_check_branch
      %175 = sbr.rel (%p173) target = $region24
    $region23: #{_lambda_.3} parent=5 // pred_region
      // Predicated region
      $region25: #{_lambda_.3} parent=23 // pred_check
        %p176 = pneg %p47
      $region26: #{_lambda_.3} parent=23 // pred_check_branch
        %178 = sbr.rel (%p176) target = $region28
      $region27: #{_lambda_.3} parent=23 // pred_region
        %s179 = smul.u32 %s19, 2
        %s180 = sadd.s32 %s179, %s18
        %p181 = scmp.lt.s32.totalorder %s180, 15
        %s182 = scalar_select %p181, %s180, 15
        %s183 = smul.addr %s182, 54
        %s184 = smul.addr %s183, 8
        %s185 = scalar_lea.vmem %s0, %s184
        %s186 = smul.u32 %s19, 2
        %s187 = sadd.s32 %s186, %s18
      $region28: #{_lambda_.3} parent=23 // pred_fallthru
        _
    $region24: #{_lambda_.3} parent=5 // pred_fallthru
      _
    %p188 = scmp.le.s32.totalorder 1, %s11
    %p189 = scmp.lt.s32.totalorder %s11, 17
    %p190 = pnand %p188, %p189
    %p191 = pneg %p190
    // Predicated region
    $region29: #{_lambda_.3} parent=5 // pred_check
      _
    $region30: #{_lambda_.3} parent=5 // pred_check_branch
      %193 = sbr.rel (%p190) target = $region32
    $region31: #{_lambda_.3} parent=5 // pred_region
      %s194 = ssub.s32 %s11, 1
      %s195 = smul.u32 %s21, 2
      %s196 = sadd.s32 %s195, %s20
      %p197 = scmp.lt.s32.totalorder %s196, 15
      %s198 = scalar_select %p197, %s196, 15
      %s199 = smul.addr %s198, 54
      %s200 = smul.addr %s199, 8
      %s201 = scalar_lea.vmem %s0, %s200
      %p202 = pneg %p53
      %p203 = pneg %p50
      %p204 = pneg %p74
      %p205 = pneg %p71
      %p206 = pneg %p95
      %p207 = pneg %p92
      %p208 = pneg %p125
      %p209 = pneg %p122
      %s210 = smul.u32 %s21, 2
      %s211 = sadd.s32 %s210, %s20
      %p212 = scmp.lt.s32.totalorder %s211, 15
      %s213 = scalar_select %p212, %s211, 15
      %s214 = smul.addr %s213, 32
      %s215 = smul.addr %s214, 8
      %s216 = scalar_lea.vmem %s3, %s215
      %p217 = pneg %p151
      %p218 = pneg %p148
      %p219 = scmp.lt.s32.totalorder %s20, 1
      %s220 = scalar_select %p219, %s20, 1
      %s221 = smul.addr %s220, 32
      %s222 = smul.addr %s221, 8
      %s223 = scalar_lea.vmem %s4, %s222
      %s224 = smul.u32 %s21, 2
      %s225 = sadd.s32 %s224, %s20
      %p226 = scmp.lt.s32.totalorder %s225, 15
      %s227 = scalar_select %p226, %s225, 15
      %s228 = smul.addr %s227, 54
      %s229 = smul.addr %s228, 8
      %s230 = scalar_lea.vmem %s0, %s229
      %s231 = smul.u32 %s21, 2
      %s232 = sadd.s32 %s231, %s20
      %s233 = smul.u32 %s21, 2
      %s234 = sadd.s32 %s233, %s20
      %p235 = scmp.lt.s32.totalorder %s234, 15
      %s236 = scalar_select %p235, %s234, 15
      %s237 = smul.addr %s236, 32
      %s238 = smul.addr %s237, 8
      %s239 = scalar_lea.vmem %s3, %s238
      %s240 = smul.u32 %s21, 2
      %s241 = sadd.s32 %s240, %s20
      %p242 = scmp.lt.s32.totalorder %s20, 1
      %s243 = scalar_select %p242, %s20, 1
      %s244 = smul.addr %s243, 32
      %s245 = smul.addr %s244, 8
      %s246 = scalar_lea.vmem %s4, %s245
      %p247 = scmp.eq.s32.totalorder %s21, 0
      // Predicated region
      $region33: #{_lambda_.3} parent=31 // pred_check
        %p248 = pneg %p247
      $region34: #{_lambda_.3} parent=31 // pred_check_branch
        %250 = sbr.rel (%p248) target = $region36
      $region35: #{_lambda_.3} parent=31 // pred_region
        %vm251 = vcmask 64512
        %252 = vst.msk [vmem:[#allocation3] sm:$0xff] %vm251, 0.0
        %253 = vst.msk [vmem:[#allocation3 + $0x8] sm:$0xff] %vm251, 0.0
        %vm254 = vcmask 58368
        %255 = vst.msk [vmem:[#allocation3 + $0x10] sm:$0x3] %vm254, 0.0
        %256 = vst.msk [vmem:[#allocation3 + $0x18] sm:$0xff] %vm251, 0.0
        %257 = vst.msk [vmem:[#allocation3 + $0x20] sm:$0xff] %vm251, 0.0
        %258 = vst.msk [vmem:[#allocation3 + $0x28] sm:$0x3] %vm254, 0.0
        %259 = vst.msk [vmem:[#allocation3 + $0x30] sm:$0xff] %vm251, 0.0
        %260 = vst.msk [vmem:[#allocation3 + $0x38] sm:$0xff] %vm251, 0.0
        %261 = vst.msk [vmem:[#allocation3 + $0x40] sm:$0x3] %vm254, 0.0
        %262 = vst.msk [vmem:[#allocation3 + $0x48] sm:$0xff] %vm251, 0.0
        %263 = vst.msk [vmem:[#allocation3 + $0x50] sm:$0xff] %vm251, 0.0
        %264 = vst.msk [vmem:[#allocation3 + $0x58] sm:$0x3] %vm254, 0.0
        %265 = vst.msk [vmem:[#allocation3 + $0x60] sm:$0xff] %vm251, 0.0
        %266 = vst.msk [vmem:[#allocation3 + $0x68] sm:$0xff] %vm251, 0.0
        %267 = vst.msk [vmem:[#allocation3 + $0x70] sm:$0x3] %vm254, 0.0
        %268 = vst.msk [vmem:[#allocation3 + $0x78] sm:$0xff] %vm251, 0.0
        %269 = vst.msk [vmem:[#allocation3 + $0x80] sm:$0xff] %vm251, 0.0
        %270 = vst.msk [vmem:[#allocation3 + $0x88] sm:$0x3] %vm254, 0.0
        %271 = vst.msk [vmem:[#allocation3 + $0x90] sm:$0xff] %vm251, 0.0
        %272 = vst.msk [vmem:[#allocation3 + $0x98] sm:$0xff] %vm251, 0.0
        %273 = vst.msk [vmem:[#allocation3 + $0xa0] sm:$0x3] %vm254, 0.0
        %274 = vst.msk [vmem:[#allocation3 + $0xa8] sm:$0xff] %vm251, 0.0
        %275 = vst.msk [vmem:[#allocation3 + $0xb0] sm:$0xff] %vm251, 0.0
        %276 = vst.msk [vmem:[#allocation3 + $0xb8] sm:$0x3] %vm254, 0.0
        %277 = vst.msk [vmem:[#allocation3 + $0xc0] sm:$0xff] %vm251, 0.0
        %278 = vst.msk [vmem:[#allocation3 + $0xc8] sm:$0xff] %vm251, 0.0
        %279 = vst.msk [vmem:[#allocation3 + $0xd0] sm:$0x3] %vm254, 0.0
        %280 = vst.msk [vmem:[#allocation3 + $0xd8] sm:$0xff] %vm251, 0.0
        %281 = vst.msk [vmem:[#allocation3 + $0xe0] sm:$0xff] %vm251, 0.0
        %282 = vst.msk [vmem:[#allocation3 + $0xe8] sm:$0x3] %vm254, 0.0
        %283 = vst.msk [vmem:[#allocation3 + $0xf0] sm:$0xff] %vm251, 0.0
        %284 = vst.msk [vmem:[#allocation3 + $0xf8] sm:$0xff] %vm251, 0.0
        %285 = vst.msk [vmem:[#allocation3 + $0x100] sm:$0x3] %vm254, 0.0
        %286 = vst.msk [vmem:[#allocation3 + $0x108] sm:$0xff] %vm251, 0.0
        %287 = vst.msk [vmem:[#allocation3 + $0x110] sm:$0xff] %vm251, 0.0
        %288 = vst.msk [vmem:[#allocation3 + $0x118] sm:$0x3] %vm254, 0.0
        %289 = vst.msk [vmem:[#allocation3 + $0x120] sm:$0xff] %vm251, 0.0
        %290 = vst.msk [vmem:[#allocation3 + $0x128] sm:$0xff] %vm251, 0.0
        %291 = vst.msk [vmem:[#allocation3 + $0x130] sm:$0x3] %vm254, 0.0
        %292 = vst.msk [vmem:[#allocation3 + $0x138] sm:$0xff] %vm251, 0.0
        %293 = vst.msk [vmem:[#allocation3 + $0x140] sm:$0xff] %vm251, 0.0
        %294 = vst.msk [vmem:[#allocation3 + $0x148] sm:$0x3] %vm254, 0.0
        %295 = vst.msk [vmem:[#allocation3 + $0x150] sm:$0xff] %vm251, 0.0
        %296 = vst.msk [vmem:[#allocation3 + $0x158] sm:$0xff] %vm251, 0.0
        %297 = vst.msk [vmem:[#allocation3 + $0x160] sm:$0x3] %vm254, 0.0
        %298 = vst.msk [vmem:[#allocation3 + $0x168] sm:$0xff] %vm251, 0.0
        %299 = vst.msk [vmem:[#allocation3 + $0x170] sm:$0xff] %vm251, 0.0
        %300 = vst.msk [vmem:[#allocation3 + $0x178] sm:$0x3] %vm254, 0.0
        %301 = vst.msk [vmem:[#allocation3 + $0x180] sm:$0xff] %vm251, 0.0
        %302 = vst.msk [vmem:[#allocation3 + $0x188] sm:$0xff] %vm251, 0.0
        %303 = vst.msk [vmem:[#allocation3 + $0x190] sm:$0x3] %vm254, 0.0
        %304 = vst.msk [vmem:[#allocation3 + $0x198] sm:$0xff] %vm251, 0.0
        %305 = vst.msk [vmem:[#allocation3 + $0x1a0] sm:$0xff] %vm251, 0.0
        %306 = vst.msk [vmem:[#allocation3 + $0x1a8] sm:$0x3] %vm254, 0.0
        %307 = vst.msk [vmem:[%s246] sm:$0xff] %vm251, 0.0
        %308 = vst.msk [vmem:[%s246 + $0x8] sm:$0xff] %vm251, 0.0
        %309 = vst.msk [vmem:[%s246 + $0x10] sm:$0xff] %vm251, 0.0
        %310 = vst.msk [vmem:[%s246 + $0x18] sm:$0xff] %vm251, 0.0
        %311 = vst.msk [vmem:[%s246 + $0x20] sm:$0xff] %vm251, 0.0
        %312 = vst.msk [vmem:[%s246 + $0x28] sm:$0xff] %vm251, 0.0
        %313 = vst.msk [vmem:[%s246 + $0x30] sm:$0xff] %vm251, 0.0
        %314 = vst.msk [vmem:[%s246 + $0x38] sm:$0xff] %vm251, 0.0
        %315 = vst.msk [vmem:[%s246 + $0x40] sm:$0xff] %vm251, 0.0
        %316 = vst.msk [vmem:[%s246 + $0x48] sm:$0xff] %vm251, 0.0
        %317 = vst.msk [vmem:[%s246 + $0x50] sm:$0xff] %vm251, 0.0
        %318 = vst.msk [vmem:[%s246 + $0x58] sm:$0xff] %vm251, 0.0
        %319 = vst.msk [vmem:[%s246 + $0x60] sm:$0xff] %vm251, 0.0
        %320 = vst.msk [vmem:[%s246 + $0x68] sm:$0xff] %vm251, 0.0
        %321 = vst.msk [vmem:[%s246 + $0x70] sm:$0xff] %vm251, 0.0
        %322 = vst.msk [vmem:[%s246 + $0x78] sm:$0xff] %vm251, 0.0
        %323 = vst.msk [vmem:[%s246 + $0x80] sm:$0xff] %vm251, 0.0
        %324 = vst.msk [vmem:[%s246 + $0x88] sm:$0xff] %vm251, 0.0
        %325 = vst.msk [vmem:[%s246 + $0x90] sm:$0xff] %vm251, 0.0
        %326 = vst.msk [vmem:[%s246 + $0x98] sm:$0xff] %vm251, 0.0
        %327 = vst.msk [vmem:[%s246 + $0xa0] sm:$0xff] %vm251, 0.0
        %328 = vst.msk [vmem:[%s246 + $0xa8] sm:$0xff] %vm251, 0.0
        %329 = vst.msk [vmem:[%s246 + $0xb0] sm:$0xff] %vm251, 0.0
        %330 = vst.msk [vmem:[%s246 + $0xb8] sm:$0xff] %vm251, 0.0
        %331 = vst.msk [vmem:[%s246 + $0xc0] sm:$0xff] %vm251, 0.0
        %332 = vst.msk [vmem:[%s246 + $0xc8] sm:$0xff] %vm251, 0.0
        %333 = vst.msk [vmem:[%s246 + $0xd0] sm:$0xff] %vm251, 0.0
        %334 = vst.msk [vmem:[%s246 + $0xd8] sm:$0xff] %vm251, 0.0
        %335 = vst.msk [vmem:[%s246 + $0xe0] sm:$0xff] %vm251, 0.0
        %336 = vst.msk [vmem:[%s246 + $0xe8] sm:$0xff] %vm251, 0.0
        %337 = vst.msk [vmem:[%s246 + $0xf0] sm:$0xff] %vm251, 0.0
        %338 = vst.msk [vmem:[%s246 + $0xf8] sm:$0xff] %vm251, 0.0
      $region36: #{_lambda_.3} parent=31 // pred_fallthru
        _
      %v339 = vld [vmem:[%s230] sm:$0xff]
      %v340 = vld [vmem:[%s230 + $0x8] sm:$0xff]
      %v341 = vld [vmem:[%s230 + $0x10] sm:$0x3]
      %v342 = vld [vmem:[%s230 + $0x18] sm:$0xff]
      %v343 = vld [vmem:[%s230 + $0x20] sm:$0xff]
      %v344 = vld [vmem:[%s230 + $0x28] sm:$0x3]
      %v345 = vld [vmem:[%s230 + $0x30] sm:$0xff]
      %v346 = vld [vmem:[%s230 + $0x38] sm:$0xff]
      %v347 = vld [vmem:[%s230 + $0x40] sm:$0x3]
      %v348 = vld [vmem:[%s230 + $0x48] sm:$0xff]
      %v349 = vld [vmem:[%s230 + $0x50] sm:$0xff]
      %v350 = vld [vmem:[%s230 + $0x58] sm:$0x3]
      %v351 = vld [vmem:[%s230 + $0x60] sm:$0xff]
      %v352 = vld [vmem:[%s230 + $0x68] sm:$0xff]
      %v353 = vld [vmem:[%s230 + $0x70] sm:$0x3]
      %v354 = vld [vmem:[%s230 + $0x78] sm:$0xff]
      %v355 = vld [vmem:[%s230 + $0x80] sm:$0xff]
      %v356 = vld [vmem:[%s230 + $0x88] sm:$0x3]
      %v357 = vld [vmem:[%s230 + $0x90] sm:$0xff]
      %v358 = vld [vmem:[%s230 + $0x98] sm:$0xff]
      %v359 = vld [vmem:[%s230 + $0xa0] sm:$0x3]
      %v360 = vld [vmem:[%s230 + $0xa8] sm:$0xff]
      %v361 = vld [vmem:[%s230 + $0xb0] sm:$0xff]
      %v362 = vld [vmem:[%s230 + $0xb8] sm:$0x3]
      %v363 = vld [vmem:[%s230 + $0xc0] sm:$0xff]
      %v364 = vld [vmem:[%s230 + $0xc8] sm:$0xff]
      %v365 = vld [vmem:[%s230 + $0xd0] sm:$0x3]
      %v366 = vld [vmem:[%s230 + $0xd8] sm:$0xff]
      %v367 = vld [vmem:[%s230 + $0xe0] sm:$0xff]
      %v368 = vld [vmem:[%s230 + $0xe8] sm:$0x3]
      %v369 = vld [vmem:[%s230 + $0xf0] sm:$0xff]
      %v370 = vld [vmem:[%s230 + $0xf8] sm:$0xff]
      %v371 = vld [vmem:[%s230 + $0x100] sm:$0x3]
      %v372 = vld [vmem:[%s230 + $0x108] sm:$0xff]
      %v373 = vld [vmem:[%s230 + $0x110] sm:$0xff]
      %v374 = vld [vmem:[%s230 + $0x118] sm:$0x3]
      %v375 = vld [vmem:[%s230 + $0x120] sm:$0xff]
      %v376 = vld [vmem:[%s230 + $0x128] sm:$0xff]
      %v377 = vld [vmem:[%s230 + $0x130] sm:$0x3]
      %v378 = vld [vmem:[%s230 + $0x138] sm:$0xff]
      %v379 = vld [vmem:[%s230 + $0x140] sm:$0xff]
      %v380 = vld [vmem:[%s230 + $0x148] sm:$0x3]
      %v381 = vld [vmem:[%s230 + $0x150] sm:$0xff]
      %v382 = vld [vmem:[%s230 + $0x158] sm:$0xff]
      %v383 = vld [vmem:[%s230 + $0x160] sm:$0x3]
      %v384 = vld [vmem:[%s230 + $0x168] sm:$0xff]
      %v385 = vld [vmem:[%s230 + $0x170] sm:$0xff]
      %v386 = vld [vmem:[%s230 + $0x178] sm:$0x3]
      %v387 = vld [vmem:[%s230 + $0x180] sm:$0xff]
      %v388 = vld [vmem:[%s230 + $0x188] sm:$0xff]
      %v389 = vld [vmem:[%s230 + $0x190] sm:$0x3]
      %v390 = vld [vmem:[%s230 + $0x198] sm:$0xff]
      %v391 = vld [vmem:[%s230 + $0x1a0] sm:$0xff]
      %v392 = vld [vmem:[%s230 + $0x1a8] sm:$0x3]
      %v393 = vld [vmem:[#allocation3] sm:$0xff]
      %v394 = vld [vmem:[#allocation3 + $0x8] sm:$0xff]
      %v395 = vld [vmem:[#allocation3 + $0x10] sm:$0x3]
      %v396 = vld [vmem:[#allocation3 + $0x18] sm:$0xff]
      %v397 = vld [vmem:[#allocation3 + $0x20] sm:$0xff]
      %v398 = vld [vmem:[#allocation3 + $0x28] sm:$0x3]
      %v399 = vld [vmem:[#allocation3 + $0x30] sm:$0xff]
      %v400 = vld [vmem:[#allocation3 + $0x38] sm:$0xff]
      %v401 = vld [vmem:[#allocation3 + $0x40] sm:$0x3]
      %v402 = vld [vmem:[#allocation3 + $0x48] sm:$0xff]
      %v403 = vld [vmem:[#allocation3 + $0x50] sm:$0xff]
      %v404 = vld [vmem:[#allocation3 + $0x58] sm:$0x3]
      %v405 = vld [vmem:[#allocation3 + $0x60] sm:$0xff]
      %v406 = vld [vmem:[#allocation3 + $0x68] sm:$0xff]
      %v407 = vld [vmem:[#allocation3 + $0x70] sm:$0x3]
      %v408 = vld [vmem:[#allocation3 + $0x78] sm:$0xff]
      %v409 = vld [vmem:[#allocation3 + $0x80] sm:$0xff]
      %v410 = vld [vmem:[#allocation3 + $0x88] sm:$0x3]
      %v411 = vld [vmem:[#allocation3 + $0x90] sm:$0xff]
      %v412 = vld [vmem:[#allocation3 + $0x98] sm:$0xff]
      %v413 = vld [vmem:[#allocation3 + $0xa0] sm:$0x3]
      %v414 = vld [vmem:[#allocation3 + $0xa8] sm:$0xff]
      %v415 = vld [vmem:[#allocation3 + $0xb0] sm:$0xff]
      %v416 = vld [vmem:[#allocation3 + $0xb8] sm:$0x3]
      %v417 = vld [vmem:[#allocation3 + $0xc0] sm:$0xff]
      %v418 = vld [vmem:[#allocation3 + $0xc8] sm:$0xff]
      %v419 = vld [vmem:[#allocation3 + $0xd0] sm:$0x3]
      %v420 = vld [vmem:[#allocation3 + $0xd8] sm:$0xff]
      %v421 = vld [vmem:[#allocation3 + $0xe0] sm:$0xff]
      %v422 = vld [vmem:[#allocation3 + $0xe8] sm:$0x3]
      %v423 = vld [vmem:[#allocation3 + $0xf0] sm:$0xff]
      %v424 = vld [vmem:[#allocation3 + $0xf8] sm:$0xff]
      %v425 = vld [vmem:[#allocation3 + $0x100] sm:$0x3]
      %v426 = vld [vmem:[#allocation3 + $0x108] sm:$0xff]
      %v427 = vld [vmem:[#allocation3 + $0x110] sm:$0xff]
      %v428 = vld [vmem:[#allocation3 + $0x118] sm:$0x3]
      %v429 = vld [vmem:[#allocation3 + $0x120] sm:$0xff]
      %v430 = vld [vmem:[#allocation3 + $0x128] sm:$0xff]
      %v431 = vld [vmem:[#allocation3 + $0x130] sm:$0x3]
      %v432 = vld [vmem:[#allocation3 + $0x138] sm:$0xff]
      %v433 = vld [vmem:[#allocation3 + $0x140] sm:$0xff]
      %v434 = vld [vmem:[#allocation3 + $0x148] sm:$0x3]
      %v435 = vld [vmem:[#allocation3 + $0x150] sm:$0xff]
      %v436 = vld [vmem:[#allocation3 + $0x158] sm:$0xff]
      %v437 = vld [vmem:[#allocation3 + $0x160] sm:$0x3]
      %v438 = vld [vmem:[#allocation3 + $0x168] sm:$0xff]
      %v439 = vld [vmem:[#allocation3 + $0x170] sm:$0xff]
      %v440 = vld [vmem:[#allocation3 + $0x178] sm:$0x3]
      %v441 = vld [vmem:[#allocation3 + $0x180] sm:$0xff]
      %v442 = vld [vmem:[#allocation3 + $0x188] sm:$0xff]
      %v443 = vld [vmem:[#allocation3 + $0x190] sm:$0x3]
      %v444 = vld [vmem:[#allocation3 + $0x198] sm:$0xff]
      %v445 = vld [vmem:[#allocation3 + $0x1a0] sm:$0xff]
      %v446 = vld [vmem:[#allocation3 + $0x1a8] sm:$0x3]
      %vm447 = vcmask 64512
      %448 = vst.msk [vmem:[#allocation2] sm:$0xff] %vm447, %v339
      %449 = vst.msk [vmem:[#allocation2 + $0x10] sm:$0xff] %vm447, %v340
      %450 = vst.msk [vmem:[#allocation2 + $0x20] sm:$0xff] %vm447, %v342
      %451 = vst.msk [vmem:[#allocation2 + $0x30] sm:$0xff] %vm447, %v343
      %452 = vst.msk [vmem:[#allocation2 + $0x40] sm:$0xff] %vm447, %v345
      %453 = vst.msk [vmem:[#allocation2 + $0x50] sm:$0xff] %vm447, %v346
      %454 = vst.msk [vmem:[#allocation2 + $0x60] sm:$0xff] %vm447, %v348
      %455 = vst.msk [vmem:[#allocation2 + $0x70] sm:$0xff] %vm447, %v349
      %456 = vst.msk [vmem:[#allocation2 + $0x80] sm:$0xff] %vm447, %v351
      %457 = vst.msk [vmem:[#allocation2 + $0x90] sm:$0xff] %vm447, %v352
      %458 = vst.msk [vmem:[#allocation2 + $0xa0] sm:$0xff] %vm447, %v354
      %459 = vst.msk [vmem:[#allocation2 + $0xb0] sm:$0xff] %vm447, %v355
      %460 = vst.msk [vmem:[#allocation2 + $0xc0] sm:$0xff] %vm447, %v357
      %461 = vst.msk [vmem:[#allocation2 + $0xd0] sm:$0xff] %vm447, %v358
      %462 = vst.msk [vmem:[#allocation2 + $0xe0] sm:$0xff] %vm447, %v360
      %463 = vst.msk [vmem:[#allocation2 + $0xf0] sm:$0xff] %vm447, %v361
      %464 = vst.msk [vmem:[#allocation2 + $0x100] sm:$0xff] %vm447, %v363
      %465 = vst.msk [vmem:[#allocation2 + $0x110] sm:$0xff] %vm447, %v364
      %466 = vst.msk [vmem:[#allocation2 + $0x120] sm:$0xff] %vm447, %v366
      %467 = vst.msk [vmem:[#allocation2 + $0x130] sm:$0xff] %vm447, %v367
      %468 = vst.msk [vmem:[#allocation2 + $0x140] sm:$0xff] %vm447, %v369
      %469 = vst.msk [vmem:[#allocation2 + $0x150] sm:$0xff] %vm447, %v370
      %470 = vst.msk [vmem:[#allocation2 + $0x160] sm:$0xff] %vm447, %v372
      %471 = vst.msk [vmem:[#allocation2 + $0x170] sm:$0xff] %vm447, %v373
      %472 = vst.msk [vmem:[#allocation2 + $0x180] sm:$0xff] %vm447, %v375
      %473 = vst.msk [vmem:[#allocation2 + $0x190] sm:$0xff] %vm447, %v376
      %474 = vst.msk [vmem:[#allocation2 + $0x1a0] sm:$0xff] %vm447, %v378
      %475 = vst.msk [vmem:[#allocation2 + $0x1b0] sm:$0xff] %vm447, %v379
      %476 = vst.msk [vmem:[#allocation2 + $0x1c0] sm:$0xff] %vm447, %v381
      %477 = vst.msk [vmem:[#allocation2 + $0x1d0] sm:$0xff] %vm447, %v382
      %478 = vst.msk [vmem:[#allocation2 + $0x1e0] sm:$0xff] %vm447, %v384
      %479 = vst.msk [vmem:[#allocation2 + $0x1f0] sm:$0xff] %vm447, %v385
      %512 = vrot.lane.b32.xlu0 %v393, 8
      %v513 = vpop.permute.xlu0 %512
      %514 = vrot.lane.b32.xlu0 %v394, 8
      %v515 = vpop.permute.xlu0 %514
      %516 = vrot.lane.b32.xlu0 %v396, 8
      %v517 = vpop.permute.xlu0 %516
      %518 = vrot.lane.b32.xlu0 %v397, 8
      %v519 = vpop.permute.xlu0 %518
      %520 = vrot.lane.b32.xlu0 %v399, 8
      %v521 = vpop.permute.xlu0 %520
      %522 = vrot.lane.b32.xlu0 %v400, 8
      %v523 = vpop.permute.xlu0 %522
      %524 = vrot.lane.b32.xlu0 %v402, 8
      %v525 = vpop.permute.xlu0 %524
      %526 = vrot.lane.b32.xlu0 %v403, 8
      %v527 = vpop.permute.xlu0 %526
      %528 = vrot.lane.b32.xlu0 %v405, 8
      %v529 = vpop.permute.xlu0 %528
      %530 = vrot.lane.b32.xlu0 %v406, 8
      %v531 = vpop.permute.xlu0 %530
      %532 = vrot.lane.b32.xlu0 %v408, 8
      %v533 = vpop.permute.xlu0 %532
      %534 = vrot.lane.b32.xlu0 %v409, 8
      %v535 = vpop.permute.xlu0 %534
      %536 = vrot.lane.b32.xlu0 %v411, 8
      %v537 = vpop.permute.xlu0 %536
      %538 = vrot.lane.b32.xlu0 %v412, 8
      %v539 = vpop.permute.xlu0 %538
      %540 = vrot.lane.b32.xlu0 %v414, 8
      %v541 = vpop.permute.xlu0 %540
      %542 = vrot.lane.b32.xlu0 %v415, 8
      %v543 = vpop.permute.xlu0 %542
      %544 = vrot.lane.b32.xlu0 %v417, 8
      %v545 = vpop.permute.xlu0 %544
      %546 = vrot.lane.b32.xlu0 %v418, 8
      %v547 = vpop.permute.xlu0 %546
      %548 = vrot.lane.b32.xlu0 %v420, 8
      %v549 = vpop.permute.xlu0 %548
      %550 = vrot.lane.b32.xlu0 %v421, 8
      %v551 = vpop.permute.xlu0 %550
      %552 = vrot.lane.b32.xlu0 %v423, 8
      %v553 = vpop.permute.xlu0 %552
      %554 = vrot.lane.b32.xlu0 %v424, 8
      %v555 = vpop.permute.xlu0 %554
      %556 = vrot.lane.b32.xlu0 %v426, 8
      %v557 = vpop.permute.xlu0 %556
      %558 = vrot.lane.b32.xlu0 %v427, 8
      %v559 = vpop.permute.xlu0 %558
      %560 = vrot.lane.b32.xlu0 %v429, 8
      %v561 = vpop.permute.xlu0 %560
      %562 = vrot.lane.b32.xlu0 %v430, 8
      %v563 = vpop.permute.xlu0 %562
      %564 = vrot.lane.b32.xlu0 %v432, 8
      %v565 = vpop.permute.xlu0 %564
      %566 = vrot.lane.b32.xlu0 %v433, 8
      %v567 = vpop.permute.xlu0 %566
      %568 = vrot.lane.b32.xlu0 %v435, 8
      %v569 = vpop.permute.xlu0 %568
      %570 = vrot.lane.b32.xlu0 %v436, 8
      %v571 = vpop.permute.xlu0 %570
      %572 = vrot.lane.b32.xlu0 %v438, 8
      %v573 = vpop.permute.xlu0 %572
      %574 = vrot.lane.b32.xlu0 %v439, 8
      %v575 = vpop.permute.xlu0 %574
      %vm608 = vcmask 130112
      %609 = vst.msk [vmem:[#allocation2] sm:$0xff] %vm608, %v513
      %610 = vst.msk [vmem:[#allocation2 + $0x10] sm:$0xff] %vm608, %v515
      %611 = vst.msk [vmem:[#allocation2 + $0x20] sm:$0xff] %vm608, %v517
      %612 = vst.msk [vmem:[#allocation2 + $0x30] sm:$0xff] %vm608, %v519
      %613 = vst.msk [vmem:[#allocation2 + $0x40] sm:$0xff] %vm608, %v521
      %614 = vst.msk [vmem:[#allocation2 + $0x50] sm:$0xff] %vm608, %v523
      %615 = vst.msk [vmem:[#allocation2 + $0x60] sm:$0xff] %vm608, %v525
      %616 = vst.msk [vmem:[#allocation2 + $0x70] sm:$0xff] %vm608, %v527
      %617 = vst.msk [vmem:[#allocation2 + $0x80] sm:$0xff] %vm608, %v529
      %618 = vst.msk [vmem:[#allocation2 + $0x90] sm:$0xff] %vm608, %v531
      %619 = vst.msk [vmem:[#allocation2 + $0xa0] sm:$0xff] %vm608, %v533
      %620 = vst.msk [vmem:[#allocation2 + $0xb0] sm:$0xff] %vm608, %v535
      %621 = vst.msk [vmem:[#allocation2 + $0xc0] sm:$0xff] %vm608, %v537
      %622 = vst.msk [vmem:[#allocation2 + $0xd0] sm:$0xff] %vm608, %v539
      %623 = vst.msk [vmem:[#allocation2 + $0xe0] sm:$0xff] %vm608, %v541
      %624 = vst.msk [vmem:[#allocation2 + $0xf0] sm:$0xff] %vm608, %v543
      %625 = vst.msk [vmem:[#allocation2 + $0x100] sm:$0xff] %vm608, %v545
      %626 = vst.msk [vmem:[#allocation2 + $0x110] sm:$0xff] %vm608, %v547
      %627 = vst.msk [vmem:[#allocation2 + $0x120] sm:$0xff] %vm608, %v549
      %628 = vst.msk [vmem:[#allocation2 + $0x130] sm:$0xff] %vm608, %v551
      %629 = vst.msk [vmem:[#allocation2 + $0x140] sm:$0xff] %vm608, %v553
      %630 = vst.msk [vmem:[#allocation2 + $0x150] sm:$0xff] %vm608, %v555
      %631 = vst.msk [vmem:[#allocation2 + $0x160] sm:$0xff] %vm608, %v557
      %632 = vst.msk [vmem:[#allocation2 + $0x170] sm:$0xff] %vm608, %v559
      %633 = vst.msk [vmem:[#allocation2 + $0x180] sm:$0xff] %vm608, %v561
      %634 = vst.msk [vmem:[#allocation2 + $0x190] sm:$0xff] %vm608, %v563
      %635 = vst.msk [vmem:[#allocation2 + $0x1a0] sm:$0xff] %vm608, %v565
      %636 = vst.msk [vmem:[#allocation2 + $0x1b0] sm:$0xff] %vm608, %v567
      %637 = vst.msk [vmem:[#allocation2 + $0x1c0] sm:$0xff] %vm608, %v569
      %638 = vst.msk [vmem:[#allocation2 + $0x1d0] sm:$0xff] %vm608, %v571
      %639 = vst.msk [vmem:[#allocation2 + $0x1e0] sm:$0xff] %vm608, %v573
      %640 = vst.msk [vmem:[#allocation2 + $0x1f0] sm:$0xff] %vm608, %v575
      %vm689 = vcmask 1046528
      %v690 = vrot.slane %v339, 1
      %v691 = vrot.slane %v340, 1
      %v692 = vsel %vm689, %v690, %v691
      %v693 = vrot.slane %v341, 1
      %v694 = vsel %vm689, %v691, %v693
      %v695 = vrot.slane %v342, 1
      %v696 = vrot.slane %v343, 1
      %v697 = vsel %vm689, %v695, %v696
      %v698 = vrot.slane %v344, 1
      %v699 = vsel %vm689, %v696, %v698
      %v700 = vrot.slane %v345, 1
      %v701 = vrot.slane %v346, 1
      %v702 = vsel %vm689, %v700, %v701
      %v703 = vrot.slane %v347, 1
      %v704 = vsel %vm689, %v701, %v703
      %v705 = vrot.slane %v348, 1
      %v706 = vrot.slane %v349, 1
      %v707 = vsel %vm689, %v705, %v706
      %v708 = vrot.slane %v350, 1
      %v709 = vsel %vm689, %v706, %v708
      %v710 = vrot.slane %v351, 1
      %v711 = vrot.slane %v352, 1
      %v712 = vsel %vm689, %v710, %v711
      %v713 = vrot.slane %v353, 1
      %v714 = vsel %vm689, %v711, %v713
      %v715 = vrot.slane %v354, 1
      %v716 = vrot.slane %v355, 1
      %v717 = vsel %vm689, %v715, %v716
      %v718 = vrot.slane %v356, 1
      %v719 = vsel %vm689, %v716, %v718
      %v720 = vrot.slane %v357, 1
      %v721 = vrot.slane %v358, 1
      %v722 = vsel %vm689, %v720, %v721
      %v723 = vrot.slane %v359, 1
      %v724 = vsel %vm689, %v721, %v723
      %v725 = vrot.slane %v360, 1
      %v726 = vrot.slane %v361, 1
      %v727 = vsel %vm689, %v725, %v726
      %v728 = vrot.slane %v362, 1
      %v729 = vsel %vm689, %v726, %v728
      %v730 = vrot.slane %v363, 1
      %v731 = vrot.slane %v364, 1
      %v732 = vsel %vm689, %v730, %v731
      %v733 = vrot.slane %v365, 1
      %v734 = vsel %vm689, %v731, %v733
      %v735 = vrot.slane %v366, 1
      %v736 = vrot.slane %v367, 1
      %v737 = vsel %vm689, %v735, %v736
      %v738 = vrot.slane %v368, 1
      %v739 = vsel %vm689, %v736, %v738
      %v740 = vrot.slane %v369, 1
      %v741 = vrot.slane %v370, 1
      %v742 = vsel %vm689, %v740, %v741
      %v743 = vrot.slane %v371, 1
      %v744 = vsel %vm689, %v741, %v743
      %v745 = vrot.slane %v372, 1
      %v746 = vrot.slane %v373, 1
      %v747 = vsel %vm689, %v745, %v746
      %v748 = vrot.slane %v374, 1
      %v749 = vsel %vm689, %v746, %v748
      %v750 = vrot.slane %v375, 1
      %v751 = vrot.slane %v376, 1
      %v752 = vsel %vm689, %v750, %v751
      %v753 = vrot.slane %v377, 1
      %v754 = vsel %vm689, %v751, %v753
      %v755 = vrot.slane %v378, 1
      %v756 = vrot.slane %v379, 1
      %v757 = vsel %vm689, %v755, %v756
      %v758 = vrot.slane %v380, 1
      %v759 = vsel %vm689, %v756, %v758
      %v760 = vrot.slane %v381, 1
      %v761 = vrot.slane %v382, 1
      %v762 = vsel %vm689, %v760, %v761
      %v763 = vrot.slane %v383, 1
      %v764 = vsel %vm689, %v761, %v763
      %v765 = vrot.slane %v384, 1
      %v766 = vrot.slane %v385, 1
      %v767 = vsel %vm689, %v765, %v766
      %v768 = vrot.slane %v386, 1
      %v769 = vsel %vm689, %v766, %v768
      %770 = vrot.lane.b32.xlu0 %v692, 16
      %v771 = vpop.permute.xlu0 %770
      %772 = vrot.lane.b32.xlu0 %v694, 16
      %v773 = vpop.permute.xlu0 %772
      %774 = vrot.lane.b32.xlu0 %v697, 16
      %v775 = vpop.permute.xlu0 %774
      %776 = vrot.lane.b32.xlu0 %v699, 16
      %v777 = vpop.permute.xlu0 %776
      %778 = vrot.lane.b32.xlu0 %v702, 16
      %v779 = vpop.permute.xlu0 %778
      %780 = vrot.lane.b32.xlu0 %v704, 16
      %v781 = vpop.permute.xlu0 %780
      %782 = vrot.lane.b32.xlu0 %v707, 16
      %v783 = vpop.permute.xlu0 %782
      %784 = vrot.lane.b32.xlu0 %v709, 16
      %v785 = vpop.permute.xlu0 %784
      %786 = vrot.lane.b32.xlu0 %v712, 16
      %v787 = vpop.permute.xlu0 %786
      %788 = vrot.lane.b32.xlu0 %v714, 16
      %v789 = vpop.permute.xlu0 %788
      %790 = vrot.lane.b32.xlu0 %v717, 16
      %v791 = vpop.permute.xlu0 %790
      %792 = vrot.lane.b32.xlu0 %v719, 16
      %v793 = vpop.permute.xlu0 %792
      %794 = vrot.lane.b32.xlu0 %v722, 16
      %v795 = vpop.permute.xlu0 %794
      %796 = vrot.lane.b32.xlu0 %v724, 16
      %v797 = vpop.permute.xlu0 %796
      %798 = vrot.lane.b32.xlu0 %v727, 16
      %v799 = vpop.permute.xlu0 %798
      %800 = vrot.lane.b32.xlu0 %v729, 16
      %v801 = vpop.permute.xlu0 %800
      %802 = vrot.lane.b32.xlu0 %v732, 16
      %v803 = vpop.permute.xlu0 %802
      %804 = vrot.lane.b32.xlu0 %v734, 16
      %v805 = vpop.permute.xlu0 %804
      %806 = vrot.lane.b32.xlu0 %v737, 16
      %v807 = vpop.permute.xlu0 %806
      %808 = vrot.lane.b32.xlu0 %v739, 16
      %v809 = vpop.permute.xlu0 %808
      %810 = vrot.lane.b32.xlu0 %v742, 16
      %v811 = vpop.permute.xlu0 %810
      %812 = vrot.lane.b32.xlu0 %v744, 16
      %v813 = vpop.permute.xlu0 %812
      %814 = vrot.lane.b32.xlu0 %v747, 16
      %v815 = vpop.permute.xlu0 %814
      %816 = vrot.lane.b32.xlu0 %v749, 16
      %v817 = vpop.permute.xlu0 %816
      %818 = vrot.lane.b32.xlu0 %v752, 16
      %v819 = vpop.permute.xlu0 %818
      %820 = vrot.lane.b32.xlu0 %v754, 16
      %v821 = vpop.permute.xlu0 %820
      %822 = vrot.lane.b32.xlu0 %v757, 16
      %v823 = vpop.permute.xlu0 %822
      %824 = vrot.lane.b32.xlu0 %v759, 16
      %v825 = vpop.permute.xlu0 %824
      %826 = vrot.lane.b32.xlu0 %v762, 16
      %v827 = vpop.permute.xlu0 %826
      %828 = vrot.lane.b32.xlu0 %v764, 16
      %v829 = vpop.permute.xlu0 %828
      %830 = vrot.lane.b32.xlu0 %v767, 16
      %v831 = vpop.permute.xlu0 %830
      %832 = vrot.lane.b32.xlu0 %v769, 16
      %v833 = vpop.permute.xlu0 %832
      %vm866 = vcmask 195712
      %867 = vst.msk [vmem:[#allocation2] sm:$0xff] %vm866, %v771
      %868 = vst.msk [vmem:[#allocation2 + $0x10] sm:$0xff] %vm866, %v773
      %869 = vst.msk [vmem:[#allocation2 + $0x20] sm:$0xff] %vm866, %v775
      %870 = vst.msk [vmem:[#allocation2 + $0x30] sm:$0xff] %vm866, %v777
      %871 = vst.msk [vmem:[#allocation2 + $0x40] sm:$0xff] %vm866, %v779
      %872 = vst.msk [vmem:[#allocation2 + $0x50] sm:$0xff] %vm866, %v781
      %873 = vst.msk [vmem:[#allocation2 + $0x60] sm:$0xff] %vm866, %v783
      %874 = vst.msk [vmem:[#allocation2 + $0x70] sm:$0xff] %vm866, %v785
      %875 = vst.msk [vmem:[#allocation2 + $0x80] sm:$0xff] %vm866, %v787
      %876 = vst.msk [vmem:[#allocation2 + $0x90] sm:$0xff] %vm866, %v789
      %877 = vst.msk [vmem:[#allocation2 + $0xa0] sm:$0xff] %vm866, %v791
      %878 = vst.msk [vmem:[#allocation2 + $0xb0] sm:$0xff] %vm866, %v793
      %879 = vst.msk [vmem:[#allocation2 + $0xc0] sm:$0xff] %vm866, %v795
      %880 = vst.msk [vmem:[#allocation2 + $0xd0] sm:$0xff] %vm866, %v797
      %881 = vst.msk [vmem:[#allocation2 + $0xe0] sm:$0xff] %vm866, %v799
      %882 = vst.msk [vmem:[#allocation2 + $0xf0] sm:$0xff] %vm866, %v801
      %883 = vst.msk [vmem:[#allocation2 + $0x100] sm:$0xff] %vm866, %v803
      %884 = vst.msk [vmem:[#allocation2 + $0x110] sm:$0xff] %vm866, %v805
      %885 = vst.msk [vmem:[#allocation2 + $0x120] sm:$0xff] %vm866, %v807
      %886 = vst.msk [vmem:[#allocation2 + $0x130] sm:$0xff] %vm866, %v809
      %887 = vst.msk [vmem:[#allocation2 + $0x140] sm:$0xff] %vm866, %v811
      %888 = vst.msk [vmem:[#allocation2 + $0x150] sm:$0xff] %vm866, %v813
      %889 = vst.msk [vmem:[#allocation2 + $0x160] sm:$0xff] %vm866, %v815
      %890 = vst.msk [vmem:[#allocation2 + $0x170] sm:$0xff] %vm866, %v817
      %891 = vst.msk [vmem:[#allocation2 + $0x180] sm:$0xff] %vm866, %v819
      %892 = vst.msk [vmem:[#allocation2 + $0x190] sm:$0xff] %vm866, %v821
      %893 = vst.msk [vmem:[#allocation2 + $0x1a0] sm:$0xff] %vm866, %v823
      %894 = vst.msk [vmem:[#allocation2 + $0x1b0] sm:$0xff] %vm866, %v825
      %895 = vst.msk [vmem:[#allocation2 + $0x1c0] sm:$0xff] %vm866, %v827
      %896 = vst.msk [vmem:[#allocation2 + $0x1d0] sm:$0xff] %vm866, %v829
      %897 = vst.msk [vmem:[#allocation2 + $0x1e0] sm:$0xff] %vm866, %v831
      %898 = vst.msk [vmem:[#allocation2 + $0x1f0] sm:$0xff] %vm866, %v833
      %v915 = vrot.slane %v393, 1
      %v916 = vrot.slane %v394, 1
      %v917 = vsel %vm689, %v915, %v916
      %v918 = vrot.slane %v395, 1
      %v919 = vsel %vm689, %v916, %v918
      %v920 = vrot.slane %v396, 1
      %v921 = vrot.slane %v397, 1
      %v922 = vsel %vm689, %v920, %v921
      %v923 = vrot.slane %v398, 1
      %v924 = vsel %vm689, %v921, %v923
      %v925 = vrot.slane %v399, 1
      %v926 = vrot.slane %v400, 1
      %v927 = vsel %vm689, %v925, %v926
      %v928 = vrot.slane %v401, 1
      %v929 = vsel %vm689, %v926, %v928
      %v930 = vrot.slane %v402, 1
      %v931 = vrot.slane %v403, 1
      %v932 = vsel %vm689, %v930, %v931
      %v933 = vrot.slane %v404, 1
      %v934 = vsel %vm689, %v931, %v933
      %v935 = vrot.slane %v405, 1
      %v936 = vrot.slane %v406, 1
      %v937 = vsel %vm689, %v935, %v936
      %v938 = vrot.slane %v407, 1
      %v939 = vsel %vm689, %v936, %v938
      %v940 = vrot.slane %v408, 1
      %v941 = vrot.slane %v409, 1
      %v942 = vsel %vm689, %v940, %v941
      %v943 = vrot.slane %v410, 1
      %v944 = vsel %vm689, %v941, %v943
      %v945 = vrot.slane %v411, 1
      %v946 = vrot.slane %v412, 1
      %v947 = vsel %vm689, %v945, %v946
      %v948 = vrot.slane %v413, 1
      %v949 = vsel %vm689, %v946, %v948
      %v950 = vrot.slane %v414, 1
      %v951 = vrot.slane %v415, 1
      %v952 = vsel %vm689, %v950, %v951
      %v953 = vrot.slane %v416, 1
      %v954 = vsel %vm689, %v951, %v953
      %v955 = vrot.slane %v417, 1
      %v956 = vrot.slane %v418, 1
      %v957 = vsel %vm689, %v955, %v956
      %v958 = vrot.slane %v419, 1
      %v959 = vsel %vm689, %v956, %v958
      %v960 = vrot.slane %v420, 1
      %v961 = vrot.slane %v421, 1
      %v962 = vsel %vm689, %v960, %v961
      %v963 = vrot.slane %v422, 1
      %v964 = vsel %vm689, %v961, %v963
      %v965 = vrot.slane %v423, 1
      %v966 = vrot.slane %v424, 1
      %v967 = vsel %vm689, %v965, %v966
      %v968 = vrot.slane %v425, 1
      %v969 = vsel %vm689, %v966, %v968
      %v970 = vrot.slane %v426, 1
      %v971 = vrot.slane %v427, 1
      %v972 = vsel %vm689, %v970, %v971
      %v973 = vrot.slane %v428, 1
      %v974 = vsel %vm689, %v971, %v973
      %v975 = vrot.slane %v429, 1
      %v976 = vrot.slane %v430, 1
      %v977 = vsel %vm689, %v975, %v976
      %v978 = vrot.slane %v431, 1
      %v979 = vsel %vm689, %v976, %v978
      %v980 = vrot.slane %v432, 1
      %v981 = vrot.slane %v433, 1
      %v982 = vsel %vm689, %v980, %v981
      %v983 = vrot.slane %v434, 1
      %v984 = vsel %vm689, %v981, %v983
      %v985 = vrot.slane %v435, 1
      %v986 = vrot.slane %v436, 1
      %v987 = vsel %vm689, %v985, %v986
      %v988 = vrot.slane %v437, 1
      %v989 = vsel %vm689, %v986, %v988
      %v990 = vrot.slane %v438, 1
      %v991 = vrot.slane %v439, 1
      %v992 = vsel %vm689, %v990, %v991
      %v993 = vrot.slane %v440, 1
      %v994 = vsel %vm689, %v991, %v993
      %995 = vrot.lane.b32.xlu0 %v917, 24
      %v996 = vpop.permute.xlu0 %995
      %997 = vrot.lane.b32.xlu0 %v919, 24
      %v998 = vpop.permute.xlu0 %997
      %999 = vrot.lane.b32.xlu0 %v922, 24
      %v1000 = vpop.permute.xlu0 %999
      %1001 = vrot.lane.b32.xlu0 %v924, 24
      %v1002 = vpop.permute.xlu0 %1001
      %1003 = vrot.lane.b32.xlu0 %v927, 24
      %v1004 = vpop.permute.xlu0 %1003
      %1005 = vrot.lane.b32.xlu0 %v929, 24
      %v1006 = vpop.permute.xlu0 %1005
      %1007 = vrot.lane.b32.xlu0 %v932, 24
      %v1008 = vpop.permute.xlu0 %1007
      %1009 = vrot.lane.b32.xlu0 %v934, 24
      %v1010 = vpop.permute.xlu0 %1009
      %1011 = vrot.lane.b32.xlu0 %v937, 24
      %v1012 = vpop.permute.xlu0 %1011
      %1013 = vrot.lane.b32.xlu0 %v939, 24
      %v1014 = vpop.permute.xlu0 %1013
      %1015 = vrot.lane.b32.xlu0 %v942, 24
      %v1016 = vpop.permute.xlu0 %1015
      %1017 = vrot.lane.b32.xlu0 %v944, 24
      %v1018 = vpop.permute.xlu0 %1017
      %1019 = vrot.lane.b32.xlu0 %v947, 24
      %v1020 = vpop.permute.xlu0 %1019
      %1021 = vrot.lane.b32.xlu0 %v949, 24
      %v1022 = vpop.permute.xlu0 %1021
      %1023 = vrot.lane.b32.xlu0 %v952, 24
      %v1024 = vpop.permute.xlu0 %1023
      %1025 = vrot.lane.b32.xlu0 %v954, 24
      %v1026 = vpop.permute.xlu0 %1025
      %1027 = vrot.lane.b32.xlu0 %v957, 24
      %v1028 = vpop.permute.xlu0 %1027
      %1029 = vrot.lane.b32.xlu0 %v959, 24
      %v1030 = vpop.permute.xlu0 %1029
      %1031 = vrot.lane.b32.xlu0 %v962, 24
      %v1032 = vpop.permute.xlu0 %1031
      %1033 = vrot.lane.b32.xlu0 %v964, 24
      %v1034 = vpop.permute.xlu0 %1033
      %1035 = vrot.lane.b32.xlu0 %v967, 24
      %v1036 = vpop.permute.xlu0 %1035
      %1037 = vrot.lane.b32.xlu0 %v969, 24
      %v1038 = vpop.permute.xlu0 %1037
      %1039 = vrot.lane.b32.xlu0 %v972, 24
      %v1040 = vpop.permute.xlu0 %1039
      %1041 = vrot.lane.b32.xlu0 %v974, 24
      %v1042 = vpop.permute.xlu0 %1041
      %1043 = vrot.lane.b32.xlu0 %v977, 24
      %v1044 = vpop.permute.xlu0 %1043
      %1045 = vrot.lane.b32.xlu0 %v979, 24
      %v1046 = vpop.permute.xlu0 %1045
      %1047 = vrot.lane.b32.xlu0 %v982, 24
      %v1048 = vpop.permute.xlu0 %1047
      %1049 = vrot.lane.b32.xlu0 %v984, 24
      %v1050 = vpop.permute.xlu0 %1049
      %1051 = vrot.lane.b32.xlu0 %v987, 24
      %v1052 = vpop.permute.xlu0 %1051
      %1053 = vrot.lane.b32.xlu0 %v989, 24
      %v1054 = vpop.permute.xlu0 %1053
      %1055 = vrot.lane.b32.xlu0 %v992, 24
      %v1056 = vpop.permute.xlu0 %1055
      %1057 = vrot.lane.b32.xlu0 %v994, 24
      %v1058 = vpop.permute.xlu0 %1057
      %vm1091 = vcmask 261312
      %1092 = vst.msk [vmem:[#allocation2] sm:$0xff] %vm1091, %v996
      %1093 = vst.msk [vmem:[#allocation2 + $0x10] sm:$0xff] %vm1091, %v998
      %1094 = vst.msk [vmem:[#allocation2 + $0x20] sm:$0xff] %vm1091, %v1000
      %1095 = vst.msk [vmem:[#allocation2 + $0x30] sm:$0xff] %vm1091, %v1002
      %1096 = vst.msk [vmem:[#allocation2 + $0x40] sm:$0xff] %vm1091, %v1004
      %1097 = vst.msk [vmem:[#allocation2 + $0x50] sm:$0xff] %vm1091, %v1006
      %1098 = vst.msk [vmem:[#allocation2 + $0x60] sm:$0xff] %vm1091, %v1008
      %1099 = vst.msk [vmem:[#allocation2 + $0x70] sm:$0xff] %vm1091, %v1010
      %1100 = vst.msk [vmem:[#allocation2 + $0x80] sm:$0xff] %vm1091, %v1012
      %1101 = vst.msk [vmem:[#allocation2 + $0x90] sm:$0xff] %vm1091, %v1014
      %1102 = vst.msk [vmem:[#allocation2 + $0xa0] sm:$0xff] %vm1091, %v1016
      %1103 = vst.msk [vmem:[#allocation2 + $0xb0] sm:$0xff] %vm1091, %v1018
      %1104 = vst.msk [vmem:[#allocation2 + $0xc0] sm:$0xff] %vm1091, %v1020
      %1105 = vst.msk [vmem:[#allocation2 + $0xd0] sm:$0xff] %vm1091, %v1022
      %1106 = vst.msk [vmem:[#allocation2 + $0xe0] sm:$0xff] %vm1091, %v1024
      %1107 = vst.msk [vmem:[#allocation2 + $0xf0] sm:$0xff] %vm1091, %v1026
      %1108 = vst.msk [vmem:[#allocation2 + $0x100] sm:$0xff] %vm1091, %v1028
      %1109 = vst.msk [vmem:[#allocation2 + $0x110] sm:$0xff] %vm1091, %v1030
      %1110 = vst.msk [vmem:[#allocation2 + $0x120] sm:$0xff] %vm1091, %v1032
      %1111 = vst.msk [vmem:[#allocation2 + $0x130] sm:$0xff] %vm1091, %v1034
      %1112 = vst.msk [vmem:[#allocation2 + $0x140] sm:$0xff] %vm1091, %v1036
      %1113 = vst.msk [vmem:[#allocation2 + $0x150] sm:$0xff] %vm1091, %v1038
      %1114 = vst.msk [vmem:[#allocation2 + $0x160] sm:$0xff] %vm1091, %v1040
      %1115 = vst.msk [vmem:[#allocation2 + $0x170] sm:$0xff] %vm1091, %v1042
      %1116 = vst.msk [vmem:[#allocation2 + $0x180] sm:$0xff] %vm1091, %v1044
      %1117 = vst.msk [vmem:[#allocation2 + $0x190] sm:$0xff] %vm1091, %v1046
      %1118 = vst.msk [vmem:[#allocation2 + $0x1a0] sm:$0xff] %vm1091, %v1048
      %1119 = vst.msk [vmem:[#allocation2 + $0x1b0] sm:$0xff] %vm1091, %v1050
      %1120 = vst.msk [vmem:[#allocation2 + $0x1c0] sm:$0xff] %vm1091, %v1052
      %1121 = vst.msk [vmem:[#allocation2 + $0x1d0] sm:$0xff] %vm1091, %v1054
      %1122 = vst.msk [vmem:[#allocation2 + $0x1e0] sm:$0xff] %vm1091, %v1056
      %1123 = vst.msk [vmem:[#allocation2 + $0x1f0] sm:$0xff] %vm1091, %v1058
      %vm1124 = vcmask 1045504
      %v1125 = vrot.slane %v339, 2
      %v1126 = vrot.slane %v340, 2
      %v1127 = vsel %vm1124, %v1125, %v1126
      %v1128 = vrot.slane %v341, 2
      %v1129 = vsel %vm1124, %v1126, %v1128
      %v1130 = vrot.slane %v342, 2
      %v1131 = vrot.slane %v343, 2
      %v1132 = vsel %vm1124, %v1130, %v1131
      %v1133 = vrot.slane %v344, 2
      %v1134 = vsel %vm1124, %v1131, %v1133
      %v1135 = vrot.slane %v345, 2
      %v1136 = vrot.slane %v346, 2
      %v1137 = vsel %vm1124, %v1135, %v1136
      %v1138 = vrot.slane %v347, 2
      %v1139 = vsel %vm1124, %v1136, %v1138
      %v1140 = vrot.slane %v348, 2
      %v1141 = vrot.slane %v349, 2
      %v1142 = vsel %vm1124, %v1140, %v1141
      %v1143 = vrot.slane %v350, 2
      %v1144 = vsel %vm1124, %v1141, %v1143
      %v1145 = vrot.slane %v351, 2
      %v1146 = vrot.slane %v352, 2
      %v1147 = vsel %vm1124, %v1145, %v1146
      %v1148 = vrot.slane %v353, 2
      %v1149 = vsel %vm1124, %v1146, %v1148
      %v1150 = vrot.slane %v354, 2
      %v1151 = vrot.slane %v355, 2
      %v1152 = vsel %vm1124, %v1150, %v1151
      %v1153 = vrot.slane %v356, 2
      %v1154 = vsel %vm1124, %v1151, %v1153
      %v1155 = vrot.slane %v357, 2
      %v1156 = vrot.slane %v358, 2
      %v1157 = vsel %vm1124, %v1155, %v1156
      %v1158 = vrot.slane %v359, 2
      %v1159 = vsel %vm1124, %v1156, %v1158
      %v1160 = vrot.slane %v360, 2
      %v1161 = vrot.slane %v361, 2
      %v1162 = vsel %vm1124, %v1160, %v1161
      %v1163 = vrot.slane %v362, 2
      %v1164 = vsel %vm1124, %v1161, %v1163
      %v1165 = vrot.slane %v363, 2
      %v1166 = vrot.slane %v364, 2
      %v1167 = vsel %vm1124, %v1165, %v1166
      %v1168 = vrot.slane %v365, 2
      %v1169 = vsel %vm1124, %v1166, %v1168
      %v1170 = vrot.slane %v366, 2
      %v1171 = vrot.slane %v367, 2
      %v1172 = vsel %vm1124, %v1170, %v1171
      %v1173 = vrot.slane %v368, 2
      %v1174 = vsel %vm1124, %v1171, %v1173
      %v1175 = vrot.slane %v369, 2
      %v1176 = vrot.slane %v370, 2
      %v1177 = vsel %vm1124, %v1175, %v1176
      %v1178 = vrot.slane %v371, 2
      %v1179 = vsel %vm1124, %v1176, %v1178
      %v1180 = vrot.slane %v372, 2
      %v1181 = vrot.slane %v373, 2
      %v1182 = vsel %vm1124, %v1180, %v1181
      %v1183 = vrot.slane %v374, 2
      %v1184 = vsel %vm1124, %v1181, %v1183
      %v1185 = vrot.slane %v375, 2
      %v1186 = vrot.slane %v376, 2
      %v1187 = vsel %vm1124, %v1185, %v1186
      %v1188 = vrot.slane %v377, 2
      %v1189 = vsel %vm1124, %v1186, %v1188
      %v1190 = vrot.slane %v378, 2
      %v1191 = vrot.slane %v379, 2
      %v1192 = vsel %vm1124, %v1190, %v1191
      %v1193 = vrot.slane %v380, 2
      %v1194 = vsel %vm1124, %v1191, %v1193
      %v1195 = vrot.slane %v381, 2
      %v1196 = vrot.slane %v382, 2
      %v1197 = vsel %vm1124, %v1195, %v1196
      %v1198 = vrot.slane %v383, 2
      %v1199 = vsel %vm1124, %v1196, %v1198
      %v1200 = vrot.slane %v384, 2
      %v1201 = vrot.slane %v385, 2
      %v1202 = vsel %vm1124, %v1200, %v1201
      %v1203 = vrot.slane %v386, 2
      %v1204 = vsel %vm1124, %v1201, %v1203
      %1205 = vrot.lane.b32.xlu0 %v1127, 32
      %v1206 = vpop.permute.xlu0 %1205
      %1207 = vrot.lane.b32.xlu0 %v1129, 32
      %v1208 = vpop.permute.xlu0 %1207
      %1209 = vrot.lane.b32.xlu0 %v1132, 32
      %v1210 = vpop.permute.xlu0 %1209
      %1211 = vrot.lane.b32.xlu0 %v1134, 32
      %v1212 = vpop.permute.xlu0 %1211
      %1213 = vrot.lane.b32.xlu0 %v1137, 32
      %v1214 = vpop.permute.xlu0 %1213
      %1215 = vrot.lane.b32.xlu0 %v1139, 32
      %v1216 = vpop.permute.xlu0 %1215
      %1217 = vrot.lane.b32.xlu0 %v1142, 32
      %v1218 = vpop.permute.xlu0 %1217
      %1219 = vrot.lane.b32.xlu0 %v1144, 32
      %v1220 = vpop.permute.xlu0 %1219
      %1221 = vrot.lane.b32.xlu0 %v1147, 32
      %v1222 = vpop.permute.xlu0 %1221
      %1223 = vrot.lane.b32.xlu0 %v1149, 32
      %v1224 = vpop.permute.xlu0 %1223
      %1225 = vrot.lane.b32.xlu0 %v1152, 32
      %v1226 = vpop.permute.xlu0 %1225
      %1227 = vrot.lane.b32.xlu0 %v1154, 32
      %v1228 = vpop.permute.xlu0 %1227
      %1229 = vrot.lane.b32.xlu0 %v1157, 32
      %v1230 = vpop.permute.xlu0 %1229
      %1231 = vrot.lane.b32.xlu0 %v1159, 32
      %v1232 = vpop.permute.xlu0 %1231
      %1233 = vrot.lane.b32.xlu0 %v1162, 32
      %v1234 = vpop.permute.xlu0 %1233
      %1235 = vrot.lane.b32.xlu0 %v1164, 32
      %v1236 = vpop.permute.xlu0 %1235
      %1237 = vrot.lane.b32.xlu0 %v1167, 32
      %v1238 = vpop.permute.xlu0 %1237
      %1239 = vrot.lane.b32.xlu0 %v1169, 32
      %v1240 = vpop.permute.xlu0 %1239
      %1241 = vrot.lane.b32.xlu0 %v1172, 32
      %v1242 = vpop.permute.xlu0 %1241
      %1243 = vrot.lane.b32.xlu0 %v1174, 32
      %v1244 = vpop.permute.xlu0 %1243
      %1245 = vrot.lane.b32.xlu0 %v1177, 32
      %v1246 = vpop.permute.xlu0 %1245
      %1247 = vrot.lane.b32.xlu0 %v1179, 32
      %v1248 = vpop.permute.xlu0 %1247
      %1249 = vrot.lane.b32.xlu0 %v1182, 32
      %v1250 = vpop.permute.xlu0 %1249
      %1251 = vrot.lane.b32.xlu0 %v1184, 32
      %v1252 = vpop.permute.xlu0 %1251
      %1253 = vrot.lane.b32.xlu0 %v1187, 32
      %v1254 = vpop.permute.xlu0 %1253
      %1255 = vrot.lane.b32.xlu0 %v1189, 32
      %v1256 = vpop.permute.xlu0 %1255
      %1257 = vrot.lane.b32.xlu0 %v1192, 32
      %v1258 = vpop.permute.xlu0 %1257
      %1259 = vrot.lane.b32.xlu0 %v1194, 32
      %v1260 = vpop.permute.xlu0 %1259
      %1261 = vrot.lane.b32.xlu0 %v1197, 32
      %v1262 = vpop.permute.xlu0 %1261
      %1263 = vrot.lane.b32.xlu0 %v1199, 32
      %v1264 = vpop.permute.xlu0 %1263
      %1265 = vrot.lane.b32.xlu0 %v1202, 32
      %v1266 = vpop.permute.xlu0 %1265
      %1267 = vrot.lane.b32.xlu0 %v1204, 32
      %v1268 = vpop.permute.xlu0 %1267
      %vm1301 = vcmask 326912
      %1302 = vst.msk [vmem:[#allocation2] sm:$0xff] %vm1301, %v1206
      %1303 = vst.msk [vmem:[#allocation2 + $0x10] sm:$0xff] %vm1301, %v1208
      %1304 = vst.msk [vmem:[#allocation2 + $0x20] sm:$0xff] %vm1301, %v1210
      %1305 = vst.msk [vmem:[#allocation2 + $0x30] sm:$0xff] %vm1301, %v1212
      %1306 = vst.msk [vmem:[#allocation2 + $0x40] sm:$0xff] %vm1301, %v1214
      %1307 = vst.msk [vmem:[#allocation2 + $0x50] sm:$0xff] %vm1301, %v1216
      %1308 = vst.msk [vmem:[#allocation2 + $0x60] sm:$0xff] %vm1301, %v1218
      %1309 = vst.msk [vmem:[#allocation2 + $0x70] sm:$0xff] %vm1301, %v1220
      %1310 = vst.msk [vmem:[#allocation2 + $0x80] sm:$0xff] %vm1301, %v1222
      %1311 = vst.msk [vmem:[#allocation2 + $0x90] sm:$0xff] %vm1301, %v1224
      %1312 = vst.msk [vmem:[#allocation2 + $0xa0] sm:$0xff] %vm1301, %v1226
      %1313 = vst.msk [vmem:[#allocation2 + $0xb0] sm:$0xff] %vm1301, %v1228
      %1314 = vst.msk [vmem:[#allocation2 + $0xc0] sm:$0xff] %vm1301, %v1230
      %1315 = vst.msk [vmem:[#allocation2 + $0xd0] sm:$0xff] %vm1301, %v1232
      %1316 = vst.msk [vmem:[#allocation2 + $0xe0] sm:$0xff] %vm1301, %v1234
      %1317 = vst.msk [vmem:[#allocation2 + $0xf0] sm:$0xff] %vm1301, %v1236
      %1318 = vst.msk [vmem:[#allocation2 + $0x100] sm:$0xff] %vm1301, %v1238
      %1319 = vst.msk [vmem:[#allocation2 + $0x110] sm:$0xff] %vm1301, %v1240
      %1320 = vst.msk [vmem:[#allocation2 + $0x120] sm:$0xff] %vm1301, %v1242
      %1321 = vst.msk [vmem:[#allocation2 + $0x130] sm:$0xff] %vm1301, %v1244
      %1322 = vst.msk [vmem:[#allocation2 + $0x140] sm:$0xff] %vm1301, %v1246
      %1323 = vst.msk [vmem:[#allocation2 + $0x150] sm:$0xff] %vm1301, %v1248
      %1324 = vst.msk [vmem:[#allocation2 + $0x160] sm:$0xff] %vm1301, %v1250
      %1325 = vst.msk [vmem:[#allocation2 + $0x170] sm:$0xff] %vm1301, %v1252
      %1326 = vst.msk [vmem:[#allocation2 + $0x180] sm:$0xff] %vm1301, %v1254
      %1327 = vst.msk [vmem:[#allocation2 + $0x190] sm:$0xff] %vm1301, %v1256
      %1328 = vst.msk [vmem:[#allocation2 + $0x1a0] sm:$0xff] %vm1301, %v1258
      %1329 = vst.msk [vmem:[#allocation2 + $0x1b0] sm:$0xff] %vm1301, %v1260
      %1330 = vst.msk [vmem:[#allocation2 + $0x1c0] sm:$0xff] %vm1301, %v1262
      %1331 = vst.msk [vmem:[#allocation2 + $0x1d0] sm:$0xff] %vm1301, %v1264
      %1332 = vst.msk [vmem:[#allocation2 + $0x1e0] sm:$0xff] %vm1301, %v1266
      %1333 = vst.msk [vmem:[#allocation2 + $0x1f0] sm:$0xff] %vm1301, %v1268
      %v1334 = vrot.slane %v393, 2
      %v1335 = vrot.slane %v394, 2
      %v1336 = vsel %vm1124, %v1334, %v1335
      %v1337 = vrot.slane %v395, 2
      %v1338 = vsel %vm1124, %v1335, %v1337
      %v1339 = vrot.slane %v396, 2
      %v1340 = vrot.slane %v397, 2
      %v1341 = vsel %vm1124, %v1339, %v1340
      %v1342 = vrot.slane %v398, 2
      %v1343 = vsel %vm1124, %v1340, %v1342
      %v1344 = vrot.slane %v399, 2
      %v1345 = vrot.slane %v400, 2
      %v1346 = vsel %vm1124, %v1344, %v1345
      %v1347 = vrot.slane %v401, 2
      %v1348 = vsel %vm1124, %v1345, %v1347
      %v1349 = vrot.slane %v402, 2
      %v1350 = vrot.slane %v403, 2
      %v1351 = vsel %vm1124, %v1349, %v1350
      %v1352 = vrot.slane %v404, 2
      %v1353 = vsel %vm1124, %v1350, %v1352
      %v1354 = vrot.slane %v405, 2
      %v1355 = vrot.slane %v406, 2
      %v1356 = vsel %vm1124, %v1354, %v1355
      %v1357 = vrot.slane %v407, 2
      %v1358 = vsel %vm1124, %v1355, %v1357
      %v1359 = vrot.slane %v408, 2
      %v1360 = vrot.slane %v409, 2
      %v1361 = vsel %vm1124, %v1359, %v1360
      %v1362 = vrot.slane %v410, 2
      %v1363 = vsel %vm1124, %v1360, %v1362
      %v1364 = vrot.slane %v411, 2
      %v1365 = vrot.slane %v412, 2
      %v1366 = vsel %vm1124, %v1364, %v1365
      %v1367 = vrot.slane %v413, 2
      %v1368 = vsel %vm1124, %v1365, %v1367
      %v1369 = vrot.slane %v414, 2
      %v1370 = vrot.slane %v415, 2
      %v1371 = vsel %vm1124, %v1369, %v1370
      %v1372 = vrot.slane %v416, 2
      %v1373 = vsel %vm1124, %v1370, %v1372
      %v1374 = vrot.slane %v417, 2
      %v1375 = vrot.slane %v418, 2
      %v1376 = vsel %vm1124, %v1374, %v1375
      %v1377 = vrot.slane %v419, 2
      %v1378 = vsel %vm1124, %v1375, %v1377
      %v1379 = vrot.slane %v420, 2
      %v1380 = vrot.slane %v421, 2
      %v1381 = vsel %vm1124, %v1379, %v1380
      %v1382 = vrot.slane %v422, 2
      %v1383 = vsel %vm1124, %v1380, %v1382
      %v1384 = vrot.slane %v423, 2
      %v1385 = vrot.slane %v424, 2
      %v1386 = vsel %vm1124, %v1384, %v1385
      %v1387 = vrot.slane %v425, 2
      %v1388 = vsel %vm1124, %v1385, %v1387
      %v1389 = vrot.slane %v426, 2
      %v1390 = vrot.slane %v427, 2
      %v1391 = vsel %vm1124, %v1389, %v1390
      %v1392 = vrot.slane %v428, 2
      %v1393 = vsel %vm1124, %v1390, %v1392
      %v1394 = vrot.slane %v429, 2
      %v1395 = vrot.slane %v430, 2
      %v1396 = vsel %vm1124, %v1394, %v1395
      %v1397 = vrot.slane %v431, 2
      %v1398 = vsel %vm1124, %v1395, %v1397
      %v1399 = vrot.slane %v432, 2
      %v1400 = vrot.slane %v433, 2
      %v1401 = vsel %vm1124, %v1399, %v1400
      %v1402 = vrot.slane %v434, 2
      %v1403 = vsel %vm1124, %v1400, %v1402
      %v1404 = vrot.slane %v435, 2
      %v1405 = vrot.slane %v436, 2
      %v1406 = vsel %vm1124, %v1404, %v1405
      %v1407 = vrot.slane %v437, 2
      %v1408 = vsel %vm1124, %v1405, %v1407
      %v1409 = vrot.slane %v438, 2
      %v1410 = vrot.slane %v439, 2
      %v1411 = vsel %vm1124, %v1409, %v1410
      %v1412 = vrot.slane %v440, 2
      %v1413 = vsel %vm1124, %v1410, %v1412
      %1414 = vrot.lane.b32.xlu0 %v1336, 40
      %v1415 = vpop.permute.xlu0 %1414
      %1416 = vrot.lane.b32.xlu0 %v1338, 40
      %v1417 = vpop.permute.xlu0 %1416
      %1418 = vrot.lane.b32.xlu0 %v1341, 40
      %v1419 = vpop.permute.xlu0 %1418
      %1420 = vrot.lane.b32.xlu0 %v1343, 40
      %v1421 = vpop.permute.xlu0 %1420
      %1422 = vrot.lane.b32.xlu0 %v1346, 40
      %v1423 = vpop.permute.xlu0 %1422
      %1424 = vrot.lane.b32.xlu0 %v1348, 40
      %v1425 = vpop.permute.xlu0 %1424
      %1426 = vrot.lane.b32.xlu0 %v1351, 40
      %v1427 = vpop.permute.xlu0 %1426
      %1428 = vrot.lane.b32.xlu0 %v1353, 40
      %v1429 = vpop.permute.xlu0 %1428
      %1430 = vrot.lane.b32.xlu0 %v1356, 40
      %v1431 = vpop.permute.xlu0 %1430
      %1432 = vrot.lane.b32.xlu0 %v1358, 40
      %v1433 = vpop.permute.xlu0 %1432
      %1434 = vrot.lane.b32.xlu0 %v1361, 40
      %v1435 = vpop.permute.xlu0 %1434
      %1436 = vrot.lane.b32.xlu0 %v1363, 40
      %v1437 = vpop.permute.xlu0 %1436
      %1438 = vrot.lane.b32.xlu0 %v1366, 40
      %v1439 = vpop.permute.xlu0 %1438
      %1440 = vrot.lane.b32.xlu0 %v1368, 40
      %v1441 = vpop.permute.xlu0 %1440
      %1442 = vrot.lane.b32.xlu0 %v1371, 40
      %v1443 = vpop.permute.xlu0 %1442
      %1444 = vrot.lane.b32.xlu0 %v1373, 40
      %v1445 = vpop.permute.xlu0 %1444
      %1446 = vrot.lane.b32.xlu0 %v1376, 40
      %v1447 = vpop.permute.xlu0 %1446
      %1448 = vrot.lane.b32.xlu0 %v1378, 40
      %v1449 = vpop.permute.xlu0 %1448
      %1450 = vrot.lane.b32.xlu0 %v1381, 40
      %v1451 = vpop.permute.xlu0 %1450
      %1452 = vrot.lane.b32.xlu0 %v1383, 40
      %v1453 = vpop.permute.xlu0 %1452
      %1454 = vrot.lane.b32.xlu0 %v1386, 40
      %v1455 = vpop.permute.xlu0 %1454
      %1456 = vrot.lane.b32.xlu0 %v1388, 40
      %v1457 = vpop.permute.xlu0 %1456
      %1458 = vrot.lane.b32.xlu0 %v1391, 40
      %v1459 = vpop.permute.xlu0 %1458
      %1460 = vrot.lane.b32.xlu0 %v1393, 40
      %v1461 = vpop.permute.xlu0 %1460
      %1462 = vrot.lane.b32.xlu0 %v1396, 40
      %v1463 = vpop.permute.xlu0 %1462
      %1464 = vrot.lane.b32.xlu0 %v1398, 40
      %v1465 = vpop.permute.xlu0 %1464
      %1466 = vrot.lane.b32.xlu0 %v1401, 40
      %v1467 = vpop.permute.xlu0 %1466
      %1468 = vrot.lane.b32.xlu0 %v1403, 40
      %v1469 = vpop.permute.xlu0 %1468
      %1470 = vrot.lane.b32.xlu0 %v1406, 40
      %v1471 = vpop.permute.xlu0 %1470
      %1472 = vrot.lane.b32.xlu0 %v1408, 40
      %v1473 = vpop.permute.xlu0 %1472
      %1474 = vrot.lane.b32.xlu0 %v1411, 40
      %v1475 = vpop.permute.xlu0 %1474
      %1476 = vrot.lane.b32.xlu0 %v1413, 40
      %v1477 = vpop.permute.xlu0 %1476
      %vm1510 = vcmask 392512
      %1511 = vst.msk [vmem:[#allocation2] sm:$0xff] %vm1510, %v1415
      %1512 = vst.msk [vmem:[#allocation2 + $0x10] sm:$0xff] %vm1510, %v1417
      %1513 = vst.msk [vmem:[#allocation2 + $0x20] sm:$0xff] %vm1510, %v1419
      %1514 = vst.msk [vmem:[#allocation2 + $0x30] sm:$0xff] %vm1510, %v1421
      %1515 = vst.msk [vmem:[#allocation2 + $0x40] sm:$0xff] %vm1510, %v1423
      %1516 = vst.msk [vmem:[#allocation2 + $0x50] sm:$0xff] %vm1510, %v1425
      %1517 = vst.msk [vmem:[#allocation2 + $0x60] sm:$0xff] %vm1510, %v1427
      %1518 = vst.msk [vmem:[#allocation2 + $0x70] sm:$0xff] %vm1510, %v1429
      %1519 = vst.msk [vmem:[#allocation2 + $0x80] sm:$0xff] %vm1510, %v1431
      %1520 = vst.msk [vmem:[#allocation2 + $0x90] sm:$0xff] %vm1510, %v1433
      %1521 = vst.msk [vmem:[#allocation2 + $0xa0] sm:$0xff] %vm1510, %v1435
      %1522 = vst.msk [vmem:[#allocation2 + $0xb0] sm:$0xff] %vm1510, %v1437
      %1523 = vst.msk [vmem:[#allocation2 + $0xc0] sm:$0xff] %vm1510, %v1439
      %1524 = vst.msk [vmem:[#allocation2 + $0xd0] sm:$0xff] %vm1510, %v1441
      %1525 = vst.msk [vmem:[#allocation2 + $0xe0] sm:$0xff] %vm1510, %v1443
      %1526 = vst.msk [vmem:[#allocation2 + $0xf0] sm:$0xff] %vm1510, %v1445
      %1527 = vst.msk [vmem:[#allocation2 + $0x100] sm:$0xff] %vm1510, %v1447
      %1528 = vst.msk [vmem:[#allocation2 + $0x110] sm:$0xff] %vm1510, %v1449
      %1529 = vst.msk [vmem:[#allocation2 + $0x120] sm:$0xff] %vm1510, %v1451
      %1530 = vst.msk [vmem:[#allocation2 + $0x130] sm:$0xff] %vm1510, %v1453
      %1531 = vst.msk [vmem:[#allocation2 + $0x140] sm:$0xff] %vm1510, %v1455
      %1532 = vst.msk [vmem:[#allocation2 + $0x150] sm:$0xff] %vm1510, %v1457
      %1533 = vst.msk [vmem:[#allocation2 + $0x160] sm:$0xff] %vm1510, %v1459
      %1534 = vst.msk [vmem:[#allocation2 + $0x170] sm:$0xff] %vm1510, %v1461
      %1535 = vst.msk [vmem:[#allocation2 + $0x180] sm:$0xff] %vm1510, %v1463
      %1536 = vst.msk [vmem:[#allocation2 + $0x190] sm:$0xff] %vm1510, %v1465
      %1537 = vst.msk [vmem:[#allocation2 + $0x1a0] sm:$0xff] %vm1510, %v1467
      %1538 = vst.msk [vmem:[#allocation2 + $0x1b0] sm:$0xff] %vm1510, %v1469
      %1539 = vst.msk [vmem:[#allocation2 + $0x1c0] sm:$0xff] %vm1510, %v1471
      %1540 = vst.msk [vmem:[#allocation2 + $0x1d0] sm:$0xff] %vm1510, %v1473
      %1541 = vst.msk [vmem:[#allocation2 + $0x1e0] sm:$0xff] %vm1510, %v1475
      %1542 = vst.msk [vmem:[#allocation2 + $0x1f0] sm:$0xff] %vm1510, %v1477
      %1545 = vrot.lane.b32.xlu0 %v342, 48
      %v1546 = vpop.permute.xlu0 %1545
      %1547 = vrot.lane.b32.xlu0 %v343, 48
      %v1548 = vpop.permute.xlu0 %1547
      %1549 = vrot.lane.b32.xlu0 %v345, 48
      %v1550 = vpop.permute.xlu0 %1549
      %1551 = vrot.lane.b32.xlu0 %v346, 48
      %v1552 = vpop.permute.xlu0 %1551
      %1553 = vrot.lane.b32.xlu0 %v348, 48
      %v1554 = vpop.permute.xlu0 %1553
      %1555 = vrot.lane.b32.xlu0 %v349, 48
      %v1556 = vpop.permute.xlu0 %1555
      %1557 = vrot.lane.b32.xlu0 %v351, 48
      %v1558 = vpop.permute.xlu0 %1557
      %1559 = vrot.lane.b32.xlu0 %v352, 48
      %v1560 = vpop.permute.xlu0 %1559
      %1561 = vrot.lane.b32.xlu0 %v354, 48
      %v1562 = vpop.permute.xlu0 %1561
      %1563 = vrot.lane.b32.xlu0 %v355, 48
      %v1564 = vpop.permute.xlu0 %1563
      %1565 = vrot.lane.b32.xlu0 %v357, 48
      %v1566 = vpop.permute.xlu0 %1565
      %1567 = vrot.lane.b32.xlu0 %v358, 48
      %v1568 = vpop.permute.xlu0 %1567
      %1569 = vrot.lane.b32.xlu0 %v360, 48
      %v1570 = vpop.permute.xlu0 %1569
      %1571 = vrot.lane.b32.xlu0 %v361, 48
      %v1572 = vpop.permute.xlu0 %1571
      %1573 = vrot.lane.b32.xlu0 %v363, 48
      %v1574 = vpop.permute.xlu0 %1573
      %1575 = vrot.lane.b32.xlu0 %v364, 48
      %v1576 = vpop.permute.xlu0 %1575
      %1577 = vrot.lane.b32.xlu0 %v366, 48
      %v1578 = vpop.permute.xlu0 %1577
      %1579 = vrot.lane.b32.xlu0 %v367, 48
      %v1580 = vpop.permute.xlu0 %1579
      %1581 = vrot.lane.b32.xlu0 %v369, 48
      %v1582 = vpop.permute.xlu0 %1581
      %1583 = vrot.lane.b32.xlu0 %v370, 48
      %v1584 = vpop.permute.xlu0 %1583
      %1585 = vrot.lane.b32.xlu0 %v372, 48
      %v1586 = vpop.permute.xlu0 %1585
      %1587 = vrot.lane.b32.xlu0 %v373, 48
      %v1588 = vpop.permute.xlu0 %1587
      %1589 = vrot.lane.b32.xlu0 %v375, 48
      %v1590 = vpop.permute.xlu0 %1589
      %1591 = vrot.lane.b32.xlu0 %v376, 48
      %v1592 = vpop.permute.xlu0 %1591
      %1593 = vrot.lane.b32.xlu0 %v378, 48
      %v1594 = vpop.permute.xlu0 %1593
      %1595 = vrot.lane.b32.xlu0 %v379, 48
      %v1596 = vpop.permute.xlu0 %1595
      %1597 = vrot.lane.b32.xlu0 %v381, 48
      %v1598 = vpop.permute.xlu0 %1597
      %1599 = vrot.lane.b32.xlu0 %v382, 48
      %v1600 = vpop.permute.xlu0 %1599
      %1601 = vrot.lane.b32.xlu0 %v384, 48
      %v1602 = vpop.permute.xlu0 %1601
      %1603 = vrot.lane.b32.xlu0 %v385, 48
      %v1604 = vpop.permute.xlu0 %1603
      %1605 = vrot.lane.b32.xlu0 %v387, 48
      %v1606 = vpop.permute.xlu0 %1605
      %1607 = vrot.lane.b32.xlu0 %v388, 48
      %v1608 = vpop.permute.xlu0 %1607
      %vm1641 = vcmask 458112
      %1642 = vst.msk [vmem:[#allocation2] sm:$0xff] %vm1641, %v1546
      %1643 = vst.msk [vmem:[#allocation2 + $0x10] sm:$0xff] %vm1641, %v1548
      %1644 = vst.msk [vmem:[#allocation2 + $0x20] sm:$0xff] %vm1641, %v1550
      %1645 = vst.msk [vmem:[#allocation2 + $0x30] sm:$0xff] %vm1641, %v1552
      %1646 = vst.msk [vmem:[#allocation2 + $0x40] sm:$0xff] %vm1641, %v1554
      %1647 = vst.msk [vmem:[#allocation2 + $0x50] sm:$0xff] %vm1641, %v1556
      %1648 = vst.msk [vmem:[#allocation2 + $0x60] sm:$0xff] %vm1641, %v1558
      %1649 = vst.msk [vmem:[#allocation2 + $0x70] sm:$0xff] %vm1641, %v1560
      %1650 = vst.msk [vmem:[#allocation2 + $0x80] sm:$0xff] %vm1641, %v1562
      %1651 = vst.msk [vmem:[#allocation2 + $0x90] sm:$0xff] %vm1641, %v1564
      %1652 = vst.msk [vmem:[#allocation2 + $0xa0] sm:$0xff] %vm1641, %v1566
      %1653 = vst.msk [vmem:[#allocation2 + $0xb0] sm:$0xff] %vm1641, %v1568
      %1654 = vst.msk [vmem:[#allocation2 + $0xc0] sm:$0xff] %vm1641, %v1570
      %1655 = vst.msk [vmem:[#allocation2 + $0xd0] sm:$0xff] %vm1641, %v1572
      %1656 = vst.msk [vmem:[#allocation2 + $0xe0] sm:$0xff] %vm1641, %v1574
      %1657 = vst.msk [vmem:[#allocation2 + $0xf0] sm:$0xff] %vm1641, %v1576
      %1658 = vst.msk [vmem:[#allocation2 + $0x100] sm:$0xff] %vm1641, %v1578
      %1659 = vst.msk [vmem:[#allocation2 + $0x110] sm:$0xff] %vm1641, %v1580
      %1660 = vst.msk [vmem:[#allocation2 + $0x120] sm:$0xff] %vm1641, %v1582
      %1661 = vst.msk [vmem:[#allocation2 + $0x130] sm:$0xff] %vm1641, %v1584
      %1662 = vst.msk [vmem:[#allocation2 + $0x140] sm:$0xff] %vm1641, %v1586
      %1663 = vst.msk [vmem:[#allocation2 + $0x150] sm:$0xff] %vm1641, %v1588
      %1664 = vst.msk [vmem:[#allocation2 + $0x160] sm:$0xff] %vm1641, %v1590
      %1665 = vst.msk [vmem:[#allocation2 + $0x170] sm:$0xff] %vm1641, %v1592
      %1666 = vst.msk [vmem:[#allocation2 + $0x180] sm:$0xff] %vm1641, %v1594
      %1667 = vst.msk [vmem:[#allocation2 + $0x190] sm:$0xff] %vm1641, %v1596
      %1668 = vst.msk [vmem:[#allocation2 + $0x1a0] sm:$0xff] %vm1641, %v1598
      %1669 = vst.msk [vmem:[#allocation2 + $0x1b0] sm:$0xff] %vm1641, %v1600
      %1670 = vst.msk [vmem:[#allocation2 + $0x1c0] sm:$0xff] %vm1641, %v1602
      %1671 = vst.msk [vmem:[#allocation2 + $0x1d0] sm:$0xff] %vm1641, %v1604
      %1672 = vst.msk [vmem:[#allocation2 + $0x1e0] sm:$0xff] %vm1641, %v1606
      %1673 = vst.msk [vmem:[#allocation2 + $0x1f0] sm:$0xff] %vm1641, %v1608
      %1676 = vrot.lane.b32.xlu0 %v396, 56
      %v1677 = vpop.permute.xlu0 %1676
      %1678 = vrot.lane.b32.xlu0 %v397, 56
      %v1679 = vpop.permute.xlu0 %1678
      %1680 = vrot.lane.b32.xlu0 %v399, 56
      %v1681 = vpop.permute.xlu0 %1680
      %1682 = vrot.lane.b32.xlu0 %v400, 56
      %v1683 = vpop.permute.xlu0 %1682
      %1684 = vrot.lane.b32.xlu0 %v402, 56
      %v1685 = vpop.permute.xlu0 %1684
      %1686 = vrot.lane.b32.xlu0 %v403, 56
      %v1687 = vpop.permute.xlu0 %1686
      %1688 = vrot.lane.b32.xlu0 %v405, 56
      %v1689 = vpop.permute.xlu0 %1688
      %1690 = vrot.lane.b32.xlu0 %v406, 56
      %v1691 = vpop.permute.xlu0 %1690
      %1692 = vrot.lane.b32.xlu0 %v408, 56
      %v1693 = vpop.permute.xlu0 %1692
      %1694 = vrot.lane.b32.xlu0 %v409, 56
      %v1695 = vpop.permute.xlu0 %1694
      %1696 = vrot.lane.b32.xlu0 %v411, 56
      %v1697 = vpop.permute.xlu0 %1696
      %1698 = vrot.lane.b32.xlu0 %v412, 56
      %v1699 = vpop.permute.xlu0 %1698
      %1700 = vrot.lane.b32.xlu0 %v414, 56
      %v1701 = vpop.permute.xlu0 %1700
      %1702 = vrot.lane.b32.xlu0 %v415, 56
      %v1703 = vpop.permute.xlu0 %1702
      %1704 = vrot.lane.b32.xlu0 %v417, 56
      %v1705 = vpop.permute.xlu0 %1704
      %1706 = vrot.lane.b32.xlu0 %v418, 56
      %v1707 = vpop.permute.xlu0 %1706
      %1708 = vrot.lane.b32.xlu0 %v420, 56
      %v1709 = vpop.permute.xlu0 %1708
      %1710 = vrot.lane.b32.xlu0 %v421, 56
      %v1711 = vpop.permute.xlu0 %1710
      %1712 = vrot.lane.b32.xlu0 %v423, 56
      %v1713 = vpop.permute.xlu0 %1712
      %1714 = vrot.lane.b32.xlu0 %v424, 56
      %v1715 = vpop.permute.xlu0 %1714
      %1716 = vrot.lane.b32.xlu0 %v426, 56
      %v1717 = vpop.permute.xlu0 %1716
      %1718 = vrot.lane.b32.xlu0 %v427, 56
      %v1719 = vpop.permute.xlu0 %1718
      %1720 = vrot.lane.b32.xlu0 %v429, 56
      %v1721 = vpop.permute.xlu0 %1720
      %1722 = vrot.lane.b32.xlu0 %v430, 56
      %v1723 = vpop.permute.xlu0 %1722
      %1724 = vrot.lane.b32.xlu0 %v432, 56
      %v1725 = vpop.permute.xlu0 %1724
      %1726 = vrot.lane.b32.xlu0 %v433, 56
      %v1727 = vpop.permute.xlu0 %1726
      %1728 = vrot.lane.b32.xlu0 %v435, 56
      %v1729 = vpop.permute.xlu0 %1728
      %1730 = vrot.lane.b32.xlu0 %v436, 56
      %v1731 = vpop.permute.xlu0 %1730
      %1732 = vrot.lane.b32.xlu0 %v438, 56
      %v1733 = vpop.permute.xlu0 %1732
      %1734 = vrot.lane.b32.xlu0 %v439, 56
      %v1735 = vpop.permute.xlu0 %1734
      %1736 = vrot.lane.b32.xlu0 %v441, 56
      %v1737 = vpop.permute.xlu0 %1736
      %1738 = vrot.lane.b32.xlu0 %v442, 56
      %v1739 = vpop.permute.xlu0 %1738
      %vm1772 = vcmask 523712
      %1773 = vst.msk [vmem:[#allocation2] sm:$0xff] %vm1772, %v1677
      %1774 = vst.msk [vmem:[#allocation2 + $0x10] sm:$0xff] %vm1772, %v1679
      %1775 = vst.msk [vmem:[#allocation2 + $0x20] sm:$0xff] %vm1772, %v1681
      %1776 = vst.msk [vmem:[#allocation2 + $0x30] sm:$0xff] %vm1772, %v1683
      %1777 = vst.msk [vmem:[#allocation2 + $0x40] sm:$0xff] %vm1772, %v1685
      %1778 = vst.msk [vmem:[#allocation2 + $0x50] sm:$0xff] %vm1772, %v1687
      %1779 = vst.msk [vmem:[#allocation2 + $0x60] sm:$0xff] %vm1772, %v1689
      %1780 = vst.msk [vmem:[#allocation2 + $0x70] sm:$0xff] %vm1772, %v1691
      %1781 = vst.msk [vmem:[#allocation2 + $0x80] sm:$0xff] %vm1772, %v1693
      %1782 = vst.msk [vmem:[#allocation2 + $0x90] sm:$0xff] %vm1772, %v1695
      %1783 = vst.msk [vmem:[#allocation2 + $0xa0] sm:$0xff] %vm1772, %v1697
      %1784 = vst.msk [vmem:[#allocation2 + $0xb0] sm:$0xff] %vm1772, %v1699
      %1785 = vst.msk [vmem:[#allocation2 + $0xc0] sm:$0xff] %vm1772, %v1701
      %1786 = vst.msk [vmem:[#allocation2 + $0xd0] sm:$0xff] %vm1772, %v1703
      %1787 = vst.msk [vmem:[#allocation2 + $0xe0] sm:$0xff] %vm1772, %v1705
      %1788 = vst.msk [vmem:[#allocation2 + $0xf0] sm:$0xff] %vm1772, %v1707
      %1789 = vst.msk [vmem:[#allocation2 + $0x100] sm:$0xff] %vm1772, %v1709
      %1790 = vst.msk [vmem:[#allocation2 + $0x110] sm:$0xff] %vm1772, %v1711
      %1791 = vst.msk [vmem:[#allocation2 + $0x120] sm:$0xff] %vm1772, %v1713
      %1792 = vst.msk [vmem:[#allocation2 + $0x130] sm:$0xff] %vm1772, %v1715
      %1793 = vst.msk [vmem:[#allocation2 + $0x140] sm:$0xff] %vm1772, %v1717
      %1794 = vst.msk [vmem:[#allocation2 + $0x150] sm:$0xff] %vm1772, %v1719
      %1795 = vst.msk [vmem:[#allocation2 + $0x160] sm:$0xff] %vm1772, %v1721
      %1796 = vst.msk [vmem:[#allocation2 + $0x170] sm:$0xff] %vm1772, %v1723
      %1797 = vst.msk [vmem:[#allocation2 + $0x180] sm:$0xff] %vm1772, %v1725
      %1798 = vst.msk [vmem:[#allocation2 + $0x190] sm:$0xff] %vm1772, %v1727
      %1799 = vst.msk [vmem:[#allocation2 + $0x1a0] sm:$0xff] %vm1772, %v1729
      %1800 = vst.msk [vmem:[#allocation2 + $0x1b0] sm:$0xff] %vm1772, %v1731
      %1801 = vst.msk [vmem:[#allocation2 + $0x1c0] sm:$0xff] %vm1772, %v1733
      %1802 = vst.msk [vmem:[#allocation2 + $0x1d0] sm:$0xff] %vm1772, %v1735
      %1803 = vst.msk [vmem:[#allocation2 + $0x1e0] sm:$0xff] %vm1772, %v1737
      %1804 = vst.msk [vmem:[#allocation2 + $0x1f0] sm:$0xff] %vm1772, %v1739
      %v1806 = vrot.slane %v387, 1
      %v1807 = vrot.slane %v388, 1
      %v1808 = vsel %vm689, %v1806, %v1807
      %v1809 = vrot.slane %v389, 1
      %v1810 = vsel %vm689, %v1807, %v1809
      %1811 = vrot.lane.b32.xlu0 %v697, 64
      %v1812 = vpop.permute.xlu0 %1811
      %1813 = vrot.lane.b32.xlu0 %v699, 64
      %v1814 = vpop.permute.xlu0 %1813
      %1815 = vrot.lane.b32.xlu0 %v702, 64
      %v1816 = vpop.permute.xlu0 %1815
      %1817 = vrot.lane.b32.xlu0 %v704, 64
      %v1818 = vpop.permute.xlu0 %1817
      %1819 = vrot.lane.b32.xlu0 %v707, 64
      %v1820 = vpop.permute.xlu0 %1819
      %1821 = vrot.lane.b32.xlu0 %v709, 64
      %v1822 = vpop.permute.xlu0 %1821
      %1823 = vrot.lane.b32.xlu0 %v712, 64
      %v1824 = vpop.permute.xlu0 %1823
      %1825 = vrot.lane.b32.xlu0 %v714, 64
      %v1826 = vpop.permute.xlu0 %1825
      %1827 = vrot.lane.b32.xlu0 %v717, 64
      %v1828 = vpop.permute.xlu0 %1827
      %1829 = vrot.lane.b32.xlu0 %v719, 64
      %v1830 = vpop.permute.xlu0 %1829
      %1831 = vrot.lane.b32.xlu0 %v722, 64
      %v1832 = vpop.permute.xlu0 %1831
      %1833 = vrot.lane.b32.xlu0 %v724, 64
      %v1834 = vpop.permute.xlu0 %1833
      %1835 = vrot.lane.b32.xlu0 %v727, 64
      %v1836 = vpop.permute.xlu0 %1835
      %1837 = vrot.lane.b32.xlu0 %v729, 64
      %v1838 = vpop.permute.xlu0 %1837
      %1839 = vrot.lane.b32.xlu0 %v732, 64
      %v1840 = vpop.permute.xlu0 %1839
      %1841 = vrot.lane.b32.xlu0 %v734, 64
      %v1842 = vpop.permute.xlu0 %1841
      %1843 = vrot.lane.b32.xlu0 %v737, 64
      %v1844 = vpop.permute.xlu0 %1843
      %1845 = vrot.lane.b32.xlu0 %v739, 64
      %v1846 = vpop.permute.xlu0 %1845
      %1847 = vrot.lane.b32.xlu0 %v742, 64
      %v1848 = vpop.permute.xlu0 %1847
      %1849 = vrot.lane.b32.xlu0 %v744, 64
      %v1850 = vpop.permute.xlu0 %1849
      %1851 = vrot.lane.b32.xlu0 %v747, 64
      %v1852 = vpop.permute.xlu0 %1851
      %1853 = vrot.lane.b32.xlu0 %v749, 64
      %v1854 = vpop.permute.xlu0 %1853
      %1855 = vrot.lane.b32.xlu0 %v752, 64
      %v1856 = vpop.permute.xlu0 %1855
      %1857 = vrot.lane.b32.xlu0 %v754, 64
      %v1858 = vpop.permute.xlu0 %1857
      %1859 = vrot.lane.b32.xlu0 %v757, 64
      %v1860 = vpop.permute.xlu0 %1859
      %1861 = vrot.lane.b32.xlu0 %v759, 64
      %v1862 = vpop.permute.xlu0 %1861
      %1863 = vrot.lane.b32.xlu0 %v762, 64
      %v1864 = vpop.permute.xlu0 %1863
      %1865 = vrot.lane.b32.xlu0 %v764, 64
      %v1866 = vpop.permute.xlu0 %1865
      %1867 = vrot.lane.b32.xlu0 %v767, 64
      %v1868 = vpop.permute.xlu0 %1867
      %1869 = vrot.lane.b32.xlu0 %v769, 64
      %v1870 = vpop.permute.xlu0 %1869
      %1871 = vrot.lane.b32.xlu0 %v1808, 64
      %v1872 = vpop.permute.xlu0 %1871
      %1873 = vrot.lane.b32.xlu0 %v1810, 64
      %v1874 = vpop.permute.xlu0 %1873
      %vm1907 = vcmask 589312
      %1908 = vst.msk [vmem:[#allocation2] sm:$0xff] %vm1907, %v1812
      %1909 = vst.msk [vmem:[#allocation2 + $0x10] sm:$0xff] %vm1907, %v1814
      %1910 = vst.msk [vmem:[#allocation2 + $0x20] sm:$0xff] %vm1907, %v1816
      %1911 = vst.msk [vmem:[#allocation2 + $0x30] sm:$0xff] %vm1907, %v1818
      %1912 = vst.msk [vmem:[#allocation2 + $0x40] sm:$0xff] %vm1907, %v1820
      %1913 = vst.msk [vmem:[#allocation2 + $0x50] sm:$0xff] %vm1907, %v1822
      %1914 = vst.msk [vmem:[#allocation2 + $0x60] sm:$0xff] %vm1907, %v1824
      %1915 = vst.msk [vmem:[#allocation2 + $0x70] sm:$0xff] %vm1907, %v1826
      %1916 = vst.msk [vmem:[#allocation2 + $0x80] sm:$0xff] %vm1907, %v1828
      %1917 = vst.msk [vmem:[#allocation2 + $0x90] sm:$0xff] %vm1907, %v1830
      %1918 = vst.msk [vmem:[#allocation2 + $0xa0] sm:$0xff] %vm1907, %v1832
      %1919 = vst.msk [vmem:[#allocation2 + $0xb0] sm:$0xff] %vm1907, %v1834
      %1920 = vst.msk [vmem:[#allocation2 + $0xc0] sm:$0xff] %vm1907, %v1836
      %1921 = vst.msk [vmem:[#allocation2 + $0xd0] sm:$0xff] %vm1907, %v1838
      %1922 = vst.msk [vmem:[#allocation2 + $0xe0] sm:$0xff] %vm1907, %v1840
      %1923 = vst.msk [vmem:[#allocation2 + $0xf0] sm:$0xff] %vm1907, %v1842
      %1924 = vst.msk [vmem:[#allocation2 + $0x100] sm:$0xff] %vm1907, %v1844
      %1925 = vst.msk [vmem:[#allocation2 + $0x110] sm:$0xff] %vm1907, %v1846
      %1926 = vst.msk [vmem:[#allocation2 + $0x120] sm:$0xff] %vm1907, %v1848
      %1927 = vst.msk [vmem:[#allocation2 + $0x130] sm:$0xff] %vm1907, %v1850
      %1928 = vst.msk [vmem:[#allocation2 + $0x140] sm:$0xff] %vm1907, %v1852
      %1929 = vst.msk [vmem:[#allocation2 + $0x150] sm:$0xff] %vm1907, %v1854
      %1930 = vst.msk [vmem:[#allocation2 + $0x160] sm:$0xff] %vm1907, %v1856
      %1931 = vst.msk [vmem:[#allocation2 + $0x170] sm:$0xff] %vm1907, %v1858
      %1932 = vst.msk [vmem:[#allocation2 + $0x180] sm:$0xff] %vm1907, %v1860
      %1933 = vst.msk [vmem:[#allocation2 + $0x190] sm:$0xff] %vm1907, %v1862
      %1934 = vst.msk [vmem:[#allocation2 + $0x1a0] sm:$0xff] %vm1907, %v1864
      %1935 = vst.msk [vmem:[#allocation2 + $0x1b0] sm:$0xff] %vm1907, %v1866
      %1936 = vst.msk [vmem:[#allocation2 + $0x1c0] sm:$0xff] %vm1907, %v1868
      %1937 = vst.msk [vmem:[#allocation2 + $0x1d0] sm:$0xff] %vm1907, %v1870
      %1938 = vst.msk [vmem:[#allocation2 + $0x1e0] sm:$0xff] %vm1907, %v1872
      %1939 = vst.msk [vmem:[#allocation2 + $0x1f0] sm:$0xff] %vm1907, %v1874
      %v1941 = vrot.slane %v441, 1
      %v1942 = vrot.slane %v442, 1
      %v1943 = vsel %vm689, %v1941, %v1942
      %v1944 = vrot.slane %v443, 1
      %v1945 = vsel %vm689, %v1942, %v1944
      %1946 = vrot.lane.b32.xlu0 %v922, 72
      %v1947 = vpop.permute.xlu0 %1946
      %1948 = vrot.lane.b32.xlu0 %v924, 72
      %v1949 = vpop.permute.xlu0 %1948
      %1950 = vrot.lane.b32.xlu0 %v927, 72
      %v1951 = vpop.permute.xlu0 %1950
      %1952 = vrot.lane.b32.xlu0 %v929, 72
      %v1953 = vpop.permute.xlu0 %1952
      %1954 = vrot.lane.b32.xlu0 %v932, 72
      %v1955 = vpop.permute.xlu0 %1954
      %1956 = vrot.lane.b32.xlu0 %v934, 72
      %v1957 = vpop.permute.xlu0 %1956
      %1958 = vrot.lane.b32.xlu0 %v937, 72
      %v1959 = vpop.permute.xlu0 %1958
      %1960 = vrot.lane.b32.xlu0 %v939, 72
      %v1961 = vpop.permute.xlu0 %1960
      %1962 = vrot.lane.b32.xlu0 %v942, 72
      %v1963 = vpop.permute.xlu0 %1962
      %1964 = vrot.lane.b32.xlu0 %v944, 72
      %v1965 = vpop.permute.xlu0 %1964
      %1966 = vrot.lane.b32.xlu0 %v947, 72
      %v1967 = vpop.permute.xlu0 %1966
      %1968 = vrot.lane.b32.xlu0 %v949, 72
      %v1969 = vpop.permute.xlu0 %1968
      %1970 = vrot.lane.b32.xlu0 %v952, 72
      %v1971 = vpop.permute.xlu0 %1970
      %1972 = vrot.lane.b32.xlu0 %v954, 72
      %v1973 = vpop.permute.xlu0 %1972
      %1974 = vrot.lane.b32.xlu0 %v957, 72
      %v1975 = vpop.permute.xlu0 %1974
      %1976 = vrot.lane.b32.xlu0 %v959, 72
      %v1977 = vpop.permute.xlu0 %1976
      %1978 = vrot.lane.b32.xlu0 %v962, 72
      %v1979 = vpop.permute.xlu0 %1978
      %1980 = vrot.lane.b32.xlu0 %v964, 72
      %v1981 = vpop.permute.xlu0 %1980
      %1982 = vrot.lane.b32.xlu0 %v967, 72
      %v1983 = vpop.permute.xlu0 %1982
      %1984 = vrot.lane.b32.xlu0 %v969, 72
      %v1985 = vpop.permute.xlu0 %1984
      %1986 = vrot.lane.b32.xlu0 %v972, 72
      %v1987 = vpop.permute.xlu0 %1986
      %1988 = vrot.lane.b32.xlu0 %v974, 72
      %v1989 = vpop.permute.xlu0 %1988
      %1990 = vrot.lane.b32.xlu0 %v977, 72
      %v1991 = vpop.permute.xlu0 %1990
      %1992 = vrot.lane.b32.xlu0 %v979, 72
      %v1993 = vpop.permute.xlu0 %1992
      %1994 = vrot.lane.b32.xlu0 %v982, 72
      %v1995 = vpop.permute.xlu0 %1994
      %1996 = vrot.lane.b32.xlu0 %v984, 72
      %v1997 = vpop.permute.xlu0 %1996
      %1998 = vrot.lane.b32.xlu0 %v987, 72
      %v1999 = vpop.permute.xlu0 %1998
      %2000 = vrot.lane.b32.xlu0 %v989, 72
      %v2001 = vpop.permute.xlu0 %2000
      %2002 = vrot.lane.b32.xlu0 %v992, 72
      %v2003 = vpop.permute.xlu0 %2002
      %2004 = vrot.lane.b32.xlu0 %v994, 72
      %v2005 = vpop.permute.xlu0 %2004
      %2006 = vrot.lane.b32.xlu0 %v1943, 72
      %v2007 = vpop.permute.xlu0 %2006
      %2008 = vrot.lane.b32.xlu0 %v1945, 72
      %v2009 = vpop.permute.xlu0 %2008
      %vm2042 = vcmask 654912
      %2043 = vst.msk [vmem:[#allocation2] sm:$0xff] %vm2042, %v1947
      %2044 = vst.msk [vmem:[#allocation2 + $0x10] sm:$0xff] %vm2042, %v1949
      %2045 = vst.msk [vmem:[#allocation2 + $0x20] sm:$0xff] %vm2042, %v1951
      %2046 = vst.msk [vmem:[#allocation2 + $0x30] sm:$0xff] %vm2042, %v1953
      %2047 = vst.msk [vmem:[#allocation2 + $0x40] sm:$0xff] %vm2042, %v1955
      %2048 = vst.msk [vmem:[#allocation2 + $0x50] sm:$0xff] %vm2042, %v1957
      %2049 = vst.msk [vmem:[#allocation2 + $0x60] sm:$0xff] %vm2042, %v1959
      %2050 = vst.msk [vmem:[#allocation2 + $0x70] sm:$0xff] %vm2042, %v1961
      %2051 = vst.msk [vmem:[#allocation2 + $0x80] sm:$0xff] %vm2042, %v1963
      %2052 = vst.msk [vmem:[#allocation2 + $0x90] sm:$0xff] %vm2042, %v1965
      %2053 = vst.msk [vmem:[#allocation2 + $0xa0] sm:$0xff] %vm2042, %v1967
      %2054 = vst.msk [vmem:[#allocation2 + $0xb0] sm:$0xff] %vm2042, %v1969
      %2055 = vst.msk [vmem:[#allocation2 + $0xc0] sm:$0xff] %vm2042, %v1971
      %2056 = vst.msk [vmem:[#allocation2 + $0xd0] sm:$0xff] %vm2042, %v1973
      %2057 = vst.msk [vmem:[#allocation2 + $0xe0] sm:$0xff] %vm2042, %v1975
      %2058 = vst.msk [vmem:[#allocation2 + $0xf0] sm:$0xff] %vm2042, %v1977
      %2059 = vst.msk [vmem:[#allocation2 + $0x100] sm:$0xff] %vm2042, %v1979
      %2060 = vst.msk [vmem:[#allocation2 + $0x110] sm:$0xff] %vm2042, %v1981
      %2061 = vst.msk [vmem:[#allocation2 + $0x120] sm:$0xff] %vm2042, %v1983
      %2062 = vst.msk [vmem:[#allocation2 + $0x130] sm:$0xff] %vm2042, %v1985
      %2063 = vst.msk [vmem:[#allocation2 + $0x140] sm:$0xff] %vm2042, %v1987
      %2064 = vst.msk [vmem:[#allocation2 + $0x150] sm:$0xff] %vm2042, %v1989
      %2065 = vst.msk [vmem:[#allocation2 + $0x160] sm:$0xff] %vm2042, %v1991
      %2066 = vst.msk [vmem:[#allocation2 + $0x170] sm:$0xff] %vm2042, %v1993
      %2067 = vst.msk [vmem:[#allocation2 + $0x180] sm:$0xff] %vm2042, %v1995
      %2068 = vst.msk [vmem:[#allocation2 + $0x190] sm:$0xff] %vm2042, %v1997
      %2069 = vst.msk [vmem:[#allocation2 + $0x1a0] sm:$0xff] %vm2042, %v1999
      %2070 = vst.msk [vmem:[#allocation2 + $0x1b0] sm:$0xff] %vm2042, %v2001
      %2071 = vst.msk [vmem:[#allocation2 + $0x1c0] sm:$0xff] %vm2042, %v2003
      %2072 = vst.msk [vmem:[#allocation2 + $0x1d0] sm:$0xff] %vm2042, %v2005
      %2073 = vst.msk [vmem:[#allocation2 + $0x1e0] sm:$0xff] %vm2042, %v2007
      %2074 = vst.msk [vmem:[#allocation2 + $0x1f0] sm:$0xff] %vm2042, %v2009
      %v2075 = vrot.slane %v387, 2
      %v2076 = vrot.slane %v388, 2
      %v2077 = vsel %vm1124, %v2075, %v2076
      %v2078 = vrot.slane %v389, 2
      %v2079 = vsel %vm1124, %v2076, %v2078
      %2080 = vrot.lane.b32.xlu0 %v1132, 80
      %v2081 = vpop.permute.xlu0 %2080
      %2082 = vrot.lane.b32.xlu0 %v1134, 80
      %v2083 = vpop.permute.xlu0 %2082
      %2084 = vrot.lane.b32.xlu0 %v1137, 80
      %v2085 = vpop.permute.xlu0 %2084
      %2086 = vrot.lane.b32.xlu0 %v1139, 80
      %v2087 = vpop.permute.xlu0 %2086
      %2088 = vrot.lane.b32.xlu0 %v1142, 80
      %v2089 = vpop.permute.xlu0 %2088
      %2090 = vrot.lane.b32.xlu0 %v1144, 80
      %v2091 = vpop.permute.xlu0 %2090
      %2092 = vrot.lane.b32.xlu0 %v1147, 80
      %v2093 = vpop.permute.xlu0 %2092
      %2094 = vrot.lane.b32.xlu0 %v1149, 80
      %v2095 = vpop.permute.xlu0 %2094
      %2096 = vrot.lane.b32.xlu0 %v1152, 80
      %v2097 = vpop.permute.xlu0 %2096
      %2098 = vrot.lane.b32.xlu0 %v1154, 80
      %v2099 = vpop.permute.xlu0 %2098
      %2100 = vrot.lane.b32.xlu0 %v1157, 80
      %v2101 = vpop.permute.xlu0 %2100
      %2102 = vrot.lane.b32.xlu0 %v1159, 80
      %v2103 = vpop.permute.xlu0 %2102
      %2104 = vrot.lane.b32.xlu0 %v1162, 80
      %v2105 = vpop.permute.xlu0 %2104
      %2106 = vrot.lane.b32.xlu0 %v1164, 80
      %v2107 = vpop.permute.xlu0 %2106
      %2108 = vrot.lane.b32.xlu0 %v1167, 80
      %v2109 = vpop.permute.xlu0 %2108
      %2110 = vrot.lane.b32.xlu0 %v1169, 80
      %v2111 = vpop.permute.xlu0 %2110
      %2112 = vrot.lane.b32.xlu0 %v1172, 80
      %v2113 = vpop.permute.xlu0 %2112
      %2114 = vrot.lane.b32.xlu0 %v1174, 80
      %v2115 = vpop.permute.xlu0 %2114
      %2116 = vrot.lane.b32.xlu0 %v1177, 80
      %v2117 = vpop.permute.xlu0 %2116
      %2118 = vrot.lane.b32.xlu0 %v1179, 80
      %v2119 = vpop.permute.xlu0 %2118
      %2120 = vrot.lane.b32.xlu0 %v1182, 80
      %v2121 = vpop.permute.xlu0 %2120
      %2122 = vrot.lane.b32.xlu0 %v1184, 80
      %v2123 = vpop.permute.xlu0 %2122
      %2124 = vrot.lane.b32.xlu0 %v1187, 80
      %v2125 = vpop.permute.xlu0 %2124
      %2126 = vrot.lane.b32.xlu0 %v1189, 80
      %v2127 = vpop.permute.xlu0 %2126
      %2128 = vrot.lane.b32.xlu0 %v1192, 80
      %v2129 = vpop.permute.xlu0 %2128
      %2130 = vrot.lane.b32.xlu0 %v1194, 80
      %v2131 = vpop.permute.xlu0 %2130
      %2132 = vrot.lane.b32.xlu0 %v1197, 80
      %v2133 = vpop.permute.xlu0 %2132
      %2134 = vrot.lane.b32.xlu0 %v1199, 80
      %v2135 = vpop.permute.xlu0 %2134
      %2136 = vrot.lane.b32.xlu0 %v1202, 80
      %v2137 = vpop.permute.xlu0 %2136
      %2138 = vrot.lane.b32.xlu0 %v1204, 80
      %v2139 = vpop.permute.xlu0 %2138
      %2140 = vrot.lane.b32.xlu0 %v2077, 80
      %v2141 = vpop.permute.xlu0 %2140
      %2142 = vrot.lane.b32.xlu0 %v2079, 80
      %v2143 = vpop.permute.xlu0 %2142
      %vm2176 = vcmask 720512
      %2177 = vst.msk [vmem:[#allocation2] sm:$0xff] %vm2176, %v2081
      %2178 = vst.msk [vmem:[#allocation2 + $0x10] sm:$0xff] %vm2176, %v2083
      %2179 = vst.msk [vmem:[#allocation2 + $0x20] sm:$0xff] %vm2176, %v2085
      %2180 = vst.msk [vmem:[#allocation2 + $0x30] sm:$0xff] %vm2176, %v2087
      %2181 = vst.msk [vmem:[#allocation2 + $0x40] sm:$0xff] %vm2176, %v2089
      %2182 = vst.msk [vmem:[#allocation2 + $0x50] sm:$0xff] %vm2176, %v2091
      %2183 = vst.msk [vmem:[#allocation2 + $0x60] sm:$0xff] %vm2176, %v2093
      %2184 = vst.msk [vmem:[#allocation2 + $0x70] sm:$0xff] %vm2176, %v2095
      %2185 = vst.msk [vmem:[#allocation2 + $0x80] sm:$0xff] %vm2176, %v2097
      %2186 = vst.msk [vmem:[#allocation2 + $0x90] sm:$0xff] %vm2176, %v2099
      %2187 = vst.msk [vmem:[#allocation2 + $0xa0] sm:$0xff] %vm2176, %v2101
      %2188 = vst.msk [vmem:[#allocation2 + $0xb0] sm:$0xff] %vm2176, %v2103
      %2189 = vst.msk [vmem:[#allocation2 + $0xc0] sm:$0xff] %vm2176, %v2105
      %2190 = vst.msk [vmem:[#allocation2 + $0xd0] sm:$0xff] %vm2176, %v2107
      %2191 = vst.msk [vmem:[#allocation2 + $0xe0] sm:$0xff] %vm2176, %v2109
      %2192 = vst.msk [vmem:[#allocation2 + $0xf0] sm:$0xff] %vm2176, %v2111
      %2193 = vst.msk [vmem:[#allocation2 + $0x100] sm:$0xff] %vm2176, %v2113
      %2194 = vst.msk [vmem:[#allocation2 + $0x110] sm:$0xff] %vm2176, %v2115
      %2195 = vst.msk [vmem:[#allocation2 + $0x120] sm:$0xff] %vm2176, %v2117
      %2196 = vst.msk [vmem:[#allocation2 + $0x130] sm:$0xff] %vm2176, %v2119
      %2197 = vst.msk [vmem:[#allocation2 + $0x140] sm:$0xff] %vm2176, %v2121
      %2198 = vst.msk [vmem:[#allocation2 + $0x150] sm:$0xff] %vm2176, %v2123
      %2199 = vst.msk [vmem:[#allocation2 + $0x160] sm:$0xff] %vm2176, %v2125
      %2200 = vst.msk [vmem:[#allocation2 + $0x170] sm:$0xff] %vm2176, %v2127
      %2201 = vst.msk [vmem:[#allocation2 + $0x180] sm:$0xff] %vm2176, %v2129
      %2202 = vst.msk [vmem:[#allocation2 + $0x190] sm:$0xff] %vm2176, %v2131
      %2203 = vst.msk [vmem:[#allocation2 + $0x1a0] sm:$0xff] %vm2176, %v2133
      %2204 = vst.msk [vmem:[#allocation2 + $0x1b0] sm:$0xff] %vm2176, %v2135
      %2205 = vst.msk [vmem:[#allocation2 + $0x1c0] sm:$0xff] %vm2176, %v2137
      %2206 = vst.msk [vmem:[#allocation2 + $0x1d0] sm:$0xff] %vm2176, %v2139
      %2207 = vst.msk [vmem:[#allocation2 + $0x1e0] sm:$0xff] %vm2176, %v2141
      %2208 = vst.msk [vmem:[#allocation2 + $0x1f0] sm:$0xff] %vm2176, %v2143
      %v2209 = vrot.slane %v441, 2
      %v2210 = vrot.slane %v442, 2
      %v2211 = vsel %vm1124, %v2209, %v2210
      %v2212 = vrot.slane %v443, 2
      %v2213 = vsel %vm1124, %v2210, %v2212
      %2214 = vrot.lane.b32.xlu0 %v1341, 88
      %v2215 = vpop.permute.xlu0 %2214
      %2216 = vrot.lane.b32.xlu0 %v1343, 88
      %v2217 = vpop.permute.xlu0 %2216
      %2218 = vrot.lane.b32.xlu0 %v1346, 88
      %v2219 = vpop.permute.xlu0 %2218
      %2220 = vrot.lane.b32.xlu0 %v1348, 88
      %v2221 = vpop.permute.xlu0 %2220
      %2222 = vrot.lane.b32.xlu0 %v1351, 88
      %v2223 = vpop.permute.xlu0 %2222
      %2224 = vrot.lane.b32.xlu0 %v1353, 88
      %v2225 = vpop.permute.xlu0 %2224
      %2226 = vrot.lane.b32.xlu0 %v1356, 88
      %v2227 = vpop.permute.xlu0 %2226
      %2228 = vrot.lane.b32.xlu0 %v1358, 88
      %v2229 = vpop.permute.xlu0 %2228
      %2230 = vrot.lane.b32.xlu0 %v1361, 88
      %v2231 = vpop.permute.xlu0 %2230
      %2232 = vrot.lane.b32.xlu0 %v1363, 88
      %v2233 = vpop.permute.xlu0 %2232
      %2234 = vrot.lane.b32.xlu0 %v1366, 88
      %v2235 = vpop.permute.xlu0 %2234
      %2236 = vrot.lane.b32.xlu0 %v1368, 88
      %v2237 = vpop.permute.xlu0 %2236
      %2238 = vrot.lane.b32.xlu0 %v1371, 88
      %v2239 = vpop.permute.xlu0 %2238
      %2240 = vrot.lane.b32.xlu0 %v1373, 88
      %v2241 = vpop.permute.xlu0 %2240
      %2242 = vrot.lane.b32.xlu0 %v1376, 88
      %v2243 = vpop.permute.xlu0 %2242
      %2244 = vrot.lane.b32.xlu0 %v1378, 88
      %v2245 = vpop.permute.xlu0 %2244
      %2246 = vrot.lane.b32.xlu0 %v1381, 88
      %v2247 = vpop.permute.xlu0 %2246
      %2248 = vrot.lane.b32.xlu0 %v1383, 88
      %v2249 = vpop.permute.xlu0 %2248
      %2250 = vrot.lane.b32.xlu0 %v1386, 88
      %v2251 = vpop.permute.xlu0 %2250
      %2252 = vrot.lane.b32.xlu0 %v1388, 88
      %v2253 = vpop.permute.xlu0 %2252
      %2254 = vrot.lane.b32.xlu0 %v1391, 88
      %v2255 = vpop.permute.xlu0 %2254
      %2256 = vrot.lane.b32.xlu0 %v1393, 88
      %v2257 = vpop.permute.xlu0 %2256
      %2258 = vrot.lane.b32.xlu0 %v1396, 88
      %v2259 = vpop.permute.xlu0 %2258
      %2260 = vrot.lane.b32.xlu0 %v1398, 88
      %v2261 = vpop.permute.xlu0 %2260
      %2262 = vrot.lane.b32.xlu0 %v1401, 88
      %v2263 = vpop.permute.xlu0 %2262
      %2264 = vrot.lane.b32.xlu0 %v1403, 88
      %v2265 = vpop.permute.xlu0 %2264
      %2266 = vrot.lane.b32.xlu0 %v1406, 88
      %v2267 = vpop.permute.xlu0 %2266
      %2268 = vrot.lane.b32.xlu0 %v1408, 88
      %v2269 = vpop.permute.xlu0 %2268
      %2270 = vrot.lane.b32.xlu0 %v1411, 88
      %v2271 = vpop.permute.xlu0 %2270
      %2272 = vrot.lane.b32.xlu0 %v1413, 88
      %v2273 = vpop.permute.xlu0 %2272
      %2274 = vrot.lane.b32.xlu0 %v2211, 88
      %v2275 = vpop.permute.xlu0 %2274
      %2276 = vrot.lane.b32.xlu0 %v2213, 88
      %v2277 = vpop.permute.xlu0 %2276
      %vm2310 = vcmask 786112
      %2311 = vst.msk [vmem:[#allocation2] sm:$0xff] %vm2310, %v2215
      %2312 = vst.msk [vmem:[#allocation2 + $0x10] sm:$0xff] %vm2310, %v2217
      %2313 = vst.msk [vmem:[#allocation2 + $0x20] sm:$0xff] %vm2310, %v2219
      %2314 = vst.msk [vmem:[#allocation2 + $0x30] sm:$0xff] %vm2310, %v2221
      %2315 = vst.msk [vmem:[#allocation2 + $0x40] sm:$0xff] %vm2310, %v2223
      %2316 = vst.msk [vmem:[#allocation2 + $0x50] sm:$0xff] %vm2310, %v2225
      %2317 = vst.msk [vmem:[#allocation2 + $0x60] sm:$0xff] %vm2310, %v2227
      %2318 = vst.msk [vmem:[#allocation2 + $0x70] sm:$0xff] %vm2310, %v2229
      %2319 = vst.msk [vmem:[#allocation2 + $0x80] sm:$0xff] %vm2310, %v2231
      %2320 = vst.msk [vmem:[#allocation2 + $0x90] sm:$0xff] %vm2310, %v2233
      %2321 = vst.msk [vmem:[#allocation2 + $0xa0] sm:$0xff] %vm2310, %v2235
      %2322 = vst.msk [vmem:[#allocation2 + $0xb0] sm:$0xff] %vm2310, %v2237
      %2323 = vst.msk [vmem:[#allocation2 + $0xc0] sm:$0xff] %vm2310, %v2239
      %2324 = vst.msk [vmem:[#allocation2 + $0xd0] sm:$0xff] %vm2310, %v2241
      %2325 = vst.msk [vmem:[#allocation2 + $0xe0] sm:$0xff] %vm2310, %v2243
      %2326 = vst.msk [vmem:[#allocation2 + $0xf0] sm:$0xff] %vm2310, %v2245
      %2327 = vst.msk [vmem:[#allocation2 + $0x100] sm:$0xff] %vm2310, %v2247
      %2328 = vst.msk [vmem:[#allocation2 + $0x110] sm:$0xff] %vm2310, %v2249
      %2329 = vst.msk [vmem:[#allocation2 + $0x120] sm:$0xff] %vm2310, %v2251
      %2330 = vst.msk [vmem:[#allocation2 + $0x130] sm:$0xff] %vm2310, %v2253
      %2331 = vst.msk [vmem:[#allocation2 + $0x140] sm:$0xff] %vm2310, %v2255
      %2332 = vst.msk [vmem:[#allocation2 + $0x150] sm:$0xff] %vm2310, %v2257
      %2333 = vst.msk [vmem:[#allocation2 + $0x160] sm:$0xff] %vm2310, %v2259
      %2334 = vst.msk [vmem:[#allocation2 + $0x170] sm:$0xff] %vm2310, %v2261
      %2335 = vst.msk [vmem:[#allocation2 + $0x180] sm:$0xff] %vm2310, %v2263
      %2336 = vst.msk [vmem:[#allocation2 + $0x190] sm:$0xff] %vm2310, %v2265
      %2337 = vst.msk [vmem:[#allocation2 + $0x1a0] sm:$0xff] %vm2310, %v2267
      %2338 = vst.msk [vmem:[#allocation2 + $0x1b0] sm:$0xff] %vm2310, %v2269
      %2339 = vst.msk [vmem:[#allocation2 + $0x1c0] sm:$0xff] %vm2310, %v2271
      %2340 = vst.msk [vmem:[#allocation2 + $0x1d0] sm:$0xff] %vm2310, %v2273
      %2341 = vst.msk [vmem:[#allocation2 + $0x1e0] sm:$0xff] %vm2310, %v2275
      %2342 = vst.msk [vmem:[#allocation2 + $0x1f0] sm:$0xff] %vm2310, %v2277
      %2345 = vrot.lane.b32.xlu0 %v345, 96
      %v2346 = vpop.permute.xlu0 %2345
      %2347 = vrot.lane.b32.xlu0 %v346, 96
      %v2348 = vpop.permute.xlu0 %2347
      %2349 = vrot.lane.b32.xlu0 %v348, 96
      %v2350 = vpop.permute.xlu0 %2349
      %2351 = vrot.lane.b32.xlu0 %v349, 96
      %v2352 = vpop.permute.xlu0 %2351
      %2353 = vrot.lane.b32.xlu0 %v351, 96
      %v2354 = vpop.permute.xlu0 %2353
      %2355 = vrot.lane.b32.xlu0 %v352, 96
      %v2356 = vpop.permute.xlu0 %2355
      %2357 = vrot.lane.b32.xlu0 %v354, 96
      %v2358 = vpop.permute.xlu0 %2357
      %2359 = vrot.lane.b32.xlu0 %v355, 96
      %v2360 = vpop.permute.xlu0 %2359
      %2361 = vrot.lane.b32.xlu0 %v357, 96
      %v2362 = vpop.permute.xlu0 %2361
      %2363 = vrot.lane.b32.xlu0 %v358, 96
      %v2364 = vpop.permute.xlu0 %2363
      %2365 = vrot.lane.b32.xlu0 %v360, 96
      %v2366 = vpop.permute.xlu0 %2365
      %2367 = vrot.lane.b32.xlu0 %v361, 96
      %v2368 = vpop.permute.xlu0 %2367
      %2369 = vrot.lane.b32.xlu0 %v363, 96
      %v2370 = vpop.permute.xlu0 %2369
      %2371 = vrot.lane.b32.xlu0 %v364, 96
      %v2372 = vpop.permute.xlu0 %2371
      %2373 = vrot.lane.b32.xlu0 %v366, 96
      %v2374 = vpop.permute.xlu0 %2373
      %2375 = vrot.lane.b32.xlu0 %v367, 96
      %v2376 = vpop.permute.xlu0 %2375
      %2377 = vrot.lane.b32.xlu0 %v369, 96
      %v2378 = vpop.permute.xlu0 %2377
      %2379 = vrot.lane.b32.xlu0 %v370, 96
      %v2380 = vpop.permute.xlu0 %2379
      %2381 = vrot.lane.b32.xlu0 %v372, 96
      %v2382 = vpop.permute.xlu0 %2381
      %2383 = vrot.lane.b32.xlu0 %v373, 96
      %v2384 = vpop.permute.xlu0 %2383
      %2385 = vrot.lane.b32.xlu0 %v375, 96
      %v2386 = vpop.permute.xlu0 %2385
      %2387 = vrot.lane.b32.xlu0 %v376, 96
      %v2388 = vpop.permute.xlu0 %2387
      %2389 = vrot.lane.b32.xlu0 %v378, 96
      %v2390 = vpop.permute.xlu0 %2389
      %2391 = vrot.lane.b32.xlu0 %v379, 96
      %v2392 = vpop.permute.xlu0 %2391
      %2393 = vrot.lane.b32.xlu0 %v381, 96
      %v2394 = vpop.permute.xlu0 %2393
      %2395 = vrot.lane.b32.xlu0 %v382, 96
      %v2396 = vpop.permute.xlu0 %2395
      %2397 = vrot.lane.b32.xlu0 %v384, 96
      %v2398 = vpop.permute.xlu0 %2397
      %2399 = vrot.lane.b32.xlu0 %v385, 96
      %v2400 = vpop.permute.xlu0 %2399
      %2401 = vrot.lane.b32.xlu0 %v387, 96
      %v2402 = vpop.permute.xlu0 %2401
      %2403 = vrot.lane.b32.xlu0 %v388, 96
      %v2404 = vpop.permute.xlu0 %2403
      %2405 = vrot.lane.b32.xlu0 %v390, 96
      %v2406 = vpop.permute.xlu0 %2405
      %2407 = vrot.lane.b32.xlu0 %v391, 96
      %v2408 = vpop.permute.xlu0 %2407
      %vm2441 = vcmask 851712
      %2442 = vst.msk [vmem:[#allocation2] sm:$0xff] %vm2441, %v2346
      %2443 = vst.msk [vmem:[#allocation2 + $0x10] sm:$0xff] %vm2441, %v2348
      %2444 = vst.msk [vmem:[#allocation2 + $0x20] sm:$0xff] %vm2441, %v2350
      %2445 = vst.msk [vmem:[#allocation2 + $0x30] sm:$0xff] %vm2441, %v2352
      %2446 = vst.msk [vmem:[#allocation2 + $0x40] sm:$0xff] %vm2441, %v2354
      %2447 = vst.msk [vmem:[#allocation2 + $0x50] sm:$0xff] %vm2441, %v2356
      %2448 = vst.msk [vmem:[#allocation2 + $0x60] sm:$0xff] %vm2441, %v2358
      %2449 = vst.msk [vmem:[#allocation2 + $0x70] sm:$0xff] %vm2441, %v2360
      %2450 = vst.msk [vmem:[#allocation2 + $0x80] sm:$0xff] %vm2441, %v2362
      %2451 = vst.msk [vmem:[#allocation2 + $0x90] sm:$0xff] %vm2441, %v2364
      %2452 = vst.msk [vmem:[#allocation2 + $0xa0] sm:$0xff] %vm2441, %v2366
      %2453 = vst.msk [vmem:[#allocation2 + $0xb0] sm:$0xff] %vm2441, %v2368
      %2454 = vst.msk [vmem:[#allocation2 + $0xc0] sm:$0xff] %vm2441, %v2370
      %2455 = vst.msk [vmem:[#allocation2 + $0xd0] sm:$0xff] %vm2441, %v2372
      %2456 = vst.msk [vmem:[#allocation2 + $0xe0] sm:$0xff] %vm2441, %v2374
      %2457 = vst.msk [vmem:[#allocation2 + $0xf0] sm:$0xff] %vm2441, %v2376
      %2458 = vst.msk [vmem:[#allocation2 + $0x100] sm:$0xff] %vm2441, %v2378
      %2459 = vst.msk [vmem:[#allocation2 + $0x110] sm:$0xff] %vm2441, %v2380
      %2460 = vst.msk [vmem:[#allocation2 + $0x120] sm:$0xff] %vm2441, %v2382
      %2461 = vst.msk [vmem:[#allocation2 + $0x130] sm:$0xff] %vm2441, %v2384
      %2462 = vst.msk [vmem:[#allocation2 + $0x140] sm:$0xff] %vm2441, %v2386
      %2463 = vst.msk [vmem:[#allocation2 + $0x150] sm:$0xff] %vm2441, %v2388
      %2464 = vst.msk [vmem:[#allocation2 + $0x160] sm:$0xff] %vm2441, %v2390
      %2465 = vst.msk [vmem:[#allocation2 + $0x170] sm:$0xff] %vm2441, %v2392
      %2466 = vst.msk [vmem:[#allocation2 + $0x180] sm:$0xff] %vm2441, %v2394
      %2467 = vst.msk [vmem:[#allocation2 + $0x190] sm:$0xff] %vm2441, %v2396
      %2468 = vst.msk [vmem:[#allocation2 + $0x1a0] sm:$0xff] %vm2441, %v2398
      %2469 = vst.msk [vmem:[#allocation2 + $0x1b0] sm:$0xff] %vm2441, %v2400
      %2470 = vst.msk [vmem:[#allocation2 + $0x1c0] sm:$0xff] %vm2441, %v2402
      %2471 = vst.msk [vmem:[#allocation2 + $0x1d0] sm:$0xff] %vm2441, %v2404
      %2472 = vst.msk [vmem:[#allocation2 + $0x1e0] sm:$0xff] %vm2441, %v2406
      %2473 = vst.msk [vmem:[#allocation2 + $0x1f0] sm:$0xff] %vm2441, %v2408
      %2476 = vrot.lane.b32.xlu0 %v399, 104
      %v2477 = vpop.permute.xlu0 %2476
      %2478 = vrot.lane.b32.xlu0 %v400, 104
      %v2479 = vpop.permute.xlu0 %2478
      %2480 = vrot.lane.b32.xlu0 %v402, 104
      %v2481 = vpop.permute.xlu0 %2480
      %2482 = vrot.lane.b32.xlu0 %v403, 104
      %v2483 = vpop.permute.xlu0 %2482
      %2484 = vrot.lane.b32.xlu0 %v405, 104
      %v2485 = vpop.permute.xlu0 %2484
      %2486 = vrot.lane.b32.xlu0 %v406, 104
      %v2487 = vpop.permute.xlu0 %2486
      %2488 = vrot.lane.b32.xlu0 %v408, 104
      %v2489 = vpop.permute.xlu0 %2488
      %2490 = vrot.lane.b32.xlu0 %v409, 104
      %v2491 = vpop.permute.xlu0 %2490
      %2492 = vrot.lane.b32.xlu0 %v411, 104
      %v2493 = vpop.permute.xlu0 %2492
      %2494 = vrot.lane.b32.xlu0 %v412, 104
      %v2495 = vpop.permute.xlu0 %2494
      %2496 = vrot.lane.b32.xlu0 %v414, 104
      %v2497 = vpop.permute.xlu0 %2496
      %2498 = vrot.lane.b32.xlu0 %v415, 104
      %v2499 = vpop.permute.xlu0 %2498
      %2500 = vrot.lane.b32.xlu0 %v417, 104
      %v2501 = vpop.permute.xlu0 %2500
      %2502 = vrot.lane.b32.xlu0 %v418, 104
      %v2503 = vpop.permute.xlu0 %2502
      %2504 = vrot.lane.b32.xlu0 %v420, 104
      %v2505 = vpop.permute.xlu0 %2504
      %2506 = vrot.lane.b32.xlu0 %v421, 104
      %v2507 = vpop.permute.xlu0 %2506
      %2508 = vrot.lane.b32.xlu0 %v423, 104
      %v2509 = vpop.permute.xlu0 %2508
      %2510 = vrot.lane.b32.xlu0 %v424, 104
      %v2511 = vpop.permute.xlu0 %2510
      %2512 = vrot.lane.b32.xlu0 %v426, 104
      %v2513 = vpop.permute.xlu0 %2512
      %2514 = vrot.lane.b32.xlu0 %v427, 104
      %v2515 = vpop.permute.xlu0 %2514
      %2516 = vrot.lane.b32.xlu0 %v429, 104
      %v2517 = vpop.permute.xlu0 %2516
      %2518 = vrot.lane.b32.xlu0 %v430, 104
      %v2519 = vpop.permute.xlu0 %2518
      %2520 = vrot.lane.b32.xlu0 %v432, 104
      %v2521 = vpop.permute.xlu0 %2520
      %2522 = vrot.lane.b32.xlu0 %v433, 104
      %v2523 = vpop.permute.xlu0 %2522
      %2524 = vrot.lane.b32.xlu0 %v435, 104
      %v2525 = vpop.permute.xlu0 %2524
      %2526 = vrot.lane.b32.xlu0 %v436, 104
      %v2527 = vpop.permute.xlu0 %2526
      %2528 = vrot.lane.b32.xlu0 %v438, 104
      %v2529 = vpop.permute.xlu0 %2528
      %2530 = vrot.lane.b32.xlu0 %v439, 104
      %v2531 = vpop.permute.xlu0 %2530
      %2532 = vrot.lane.b32.xlu0 %v441, 104
      %v2533 = vpop.permute.xlu0 %2532
      %2534 = vrot.lane.b32.xlu0 %v442, 104
      %v2535 = vpop.permute.xlu0 %2534
      %2536 = vrot.lane.b32.xlu0 %v444, 104
      %v2537 = vpop.permute.xlu0 %2536
      %2538 = vrot.lane.b32.xlu0 %v445, 104
      %v2539 = vpop.permute.xlu0 %2538
      %vm2572 = vcmask 917312
      %2573 = vst.msk [vmem:[#allocation2] sm:$0xff] %vm2572, %v2477
      %2574 = vst.msk [vmem:[#allocation2 + $0x10] sm:$0xff] %vm2572, %v2479
      %2575 = vst.msk [vmem:[#allocation2 + $0x20] sm:$0xff] %vm2572, %v2481
      %2576 = vst.msk [vmem:[#allocation2 + $0x30] sm:$0xff] %vm2572, %v2483
      %2577 = vst.msk [vmem:[#allocation2 + $0x40] sm:$0xff] %vm2572, %v2485
      %2578 = vst.msk [vmem:[#allocation2 + $0x50] sm:$0xff] %vm2572, %v2487
      %2579 = vst.msk [vmem:[#allocation2 + $0x60] sm:$0xff] %vm2572, %v2489
      %2580 = vst.msk [vmem:[#allocation2 + $0x70] sm:$0xff] %vm2572, %v2491
      %2581 = vst.msk [vmem:[#allocation2 + $0x80] sm:$0xff] %vm2572, %v2493
      %2582 = vst.msk [vmem:[#allocation2 + $0x90] sm:$0xff] %vm2572, %v2495
      %2583 = vst.msk [vmem:[#allocation2 + $0xa0] sm:$0xff] %vm2572, %v2497
      %2584 = vst.msk [vmem:[#allocation2 + $0xb0] sm:$0xff] %vm2572, %v2499
      %2585 = vst.msk [vmem:[#allocation2 + $0xc0] sm:$0xff] %vm2572, %v2501
      %2586 = vst.msk [vmem:[#allocation2 + $0xd0] sm:$0xff] %vm2572, %v2503
      %2587 = vst.msk [vmem:[#allocation2 + $0xe0] sm:$0xff] %vm2572, %v2505
      %2588 = vst.msk [vmem:[#allocation2 + $0xf0] sm:$0xff] %vm2572, %v2507
      %2589 = vst.msk [vmem:[#allocation2 + $0x100] sm:$0xff] %vm2572, %v2509
      %2590 = vst.msk [vmem:[#allocation2 + $0x110] sm:$0xff] %vm2572, %v2511
      %2591 = vst.msk [vmem:[#allocation2 + $0x120] sm:$0xff] %vm2572, %v2513
      %2592 = vst.msk [vmem:[#allocation2 + $0x130] sm:$0xff] %vm2572, %v2515
      %2593 = vst.msk [vmem:[#allocation2 + $0x140] sm:$0xff] %vm2572, %v2517
      %2594 = vst.msk [vmem:[#allocation2 + $0x150] sm:$0xff] %vm2572, %v2519
      %2595 = vst.msk [vmem:[#allocation2 + $0x160] sm:$0xff] %vm2572, %v2521
      %2596 = vst.msk [vmem:[#allocation2 + $0x170] sm:$0xff] %vm2572, %v2523
      %2597 = vst.msk [vmem:[#allocation2 + $0x180] sm:$0xff] %vm2572, %v2525
      %2598 = vst.msk [vmem:[#allocation2 + $0x190] sm:$0xff] %vm2572, %v2527
      %2599 = vst.msk [vmem:[#allocation2 + $0x1a0] sm:$0xff] %vm2572, %v2529
      %2600 = vst.msk [vmem:[#allocation2 + $0x1b0] sm:$0xff] %vm2572, %v2531
      %2601 = vst.msk [vmem:[#allocation2 + $0x1c0] sm:$0xff] %vm2572, %v2533
      %2602 = vst.msk [vmem:[#allocation2 + $0x1d0] sm:$0xff] %vm2572, %v2535
      %2603 = vst.msk [vmem:[#allocation2 + $0x1e0] sm:$0xff] %vm2572, %v2537
      %2604 = vst.msk [vmem:[#allocation2 + $0x1f0] sm:$0xff] %vm2572, %v2539
      %v2606 = vrot.slane %v390, 1
      %v2607 = vrot.slane %v391, 1
      %v2608 = vsel %vm689, %v2606, %v2607
      %v2609 = vrot.slane %v392, 1
      %v2610 = vsel %vm689, %v2607, %v2609
      %2611 = vrot.lane.b32.xlu0 %v702, 112
      %v2612 = vpop.permute.xlu0 %2611
      %2613 = vrot.lane.b32.xlu0 %v704, 112
      %v2614 = vpop.permute.xlu0 %2613
      %2615 = vrot.lane.b32.xlu0 %v707, 112
      %v2616 = vpop.permute.xlu0 %2615
      %2617 = vrot.lane.b32.xlu0 %v709, 112
      %v2618 = vpop.permute.xlu0 %2617
      %2619 = vrot.lane.b32.xlu0 %v712, 112
      %v2620 = vpop.permute.xlu0 %2619
      %2621 = vrot.lane.b32.xlu0 %v714, 112
      %v2622 = vpop.permute.xlu0 %2621
      %2623 = vrot.lane.b32.xlu0 %v717, 112
      %v2624 = vpop.permute.xlu0 %2623
      %2625 = vrot.lane.b32.xlu0 %v719, 112
      %v2626 = vpop.permute.xlu0 %2625
      %2627 = vrot.lane.b32.xlu0 %v722, 112
      %v2628 = vpop.permute.xlu0 %2627
      %2629 = vrot.lane.b32.xlu0 %v724, 112
      %v2630 = vpop.permute.xlu0 %2629
      %2631 = vrot.lane.b32.xlu0 %v727, 112
      %v2632 = vpop.permute.xlu0 %2631
      %2633 = vrot.lane.b32.xlu0 %v729, 112
      %v2634 = vpop.permute.xlu0 %2633
      %2635 = vrot.lane.b32.xlu0 %v732, 112
      %v2636 = vpop.permute.xlu0 %2635
      %2637 = vrot.lane.b32.xlu0 %v734, 112
      %v2638 = vpop.permute.xlu0 %2637
      %2639 = vrot.lane.b32.xlu0 %v737, 112
      %v2640 = vpop.permute.xlu0 %2639
      %2641 = vrot.lane.b32.xlu0 %v739, 112
      %v2642 = vpop.permute.xlu0 %2641
      %2643 = vrot.lane.b32.xlu0 %v742, 112
      %v2644 = vpop.permute.xlu0 %2643
      %2645 = vrot.lane.b32.xlu0 %v744, 112
      %v2646 = vpop.permute.xlu0 %2645
      %2647 = vrot.lane.b32.xlu0 %v747, 112
      %v2648 = vpop.permute.xlu0 %2647
      %2649 = vrot.lane.b32.xlu0 %v749, 112
      %v2650 = vpop.permute.xlu0 %2649
      %2651 = vrot.lane.b32.xlu0 %v752, 112
      %v2652 = vpop.permute.xlu0 %2651
      %2653 = vrot.lane.b32.xlu0 %v754, 112
      %v2654 = vpop.permute.xlu0 %2653
      %2655 = vrot.lane.b32.xlu0 %v757, 112
      %v2656 = vpop.permute.xlu0 %2655
      %2657 = vrot.lane.b32.xlu0 %v759, 112
      %v2658 = vpop.permute.xlu0 %2657
      %2659 = vrot.lane.b32.xlu0 %v762, 112
      %v2660 = vpop.permute.xlu0 %2659
      %2661 = vrot.lane.b32.xlu0 %v764, 112
      %v2662 = vpop.permute.xlu0 %2661
      %2663 = vrot.lane.b32.xlu0 %v767, 112
      %v2664 = vpop.permute.xlu0 %2663
      %2665 = vrot.lane.b32.xlu0 %v769, 112
      %v2666 = vpop.permute.xlu0 %2665
      %2667 = vrot.lane.b32.xlu0 %v1808, 112
      %v2668 = vpop.permute.xlu0 %2667
      %2669 = vrot.lane.b32.xlu0 %v1810, 112
      %v2670 = vpop.permute.xlu0 %2669
      %2671 = vrot.lane.b32.xlu0 %v2608, 112
      %v2672 = vpop.permute.xlu0 %2671
      %2673 = vrot.lane.b32.xlu0 %v2610, 112
      %v2674 = vpop.permute.xlu0 %2673
      %vm2707 = vcmask 982912
      %2708 = vst.msk [vmem:[#allocation2] sm:$0xff] %vm2707, %v2612
      %2709 = vst.msk [vmem:[#allocation2 + $0x10] sm:$0xff] %vm2707, %v2614
      %2710 = vst.msk [vmem:[#allocation2 + $0x20] sm:$0xff] %vm2707, %v2616
      %2711 = vst.msk [vmem:[#allocation2 + $0x30] sm:$0xff] %vm2707, %v2618
      %2712 = vst.msk [vmem:[#allocation2 + $0x40] sm:$0xff] %vm2707, %v2620
      %2713 = vst.msk [vmem:[#allocation2 + $0x50] sm:$0xff] %vm2707, %v2622
      %2714 = vst.msk [vmem:[#allocation2 + $0x60] sm:$0xff] %vm2707, %v2624
      %2715 = vst.msk [vmem:[#allocation2 + $0x70] sm:$0xff] %vm2707, %v2626
      %2716 = vst.msk [vmem:[#allocation2 + $0x80] sm:$0xff] %vm2707, %v2628
      %2717 = vst.msk [vmem:[#allocation2 + $0x90] sm:$0xff] %vm2707, %v2630
      %2718 = vst.msk [vmem:[#allocation2 + $0xa0] sm:$0xff] %vm2707, %v2632
      %2719 = vst.msk [vmem:[#allocation2 + $0xb0] sm:$0xff] %vm2707, %v2634
      %2720 = vst.msk [vmem:[#allocation2 + $0xc0] sm:$0xff] %vm2707, %v2636
      %2721 = vst.msk [vmem:[#allocation2 + $0xd0] sm:$0xff] %vm2707, %v2638
      %2722 = vst.msk [vmem:[#allocation2 + $0xe0] sm:$0xff] %vm2707, %v2640
      %2723 = vst.msk [vmem:[#allocation2 + $0xf0] sm:$0xff] %vm2707, %v2642
      %2724 = vst.msk [vmem:[#allocation2 + $0x100] sm:$0xff] %vm2707, %v2644
      %2725 = vst.msk [vmem:[#allocation2 + $0x110] sm:$0xff] %vm2707, %v2646
      %2726 = vst.msk [vmem:[#allocation2 + $0x120] sm:$0xff] %vm2707, %v2648
      %2727 = vst.msk [vmem:[#allocation2 + $0x130] sm:$0xff] %vm2707, %v2650
      %2728 = vst.msk [vmem:[#allocation2 + $0x140] sm:$0xff] %vm2707, %v2652
      %2729 = vst.msk [vmem:[#allocation2 + $0x150] sm:$0xff] %vm2707, %v2654
      %2730 = vst.msk [vmem:[#allocation2 + $0x160] sm:$0xff] %vm2707, %v2656
      %2731 = vst.msk [vmem:[#allocation2 + $0x170] sm:$0xff] %vm2707, %v2658
      %2732 = vst.msk [vmem:[#allocation2 + $0x180] sm:$0xff] %vm2707, %v2660
      %2733 = vst.msk [vmem:[#allocation2 + $0x190] sm:$0xff] %vm2707, %v2662
      %2734 = vst.msk [vmem:[#allocation2 + $0x1a0] sm:$0xff] %vm2707, %v2664
      %2735 = vst.msk [vmem:[#allocation2 + $0x1b0] sm:$0xff] %vm2707, %v2666
      %2736 = vst.msk [vmem:[#allocation2 + $0x1c0] sm:$0xff] %vm2707, %v2668
      %2737 = vst.msk [vmem:[#allocation2 + $0x1d0] sm:$0xff] %vm2707, %v2670
      %2738 = vst.msk [vmem:[#allocation2 + $0x1e0] sm:$0xff] %vm2707, %v2672
      %2739 = vst.msk [vmem:[#allocation2 + $0x1f0] sm:$0xff] %vm2707, %v2674
      %v2741 = vrot.slane %v444, 1
      %v2742 = vrot.slane %v445, 1
      %v2743 = vsel %vm689, %v2741, %v2742
      %v2744 = vrot.slane %v446, 1
      %v2745 = vsel %vm689, %v2742, %v2744
      %2746 = vrot.lane.b32.xlu0 %v927, 120
      %v2747 = vpop.permute.xlu0 %2746
      %2748 = vrot.lane.b32.xlu0 %v929, 120
      %v2749 = vpop.permute.xlu0 %2748
      %2750 = vrot.lane.b32.xlu0 %v932, 120
      %v2751 = vpop.permute.xlu0 %2750
      %2752 = vrot.lane.b32.xlu0 %v934, 120
      %v2753 = vpop.permute.xlu0 %2752
      %2754 = vrot.lane.b32.xlu0 %v937, 120
      %v2755 = vpop.permute.xlu0 %2754
      %2756 = vrot.lane.b32.xlu0 %v939, 120
      %v2757 = vpop.permute.xlu0 %2756
      %2758 = vrot.lane.b32.xlu0 %v942, 120
      %v2759 = vpop.permute.xlu0 %2758
      %2760 = vrot.lane.b32.xlu0 %v944, 120
      %v2761 = vpop.permute.xlu0 %2760
      %2762 = vrot.lane.b32.xlu0 %v947, 120
      %v2763 = vpop.permute.xlu0 %2762
      %2764 = vrot.lane.b32.xlu0 %v949, 120
      %v2765 = vpop.permute.xlu0 %2764
      %2766 = vrot.lane.b32.xlu0 %v952, 120
      %v2767 = vpop.permute.xlu0 %2766
      %2768 = vrot.lane.b32.xlu0 %v954, 120
      %v2769 = vpop.permute.xlu0 %2768
      %2770 = vrot.lane.b32.xlu0 %v957, 120
      %v2771 = vpop.permute.xlu0 %2770
      %2772 = vrot.lane.b32.xlu0 %v959, 120
      %v2773 = vpop.permute.xlu0 %2772
      %2774 = vrot.lane.b32.xlu0 %v962, 120
      %v2775 = vpop.permute.xlu0 %2774
      %2776 = vrot.lane.b32.xlu0 %v964, 120
      %v2777 = vpop.permute.xlu0 %2776
      %2778 = vrot.lane.b32.xlu0 %v967, 120
      %v2779 = vpop.permute.xlu0 %2778
      %2780 = vrot.lane.b32.xlu0 %v969, 120
      %v2781 = vpop.permute.xlu0 %2780
      %2782 = vrot.lane.b32.xlu0 %v972, 120
      %v2783 = vpop.permute.xlu0 %2782
      %2784 = vrot.lane.b32.xlu0 %v974, 120
      %v2785 = vpop.permute.xlu0 %2784
      %2786 = vrot.lane.b32.xlu0 %v977, 120
      %v2787 = vpop.permute.xlu0 %2786
      %2788 = vrot.lane.b32.xlu0 %v979, 120
      %v2789 = vpop.permute.xlu0 %2788
      %2790 = vrot.lane.b32.xlu0 %v982, 120
      %v2791 = vpop.permute.xlu0 %2790
      %2792 = vrot.lane.b32.xlu0 %v984, 120
      %v2793 = vpop.permute.xlu0 %2792
      %2794 = vrot.lane.b32.xlu0 %v987, 120
      %v2795 = vpop.permute.xlu0 %2794
      %2796 = vrot.lane.b32.xlu0 %v989, 120
      %v2797 = vpop.permute.xlu0 %2796
      %2798 = vrot.lane.b32.xlu0 %v992, 120
      %v2799 = vpop.permute.xlu0 %2798
      %2800 = vrot.lane.b32.xlu0 %v994, 120
      %v2801 = vpop.permute.xlu0 %2800
      %2802 = vrot.lane.b32.xlu0 %v1943, 120
      %v2803 = vpop.permute.xlu0 %2802
      %2804 = vrot.lane.b32.xlu0 %v1945, 120
      %v2805 = vpop.permute.xlu0 %2804
      %2806 = vrot.lane.b32.xlu0 %v2743, 120
      %v2807 = vpop.permute.xlu0 %2806
      %2808 = vrot.lane.b32.xlu0 %v2745, 120
      %v2809 = vpop.permute.xlu0 %2808
      %vm2842 = vcmask 1048512
      %2843 = vst.msk [vmem:[#allocation2] sm:$0xff] %vm2842, %v2747
      %2844 = vst.msk [vmem:[#allocation2 + $0x10] sm:$0xff] %vm2842, %v2749
      %2845 = vst.msk [vmem:[#allocation2 + $0x20] sm:$0xff] %vm2842, %v2751
      %2846 = vst.msk [vmem:[#allocation2 + $0x30] sm:$0xff] %vm2842, %v2753
      %2847 = vst.msk [vmem:[#allocation2 + $0x40] sm:$0xff] %vm2842, %v2755
      %2848 = vst.msk [vmem:[#allocation2 + $0x50] sm:$0xff] %vm2842, %v2757
      %2849 = vst.msk [vmem:[#allocation2 + $0x60] sm:$0xff] %vm2842, %v2759
      %2850 = vst.msk [vmem:[#allocation2 + $0x70] sm:$0xff] %vm2842, %v2761
      %2851 = vst.msk [vmem:[#allocation2 + $0x80] sm:$0xff] %vm2842, %v2763
      %2852 = vst.msk [vmem:[#allocation2 + $0x90] sm:$0xff] %vm2842, %v2765
      %2853 = vst.msk [vmem:[#allocation2 + $0xa0] sm:$0xff] %vm2842, %v2767
      %2854 = vst.msk [vmem:[#allocation2 + $0xb0] sm:$0xff] %vm2842, %v2769
      %2855 = vst.msk [vmem:[#allocation2 + $0xc0] sm:$0xff] %vm2842, %v2771
      %2856 = vst.msk [vmem:[#allocation2 + $0xd0] sm:$0xff] %vm2842, %v2773
      %2857 = vst.msk [vmem:[#allocation2 + $0xe0] sm:$0xff] %vm2842, %v2775
      %2858 = vst.msk [vmem:[#allocation2 + $0xf0] sm:$0xff] %vm2842, %v2777
      %2859 = vst.msk [vmem:[#allocation2 + $0x100] sm:$0xff] %vm2842, %v2779
      %2860 = vst.msk [vmem:[#allocation2 + $0x110] sm:$0xff] %vm2842, %v2781
      %2861 = vst.msk [vmem:[#allocation2 + $0x120] sm:$0xff] %vm2842, %v2783
      %2862 = vst.msk [vmem:[#allocation2 + $0x130] sm:$0xff] %vm2842, %v2785
      %2863 = vst.msk [vmem:[#allocation2 + $0x140] sm:$0xff] %vm2842, %v2787
      %2864 = vst.msk [vmem:[#allocation2 + $0x150] sm:$0xff] %vm2842, %v2789
      %2865 = vst.msk [vmem:[#allocation2 + $0x160] sm:$0xff] %vm2842, %v2791
      %2866 = vst.msk [vmem:[#allocation2 + $0x170] sm:$0xff] %vm2842, %v2793
      %2867 = vst.msk [vmem:[#allocation2 + $0x180] sm:$0xff] %vm2842, %v2795
      %2868 = vst.msk [vmem:[#allocation2 + $0x190] sm:$0xff] %vm2842, %v2797
      %2869 = vst.msk [vmem:[#allocation2 + $0x1a0] sm:$0xff] %vm2842, %v2799
      %2870 = vst.msk [vmem:[#allocation2 + $0x1b0] sm:$0xff] %vm2842, %v2801
      %2871 = vst.msk [vmem:[#allocation2 + $0x1c0] sm:$0xff] %vm2842, %v2803
      %2872 = vst.msk [vmem:[#allocation2 + $0x1d0] sm:$0xff] %vm2842, %v2805
      %2873 = vst.msk [vmem:[#allocation2 + $0x1e0] sm:$0xff] %vm2842, %v2807
      %2874 = vst.msk [vmem:[#allocation2 + $0x1f0] sm:$0xff] %vm2842, %v2809
      %v2875 = vrot.slane %v390, 2
      %v2876 = vrot.slane %v391, 2
      %v2877 = vsel %vm1124, %v2875, %v2876
      %v2878 = vrot.slane %v392, 2
      %v2879 = vsel %vm1124, %v2876, %v2878
      %2912 = vst.msk [vmem:[#allocation2 + $0x8] sm:$0xff] %vm447, %v1137
      %2913 = vst.msk [vmem:[#allocation2 + $0x18] sm:$0xff] %vm447, %v1139
      %2914 = vst.msk [vmem:[#allocation2 + $0x28] sm:$0xff] %vm447, %v1142
      %2915 = vst.msk [vmem:[#allocation2 + $0x38] sm:$0xff] %vm447, %v1144
      %2916 = vst.msk [vmem:[#allocation2 + $0x48] sm:$0xff] %vm447, %v1147
      %2917 = vst.msk [vmem:[#allocation2 + $0x58] sm:$0xff] %vm447, %v1149
      %2918 = vst.msk [vmem:[#allocation2 + $0x68] sm:$0xff] %vm447, %v1152
      %2919 = vst.msk [vmem:[#allocation2 + $0x78] sm:$0xff] %vm447, %v1154
      %2920 = vst.msk [vmem:[#allocation2 + $0x88] sm:$0xff] %vm447, %v1157
      %2921 = vst.msk [vmem:[#allocation2 + $0x98] sm:$0xff] %vm447, %v1159
      %2922 = vst.msk [vmem:[#allocation2 + $0xa8] sm:$0xff] %vm447, %v1162
      %2923 = vst.msk [vmem:[#allocation2 + $0xb8] sm:$0xff] %vm447, %v1164
      %2924 = vst.msk [vmem:[#allocation2 + $0xc8] sm:$0xff] %vm447, %v1167
      %2925 = vst.msk [vmem:[#allocation2 + $0xd8] sm:$0xff] %vm447, %v1169
      %2926 = vst.msk [vmem:[#allocation2 + $0xe8] sm:$0xff] %vm447, %v1172
      %2927 = vst.msk [vmem:[#allocation2 + $0xf8] sm:$0xff] %vm447, %v1174
      %2928 = vst.msk [vmem:[#allocation2 + $0x108] sm:$0xff] %vm447, %v1177
      %2929 = vst.msk [vmem:[#allocation2 + $0x118] sm:$0xff] %vm447, %v1179
      %2930 = vst.msk [vmem:[#allocation2 + $0x128] sm:$0xff] %vm447, %v1182
      %2931 = vst.msk [vmem:[#allocation2 + $0x138] sm:$0xff] %vm447, %v1184
      %2932 = vst.msk [vmem:[#allocation2 + $0x148] sm:$0xff] %vm447, %v1187
      %2933 = vst.msk [vmem:[#allocation2 + $0x158] sm:$0xff] %vm447, %v1189
      %2934 = vst.msk [vmem:[#allocation2 + $0x168] sm:$0xff] %vm447, %v1192
      %2935 = vst.msk [vmem:[#allocation2 + $0x178] sm:$0xff] %vm447, %v1194
      %2936 = vst.msk [vmem:[#allocation2 + $0x188] sm:$0xff] %vm447, %v1197
      %2937 = vst.msk [vmem:[#allocation2 + $0x198] sm:$0xff] %vm447, %v1199
      %2938 = vst.msk [vmem:[#allocation2 + $0x1a8] sm:$0xff] %vm447, %v1202
      %2939 = vst.msk [vmem:[#allocation2 + $0x1b8] sm:$0xff] %vm447, %v1204
      %2940 = vst.msk [vmem:[#allocation2 + $0x1c8] sm:$0xff] %vm447, %v2077
      %2941 = vst.msk [vmem:[#allocation2 + $0x1d8] sm:$0xff] %vm447, %v2079
      %2942 = vst.msk [vmem:[#allocation2 + $0x1e8] sm:$0xff] %vm447, %v2877
      %2943 = vst.msk [vmem:[#allocation2 + $0x1f8] sm:$0xff] %vm447, %v2879
      %v2944 = vrot.slane %v444, 2
      %v2945 = vrot.slane %v445, 2
      %v2946 = vsel %vm1124, %v2944, %v2945
      %v2947 = vrot.slane %v446, 2
      %v2948 = vsel %vm1124, %v2945, %v2947
      %2949 = vrot.lane.b32.xlu0 %v1346, 8
      %v2950 = vpop.permute.xlu0 %2949
      %2951 = vrot.lane.b32.xlu0 %v1348, 8
      %v2952 = vpop.permute.xlu0 %2951
      %2953 = vrot.lane.b32.xlu0 %v1351, 8
      %v2954 = vpop.permute.xlu0 %2953
      %2955 = vrot.lane.b32.xlu0 %v1353, 8
      %v2956 = vpop.permute.xlu0 %2955
      %2957 = vrot.lane.b32.xlu0 %v1356, 8
      %v2958 = vpop.permute.xlu0 %2957
      %2959 = vrot.lane.b32.xlu0 %v1358, 8
      %v2960 = vpop.permute.xlu0 %2959
      %2961 = vrot.lane.b32.xlu0 %v1361, 8
      %v2962 = vpop.permute.xlu0 %2961
      %2963 = vrot.lane.b32.xlu0 %v1363, 8
      %v2964 = vpop.permute.xlu0 %2963
      %2965 = vrot.lane.b32.xlu0 %v1366, 8
      %v2966 = vpop.permute.xlu0 %2965
      %2967 = vrot.lane.b32.xlu0 %v1368, 8
      %v2968 = vpop.permute.xlu0 %2967
      %2969 = vrot.lane.b32.xlu0 %v1371, 8
      %v2970 = vpop.permute.xlu0 %2969
      %2971 = vrot.lane.b32.xlu0 %v1373, 8
      %v2972 = vpop.permute.xlu0 %2971
      %2973 = vrot.lane.b32.xlu0 %v1376, 8
      %v2974 = vpop.permute.xlu0 %2973
      %2975 = vrot.lane.b32.xlu0 %v1378, 8
      %v2976 = vpop.permute.xlu0 %2975
      %2977 = vrot.lane.b32.xlu0 %v1381, 8
      %v2978 = vpop.permute.xlu0 %2977
      %2979 = vrot.lane.b32.xlu0 %v1383, 8
      %v2980 = vpop.permute.xlu0 %2979
      %2981 = vrot.lane.b32.xlu0 %v1386, 8
      %v2982 = vpop.permute.xlu0 %2981
      %2983 = vrot.lane.b32.xlu0 %v1388, 8
      %v2984 = vpop.permute.xlu0 %2983
      %2985 = vrot.lane.b32.xlu0 %v1391, 8
      %v2986 = vpop.permute.xlu0 %2985
      %2987 = vrot.lane.b32.xlu0 %v1393, 8
      %v2988 = vpop.permute.xlu0 %2987
      %2989 = vrot.lane.b32.xlu0 %v1396, 8
      %v2990 = vpop.permute.xlu0 %2989
      %2991 = vrot.lane.b32.xlu0 %v1398, 8
      %v2992 = vpop.permute.xlu0 %2991
      %2993 = vrot.lane.b32.xlu0 %v1401, 8
      %v2994 = vpop.permute.xlu0 %2993
      %2995 = vrot.lane.b32.xlu0 %v1403, 8
      %v2996 = vpop.permute.xlu0 %2995
      %2997 = vrot.lane.b32.xlu0 %v1406, 8
      %v2998 = vpop.permute.xlu0 %2997
      %2999 = vrot.lane.b32.xlu0 %v1408, 8
      %v3000 = vpop.permute.xlu0 %2999
      %3001 = vrot.lane.b32.xlu0 %v1411, 8
      %v3002 = vpop.permute.xlu0 %3001
      %3003 = vrot.lane.b32.xlu0 %v1413, 8
      %v3004 = vpop.permute.xlu0 %3003
      %3005 = vrot.lane.b32.xlu0 %v2211, 8
      %v3006 = vpop.permute.xlu0 %3005
      %3007 = vrot.lane.b32.xlu0 %v2213, 8
      %v3008 = vpop.permute.xlu0 %3007
      %3009 = vrot.lane.b32.xlu0 %v2946, 8
      %v3010 = vpop.permute.xlu0 %3009
      %3011 = vrot.lane.b32.xlu0 %v2948, 8
      %v3012 = vpop.permute.xlu0 %3011
      %3045 = vst.msk [vmem:[#allocation2 + $0x8] sm:$0xff] %vm608, %v2950
      %3046 = vst.msk [vmem:[#allocation2 + $0x18] sm:$0xff] %vm608, %v2952
      %3047 = vst.msk [vmem:[#allocation2 + $0x28] sm:$0xff] %vm608, %v2954
      %3048 = vst.msk [vmem:[#allocation2 + $0x38] sm:$0xff] %vm608, %v2956
      %3049 = vst.msk [vmem:[#allocation2 + $0x48] sm:$0xff] %vm608, %v2958
      %3050 = vst.msk [vmem:[#allocation2 + $0x58] sm:$0xff] %vm608, %v2960
      %3051 = vst.msk [vmem:[#allocation2 + $0x68] sm:$0xff] %vm608, %v2962
      %3052 = vst.msk [vmem:[#allocation2 + $0x78] sm:$0xff] %vm608, %v2964
      %3053 = vst.msk [vmem:[#allocation2 + $0x88] sm:$0xff] %vm608, %v2966
      %3054 = vst.msk [vmem:[#allocation2 + $0x98] sm:$0xff] %vm608, %v2968
      %3055 = vst.msk [vmem:[#allocation2 + $0xa8] sm:$0xff] %vm608, %v2970
      %3056 = vst.msk [vmem:[#allocation2 + $0xb8] sm:$0xff] %vm608, %v2972
      %3057 = vst.msk [vmem:[#allocation2 + $0xc8] sm:$0xff] %vm608, %v2974
      %3058 = vst.msk [vmem:[#allocation2 + $0xd8] sm:$0xff] %vm608, %v2976
      %3059 = vst.msk [vmem:[#allocation2 + $0xe8] sm:$0xff] %vm608, %v2978
      %3060 = vst.msk [vmem:[#allocation2 + $0xf8] sm:$0xff] %vm608, %v2980
      %3061 = vst.msk [vmem:[#allocation2 + $0x108] sm:$0xff] %vm608, %v2982
      %3062 = vst.msk [vmem:[#allocation2 + $0x118] sm:$0xff] %vm608, %v2984
      %3063 = vst.msk [vmem:[#allocation2 + $0x128] sm:$0xff] %vm608, %v2986
      %3064 = vst.msk [vmem:[#allocation2 + $0x138] sm:$0xff] %vm608, %v2988
      %3065 = vst.msk [vmem:[#allocation2 + $0x148] sm:$0xff] %vm608, %v2990
      %3066 = vst.msk [vmem:[#allocation2 + $0x158] sm:$0xff] %vm608, %v2992
      %3067 = vst.msk [vmem:[#allocation2 + $0x168] sm:$0xff] %vm608, %v2994
      %3068 = vst.msk [vmem:[#allocation2 + $0x178] sm:$0xff] %vm608, %v2996
      %3069 = vst.msk [vmem:[#allocation2 + $0x188] sm:$0xff] %vm608, %v2998
      %3070 = vst.msk [vmem:[#allocation2 + $0x198] sm:$0xff] %vm608, %v3000
      %3071 = vst.msk [vmem:[#allocation2 + $0x1a8] sm:$0xff] %vm608, %v3002
      %3072 = vst.msk [vmem:[#allocation2 + $0x1b8] sm:$0xff] %vm608, %v3004
      %3073 = vst.msk [vmem:[#allocation2 + $0x1c8] sm:$0xff] %vm608, %v3006
      %3074 = vst.msk [vmem:[#allocation2 + $0x1d8] sm:$0xff] %vm608, %v3008
      %3075 = vst.msk [vmem:[#allocation2 + $0x1e8] sm:$0xff] %vm608, %v3010
      %3076 = vst.msk [vmem:[#allocation2 + $0x1f8] sm:$0xff] %vm608, %v3012
      %v3077 = vld [vmem:[#allocation2] sm:$0xff]
      %v3078 = vld [vmem:[#allocation2 + $0x8] sm:$0xff]
      %v3079 = vld [vmem:[#allocation2 + $0x10] sm:$0xff]
      %v3080 = vld [vmem:[#allocation2 + $0x18] sm:$0xff]
      %v3081 = vld [vmem:[#allocation2 + $0x20] sm:$0xff]
      %v3082 = vld [vmem:[#allocation2 + $0x28] sm:$0xff]
      %v3083 = vld [vmem:[#allocation2 + $0x30] sm:$0xff]
      %v3084 = vld [vmem:[#allocation2 + $0x38] sm:$0xff]
      %v3085 = vld [vmem:[#allocation2 + $0x40] sm:$0xff]
      %v3086 = vld [vmem:[#allocation2 + $0x48] sm:$0xff]
      %v3087 = vld [vmem:[#allocation2 + $0x50] sm:$0xff]
      %v3088 = vld [vmem:[#allocation2 + $0x58] sm:$0xff]
      %v3089 = vld [vmem:[#allocation2 + $0x60] sm:$0xff]
      %v3090 = vld [vmem:[#allocation2 + $0x68] sm:$0xff]
      %v3091 = vld [vmem:[#allocation2 + $0x70] sm:$0xff]
      %v3092 = vld [vmem:[#allocation2 + $0x78] sm:$0xff]
      %v3093 = vld [vmem:[#allocation2 + $0x80] sm:$0xff]
      %v3094 = vld [vmem:[#allocation2 + $0x88] sm:$0xff]
      %v3095 = vld [vmem:[#allocation2 + $0x90] sm:$0xff]
      %v3096 = vld [vmem:[#allocation2 + $0x98] sm:$0xff]
      %v3097 = vld [vmem:[#allocation2 + $0xa0] sm:$0xff]
      %v3098 = vld [vmem:[#allocation2 + $0xa8] sm:$0xff]
      %v3099 = vld [vmem:[#allocation2 + $0xb0] sm:$0xff]
      %v3100 = vld [vmem:[#allocation2 + $0xb8] sm:$0xff]
      %v3101 = vld [vmem:[#allocation2 + $0xc0] sm:$0xff]
      %v3102 = vld [vmem:[#allocation2 + $0xc8] sm:$0xff]
      %v3103 = vld [vmem:[#allocation2 + $0xd0] sm:$0xff]
      %v3104 = vld [vmem:[#allocation2 + $0xd8] sm:$0xff]
      %v3105 = vld [vmem:[#allocation2 + $0xe0] sm:$0xff]
      %v3106 = vld [vmem:[#allocation2 + $0xe8] sm:$0xff]
      %v3107 = vld [vmem:[#allocation2 + $0xf0] sm:$0xff]
      %v3108 = vld [vmem:[#allocation2 + $0xf8] sm:$0xff]
      %v3109 = vld [vmem:[#allocation2 + $0x100] sm:$0xff]
      %v3110 = vld [vmem:[#allocation2 + $0x108] sm:$0xff]
      %v3111 = vld [vmem:[#allocation2 + $0x110] sm:$0xff]
      %v3112 = vld [vmem:[#allocation2 + $0x118] sm:$0xff]
      %v3113 = vld [vmem:[#allocation2 + $0x120] sm:$0xff]
      %v3114 = vld [vmem:[#allocation2 + $0x128] sm:$0xff]
      %v3115 = vld [vmem:[#allocation2 + $0x130] sm:$0xff]
      %v3116 = vld [vmem:[#allocation2 + $0x138] sm:$0xff]
      %v3117 = vld [vmem:[#allocation2 + $0x140] sm:$0xff]
      %v3118 = vld [vmem:[#allocation2 + $0x148] sm:$0xff]
      %v3119 = vld [vmem:[#allocation2 + $0x150] sm:$0xff]
      %v3120 = vld [vmem:[#allocation2 + $0x158] sm:$0xff]
      %v3121 = vld [vmem:[#allocation2 + $0x160] sm:$0xff]
      %v3122 = vld [vmem:[#allocation2 + $0x168] sm:$0xff]
      %v3123 = vld [vmem:[#allocation2 + $0x170] sm:$0xff]
      %v3124 = vld [vmem:[#allocation2 + $0x178] sm:$0xff]
      %v3125 = vld [vmem:[#allocation2 + $0x180] sm:$0xff]
      %v3126 = vld [vmem:[#allocation2 + $0x188] sm:$0xff]
      %v3127 = vld [vmem:[#allocation2 + $0x190] sm:$0xff]
      %v3128 = vld [vmem:[#allocation2 + $0x198] sm:$0xff]
      %v3129 = vld [vmem:[#allocation2 + $0x1a0] sm:$0xff]
      %v3130 = vld [vmem:[#allocation2 + $0x1a8] sm:$0xff]
      %v3131 = vld [vmem:[#allocation2 + $0x1b0] sm:$0xff]
      %v3132 = vld [vmem:[#allocation2 + $0x1b8] sm:$0xff]
      %v3133 = vld [vmem:[#allocation2 + $0x1c0] sm:$0xff]
      %v3134 = vld [vmem:[#allocation2 + $0x1c8] sm:$0xff]
      %v3135 = vld [vmem:[#allocation2 + $0x1d0] sm:$0xff]
      %v3136 = vld [vmem:[#allocation2 + $0x1d8] sm:$0xff]
      %v3137 = vld [vmem:[#allocation2 + $0x1e0] sm:$0xff]
      %v3138 = vld [vmem:[#allocation2 + $0x1e8] sm:$0xff]
      %v3139 = vld [vmem:[#allocation2 + $0x1f0] sm:$0xff]
      %v3140 = vld [vmem:[#allocation2 + $0x1f8] sm:$0xff]
      %v3141 = vld [vmem:[%s1] sm:$0xff]
      %v3142 = vld [vmem:[%s1 + $0x8] sm:$0xff]
      %v3143 = vld [vmem:[%s1 + $0x10] sm:$0xff]
      %v3144 = vld [vmem:[%s1 + $0x18] sm:$0xff]
      %v3145 = vld [vmem:[%s1 + $0x20] sm:$0xff]
      %v3146 = vld [vmem:[%s1 + $0x28] sm:$0xff]
      %v3147 = vld [vmem:[%s1 + $0x30] sm:$0xff]
      %v3148 = vld [vmem:[%s1 + $0x38] sm:$0xff]
      %v3149 = vld [vmem:[%s1 + $0x40] sm:$0xff]
      %v3150 = vld [vmem:[%s1 + $0x48] sm:$0xff]
      %v3151 = vld [vmem:[%s1 + $0x50] sm:$0xff]
      %v3152 = vld [vmem:[%s1 + $0x58] sm:$0xff]
      %v3153 = vld [vmem:[%s1 + $0x60] sm:$0xff]
      %v3154 = vld [vmem:[%s1 + $0x68] sm:$0xff]
      %v3155 = vld [vmem:[%s1 + $0x70] sm:$0xff]
      %v3156 = vld [vmem:[%s1 + $0x78] sm:$0xff]
      %v3157 = vld [vmem:[%s1 + $0x80] sm:$0xff]
      %v3158 = vld [vmem:[%s1 + $0x88] sm:$0xff]
      %v3159 = vld [vmem:[%s2] sm:$0x1]
      %v3161 = vperm.slane %v3159, 0
      %vm3163 = vcmask 130048
      %v3165 = vsel %vm3163, %v3078, 0
      %v3168 = vsel %vm3163, %v3080, 0
      %v3171 = vsel %vm3163, %v3082, 0
      %v3174 = vsel %vm3163, %v3084, 0
      %v3177 = vsel %vm3163, %v3086, 0
      %v3180 = vsel %vm3163, %v3088, 0
      %v3183 = vsel %vm3163, %v3090, 0
      %v3186 = vsel %vm3163, %v3092, 0
      %v3189 = vsel %vm3163, %v3094, 0
      %v3192 = vsel %vm3163, %v3096, 0
      %v3195 = vsel %vm3163, %v3098, 0
      %v3198 = vsel %vm3163, %v3100, 0
      %v3201 = vsel %vm3163, %v3102, 0
      %v3204 = vsel %vm3163, %v3104, 0
      %v3207 = vsel %vm3163, %v3106, 0
      %v3210 = vsel %vm3163, %v3108, 0
      %v3213 = vsel %vm3163, %v3110, 0
      %v3216 = vsel %vm3163, %v3112, 0
      %v3219 = vsel %vm3163, %v3114, 0
      %v3222 = vsel %vm3163, %v3116, 0
      %v3225 = vsel %vm3163, %v3118, 0
      %v3228 = vsel %vm3163, %v3120, 0
      %v3231 = vsel %vm3163, %v3122, 0
      %v3234 = vsel %vm3163, %v3124, 0
      %v3237 = vsel %vm3163, %v3126, 0
      %v3240 = vsel %vm3163, %v3128, 0
      %v3243 = vsel %vm3163, %v3130, 0
      %v3246 = vsel %vm3163, %v3132, 0
      %v3249 = vsel %vm3163, %v3134, 0
      %v3252 = vsel %vm3163, %v3136, 0
      %v3255 = vsel %vm3163, %v3138, 0
      %v3258 = vsel %vm3163, %v3140, 0
      %3260 = vmatpush.msra.mxu0 %v3156
      %3261 = vmatpush.msra.mxu0 %v3155
      %3262 = vmatpush.msra.mxu0 %v3154
      %3263 = vmatpush.msra.mxu0 %v3153
      %3264 = vmatpush.msra.mxu0 %v3152
      %3265 = vmatpush.msra.mxu0 %v3151
      %3266 = vmatpush.msra.mxu0 %v3150
      %3267 = vmatpush.msra.mxu0 %v3149
      %3268 = vmatpush.msra.mxu0 %v3148
      %3269 = vmatpush.msra.mxu0 %v3147
      %3270 = vmatpush.msra.mxu0 %v3146
      %3271 = vmatpush.msra.mxu0 %v3145
      %3272 = vmatpush.msra.mxu0 %v3144
      %3273 = vmatpush.msra.mxu0 %v3143
      %3274 = vmatpush.msra.mxu0 %v3142
      %3275 = vmatpush.msra.mxu0 %v3141
      %3276 = vmatmul.f32.gmra.mxu0 %v3077
      %v3277 = vpop.f32.mrf.mxu0
      %v3278 = vadd.f32 %v3161, %v3277
      %3279 = vmatmul.f32.gmra.mxu0 %v3079
      %v3280 = vpop.f32.mrf.mxu0
      %v3281 = vadd.f32 %v3161, %v3280
      %3282 = vmatmul.f32.gmra.mxu0 %v3081
      %v3283 = vpop.f32.mrf.mxu0
      %v3284 = vadd.f32 %v3161, %v3283
      %3285 = vmatmul.f32.gmra.mxu0 %v3083
      %v3286 = vpop.f32.mrf.mxu0
      %v3287 = vadd.f32 %v3161, %v3286
      %3288 = vmatmul.f32.gmra.mxu0 %v3085
      %v3289 = vpop.f32.mrf.mxu0
      %v3290 = vadd.f32 %v3161, %v3289
      %3291 = vmatmul.f32.gmra.mxu0 %v3087
      %v3292 = vpop.f32.mrf.mxu0
      %v3293 = vadd.f32 %v3161, %v3292
      %3294 = vmatmul.f32.gmra.mxu0 %v3089
      %v3295 = vpop.f32.mrf.mxu0
      %v3296 = vadd.f32 %v3161, %v3295
      %3297 = vmatmul.f32.gmra.mxu0 %v3091
      %v3298 = vpop.f32.mrf.mxu0
      %v3299 = vadd.f32 %v3161, %v3298
      %3300 = vmatmul.f32.gmra.mxu0 %v3093
      %v3301 = vpop.f32.mrf.mxu0
      %v3302 = vadd.f32 %v3161, %v3301
      %3303 = vmatmul.f32.gmra.mxu0 %v3095
      %v3304 = vpop.f32.mrf.mxu0
      %v3305 = vadd.f32 %v3161, %v3304
      %3306 = vmatmul.f32.gmra.mxu0 %v3097
      %v3307 = vpop.f32.mrf.mxu0
      %v3308 = vadd.f32 %v3161, %v3307
      %3309 = vmatmul.f32.gmra.mxu0 %v3099
      %v3310 = vpop.f32.mrf.mxu0
      %v3311 = vadd.f32 %v3161, %v3310
      %3312 = vmatmul.f32.gmra.mxu0 %v3101
      %v3313 = vpop.f32.mrf.mxu0
      %v3314 = vadd.f32 %v3161, %v3313
      %3315 = vmatmul.f32.gmra.mxu0 %v3103
      %v3316 = vpop.f32.mrf.mxu0
      %v3317 = vadd.f32 %v3161, %v3316
      %3318 = vmatmul.f32.gmra.mxu0 %v3105
      %v3319 = vpop.f32.mrf.mxu0
      %v3320 = vadd.f32 %v3161, %v3319
      %3321 = vmatmul.f32.gmra.mxu0 %v3107
      %v3322 = vpop.f32.mrf.mxu0
      %v3323 = vadd.f32 %v3161, %v3322
      %3324 = vmatmul.f32.gmra.mxu0 %v3109
      %v3325 = vpop.f32.mrf.mxu0
      %v3326 = vadd.f32 %v3161, %v3325
      %3327 = vmatmul.f32.gmra.mxu0 %v3111
      %v3328 = vpop.f32.mrf.mxu0
      %v3329 = vadd.f32 %v3161, %v3328
      %3330 = vmatmul.f32.gmra.mxu0 %v3113
      %v3331 = vpop.f32.mrf.mxu0
      %v3332 = vadd.f32 %v3161, %v3331
      %3333 = vmatmul.f32.gmra.mxu0 %v3115
      %v3334 = vpop.f32.mrf.mxu0
      %v3335 = vadd.f32 %v3161, %v3334
      %3336 = vmatmul.f32.gmra.mxu0 %v3117
      %v3337 = vpop.f32.mrf.mxu0
      %v3338 = vadd.f32 %v3161, %v3337
      %3339 = vmatmul.f32.gmra.mxu0 %v3119
      %v3340 = vpop.f32.mrf.mxu0
      %v3341 = vadd.f32 %v3161, %v3340
      %3342 = vmatmul.f32.gmra.mxu0 %v3121
      %v3343 = vpop.f32.mrf.mxu0
      %v3344 = vadd.f32 %v3161, %v3343
      %3345 = vmatmul.f32.gmra.mxu0 %v3123
      %v3346 = vpop.f32.mrf.mxu0
      %v3347 = vadd.f32 %v3161, %v3346
      %3348 = vmatmul.f32.gmra.mxu0 %v3125
      %v3349 = vpop.f32.mrf.mxu0
      %v3350 = vadd.f32 %v3161, %v3349
      %3351 = vmatmul.f32.gmra.mxu0 %v3127
      %v3352 = vpop.f32.mrf.mxu0
      %v3353 = vadd.f32 %v3161, %v3352
      %3354 = vmatmul.f32.gmra.mxu0 %v3129
      %v3355 = vpop.f32.mrf.mxu0
      %v3356 = vadd.f32 %v3161, %v3355
      %3357 = vmatmul.f32.gmra.mxu0 %v3131
      %v3358 = vpop.f32.mrf.mxu0
      %v3359 = vadd.f32 %v3161, %v3358
      %3360 = vmatmul.f32.gmra.mxu0 %v3133
      %v3361 = vpop.f32.mrf.mxu0
      %v3362 = vadd.f32 %v3161, %v3361
      %3363 = vmatmul.f32.gmra.mxu0 %v3135
      %v3364 = vpop.f32.mrf.mxu0
      %v3365 = vadd.f32 %v3161, %v3364
      %3366 = vmatmul.f32.gmra.mxu0 %v3137
      %v3367 = vpop.f32.mrf.mxu0
      %v3368 = vadd.f32 %v3161, %v3367
      %3369 = vmatmul.f32.gmra.mxu0 %v3139
      %v3370 = vpop.f32.mrf.mxu0
      %v3371 = vadd.f32 %v3161, %v3370
      %3372 = vdwg.mxu0
      %3373 = vmatpush.msra.mxu0 0.0
      %3374 = vmatpush.msra.mxu0 0.0
      %3375 = vmatpush.msra.mxu0 0.0
      %3376 = vmatpush.msra.mxu0 0.0
      %3377 = vmatpush.msra.mxu0 0.0
      %3378 = vmatpush.msra.mxu0 0.0
      %3379 = vmatpush.msra.mxu0 0.0
      %3380 = vmatpush.msra.mxu0 0.0
      %3381 = vmatpush.msra.mxu0 0.0
      %3382 = vmatpush.msra.mxu0 0.0
      %3383 = vmatpush.msra.mxu0 0.0
      %3384 = vmatpush.msra.mxu0 0.0
      %3385 = vmatpush.msra.mxu0 0.0
      %3386 = vmatpush.msra.mxu0 0.0
      %3387 = vmatpush.msra.mxu0 %v3158
      %3388 = vmatpush.msra.mxu0 %v3157
      %3389 = vmatmul.f32.gmra.mxu0 %v3165
      %v3390 = vpop.f32.mrf.mxu0
      %v3391 = vadd.f32 %v3278, %v3390
      %3392 = vmatmul.f32.gmra.mxu0 %v3168
      %v3393 = vpop.f32.mrf.mxu0
      %v3394 = vadd.f32 %v3281, %v3393
      %3395 = vmatmul.f32.gmra.mxu0 %v3171
      %v3396 = vpop.f32.mrf.mxu0
      %v3397 = vadd.f32 %v3284, %v3396
      %3398 = vmatmul.f32.gmra.mxu0 %v3174
      %v3399 = vpop.f32.mrf.mxu0
      %v3400 = vadd.f32 %v3287, %v3399
      %3401 = vmatmul.f32.gmra.mxu0 %v3177
      %v3402 = vpop.f32.mrf.mxu0
      %v3403 = vadd.f32 %v3290, %v3402
      %3404 = vmatmul.f32.gmra.mxu0 %v3180
      %v3405 = vpop.f32.mrf.mxu0
      %v3406 = vadd.f32 %v3293, %v3405
      %3407 = vmatmul.f32.gmra.mxu0 %v3183
      %v3408 = vpop.f32.mrf.mxu0
      %v3409 = vadd.f32 %v3296, %v3408
      %3410 = vmatmul.f32.gmra.mxu0 %v3186
      %v3411 = vpop.f32.mrf.mxu0
      %v3412 = vadd.f32 %v3299, %v3411
      %3413 = vmatmul.f32.gmra.mxu0 %v3189
      %v3414 = vpop.f32.mrf.mxu0
      %v3415 = vadd.f32 %v3302, %v3414
      %3416 = vmatmul.f32.gmra.mxu0 %v3192
      %v3417 = vpop.f32.mrf.mxu0
      %v3418 = vadd.f32 %v3305, %v3417
      %3419 = vmatmul.f32.gmra.mxu0 %v3195
      %v3420 = vpop.f32.mrf.mxu0
      %v3421 = vadd.f32 %v3308, %v3420
      %3422 = vmatmul.f32.gmra.mxu0 %v3198
      %v3423 = vpop.f32.mrf.mxu0
      %v3424 = vadd.f32 %v3311, %v3423
      %3425 = vmatmul.f32.gmra.mxu0 %v3201
      %v3426 = vpop.f32.mrf.mxu0
      %v3427 = vadd.f32 %v3314, %v3426
      %3428 = vmatmul.f32.gmra.mxu0 %v3204
      %v3429 = vpop.f32.mrf.mxu0
      %v3430 = vadd.f32 %v3317, %v3429
      %3431 = vmatmul.f32.gmra.mxu0 %v3207
      %v3432 = vpop.f32.mrf.mxu0
      %v3433 = vadd.f32 %v3320, %v3432
      %3434 = vmatmul.f32.gmra.mxu0 %v3210
      %v3435 = vpop.f32.mrf.mxu0
      %v3436 = vadd.f32 %v3323, %v3435
      %3437 = vmatmul.f32.gmra.mxu0 %v3213
      %v3438 = vpop.f32.mrf.mxu0
      %v3439 = vadd.f32 %v3326, %v3438
      %3440 = vmatmul.f32.gmra.mxu0 %v3216
      %v3441 = vpop.f32.mrf.mxu0
      %v3442 = vadd.f32 %v3329, %v3441
      %3443 = vmatmul.f32.gmra.mxu0 %v3219
      %v3444 = vpop.f32.mrf.mxu0
      %v3445 = vadd.f32 %v3332, %v3444
      %3446 = vmatmul.f32.gmra.mxu0 %v3222
      %v3447 = vpop.f32.mrf.mxu0
      %v3448 = vadd.f32 %v3335, %v3447
      %3449 = vmatmul.f32.gmra.mxu0 %v3225
      %v3450 = vpop.f32.mrf.mxu0
      %v3451 = vadd.f32 %v3338, %v3450
      %3452 = vmatmul.f32.gmra.mxu0 %v3228
      %v3453 = vpop.f32.mrf.mxu0
      %v3454 = vadd.f32 %v3341, %v3453
      %3455 = vmatmul.f32.gmra.mxu0 %v3231
      %v3456 = vpop.f32.mrf.mxu0
      %v3457 = vadd.f32 %v3344, %v3456
      %3458 = vmatmul.f32.gmra.mxu0 %v3234
      %v3459 = vpop.f32.mrf.mxu0
      %v3460 = vadd.f32 %v3347, %v3459
      %3461 = vmatmul.f32.gmra.mxu0 %v3237
      %v3462 = vpop.f32.mrf.mxu0
      %v3463 = vadd.f32 %v3350, %v3462
      %3464 = vmatmul.f32.gmra.mxu0 %v3240
      %v3465 = vpop.f32.mrf.mxu0
      %v3466 = vadd.f32 %v3353, %v3465
      %3467 = vmatmul.f32.gmra.mxu0 %v3243
      %v3468 = vpop.f32.mrf.mxu0
      %v3469 = vadd.f32 %v3356, %v3468
      %3470 = vmatmul.f32.gmra.mxu0 %v3246
      %v3471 = vpop.f32.mrf.mxu0
      %v3472 = vadd.f32 %v3359, %v3471
      %3473 = vmatmul.f32.gmra.mxu0 %v3249
      %v3474 = vpop.f32.mrf.mxu0
      %v3475 = vadd.f32 %v3362, %v3474
      %3476 = vmatmul.f32.gmra.mxu0 %v3252
      %v3477 = vpop.f32.mrf.mxu0
      %v3478 = vadd.f32 %v3365, %v3477
      %3479 = vmatmul.f32.gmra.mxu0 %v3255
      %v3480 = vpop.f32.mrf.mxu0
      %v3481 = vadd.f32 %v3368, %v3480
      %3482 = vmatmul.f32.gmra.mxu0 %v3258
      %v3483 = vpop.f32.mrf.mxu0
      %v3484 = vadd.f32 %v3371, %v3483
      %3485 = vdwg.mxu0
      %v3486 = vlaneseq
      %v3487 = vand.u32 %v3486, 127
      %vm3488 = vcmp.lt.s32.totalorder %v3487, 24
      %v3489 = vxor.u32 %v3391, 2147483648
      %v3490 = vxor.u32 %v3394, 2147483648
      %v3491 = vxor.u32 %v3397, 2147483648
      %v3492 = vxor.u32 %v3400, 2147483648
      %v3493 = vxor.u32 %v3403, 2147483648
      %v3494 = vxor.u32 %v3406, 2147483648
      %v3495 = vxor.u32 %v3409, 2147483648
      %v3496 = vxor.u32 %v3412, 2147483648
      %v3497 = vxor.u32 %v3415, 2147483648
      %v3498 = vxor.u32 %v3418, 2147483648
      %v3499 = vxor.u32 %v3421, 2147483648
      %v3500 = vxor.u32 %v3424, 2147483648
      %v3501 = vxor.u32 %v3427, 2147483648
      %v3502 = vxor.u32 %v3430, 2147483648
      %v3503 = vxor.u32 %v3433, 2147483648
      %v3504 = vxor.u32 %v3436, 2147483648
      %v3505 = vxor.u32 %v3439, 2147483648
      %v3506 = vxor.u32 %v3442, 2147483648
      %v3507 = vxor.u32 %v3445, 2147483648
      %v3508 = vxor.u32 %v3448, 2147483648
      %v3509 = vxor.u32 %v3451, 2147483648
      %v3510 = vxor.u32 %v3454, 2147483648
      %v3511 = vxor.u32 %v3457, 2147483648
      %v3512 = vxor.u32 %v3460, 2147483648
      %v3513 = vxor.u32 %v3463, 2147483648
      %v3514 = vxor.u32 %v3466, 2147483648
      %v3515 = vxor.u32 %v3469, 2147483648
      %v3516 = vxor.u32 %v3472, 2147483648
      %v3517 = vxor.u32 %v3475, 2147483648
      %v3518 = vxor.u32 %v3478, 2147483648
      %v3519 = vxor.u32 %v3481, 2147483648
      %v3520 = vxor.u32 %v3484, 2147483648
      %v3521 = vmul.f32 %v3489, 1.442695
      %v3522 = vpow.pop %v3521
      %v3523 = vmul.f32 %v3490, 1.442695
      %v3524 = vpow.pop %v3523
      %v3525 = vmul.f32 %v3491, 1.442695
      %v3526 = vpow.pop %v3525
      %v3527 = vmul.f32 %v3492, 1.442695
      %v3528 = vpow.pop %v3527
      %v3529 = vmul.f32 %v3493, 1.442695
      %v3530 = vpow.pop %v3529
      %v3531 = vmul.f32 %v3494, 1.442695
      %v3532 = vpow.pop %v3531
      %v3533 = vmul.f32 %v3495, 1.442695
      %v3534 = vpow.pop %v3533
      %v3535 = vmul.f32 %v3496, 1.442695
      %v3536 = vpow.pop %v3535
      %v3537 = vmul.f32 %v3497, 1.442695
      %v3538 = vpow.pop %v3537
      %v3539 = vmul.f32 %v3498, 1.442695
      %v3540 = vpow.pop %v3539
      %v3541 = vmul.f32 %v3499, 1.442695
      %v3542 = vpow.pop %v3541
      %v3543 = vmul.f32 %v3500, 1.442695
      %v3544 = vpow.pop %v3543
      %v3545 = vmul.f32 %v3501, 1.442695
      %v3546 = vpow.pop %v3545
      %v3547 = vmul.f32 %v3502, 1.442695
      %v3548 = vpow.pop %v3547
      %v3549 = vmul.f32 %v3503, 1.442695
      %v3550 = vpow.pop %v3549
      %v3551 = vmul.f32 %v3504, 1.442695
      %v3552 = vpow.pop %v3551
      %v3553 = vmul.f32 %v3505, 1.442695
      %v3554 = vpow.pop %v3553
      %v3555 = vmul.f32 %v3506, 1.442695
      %v3556 = vpow.pop %v3555
      %v3557 = vmul.f32 %v3507, 1.442695
      %v3558 = vpow.pop %v3557
      %v3559 = vmul.f32 %v3508, 1.442695
      %v3560 = vpow.pop %v3559
      %v3561 = vmul.f32 %v3509, 1.442695
      %v3562 = vpow.pop %v3561
      %v3563 = vmul.f32 %v3510, 1.442695
      %v3564 = vpow.pop %v3563
      %v3565 = vmul.f32 %v3511, 1.442695
      %v3566 = vpow.pop %v3565
      %v3567 = vmul.f32 %v3512, 1.442695
      %v3568 = vpow.pop %v3567
      %v3569 = vmul.f32 %v3513, 1.442695
      %v3570 = vpow.pop %v3569
      %v3571 = vmul.f32 %v3514, 1.442695
      %v3572 = vpow.pop %v3571
      %v3573 = vmul.f32 %v3515, 1.442695
      %v3574 = vpow.pop %v3573
      %v3575 = vmul.f32 %v3516, 1.442695
      %v3576 = vpow.pop %v3575
      %v3577 = vmul.f32 %v3517, 1.442695
      %v3578 = vpow.pop %v3577
      %v3579 = vmul.f32 %v3518, 1.442695
      %v3580 = vpow.pop %v3579
      %v3581 = vmul.f32 %v3519, 1.442695
      %v3582 = vpow.pop %v3581
      %v3583 = vmul.f32 %v3520, 1.442695
      %v3584 = vpow.pop %v3583
      %v3585 = vadd.f32 %v3522, 1.0
      %v3586 = vadd.f32 %v3524, 1.0
      %v3587 = vadd.f32 %v3526, 1.0
      %v3588 = vadd.f32 %v3528, 1.0
      %v3589 = vadd.f32 %v3530, 1.0
      %v3590 = vadd.f32 %v3532, 1.0
      %v3591 = vadd.f32 %v3534, 1.0
      %v3592 = vadd.f32 %v3536, 1.0
      %v3593 = vadd.f32 %v3538, 1.0
      %v3594 = vadd.f32 %v3540, 1.0
      %v3595 = vadd.f32 %v3542, 1.0
      %v3596 = vadd.f32 %v3544, 1.0
      %v3597 = vadd.f32 %v3546, 1.0
      %v3598 = vadd.f32 %v3548, 1.0
      %v3599 = vadd.f32 %v3550, 1.0
      %v3600 = vadd.f32 %v3552, 1.0
      %v3601 = vadd.f32 %v3554, 1.0
      %v3602 = vadd.f32 %v3556, 1.0
      %v3603 = vadd.f32 %v3558, 1.0
      %v3604 = vadd.f32 %v3560, 1.0
      %v3605 = vadd.f32 %v3562, 1.0
      %v3606 = vadd.f32 %v3564, 1.0
      %v3607 = vadd.f32 %v3566, 1.0
      %v3608 = vadd.f32 %v3568, 1.0
      %v3609 = vadd.f32 %v3570, 1.0
      %v3610 = vadd.f32 %v3572, 1.0
      %v3611 = vadd.f32 %v3574, 1.0
      %v3612 = vadd.f32 %v3576, 1.0
      %v3613 = vadd.f32 %v3578, 1.0
      %v3614 = vadd.f32 %v3580, 1.0
      %v3615 = vadd.f32 %v3582, 1.0
      %v3616 = vadd.f32 %v3584, 1.0
      %v3617 = vrcp.pop %v3585
      %v3618 = vmul.f32 %v3585, %v3617
      %v3619 = vsub.f32 1.0, %v3618
      %v3620 = vmul.f32 %v3617, %v3619
      %v3621 = vadd.f32 %v3617, %v3620
      %vm3622 = vweird.f32 %v3585
      %vm3623 = vweird.f32 %v3617
      %vm3624 = vmor %vm3622, %vm3623
      %v3625 = vsel %vm3624, %v3617, %v3621
      %v3626 = vand.u32 2147483647, %v3585
      %vm3627 = vcmp.eq.f32.partialorder %v3626, 8.507059e+37
      %v3628 = vand.u32 %v3585, 2147483648
      %v3629 = vor.u32 1.1754944e-38, %v3628
      %v3630 = vsel %vm3627, %v3629, %v3625
      %v3631 = vmul.f32 1.0, %v3630
      %v3632 = vrcp.pop %v3586
      %v3633 = vmul.f32 %v3586, %v3632
      %v3634 = vsub.f32 1.0, %v3633
      %v3635 = vmul.f32 %v3632, %v3634
      %v3636 = vadd.f32 %v3632, %v3635
      %vm3637 = vweird.f32 %v3586
      %vm3638 = vweird.f32 %v3632
      %vm3639 = vmor %vm3637, %vm3638
      %v3640 = vsel %vm3639, %v3632, %v3636
      %v3641 = vand.u32 2147483647, %v3586
      %vm3642 = vcmp.eq.f32.partialorder %v3641, 8.507059e+37
      %v3643 = vand.u32 %v3586, 2147483648
      %v3644 = vor.u32 1.1754944e-38, %v3643
      %v3645 = vsel %vm3642, %v3644, %v3640
      %v3646 = vmul.f32 1.0, %v3645
      %v3647 = vrcp.pop %v3587
      %v3648 = vmul.f32 %v3587, %v3647
      %v3649 = vsub.f32 1.0, %v3648
      %v3650 = vmul.f32 %v3647, %v3649
      %v3651 = vadd.f32 %v3647, %v3650
      %vm3652 = vweird.f32 %v3587
      %vm3653 = vweird.f32 %v3647
      %vm3654 = vmor %vm3652, %vm3653
      %v3655 = vsel %vm3654, %v3647, %v3651
      %v3656 = vand.u32 2147483647, %v3587
      %vm3657 = vcmp.eq.f32.partialorder %v3656, 8.507059e+37
      %v3658 = vand.u32 %v3587, 2147483648
      %v3659 = vor.u32 1.1754944e-38, %v3658
      %v3660 = vsel %vm3657, %v3659, %v3655
      %v3661 = vmul.f32 1.0, %v3660
      %v3662 = vrcp.pop %v3588
      %v3663 = vmul.f32 %v3588, %v3662
      %v3664 = vsub.f32 1.0, %v3663
      %v3665 = vmul.f32 %v3662, %v3664
      %v3666 = vadd.f32 %v3662, %v3665
      %vm3667 = vweird.f32 %v3588
      %vm3668 = vweird.f32 %v3662
      %vm3669 = vmor %vm3667, %vm3668
      %v3670 = vsel %vm3669, %v3662, %v3666
      %v3671 = vand.u32 2147483647, %v3588
      %vm3672 = vcmp.eq.f32.partialorder %v3671, 8.507059e+37
      %v3673 = vand.u32 %v3588, 2147483648
      %v3674 = vor.u32 1.1754944e-38, %v3673
      %v3675 = vsel %vm3672, %v3674, %v3670
      %v3676 = vmul.f32 1.0, %v3675
      %v3677 = vrcp.pop %v3589
      %v3678 = vmul.f32 %v3589, %v3677
      %v3679 = vsub.f32 1.0, %v3678
      %v3680 = vmul.f32 %v3677, %v3679
      %v3681 = vadd.f32 %v3677, %v3680
      %vm3682 = vweird.f32 %v3589
      %vm3683 = vweird.f32 %v3677
      %vm3684 = vmor %vm3682, %vm3683
      %v3685 = vsel %vm3684, %v3677, %v3681
      %v3686 = vand.u32 2147483647, %v3589
      %vm3687 = vcmp.eq.f32.partialorder %v3686, 8.507059e+37
      %v3688 = vand.u32 %v3589, 2147483648
      %v3689 = vor.u32 1.1754944e-38, %v3688
      %v3690 = vsel %vm3687, %v3689, %v3685
      %v3691 = vmul.f32 1.0, %v3690
      %v3692 = vrcp.pop %v3590
      %v3693 = vmul.f32 %v3590, %v3692
      %v3694 = vsub.f32 1.0, %v3693
      %v3695 = vmul.f32 %v3692, %v3694
      %v3696 = vadd.f32 %v3692, %v3695
      %vm3697 = vweird.f32 %v3590
      %vm3698 = vweird.f32 %v3692
      %vm3699 = vmor %vm3697, %vm3698
      %v3700 = vsel %vm3699, %v3692, %v3696
      %v3701 = vand.u32 2147483647, %v3590
      %vm3702 = vcmp.eq.f32.partialorder %v3701, 8.507059e+37
      %v3703 = vand.u32 %v3590, 2147483648
      %v3704 = vor.u32 1.1754944e-38, %v3703
      %v3705 = vsel %vm3702, %v3704, %v3700
      %v3706 = vmul.f32 1.0, %v3705
      %v3707 = vrcp.pop %v3591
      %v3708 = vmul.f32 %v3591, %v3707
      %v3709 = vsub.f32 1.0, %v3708
      %v3710 = vmul.f32 %v3707, %v3709
      %v3711 = vadd.f32 %v3707, %v3710
      %vm3712 = vweird.f32 %v3591
      %vm3713 = vweird.f32 %v3707
      %vm3714 = vmor %vm3712, %vm3713
      %v3715 = vsel %vm3714, %v3707, %v3711
      %v3716 = vand.u32 2147483647, %v3591
      %vm3717 = vcmp.eq.f32.partialorder %v3716, 8.507059e+37
      %v3718 = vand.u32 %v3591, 2147483648
      %v3719 = vor.u32 1.1754944e-38, %v3718
      %v3720 = vsel %vm3717, %v3719, %v3715
      %v3721 = vmul.f32 1.0, %v3720
      %v3722 = vrcp.pop %v3592
      %v3723 = vmul.f32 %v3592, %v3722
      %v3724 = vsub.f32 1.0, %v3723
      %v3725 = vmul.f32 %v3722, %v3724
      %v3726 = vadd.f32 %v3722, %v3725
      %vm3727 = vweird.f32 %v3592
      %vm3728 = vweird.f32 %v3722
      %vm3729 = vmor %vm3727, %vm3728
      %v3730 = vsel %vm3729, %v3722, %v3726
      %v3731 = vand.u32 2147483647, %v3592
      %vm3732 = vcmp.eq.f32.partialorder %v3731, 8.507059e+37
      %v3733 = vand.u32 %v3592, 2147483648
      %v3734 = vor.u32 1.1754944e-38, %v3733
      %v3735 = vsel %vm3732, %v3734, %v3730
      %v3736 = vmul.f32 1.0, %v3735
      %v3737 = vrcp.pop %v3593
      %v3738 = vmul.f32 %v3593, %v3737
      %v3739 = vsub.f32 1.0, %v3738
      %v3740 = vmul.f32 %v3737, %v3739
      %v3741 = vadd.f32 %v3737, %v3740
      %vm3742 = vweird.f32 %v3593
      %vm3743 = vweird.f32 %v3737
      %vm3744 = vmor %vm3742, %vm3743
      %v3745 = vsel %vm3744, %v3737, %v3741
      %v3746 = vand.u32 2147483647, %v3593
      %vm3747 = vcmp.eq.f32.partialorder %v3746, 8.507059e+37
      %v3748 = vand.u32 %v3593, 2147483648
      %v3749 = vor.u32 1.1754944e-38, %v3748
      %v3750 = vsel %vm3747, %v3749, %v3745
      %v3751 = vmul.f32 1.0, %v3750
      %v3752 = vrcp.pop %v3594
      %v3753 = vmul.f32 %v3594, %v3752
      %v3754 = vsub.f32 1.0, %v3753
      %v3755 = vmul.f32 %v3752, %v3754
      %v3756 = vadd.f32 %v3752, %v3755
      %vm3757 = vweird.f32 %v3594
      %vm3758 = vweird.f32 %v3752
      %vm3759 = vmor %vm3757, %vm3758
      %v3760 = vsel %vm3759, %v3752, %v3756
      %v3761 = vand.u32 2147483647, %v3594
      %vm3762 = vcmp.eq.f32.partialorder %v3761, 8.507059e+37
      %v3763 = vand.u32 %v3594, 2147483648
      %v3764 = vor.u32 1.1754944e-38, %v3763
      %v3765 = vsel %vm3762, %v3764, %v3760
      %v3766 = vmul.f32 1.0, %v3765
      %v3767 = vrcp.pop %v3595
      %v3768 = vmul.f32 %v3595, %v3767
      %v3769 = vsub.f32 1.0, %v3768
      %v3770 = vmul.f32 %v3767, %v3769
      %v3771 = vadd.f32 %v3767, %v3770
      %vm3772 = vweird.f32 %v3595
      %vm3773 = vweird.f32 %v3767
      %vm3774 = vmor %vm3772, %vm3773
      %v3775 = vsel %vm3774, %v3767, %v3771
      %v3776 = vand.u32 2147483647, %v3595
      %vm3777 = vcmp.eq.f32.partialorder %v3776, 8.507059e+37
      %v3778 = vand.u32 %v3595, 2147483648
      %v3779 = vor.u32 1.1754944e-38, %v3778
      %v3780 = vsel %vm3777, %v3779, %v3775
      %v3781 = vmul.f32 1.0, %v3780
      %v3782 = vrcp.pop %v3596
      %v3783 = vmul.f32 %v3596, %v3782
      %v3784 = vsub.f32 1.0, %v3783
      %v3785 = vmul.f32 %v3782, %v3784
      %v3786 = vadd.f32 %v3782, %v3785
      %vm3787 = vweird.f32 %v3596
      %vm3788 = vweird.f32 %v3782
      %vm3789 = vmor %vm3787, %vm3788
      %v3790 = vsel %vm3789, %v3782, %v3786
      %v3791 = vand.u32 2147483647, %v3596
      %vm3792 = vcmp.eq.f32.partialorder %v3791, 8.507059e+37
      %v3793 = vand.u32 %v3596, 2147483648
      %v3794 = vor.u32 1.1754944e-38, %v3793
      %v3795 = vsel %vm3792, %v3794, %v3790
      %v3796 = vmul.f32 1.0, %v3795
      %v3797 = vrcp.pop %v3597
      %v3798 = vmul.f32 %v3597, %v3797
      %v3799 = vsub.f32 1.0, %v3798
      %v3800 = vmul.f32 %v3797, %v3799
      %v3801 = vadd.f32 %v3797, %v3800
      %vm3802 = vweird.f32 %v3597
      %vm3803 = vweird.f32 %v3797
      %vm3804 = vmor %vm3802, %vm3803
      %v3805 = vsel %vm3804, %v3797, %v3801
      %v3806 = vand.u32 2147483647, %v3597
      %vm3807 = vcmp.eq.f32.partialorder %v3806, 8.507059e+37
      %v3808 = vand.u32 %v3597, 2147483648
      %v3809 = vor.u32 1.1754944e-38, %v3808
      %v3810 = vsel %vm3807, %v3809, %v3805
      %v3811 = vmul.f32 1.0, %v3810
      %v3812 = vrcp.pop %v3598
      %v3813 = vmul.f32 %v3598, %v3812
      %v3814 = vsub.f32 1.0, %v3813
      %v3815 = vmul.f32 %v3812, %v3814
      %v3816 = vadd.f32 %v3812, %v3815
      %vm3817 = vweird.f32 %v3598
      %vm3818 = vweird.f32 %v3812
      %vm3819 = vmor %vm3817, %vm3818
      %v3820 = vsel %vm3819, %v3812, %v3816
      %v3821 = vand.u32 2147483647, %v3598
      %vm3822 = vcmp.eq.f32.partialorder %v3821, 8.507059e+37
      %v3823 = vand.u32 %v3598, 2147483648
      %v3824 = vor.u32 1.1754944e-38, %v3823
      %v3825 = vsel %vm3822, %v3824, %v3820
      %v3826 = vmul.f32 1.0, %v3825
      %v3827 = vrcp.pop %v3599
      %v3828 = vmul.f32 %v3599, %v3827
      %v3829 = vsub.f32 1.0, %v3828
      %v3830 = vmul.f32 %v3827, %v3829
      %v3831 = vadd.f32 %v3827, %v3830
      %vm3832 = vweird.f32 %v3599
      %vm3833 = vweird.f32 %v3827
      %vm3834 = vmor %vm3832, %vm3833
      %v3835 = vsel %vm3834, %v3827, %v3831
      %v3836 = vand.u32 2147483647, %v3599
      %vm3837 = vcmp.eq.f32.partialorder %v3836, 8.507059e+37
      %v3838 = vand.u32 %v3599, 2147483648
      %v3839 = vor.u32 1.1754944e-38, %v3838
      %v3840 = vsel %vm3837, %v3839, %v3835
      %v3841 = vmul.f32 1.0, %v3840
      %v3842 = vrcp.pop %v3600
      %v3843 = vmul.f32 %v3600, %v3842
      %v3844 = vsub.f32 1.0, %v3843
      %v3845 = vmul.f32 %v3842, %v3844
      %v3846 = vadd.f32 %v3842, %v3845
      %vm3847 = vweird.f32 %v3600
      %vm3848 = vweird.f32 %v3842
      %vm3849 = vmor %vm3847, %vm3848
      %v3850 = vsel %vm3849, %v3842, %v3846
      %v3851 = vand.u32 2147483647, %v3600
      %vm3852 = vcmp.eq.f32.partialorder %v3851, 8.507059e+37
      %v3853 = vand.u32 %v3600, 2147483648
      %v3854 = vor.u32 1.1754944e-38, %v3853
      %v3855 = vsel %vm3852, %v3854, %v3850
      %v3856 = vmul.f32 1.0, %v3855
      %v3857 = vrcp.pop %v3601
      %v3858 = vmul.f32 %v3601, %v3857
      %v3859 = vsub.f32 1.0, %v3858
      %v3860 = vmul.f32 %v3857, %v3859
      %v3861 = vadd.f32 %v3857, %v3860
      %vm3862 = vweird.f32 %v3601
      %vm3863 = vweird.f32 %v3857
      %vm3864 = vmor %vm3862, %vm3863
      %v3865 = vsel %vm3864, %v3857, %v3861
      %v3866 = vand.u32 2147483647, %v3601
      %vm3867 = vcmp.eq.f32.partialorder %v3866, 8.507059e+37
      %v3868 = vand.u32 %v3601, 2147483648
      %v3869 = vor.u32 1.1754944e-38, %v3868
      %v3870 = vsel %vm3867, %v3869, %v3865
      %v3871 = vmul.f32 1.0, %v3870
      %v3872 = vrcp.pop %v3602
      %v3873 = vmul.f32 %v3602, %v3872
      %v3874 = vsub.f32 1.0, %v3873
      %v3875 = vmul.f32 %v3872, %v3874
      %v3876 = vadd.f32 %v3872, %v3875
      %vm3877 = vweird.f32 %v3602
      %vm3878 = vweird.f32 %v3872
      %vm3879 = vmor %vm3877, %vm3878
      %v3880 = vsel %vm3879, %v3872, %v3876
      %v3881 = vand.u32 2147483647, %v3602
      %vm3882 = vcmp.eq.f32.partialorder %v3881, 8.507059e+37
      %v3883 = vand.u32 %v3602, 2147483648
      %v3884 = vor.u32 1.1754944e-38, %v3883
      %v3885 = vsel %vm3882, %v3884, %v3880
      %v3886 = vmul.f32 1.0, %v3885
      %v3887 = vrcp.pop %v3603
      %v3888 = vmul.f32 %v3603, %v3887
      %v3889 = vsub.f32 1.0, %v3888
      %v3890 = vmul.f32 %v3887, %v3889
      %v3891 = vadd.f32 %v3887, %v3890
      %vm3892 = vweird.f32 %v3603
      %vm3893 = vweird.f32 %v3887
      %vm3894 = vmor %vm3892, %vm3893
      %v3895 = vsel %vm3894, %v3887, %v3891
      %v3896 = vand.u32 2147483647, %v3603
      %vm3897 = vcmp.eq.f32.partialorder %v3896, 8.507059e+37
      %v3898 = vand.u32 %v3603, 2147483648
      %v3899 = vor.u32 1.1754944e-38, %v3898
      %v3900 = vsel %vm3897, %v3899, %v3895
      %v3901 = vmul.f32 1.0, %v3900
      %v3902 = vrcp.pop %v3604
      %v3903 = vmul.f32 %v3604, %v3902
      %v3904 = vsub.f32 1.0, %v3903
      %v3905 = vmul.f32 %v3902, %v3904
      %v3906 = vadd.f32 %v3902, %v3905
      %vm3907 = vweird.f32 %v3604
      %vm3908 = vweird.f32 %v3902
      %vm3909 = vmor %vm3907, %vm3908
      %v3910 = vsel %vm3909, %v3902, %v3906
      %v3911 = vand.u32 2147483647, %v3604
      %vm3912 = vcmp.eq.f32.partialorder %v3911, 8.507059e+37
      %v3913 = vand.u32 %v3604, 2147483648
      %v3914 = vor.u32 1.1754944e-38, %v3913
      %v3915 = vsel %vm3912, %v3914, %v3910
      %v3916 = vmul.f32 1.0, %v3915
      %v3917 = vrcp.pop %v3605
      %v3918 = vmul.f32 %v3605, %v3917
      %v3919 = vsub.f32 1.0, %v3918
      %v3920 = vmul.f32 %v3917, %v3919
      %v3921 = vadd.f32 %v3917, %v3920
      %vm3922 = vweird.f32 %v3605
      %vm3923 = vweird.f32 %v3917
      %vm3924 = vmor %vm3922, %vm3923
      %v3925 = vsel %vm3924, %v3917, %v3921
      %v3926 = vand.u32 2147483647, %v3605
      %vm3927 = vcmp.eq.f32.partialorder %v3926, 8.507059e+37
      %v3928 = vand.u32 %v3605, 2147483648
      %v3929 = vor.u32 1.1754944e-38, %v3928
      %v3930 = vsel %vm3927, %v3929, %v3925
      %v3931 = vmul.f32 1.0, %v3930
      %v3932 = vrcp.pop %v3606
      %v3933 = vmul.f32 %v3606, %v3932
      %v3934 = vsub.f32 1.0, %v3933
      %v3935 = vmul.f32 %v3932, %v3934
      %v3936 = vadd.f32 %v3932, %v3935
      %vm3937 = vweird.f32 %v3606
      %vm3938 = vweird.f32 %v3932
      %vm3939 = vmor %vm3937, %vm3938
      %v3940 = vsel %vm3939, %v3932, %v3936
      %v3941 = vand.u32 2147483647, %v3606
      %vm3942 = vcmp.eq.f32.partialorder %v3941, 8.507059e+37
      %v3943 = vand.u32 %v3606, 2147483648
      %v3944 = vor.u32 1.1754944e-38, %v3943
      %v3945 = vsel %vm3942, %v3944, %v3940
      %v3946 = vmul.f32 1.0, %v3945
      %v3947 = vrcp.pop %v3607
      %v3948 = vmul.f32 %v3607, %v3947
      %v3949 = vsub.f32 1.0, %v3948
      %v3950 = vmul.f32 %v3947, %v3949
      %v3951 = vadd.f32 %v3947, %v3950
      %vm3952 = vweird.f32 %v3607
      %vm3953 = vweird.f32 %v3947
      %vm3954 = vmor %vm3952, %vm3953
      %v3955 = vsel %vm3954, %v3947, %v3951
      %v3956 = vand.u32 2147483647, %v3607
      %vm3957 = vcmp.eq.f32.partialorder %v3956, 8.507059e+37
      %v3958 = vand.u32 %v3607, 2147483648
      %v3959 = vor.u32 1.1754944e-38, %v3958
      %v3960 = vsel %vm3957, %v3959, %v3955
      %v3961 = vmul.f32 1.0, %v3960
      %v3962 = vrcp.pop %v3608
      %v3963 = vmul.f32 %v3608, %v3962
      %v3964 = vsub.f32 1.0, %v3963
      %v3965 = vmul.f32 %v3962, %v3964
      %v3966 = vadd.f32 %v3962, %v3965
      %vm3967 = vweird.f32 %v3608
      %vm3968 = vweird.f32 %v3962
      %vm3969 = vmor %vm3967, %vm3968
      %v3970 = vsel %vm3969, %v3962, %v3966
      %v3971 = vand.u32 2147483647, %v3608
      %vm3972 = vcmp.eq.f32.partialorder %v3971, 8.507059e+37
      %v3973 = vand.u32 %v3608, 2147483648
      %v3974 = vor.u32 1.1754944e-38, %v3973
      %v3975 = vsel %vm3972, %v3974, %v3970
      %v3976 = vmul.f32 1.0, %v3975
      %v3977 = vrcp.pop %v3609
      %v3978 = vmul.f32 %v3609, %v3977
      %v3979 = vsub.f32 1.0, %v3978
      %v3980 = vmul.f32 %v3977, %v3979
      %v3981 = vadd.f32 %v3977, %v3980
      %vm3982 = vweird.f32 %v3609
      %vm3983 = vweird.f32 %v3977
      %vm3984 = vmor %vm3982, %vm3983
      %v3985 = vsel %vm3984, %v3977, %v3981
      %v3986 = vand.u32 2147483647, %v3609
      %vm3987 = vcmp.eq.f32.partialorder %v3986, 8.507059e+37
      %v3988 = vand.u32 %v3609, 2147483648
      %v3989 = vor.u32 1.1754944e-38, %v3988
      %v3990 = vsel %vm3987, %v3989, %v3985
      %v3991 = vmul.f32 1.0, %v3990
      %v3992 = vrcp.pop %v3610
      %v3993 = vmul.f32 %v3610, %v3992
      %v3994 = vsub.f32 1.0, %v3993
      %v3995 = vmul.f32 %v3992, %v3994
      %v3996 = vadd.f32 %v3992, %v3995
      %vm3997 = vweird.f32 %v3610
      %vm3998 = vweird.f32 %v3992
      %vm3999 = vmor %vm3997, %vm3998
      %v4000 = vsel %vm3999, %v3992, %v3996
      %v4001 = vand.u32 2147483647, %v3610
      %vm4002 = vcmp.eq.f32.partialorder %v4001, 8.507059e+37
      %v4003 = vand.u32 %v3610, 2147483648
      %v4004 = vor.u32 1.1754944e-38, %v4003
      %v4005 = vsel %vm4002, %v4004, %v4000
      %v4006 = vmul.f32 1.0, %v4005
      %v4007 = vrcp.pop %v3611
      %v4008 = vmul.f32 %v3611, %v4007
      %v4009 = vsub.f32 1.0, %v4008
      %v4010 = vmul.f32 %v4007, %v4009
      %v4011 = vadd.f32 %v4007, %v4010
      %vm4012 = vweird.f32 %v3611
      %vm4013 = vweird.f32 %v4007
      %vm4014 = vmor %vm4012, %vm4013
      %v4015 = vsel %vm4014, %v4007, %v4011
      %v4016 = vand.u32 2147483647, %v3611
      %vm4017 = vcmp.eq.f32.partialorder %v4016, 8.507059e+37
      %v4018 = vand.u32 %v3611, 2147483648
      %v4019 = vor.u32 1.1754944e-38, %v4018
      %v4020 = vsel %vm4017, %v4019, %v4015
      %v4021 = vmul.f32 1.0, %v4020
      %v4022 = vrcp.pop %v3612
      %v4023 = vmul.f32 %v3612, %v4022
      %v4024 = vsub.f32 1.0, %v4023
      %v4025 = vmul.f32 %v4022, %v4024
      %v4026 = vadd.f32 %v4022, %v4025
      %vm4027 = vweird.f32 %v3612
      %vm4028 = vweird.f32 %v4022
      %vm4029 = vmor %vm4027, %vm4028
      %v4030 = vsel %vm4029, %v4022, %v4026
      %v4031 = vand.u32 2147483647, %v3612
      %vm4032 = vcmp.eq.f32.partialorder %v4031, 8.507059e+37
      %v4033 = vand.u32 %v3612, 2147483648
      %v4034 = vor.u32 1.1754944e-38, %v4033
      %v4035 = vsel %vm4032, %v4034, %v4030
      %v4036 = vmul.f32 1.0, %v4035
      %v4037 = vrcp.pop %v3613
      %v4038 = vmul.f32 %v3613, %v4037
      %v4039 = vsub.f32 1.0, %v4038
      %v4040 = vmul.f32 %v4037, %v4039
      %v4041 = vadd.f32 %v4037, %v4040
      %vm4042 = vweird.f32 %v3613
      %vm4043 = vweird.f32 %v4037
      %vm4044 = vmor %vm4042, %vm4043
      %v4045 = vsel %vm4044, %v4037, %v4041
      %v4046 = vand.u32 2147483647, %v3613
      %vm4047 = vcmp.eq.f32.partialorder %v4046, 8.507059e+37
      %v4048 = vand.u32 %v3613, 2147483648
      %v4049 = vor.u32 1.1754944e-38, %v4048
      %v4050 = vsel %vm4047, %v4049, %v4045
      %v4051 = vmul.f32 1.0, %v4050
      %v4052 = vrcp.pop %v3614
      %v4053 = vmul.f32 %v3614, %v4052
      %v4054 = vsub.f32 1.0, %v4053
      %v4055 = vmul.f32 %v4052, %v4054
      %v4056 = vadd.f32 %v4052, %v4055
      %vm4057 = vweird.f32 %v3614
      %vm4058 = vweird.f32 %v4052
      %vm4059 = vmor %vm4057, %vm4058
      %v4060 = vsel %vm4059, %v4052, %v4056
      %v4061 = vand.u32 2147483647, %v3614
      %vm4062 = vcmp.eq.f32.partialorder %v4061, 8.507059e+37
      %v4063 = vand.u32 %v3614, 2147483648
      %v4064 = vor.u32 1.1754944e-38, %v4063
      %v4065 = vsel %vm4062, %v4064, %v4060
      %v4066 = vmul.f32 1.0, %v4065
      %v4067 = vrcp.pop %v3615
      %v4068 = vmul.f32 %v3615, %v4067
      %v4069 = vsub.f32 1.0, %v4068
      %v4070 = vmul.f32 %v4067, %v4069
      %v4071 = vadd.f32 %v4067, %v4070
      %vm4072 = vweird.f32 %v3615
      %vm4073 = vweird.f32 %v4067
      %vm4074 = vmor %vm4072, %vm4073
      %v4075 = vsel %vm4074, %v4067, %v4071
      %v4076 = vand.u32 2147483647, %v3615
      %vm4077 = vcmp.eq.f32.partialorder %v4076, 8.507059e+37
      %v4078 = vand.u32 %v3615, 2147483648
      %v4079 = vor.u32 1.1754944e-38, %v4078
      %v4080 = vsel %vm4077, %v4079, %v4075
      %v4081 = vmul.f32 1.0, %v4080
      %v4082 = vrcp.pop %v3616
      %v4083 = vmul.f32 %v3616, %v4082
      %v4084 = vsub.f32 1.0, %v4083
      %v4085 = vmul.f32 %v4082, %v4084
      %v4086 = vadd.f32 %v4082, %v4085
      %vm4087 = vweird.f32 %v3616
      %vm4088 = vweird.f32 %v4082
      %vm4089 = vmor %vm4087, %vm4088
      %v4090 = vsel %vm4089, %v4082, %v4086
      %v4091 = vand.u32 2147483647, %v3616
      %vm4092 = vcmp.eq.f32.partialorder %v4091, 8.507059e+37
      %v4093 = vand.u32 %v3616, 2147483648
      %v4094 = vor.u32 1.1754944e-38, %v4093
      %v4095 = vsel %vm4092, %v4094, %v4090
      %v4096 = vmul.f32 1.0, %v4095
      %v4097 = vtanh.pop %v3391
      %v4098 = vtanh.pop %v3394
      %v4099 = vtanh.pop %v3397
      %v4100 = vtanh.pop %v3400
      %v4101 = vtanh.pop %v3403
      %v4102 = vtanh.pop %v3406
      %v4103 = vtanh.pop %v3409
      %v4104 = vtanh.pop %v3412
      %v4105 = vtanh.pop %v3415
      %v4106 = vtanh.pop %v3418
      %v4107 = vtanh.pop %v3421
      %v4108 = vtanh.pop %v3424
      %v4109 = vtanh.pop %v3427
      %v4110 = vtanh.pop %v3430
      %v4111 = vtanh.pop %v3433
      %v4112 = vtanh.pop %v3436
      %v4113 = vtanh.pop %v3439
      %v4114 = vtanh.pop %v3442
      %v4115 = vtanh.pop %v3445
      %v4116 = vtanh.pop %v3448
      %v4117 = vtanh.pop %v3451
      %v4118 = vtanh.pop %v3454
      %v4119 = vtanh.pop %v3457
      %v4120 = vtanh.pop %v3460
      %v4121 = vtanh.pop %v3463
      %v4122 = vtanh.pop %v3466
      %v4123 = vtanh.pop %v3469
      %v4124 = vtanh.pop %v3472
      %v4125 = vtanh.pop %v3475
      %v4126 = vtanh.pop %v3478
      %v4127 = vtanh.pop %v3481
      %v4128 = vtanh.pop %v3484
      %v4129 = vsel %vm3488, %v3631, %v4097
      %v4130 = vsel %vm3488, %v3646, %v4098
      %v4131 = vsel %vm3488, %v3661, %v4099
      %v4132 = vsel %vm3488, %v3676, %v4100
      %v4133 = vsel %vm3488, %v3691, %v4101
      %v4134 = vsel %vm3488, %v3706, %v4102
      %v4135 = vsel %vm3488, %v3721, %v4103
      %v4136 = vsel %vm3488, %v3736, %v4104
      %v4137 = vsel %vm3488, %v3751, %v4105
      %v4138 = vsel %vm3488, %v3766, %v4106
      %v4139 = vsel %vm3488, %v3781, %v4107
      %v4140 = vsel %vm3488, %v3796, %v4108
      %v4141 = vsel %vm3488, %v3811, %v4109
      %v4142 = vsel %vm3488, %v3826, %v4110
      %v4143 = vsel %vm3488, %v3841, %v4111
      %v4144 = vsel %vm3488, %v3856, %v4112
      %v4145 = vsel %vm3488, %v3871, %v4113
      %v4146 = vsel %vm3488, %v3886, %v4114
      %v4147 = vsel %vm3488, %v3901, %v4115
      %v4148 = vsel %vm3488, %v3916, %v4116
      %v4149 = vsel %vm3488, %v3931, %v4117
      %v4150 = vsel %vm3488, %v3946, %v4118
      %v4151 = vsel %vm3488, %v3961, %v4119
      %v4152 = vsel %vm3488, %v3976, %v4120
      %v4153 = vsel %vm3488, %v3991, %v4121
      %v4154 = vsel %vm3488, %v4006, %v4122
      %v4155 = vsel %vm3488, %v4021, %v4123
      %v4156 = vsel %vm3488, %v4036, %v4124
      %v4157 = vsel %vm3488, %v4051, %v4125
      %v4158 = vsel %vm3488, %v4066, %v4126
      %v4159 = vsel %vm3488, %v4081, %v4127
      %v4160 = vsel %vm3488, %v4096, %v4128
      %v4161 = vld [vmem:[%s246] sm:$0xff]
      %v4162 = vld [vmem:[%s246 + $0x8] sm:$0xff]
      %v4163 = vld [vmem:[%s246 + $0x10] sm:$0xff]
      %v4164 = vld [vmem:[%s246 + $0x18] sm:$0xff]
      %v4165 = vld [vmem:[%s246 + $0x20] sm:$0xff]
      %v4166 = vld [vmem:[%s246 + $0x28] sm:$0xff]
      %v4167 = vld [vmem:[%s246 + $0x30] sm:$0xff]
      %v4168 = vld [vmem:[%s246 + $0x38] sm:$0xff]
      %v4169 = vld [vmem:[%s246 + $0x40] sm:$0xff]
      %v4170 = vld [vmem:[%s246 + $0x48] sm:$0xff]
      %v4171 = vld [vmem:[%s246 + $0x50] sm:$0xff]
      %v4172 = vld [vmem:[%s246 + $0x58] sm:$0xff]
      %v4173 = vld [vmem:[%s246 + $0x60] sm:$0xff]
      %v4174 = vld [vmem:[%s246 + $0x68] sm:$0xff]
      %v4175 = vld [vmem:[%s246 + $0x70] sm:$0xff]
      %v4176 = vld [vmem:[%s246 + $0x78] sm:$0xff]
      %v4177 = vld [vmem:[%s246 + $0x80] sm:$0xff]
      %v4178 = vld [vmem:[%s246 + $0x88] sm:$0xff]
      %v4179 = vld [vmem:[%s246 + $0x90] sm:$0xff]
      %v4180 = vld [vmem:[%s246 + $0x98] sm:$0xff]
      %v4181 = vld [vmem:[%s246 + $0xa0] sm:$0xff]
      %v4182 = vld [vmem:[%s246 + $0xa8] sm:$0xff]
      %v4183 = vld [vmem:[%s246 + $0xb0] sm:$0xff]
      %v4184 = vld [vmem:[%s246 + $0xb8] sm:$0xff]
      %v4185 = vld [vmem:[%s246 + $0xc0] sm:$0xff]
      %v4186 = vld [vmem:[%s246 + $0xc8] sm:$0xff]
      %v4187 = vld [vmem:[%s246 + $0xd0] sm:$0xff]
      %v4188 = vld [vmem:[%s246 + $0xd8] sm:$0xff]
      %v4189 = vld [vmem:[%s246 + $0xe0] sm:$0xff]
      %v4190 = vld [vmem:[%s246 + $0xe8] sm:$0xff]
      %v4191 = vld [vmem:[%s246 + $0xf0] sm:$0xff]
      %v4192 = vld [vmem:[%s246 + $0xf8] sm:$0xff]
      %4225 = vrot.lane.b32.xlu0 %v4161, 8
      %v4226 = vpop.permute.xlu0 %4225
      %4227 = vrot.lane.b32.xlu0 %v4162, 8
      %v4228 = vpop.permute.xlu0 %4227
      %4229 = vrot.lane.b32.xlu0 %v4163, 8
      %v4230 = vpop.permute.xlu0 %4229
      %4231 = vrot.lane.b32.xlu0 %v4164, 8
      %v4232 = vpop.permute.xlu0 %4231
      %4233 = vrot.lane.b32.xlu0 %v4165, 8
      %v4234 = vpop.permute.xlu0 %4233
      %4235 = vrot.lane.b32.xlu0 %v4166, 8
      %v4236 = vpop.permute.xlu0 %4235
      %4237 = vrot.lane.b32.xlu0 %v4167, 8
      %v4238 = vpop.permute.xlu0 %4237
      %4239 = vrot.lane.b32.xlu0 %v4168, 8
      %v4240 = vpop.permute.xlu0 %4239
      %4241 = vrot.lane.b32.xlu0 %v4169, 8
      %v4242 = vpop.permute.xlu0 %4241
      %4243 = vrot.lane.b32.xlu0 %v4170, 8
      %v4244 = vpop.permute.xlu0 %4243
      %4245 = vrot.lane.b32.xlu0 %v4171, 8
      %v4246 = vpop.permute.xlu0 %4245
      %4247 = vrot.lane.b32.xlu0 %v4172, 8
      %v4248 = vpop.permute.xlu0 %4247
      %4249 = vrot.lane.b32.xlu0 %v4173, 8
      %v4250 = vpop.permute.xlu0 %4249
      %4251 = vrot.lane.b32.xlu0 %v4174, 8
      %v4252 = vpop.permute.xlu0 %4251
      %4253 = vrot.lane.b32.xlu0 %v4175, 8
      %v4254 = vpop.permute.xlu0 %4253
      %4255 = vrot.lane.b32.xlu0 %v4176, 8
      %v4256 = vpop.permute.xlu0 %4255
      %4257 = vrot.lane.b32.xlu0 %v4177, 8
      %v4258 = vpop.permute.xlu0 %4257
      %4259 = vrot.lane.b32.xlu0 %v4178, 8
      %v4260 = vpop.permute.xlu0 %4259
      %4261 = vrot.lane.b32.xlu0 %v4179, 8
      %v4262 = vpop.permute.xlu0 %4261
      %4263 = vrot.lane.b32.xlu0 %v4180, 8
      %v4264 = vpop.permute.xlu0 %4263
      %4265 = vrot.lane.b32.xlu0 %v4181, 8
      %v4266 = vpop.permute.xlu0 %4265
      %4267 = vrot.lane.b32.xlu0 %v4182, 8
      %v4268 = vpop.permute.xlu0 %4267
      %4269 = vrot.lane.b32.xlu0 %v4183, 8
      %v4270 = vpop.permute.xlu0 %4269
      %4271 = vrot.lane.b32.xlu0 %v4184, 8
      %v4272 = vpop.permute.xlu0 %4271
      %4273 = vrot.lane.b32.xlu0 %v4185, 8
      %v4274 = vpop.permute.xlu0 %4273
      %4275 = vrot.lane.b32.xlu0 %v4186, 8
      %v4276 = vpop.permute.xlu0 %4275
      %4277 = vrot.lane.b32.xlu0 %v4187, 8
      %v4278 = vpop.permute.xlu0 %4277
      %4279 = vrot.lane.b32.xlu0 %v4188, 8
      %v4280 = vpop.permute.xlu0 %4279
      %4281 = vrot.lane.b32.xlu0 %v4189, 8
      %v4282 = vpop.permute.xlu0 %4281
      %4283 = vrot.lane.b32.xlu0 %v4190, 8
      %v4284 = vpop.permute.xlu0 %4283
      %4285 = vrot.lane.b32.xlu0 %v4191, 8
      %v4286 = vpop.permute.xlu0 %4285
      %4287 = vrot.lane.b32.xlu0 %v4192, 8
      %v4288 = vpop.permute.xlu0 %4287
      %v4321 = vmul.f32 %v4129, %v4226
      %v4322 = vmul.f32 %v4130, %v4228
      %v4323 = vmul.f32 %v4131, %v4230
      %v4324 = vmul.f32 %v4132, %v4232
      %v4325 = vmul.f32 %v4133, %v4234
      %v4326 = vmul.f32 %v4134, %v4236
      %v4327 = vmul.f32 %v4135, %v4238
      %v4328 = vmul.f32 %v4136, %v4240
      %v4329 = vmul.f32 %v4137, %v4242
      %v4330 = vmul.f32 %v4138, %v4244
      %v4331 = vmul.f32 %v4139, %v4246
      %v4332 = vmul.f32 %v4140, %v4248
      %v4333 = vmul.f32 %v4141, %v4250
      %v4334 = vmul.f32 %v4142, %v4252
      %v4335 = vmul.f32 %v4143, %v4254
      %v4336 = vmul.f32 %v4144, %v4256
      %v4337 = vmul.f32 %v4145, %v4258
      %v4338 = vmul.f32 %v4146, %v4260
      %v4339 = vmul.f32 %v4147, %v4262
      %v4340 = vmul.f32 %v4148, %v4264
      %v4341 = vmul.f32 %v4149, %v4266
      %v4342 = vmul.f32 %v4150, %v4268
      %v4343 = vmul.f32 %v4151, %v4270
      %v4344 = vmul.f32 %v4152, %v4272
      %v4345 = vmul.f32 %v4153, %v4274
      %v4346 = vmul.f32 %v4154, %v4276
      %v4347 = vmul.f32 %v4155, %v4278
      %v4348 = vmul.f32 %v4156, %v4280
      %v4349 = vmul.f32 %v4157, %v4282
      %v4350 = vmul.f32 %v4158, %v4284
      %v4351 = vmul.f32 %v4159, %v4286
      %v4352 = vmul.f32 %v4160, %v4288
      %4385 = vrot.lane.b32.xlu0 %v4129, 104
      %v4386 = vpop.permute.xlu0 %4385
      %4387 = vrot.lane.b32.xlu0 %v4130, 104
      %v4388 = vpop.permute.xlu0 %4387
      %4389 = vrot.lane.b32.xlu0 %v4131, 104
      %v4390 = vpop.permute.xlu0 %4389
      %4391 = vrot.lane.b32.xlu0 %v4132, 104
      %v4392 = vpop.permute.xlu0 %4391
      %4393 = vrot.lane.b32.xlu0 %v4133, 104
      %v4394 = vpop.permute.xlu0 %4393
      %4395 = vrot.lane.b32.xlu0 %v4134, 104
      %v4396 = vpop.permute.xlu0 %4395
      %4397 = vrot.lane.b32.xlu0 %v4135, 104
      %v4398 = vpop.permute.xlu0 %4397
      %4399 = vrot.lane.b32.xlu0 %v4136, 104
      %v4400 = vpop.permute.xlu0 %4399
      %4401 = vrot.lane.b32.xlu0 %v4137, 104
      %v4402 = vpop.permute.xlu0 %4401
      %4403 = vrot.lane.b32.xlu0 %v4138, 104
      %v4404 = vpop.permute.xlu0 %4403
      %4405 = vrot.lane.b32.xlu0 %v4139, 104
      %v4406 = vpop.permute.xlu0 %4405
      %4407 = vrot.lane.b32.xlu0 %v4140, 104
      %v4408 = vpop.permute.xlu0 %4407
      %4409 = vrot.lane.b32.xlu0 %v4141, 104
      %v4410 = vpop.permute.xlu0 %4409
      %4411 = vrot.lane.b32.xlu0 %v4142, 104
      %v4412 = vpop.permute.xlu0 %4411
      %4413 = vrot.lane.b32.xlu0 %v4143, 104
      %v4414 = vpop.permute.xlu0 %4413
      %4415 = vrot.lane.b32.xlu0 %v4144, 104
      %v4416 = vpop.permute.xlu0 %4415
      %4417 = vrot.lane.b32.xlu0 %v4145, 104
      %v4418 = vpop.permute.xlu0 %4417
      %4419 = vrot.lane.b32.xlu0 %v4146, 104
      %v4420 = vpop.permute.xlu0 %4419
      %4421 = vrot.lane.b32.xlu0 %v4147, 104
      %v4422 = vpop.permute.xlu0 %4421
      %4423 = vrot.lane.b32.xlu0 %v4148, 104
      %v4424 = vpop.permute.xlu0 %4423
      %4425 = vrot.lane.b32.xlu0 %v4149, 104
      %v4426 = vpop.permute.xlu0 %4425
      %4427 = vrot.lane.b32.xlu0 %v4150, 104
      %v4428 = vpop.permute.xlu0 %4427
      %4429 = vrot.lane.b32.xlu0 %v4151, 104
      %v4430 = vpop.permute.xlu0 %4429
      %4431 = vrot.lane.b32.xlu0 %v4152, 104
      %v4432 = vpop.permute.xlu0 %4431
      %4433 = vrot.lane.b32.xlu0 %v4153, 104
      %v4434 = vpop.permute.xlu0 %4433
      %4435 = vrot.lane.b32.xlu0 %v4154, 104
      %v4436 = vpop.permute.xlu0 %4435
      %4437 = vrot.lane.b32.xlu0 %v4155, 104
      %v4438 = vpop.permute.xlu0 %4437
      %4439 = vrot.lane.b32.xlu0 %v4156, 104
      %v4440 = vpop.permute.xlu0 %4439
      %4441 = vrot.lane.b32.xlu0 %v4157, 104
      %v4442 = vpop.permute.xlu0 %4441
      %4443 = vrot.lane.b32.xlu0 %v4158, 104
      %v4444 = vpop.permute.xlu0 %4443
      %4445 = vrot.lane.b32.xlu0 %v4159, 104
      %v4446 = vpop.permute.xlu0 %4445
      %4447 = vrot.lane.b32.xlu0 %v4160, 104
      %v4448 = vpop.permute.xlu0 %4447
      %v4481 = vmul.f32 %v4129, %v4386
      %v4482 = vmul.f32 %v4130, %v4388
      %v4483 = vmul.f32 %v4131, %v4390
      %v4484 = vmul.f32 %v4132, %v4392
      %v4485 = vmul.f32 %v4133, %v4394
      %v4486 = vmul.f32 %v4134, %v4396
      %v4487 = vmul.f32 %v4135, %v4398
      %v4488 = vmul.f32 %v4136, %v4400
      %v4489 = vmul.f32 %v4137, %v4402
      %v4490 = vmul.f32 %v4138, %v4404
      %v4491 = vmul.f32 %v4139, %v4406
      %v4492 = vmul.f32 %v4140, %v4408
      %v4493 = vmul.f32 %v4141, %v4410
      %v4494 = vmul.f32 %v4142, %v4412
      %v4495 = vmul.f32 %v4143, %v4414
      %v4496 = vmul.f32 %v4144, %v4416
      %v4497 = vmul.f32 %v4145, %v4418
      %v4498 = vmul.f32 %v4146, %v4420
      %v4499 = vmul.f32 %v4147, %v4422
      %v4500 = vmul.f32 %v4148, %v4424
      %v4501 = vmul.f32 %v4149, %v4426
      %v4502 = vmul.f32 %v4150, %v4428
      %v4503 = vmul.f32 %v4151, %v4430
      %v4504 = vmul.f32 %v4152, %v4432
      %v4505 = vmul.f32 %v4153, %v4434
      %v4506 = vmul.f32 %v4154, %v4436
      %v4507 = vmul.f32 %v4155, %v4438
      %v4508 = vmul.f32 %v4156, %v4440
      %v4509 = vmul.f32 %v4157, %v4442
      %v4510 = vmul.f32 %v4158, %v4444
      %v4511 = vmul.f32 %v4159, %v4446
      %v4512 = vmul.f32 %v4160, %v4448
      %4545 = vrot.lane.b32.xlu0 %v4481, 8
      %v4546 = vpop.permute.xlu0 %4545
      %4547 = vrot.lane.b32.xlu0 %v4482, 8
      %v4548 = vpop.permute.xlu0 %4547
      %4549 = vrot.lane.b32.xlu0 %v4483, 8
      %v4550 = vpop.permute.xlu0 %4549
      %4551 = vrot.lane.b32.xlu0 %v4484, 8
      %v4552 = vpop.permute.xlu0 %4551
      %4553 = vrot.lane.b32.xlu0 %v4485, 8
      %v4554 = vpop.permute.xlu0 %4553
      %4555 = vrot.lane.b32.xlu0 %v4486, 8
      %v4556 = vpop.permute.xlu0 %4555
      %4557 = vrot.lane.b32.xlu0 %v4487, 8
      %v4558 = vpop.permute.xlu0 %4557
      %4559 = vrot.lane.b32.xlu0 %v4488, 8
      %v4560 = vpop.permute.xlu0 %4559
      %4561 = vrot.lane.b32.xlu0 %v4489, 8
      %v4562 = vpop.permute.xlu0 %4561
      %4563 = vrot.lane.b32.xlu0 %v4490, 8
      %v4564 = vpop.permute.xlu0 %4563
      %4565 = vrot.lane.b32.xlu0 %v4491, 8
      %v4566 = vpop.permute.xlu0 %4565
      %4567 = vrot.lane.b32.xlu0 %v4492, 8
      %v4568 = vpop.permute.xlu0 %4567
      %4569 = vrot.lane.b32.xlu0 %v4493, 8
      %v4570 = vpop.permute.xlu0 %4569
      %4571 = vrot.lane.b32.xlu0 %v4494, 8
      %v4572 = vpop.permute.xlu0 %4571
      %4573 = vrot.lane.b32.xlu0 %v4495, 8
      %v4574 = vpop.permute.xlu0 %4573
      %4575 = vrot.lane.b32.xlu0 %v4496, 8
      %v4576 = vpop.permute.xlu0 %4575
      %4577 = vrot.lane.b32.xlu0 %v4497, 8
      %v4578 = vpop.permute.xlu0 %4577
      %4579 = vrot.lane.b32.xlu0 %v4498, 8
      %v4580 = vpop.permute.xlu0 %4579
      %4581 = vrot.lane.b32.xlu0 %v4499, 8
      %v4582 = vpop.permute.xlu0 %4581
      %4583 = vrot.lane.b32.xlu0 %v4500, 8
      %v4584 = vpop.permute.xlu0 %4583
      %4585 = vrot.lane.b32.xlu0 %v4501, 8
      %v4586 = vpop.permute.xlu0 %4585
      %4587 = vrot.lane.b32.xlu0 %v4502, 8
      %v4588 = vpop.permute.xlu0 %4587
      %4589 = vrot.lane.b32.xlu0 %v4503, 8
      %v4590 = vpop.permute.xlu0 %4589
      %4591 = vrot.lane.b32.xlu0 %v4504, 8
      %v4592 = vpop.permute.xlu0 %4591
      %4593 = vrot.lane.b32.xlu0 %v4505, 8
      %v4594 = vpop.permute.xlu0 %4593
      %4595 = vrot.lane.b32.xlu0 %v4506, 8
      %v4596 = vpop.permute.xlu0 %4595
      %4597 = vrot.lane.b32.xlu0 %v4507, 8
      %v4598 = vpop.permute.xlu0 %4597
      %4599 = vrot.lane.b32.xlu0 %v4508, 8
      %v4600 = vpop.permute.xlu0 %4599
      %4601 = vrot.lane.b32.xlu0 %v4509, 8
      %v4602 = vpop.permute.xlu0 %4601
      %4603 = vrot.lane.b32.xlu0 %v4510, 8
      %v4604 = vpop.permute.xlu0 %4603
      %4605 = vrot.lane.b32.xlu0 %v4511, 8
      %v4606 = vpop.permute.xlu0 %4605
      %4607 = vrot.lane.b32.xlu0 %v4512, 8
      %v4608 = vpop.permute.xlu0 %4607
      %v4641 = vadd.f32 %v4321, %v4546
      %v4642 = vadd.f32 %v4322, %v4548
      %v4643 = vadd.f32 %v4323, %v4550
      %v4644 = vadd.f32 %v4324, %v4552
      %v4645 = vadd.f32 %v4325, %v4554
      %v4646 = vadd.f32 %v4326, %v4556
      %v4647 = vadd.f32 %v4327, %v4558
      %v4648 = vadd.f32 %v4328, %v4560
      %v4649 = vadd.f32 %v4329, %v4562
      %v4650 = vadd.f32 %v4330, %v4564
      %v4651 = vadd.f32 %v4331, %v4566
      %v4652 = vadd.f32 %v4332, %v4568
      %v4653 = vadd.f32 %v4333, %v4570
      %v4654 = vadd.f32 %v4334, %v4572
      %v4655 = vadd.f32 %v4335, %v4574
      %v4656 = vadd.f32 %v4336, %v4576
      %v4657 = vadd.f32 %v4337, %v4578
      %v4658 = vadd.f32 %v4338, %v4580
      %v4659 = vadd.f32 %v4339, %v4582
      %v4660 = vadd.f32 %v4340, %v4584
      %v4661 = vadd.f32 %v4341, %v4586
      %v4662 = vadd.f32 %v4342, %v4588
      %v4663 = vadd.f32 %v4343, %v4590
      %v4664 = vadd.f32 %v4344, %v4592
      %v4665 = vadd.f32 %v4345, %v4594
      %v4666 = vadd.f32 %v4346, %v4596
      %v4667 = vadd.f32 %v4347, %v4598
      %v4668 = vadd.f32 %v4348, %v4600
      %v4669 = vadd.f32 %v4349, %v4602
      %v4670 = vadd.f32 %v4350, %v4604
      %v4671 = vadd.f32 %v4351, %v4606
      %v4672 = vadd.f32 %v4352, %v4608
      %v4673 = vtanh.pop %v4641
      %v4674 = vtanh.pop %v4642
      %v4675 = vtanh.pop %v4643
      %v4676 = vtanh.pop %v4644
      %v4677 = vtanh.pop %v4645
      %v4678 = vtanh.pop %v4646
      %v4679 = vtanh.pop %v4647
      %v4680 = vtanh.pop %v4648
      %v4681 = vtanh.pop %v4649
      %v4682 = vtanh.pop %v4650
      %v4683 = vtanh.pop %v4651
      %v4684 = vtanh.pop %v4652
      %v4685 = vtanh.pop %v4653
      %v4686 = vtanh.pop %v4654
      %v4687 = vtanh.pop %v4655
      %v4688 = vtanh.pop %v4656
      %v4689 = vtanh.pop %v4657
      %v4690 = vtanh.pop %v4658
      %v4691 = vtanh.pop %v4659
      %v4692 = vtanh.pop %v4660
      %v4693 = vtanh.pop %v4661
      %v4694 = vtanh.pop %v4662
      %v4695 = vtanh.pop %v4663
      %v4696 = vtanh.pop %v4664
      %v4697 = vtanh.pop %v4665
      %v4698 = vtanh.pop %v4666
      %v4699 = vtanh.pop %v4667
      %v4700 = vtanh.pop %v4668
      %v4701 = vtanh.pop %v4669
      %v4702 = vtanh.pop %v4670
      %v4703 = vtanh.pop %v4671
      %v4704 = vtanh.pop %v4672
      %4737 = vrot.lane.b32.xlu0 %v4673, 8
      %v4738 = vpop.permute.xlu0 %4737
      %4739 = vrot.lane.b32.xlu0 %v4674, 8
      %v4740 = vpop.permute.xlu0 %4739
      %4741 = vrot.lane.b32.xlu0 %v4675, 8
      %v4742 = vpop.permute.xlu0 %4741
      %4743 = vrot.lane.b32.xlu0 %v4676, 8
      %v4744 = vpop.permute.xlu0 %4743
      %4745 = vrot.lane.b32.xlu0 %v4677, 8
      %v4746 = vpop.permute.xlu0 %4745
      %4747 = vrot.lane.b32.xlu0 %v4678, 8
      %v4748 = vpop.permute.xlu0 %4747
      %4749 = vrot.lane.b32.xlu0 %v4679, 8
      %v4750 = vpop.permute.xlu0 %4749
      %4751 = vrot.lane.b32.xlu0 %v4680, 8
      %v4752 = vpop.permute.xlu0 %4751
      %4753 = vrot.lane.b32.xlu0 %v4681, 8
      %v4754 = vpop.permute.xlu0 %4753
      %4755 = vrot.lane.b32.xlu0 %v4682, 8
      %v4756 = vpop.permute.xlu0 %4755
      %4757 = vrot.lane.b32.xlu0 %v4683, 8
      %v4758 = vpop.permute.xlu0 %4757
      %4759 = vrot.lane.b32.xlu0 %v4684, 8
      %v4760 = vpop.permute.xlu0 %4759
      %4761 = vrot.lane.b32.xlu0 %v4685, 8
      %v4762 = vpop.permute.xlu0 %4761
      %4763 = vrot.lane.b32.xlu0 %v4686, 8
      %v4764 = vpop.permute.xlu0 %4763
      %4765 = vrot.lane.b32.xlu0 %v4687, 8
      %v4766 = vpop.permute.xlu0 %4765
      %4767 = vrot.lane.b32.xlu0 %v4688, 8
      %v4768 = vpop.permute.xlu0 %4767
      %4769 = vrot.lane.b32.xlu0 %v4689, 8
      %v4770 = vpop.permute.xlu0 %4769
      %4771 = vrot.lane.b32.xlu0 %v4690, 8
      %v4772 = vpop.permute.xlu0 %4771
      %4773 = vrot.lane.b32.xlu0 %v4691, 8
      %v4774 = vpop.permute.xlu0 %4773
      %4775 = vrot.lane.b32.xlu0 %v4692, 8
      %v4776 = vpop.permute.xlu0 %4775
      %4777 = vrot.lane.b32.xlu0 %v4693, 8
      %v4778 = vpop.permute.xlu0 %4777
      %4779 = vrot.lane.b32.xlu0 %v4694, 8
      %v4780 = vpop.permute.xlu0 %4779
      %4781 = vrot.lane.b32.xlu0 %v4695, 8
      %v4782 = vpop.permute.xlu0 %4781
      %4783 = vrot.lane.b32.xlu0 %v4696, 8
      %v4784 = vpop.permute.xlu0 %4783
      %4785 = vrot.lane.b32.xlu0 %v4697, 8
      %v4786 = vpop.permute.xlu0 %4785
      %4787 = vrot.lane.b32.xlu0 %v4698, 8
      %v4788 = vpop.permute.xlu0 %4787
      %4789 = vrot.lane.b32.xlu0 %v4699, 8
      %v4790 = vpop.permute.xlu0 %4789
      %4791 = vrot.lane.b32.xlu0 %v4700, 8
      %v4792 = vpop.permute.xlu0 %4791
      %4793 = vrot.lane.b32.xlu0 %v4701, 8
      %v4794 = vpop.permute.xlu0 %4793
      %4795 = vrot.lane.b32.xlu0 %v4702, 8
      %v4796 = vpop.permute.xlu0 %4795
      %4797 = vrot.lane.b32.xlu0 %v4703, 8
      %v4798 = vpop.permute.xlu0 %4797
      %4799 = vrot.lane.b32.xlu0 %v4704, 8
      %v4800 = vpop.permute.xlu0 %4799
      %v4833 = vmul.f32 %v4129, %v4738
      %v4834 = vmul.f32 %v4130, %v4740
      %v4835 = vmul.f32 %v4131, %v4742
      %v4836 = vmul.f32 %v4132, %v4744
      %v4837 = vmul.f32 %v4133, %v4746
      %v4838 = vmul.f32 %v4134, %v4748
      %v4839 = vmul.f32 %v4135, %v4750
      %v4840 = vmul.f32 %v4136, %v4752
      %v4841 = vmul.f32 %v4137, %v4754
      %v4842 = vmul.f32 %v4138, %v4756
      %v4843 = vmul.f32 %v4139, %v4758
      %v4844 = vmul.f32 %v4140, %v4760
      %v4845 = vmul.f32 %v4141, %v4762
      %v4846 = vmul.f32 %v4142, %v4764
      %v4847 = vmul.f32 %v4143, %v4766
      %v4848 = vmul.f32 %v4144, %v4768
      %v4849 = vmul.f32 %v4145, %v4770
      %v4850 = vmul.f32 %v4146, %v4772
      %v4851 = vmul.f32 %v4147, %v4774
      %v4852 = vmul.f32 %v4148, %v4776
      %v4853 = vmul.f32 %v4149, %v4778
      %v4854 = vmul.f32 %v4150, %v4780
      %v4855 = vmul.f32 %v4151, %v4782
      %v4856 = vmul.f32 %v4152, %v4784
      %v4857 = vmul.f32 %v4153, %v4786
      %v4858 = vmul.f32 %v4154, %v4788
      %v4859 = vmul.f32 %v4155, %v4790
      %v4860 = vmul.f32 %v4156, %v4792
      %v4861 = vmul.f32 %v4157, %v4794
      %v4862 = vmul.f32 %v4158, %v4796
      %v4863 = vmul.f32 %v4159, %v4798
      %v4864 = vmul.f32 %v4160, %v4800
      %4897 = vrot.lane.b32.xlu0 %v4641, 120
      %v4898 = vpop.permute.xlu0 %4897
      %4899 = vrot.lane.b32.xlu0 %v4642, 120
      %v4900 = vpop.permute.xlu0 %4899
      %4901 = vrot.lane.b32.xlu0 %v4643, 120
      %v4902 = vpop.permute.xlu0 %4901
      %4903 = vrot.lane.b32.xlu0 %v4644, 120
      %v4904 = vpop.permute.xlu0 %4903
      %4905 = vrot.lane.b32.xlu0 %v4645, 120
      %v4906 = vpop.permute.xlu0 %4905
      %4907 = vrot.lane.b32.xlu0 %v4646, 120
      %v4908 = vpop.permute.xlu0 %4907
      %4909 = vrot.lane.b32.xlu0 %v4647, 120
      %v4910 = vpop.permute.xlu0 %4909
      %4911 = vrot.lane.b32.xlu0 %v4648, 120
      %v4912 = vpop.permute.xlu0 %4911
      %4913 = vrot.lane.b32.xlu0 %v4649, 120
      %v4914 = vpop.permute.xlu0 %4913
      %4915 = vrot.lane.b32.xlu0 %v4650, 120
      %v4916 = vpop.permute.xlu0 %4915
      %4917 = vrot.lane.b32.xlu0 %v4651, 120
      %v4918 = vpop.permute.xlu0 %4917
      %4919 = vrot.lane.b32.xlu0 %v4652, 120
      %v4920 = vpop.permute.xlu0 %4919
      %4921 = vrot.lane.b32.xlu0 %v4653, 120
      %v4922 = vpop.permute.xlu0 %4921
      %4923 = vrot.lane.b32.xlu0 %v4654, 120
      %v4924 = vpop.permute.xlu0 %4923
      %4925 = vrot.lane.b32.xlu0 %v4655, 120
      %v4926 = vpop.permute.xlu0 %4925
      %4927 = vrot.lane.b32.xlu0 %v4656, 120
      %v4928 = vpop.permute.xlu0 %4927
      %4929 = vrot.lane.b32.xlu0 %v4657, 120
      %v4930 = vpop.permute.xlu0 %4929
      %4931 = vrot.lane.b32.xlu0 %v4658, 120
      %v4932 = vpop.permute.xlu0 %4931
      %4933 = vrot.lane.b32.xlu0 %v4659, 120
      %v4934 = vpop.permute.xlu0 %4933
      %4935 = vrot.lane.b32.xlu0 %v4660, 120
      %v4936 = vpop.permute.xlu0 %4935
      %4937 = vrot.lane.b32.xlu0 %v4661, 120
      %v4938 = vpop.permute.xlu0 %4937
      %4939 = vrot.lane.b32.xlu0 %v4662, 120
      %v4940 = vpop.permute.xlu0 %4939
      %4941 = vrot.lane.b32.xlu0 %v4663, 120
      %v4942 = vpop.permute.xlu0 %4941
      %4943 = vrot.lane.b32.xlu0 %v4664, 120
      %v4944 = vpop.permute.xlu0 %4943
      %4945 = vrot.lane.b32.xlu0 %v4665, 120
      %v4946 = vpop.permute.xlu0 %4945
      %4947 = vrot.lane.b32.xlu0 %v4666, 120
      %v4948 = vpop.permute.xlu0 %4947
      %4949 = vrot.lane.b32.xlu0 %v4667, 120
      %v4950 = vpop.permute.xlu0 %4949
      %4951 = vrot.lane.b32.xlu0 %v4668, 120
      %v4952 = vpop.permute.xlu0 %4951
      %4953 = vrot.lane.b32.xlu0 %v4669, 120
      %v4954 = vpop.permute.xlu0 %4953
      %4955 = vrot.lane.b32.xlu0 %v4670, 120
      %v4956 = vpop.permute.xlu0 %4955
      %4957 = vrot.lane.b32.xlu0 %v4671, 120
      %v4958 = vpop.permute.xlu0 %4957
      %4959 = vrot.lane.b32.xlu0 %v4672, 120
      %v4960 = vpop.permute.xlu0 %4959
      %4993 = vst.msk [vmem:[%s246] sm:$0xff] %vm447, %v4898
      %4994 = vst.msk [vmem:[%s246 + $0x8] sm:$0xff] %vm447, %v4900
      %4995 = vst.msk [vmem:[%s246 + $0x10] sm:$0xff] %vm447, %v4902
      %4996 = vst.msk [vmem:[%s246 + $0x18] sm:$0xff] %vm447, %v4904
      %4997 = vst.msk [vmem:[%s246 + $0x20] sm:$0xff] %vm447, %v4906
      %4998 = vst.msk [vmem:[%s246 + $0x28] sm:$0xff] %vm447, %v4908
      %4999 = vst.msk [vmem:[%s246 + $0x30] sm:$0xff] %vm447, %v4910
      %5000 = vst.msk [vmem:[%s246 + $0x38] sm:$0xff] %vm447, %v4912
      %5001 = vst.msk [vmem:[%s246 + $0x40] sm:$0xff] %vm447, %v4914
      %5002 = vst.msk [vmem:[%s246 + $0x48] sm:$0xff] %vm447, %v4916
      %5003 = vst.msk [vmem:[%s246 + $0x50] sm:$0xff] %vm447, %v4918
      %5004 = vst.msk [vmem:[%s246 + $0x58] sm:$0xff] %vm447, %v4920
      %5005 = vst.msk [vmem:[%s246 + $0x60] sm:$0xff] %vm447, %v4922
      %5006 = vst.msk [vmem:[%s246 + $0x68] sm:$0xff] %vm447, %v4924
      %5007 = vst.msk [vmem:[%s246 + $0x70] sm:$0xff] %vm447, %v4926
      %5008 = vst.msk [vmem:[%s246 + $0x78] sm:$0xff] %vm447, %v4928
      %5009 = vst.msk [vmem:[%s246 + $0x80] sm:$0xff] %vm447, %v4930
      %5010 = vst.msk [vmem:[%s246 + $0x88] sm:$0xff] %vm447, %v4932
      %5011 = vst.msk [vmem:[%s246 + $0x90] sm:$0xff] %vm447, %v4934
      %5012 = vst.msk [vmem:[%s246 + $0x98] sm:$0xff] %vm447, %v4936
      %5013 = vst.msk [vmem:[%s246 + $0xa0] sm:$0xff] %vm447, %v4938
      %5014 = vst.msk [vmem:[%s246 + $0xa8] sm:$0xff] %vm447, %v4940
      %5015 = vst.msk [vmem:[%s246 + $0xb0] sm:$0xff] %vm447, %v4942
      %5016 = vst.msk [vmem:[%s246 + $0xb8] sm:$0xff] %vm447, %v4944
      %5017 = vst.msk [vmem:[%s246 + $0xc0] sm:$0xff] %vm447, %v4946
      %5018 = vst.msk [vmem:[%s246 + $0xc8] sm:$0xff] %vm447, %v4948
      %5019 = vst.msk [vmem:[%s246 + $0xd0] sm:$0xff] %vm447, %v4950
      %5020 = vst.msk [vmem:[%s246 + $0xd8] sm:$0xff] %vm447, %v4952
      %5021 = vst.msk [vmem:[%s246 + $0xe0] sm:$0xff] %vm447, %v4954
      %5022 = vst.msk [vmem:[%s246 + $0xe8] sm:$0xff] %vm447, %v4956
      %5023 = vst.msk [vmem:[%s246 + $0xf0] sm:$0xff] %vm447, %v4958
      %5024 = vst.msk [vmem:[%s246 + $0xf8] sm:$0xff] %vm447, %v4960
      %5057 = vrot.lane.b32.xlu0 %v4833, 112
      %v5058 = vpop.permute.xlu0 %5057
      %5059 = vrot.lane.b32.xlu0 %v4834, 112
      %v5060 = vpop.permute.xlu0 %5059
      %5061 = vrot.lane.b32.xlu0 %v4835, 112
      %v5062 = vpop.permute.xlu0 %5061
      %5063 = vrot.lane.b32.xlu0 %v4836, 112
      %v5064 = vpop.permute.xlu0 %5063
      %5065 = vrot.lane.b32.xlu0 %v4837, 112
      %v5066 = vpop.permute.xlu0 %5065
      %5067 = vrot.lane.b32.xlu0 %v4838, 112
      %v5068 = vpop.permute.xlu0 %5067
      %5069 = vrot.lane.b32.xlu0 %v4839, 112
      %v5070 = vpop.permute.xlu0 %5069
      %5071 = vrot.lane.b32.xlu0 %v4840, 112
      %v5072 = vpop.permute.xlu0 %5071
      %5073 = vrot.lane.b32.xlu0 %v4841, 112
      %v5074 = vpop.permute.xlu0 %5073
      %5075 = vrot.lane.b32.xlu0 %v4842, 112
      %v5076 = vpop.permute.xlu0 %5075
      %5077 = vrot.lane.b32.xlu0 %v4843, 112
      %v5078 = vpop.permute.xlu0 %5077
      %5079 = vrot.lane.b32.xlu0 %v4844, 112
      %v5080 = vpop.permute.xlu0 %5079
      %5081 = vrot.lane.b32.xlu0 %v4845, 112
      %v5082 = vpop.permute.xlu0 %5081
      %5083 = vrot.lane.b32.xlu0 %v4846, 112
      %v5084 = vpop.permute.xlu0 %5083
      %5085 = vrot.lane.b32.xlu0 %v4847, 112
      %v5086 = vpop.permute.xlu0 %5085
      %5087 = vrot.lane.b32.xlu0 %v4848, 112
      %v5088 = vpop.permute.xlu0 %5087
      %5089 = vrot.lane.b32.xlu0 %v4849, 112
      %v5090 = vpop.permute.xlu0 %5089
      %5091 = vrot.lane.b32.xlu0 %v4850, 112
      %v5092 = vpop.permute.xlu0 %5091
      %5093 = vrot.lane.b32.xlu0 %v4851, 112
      %v5094 = vpop.permute.xlu0 %5093
      %5095 = vrot.lane.b32.xlu0 %v4852, 112
      %v5096 = vpop.permute.xlu0 %5095
      %5097 = vrot.lane.b32.xlu0 %v4853, 112
      %v5098 = vpop.permute.xlu0 %5097
      %5099 = vrot.lane.b32.xlu0 %v4854, 112
      %v5100 = vpop.permute.xlu0 %5099
      %5101 = vrot.lane.b32.xlu0 %v4855, 112
      %v5102 = vpop.permute.xlu0 %5101
      %5103 = vrot.lane.b32.xlu0 %v4856, 112
      %v5104 = vpop.permute.xlu0 %5103
      %5105 = vrot.lane.b32.xlu0 %v4857, 112
      %v5106 = vpop.permute.xlu0 %5105
      %5107 = vrot.lane.b32.xlu0 %v4858, 112
      %v5108 = vpop.permute.xlu0 %5107
      %5109 = vrot.lane.b32.xlu0 %v4859, 112
      %v5110 = vpop.permute.xlu0 %5109
      %5111 = vrot.lane.b32.xlu0 %v4860, 112
      %v5112 = vpop.permute.xlu0 %5111
      %5113 = vrot.lane.b32.xlu0 %v4861, 112
      %v5114 = vpop.permute.xlu0 %5113
      %5115 = vrot.lane.b32.xlu0 %v4862, 112
      %v5116 = vpop.permute.xlu0 %5115
      %5117 = vrot.lane.b32.xlu0 %v4863, 112
      %v5118 = vpop.permute.xlu0 %5117
      %5119 = vrot.lane.b32.xlu0 %v4864, 112
      %v5120 = vpop.permute.xlu0 %5119
      %5153 = vst.msk [vmem:[%s239] sm:$0xff] %vm447, %v5058
      %5154 = vst.msk [vmem:[%s239 + $0x8] sm:$0xff] %vm447, %v5060
      %5155 = vst.msk [vmem:[%s239 + $0x10] sm:$0xff] %vm447, %v5062
      %5156 = vst.msk [vmem:[%s239 + $0x18] sm:$0xff] %vm447, %v5064
      %5157 = vst.msk [vmem:[%s239 + $0x20] sm:$0xff] %vm447, %v5066
      %5158 = vst.msk [vmem:[%s239 + $0x28] sm:$0xff] %vm447, %v5068
      %5159 = vst.msk [vmem:[%s239 + $0x30] sm:$0xff] %vm447, %v5070
      %5160 = vst.msk [vmem:[%s239 + $0x38] sm:$0xff] %vm447, %v5072
      %5161 = vst.msk [vmem:[%s239 + $0x40] sm:$0xff] %vm447, %v5074
      %5162 = vst.msk [vmem:[%s239 + $0x48] sm:$0xff] %vm447, %v5076
      %5163 = vst.msk [vmem:[%s239 + $0x50] sm:$0xff] %vm447, %v5078
      %5164 = vst.msk [vmem:[%s239 + $0x58] sm:$0xff] %vm447, %v5080
      %5165 = vst.msk [vmem:[%s239 + $0x60] sm:$0xff] %vm447, %v5082
      %5166 = vst.msk [vmem:[%s239 + $0x68] sm:$0xff] %vm447, %v5084
      %5167 = vst.msk [vmem:[%s239 + $0x70] sm:$0xff] %vm447, %v5086
      %5168 = vst.msk [vmem:[%s239 + $0x78] sm:$0xff] %vm447, %v5088
      %5169 = vst.msk [vmem:[%s239 + $0x80] sm:$0xff] %vm447, %v5090
      %5170 = vst.msk [vmem:[%s239 + $0x88] sm:$0xff] %vm447, %v5092
      %5171 = vst.msk [vmem:[%s239 + $0x90] sm:$0xff] %vm447, %v5094
      %5172 = vst.msk [vmem:[%s239 + $0x98] sm:$0xff] %vm447, %v5096
      %5173 = vst.msk [vmem:[%s239 + $0xa0] sm:$0xff] %vm447, %v5098
      %5174 = vst.msk [vmem:[%s239 + $0xa8] sm:$0xff] %vm447, %v5100
      %5175 = vst.msk [vmem:[%s239 + $0xb0] sm:$0xff] %vm447, %v5102
      %5176 = vst.msk [vmem:[%s239 + $0xb8] sm:$0xff] %vm447, %v5104
      %5177 = vst.msk [vmem:[%s239 + $0xc0] sm:$0xff] %vm447, %v5106
      %5178 = vst.msk [vmem:[%s239 + $0xc8] sm:$0xff] %vm447, %v5108
      %5179 = vst.msk [vmem:[%s239 + $0xd0] sm:$0xff] %vm447, %v5110
      %5180 = vst.msk [vmem:[%s239 + $0xd8] sm:$0xff] %vm447, %v5112
      %5181 = vst.msk [vmem:[%s239 + $0xe0] sm:$0xff] %vm447, %v5114
      %5182 = vst.msk [vmem:[%s239 + $0xe8] sm:$0xff] %vm447, %v5116
      %5183 = vst.msk [vmem:[%s239 + $0xf0] sm:$0xff] %vm447, %v5118
      %5184 = vst.msk [vmem:[%s239 + $0xf8] sm:$0xff] %vm447, %v5120
      %s5185 = scalar_lea.vmem [#allocation3], 24
      %5186 = vst.msk [vmem:[%s5185 + $0x1] sm:$0xff] %vm447, %v5058
      %5187 = vst.msk [vmem:[%s5185 + $0x9] sm:$0xff] %vm447, %v5060
      %5188 = vst.msk [vmem:[%s5185 + $0x19] sm:$0xff] %vm447, %v5062
      %5189 = vst.msk [vmem:[%s5185 + $0x21] sm:$0xff] %vm447, %v5064
      %5190 = vst.msk [vmem:[%s5185 + $0x31] sm:$0xff] %vm447, %v5066
      %5191 = vst.msk [vmem:[%s5185 + $0x39] sm:$0xff] %vm447, %v5068
      %5192 = vst.msk [vmem:[%s5185 + $0x49] sm:$0xff] %vm447, %v5070
      %5193 = vst.msk [vmem:[%s5185 + $0x51] sm:$0xff] %vm447, %v5072
      %5194 = vst.msk [vmem:[%s5185 + $0x61] sm:$0xff] %vm447, %v5074
      %5195 = vst.msk [vmem:[%s5185 + $0x69] sm:$0xff] %vm447, %v5076
      %5196 = vst.msk [vmem:[%s5185 + $0x79] sm:$0xff] %vm447, %v5078
      %5197 = vst.msk [vmem:[%s5185 + $0x81] sm:$0xff] %vm447, %v5080
      %5198 = vst.msk [vmem:[%s5185 + $0x91] sm:$0xff] %vm447, %v5082
      %5199 = vst.msk [vmem:[%s5185 + $0x99] sm:$0xff] %vm447, %v5084
      %5200 = vst.msk [vmem:[%s5185 + $0xa9] sm:$0xff] %vm447, %v5086
      %5201 = vst.msk [vmem:[%s5185 + $0xb1] sm:$0xff] %vm447, %v5088
      %5202 = vst.msk [vmem:[%s5185 + $0xc1] sm:$0xff] %vm447, %v5090
      %5203 = vst.msk [vmem:[%s5185 + $0xc9] sm:$0xff] %vm447, %v5092
      %5204 = vst.msk [vmem:[%s5185 + $0xd9] sm:$0xff] %vm447, %v5094
      %5205 = vst.msk [vmem:[%s5185 + $0xe1] sm:$0xff] %vm447, %v5096
      %5206 = vst.msk [vmem:[%s5185 + $0xf1] sm:$0xff] %vm447, %v5098
      %5207 = vst.msk [vmem:[%s5185 + $0xf9] sm:$0xff] %vm447, %v5100
      %5208 = vst.msk [vmem:[%s5185 + $0x109] sm:$0xff] %vm447, %v5102
      %5209 = vst.msk [vmem:[%s5185 + $0x111] sm:$0xff] %vm447, %v5104
      %5210 = vst.msk [vmem:[%s5185 + $0x121] sm:$0xff] %vm447, %v5106
      %5211 = vst.msk [vmem:[%s5185 + $0x129] sm:$0xff] %vm447, %v5108
      %5212 = vst.msk [vmem:[%s5185 + $0x139] sm:$0xff] %vm447, %v5110
      %5213 = vst.msk [vmem:[%s5185 + $0x141] sm:$0xff] %vm447, %v5112
      %5214 = vst.msk [vmem:[%s5185 + $0x151] sm:$0xff] %vm447, %v5114
      %5215 = vst.msk [vmem:[%s5185 + $0x159] sm:$0xff] %vm447, %v5116
      %5216 = vst.msk [vmem:[%s5185 + $0x169] sm:$0xff] %vm447, %v5118
      %5217 = vst.msk [vmem:[%s5185 + $0x171] sm:$0xff] %vm447, %v5120
      %s5218 = smul.u32 %s21, 2
      %s5219 = sadd.s32 %s5218, %s20
      %p5220 = scmp.lt.s32.totalorder %s5219, 15
      %s5221 = scalar_select %p5220, %s5219, 15
      %s5222 = smul.addr %s5221, 32
      %s5223 = smul.addr %s5222, 8
      %s5224 = scalar_lea.vmem %s3, %s5223
      %p5225 = scmp.lt.s32.totalorder %s20, 1
      %s5226 = scalar_select %p5225, %s20, 1
      %s5227 = smul.addr %s5226, 32
      %s5228 = smul.addr %s5227, 8
      %s5229 = scalar_lea.vmem %s4, %s5228
      // Predicated region
      $region37: #{_lambda_.3} parent=31 // pred_check
        %p5230 = pneg %p122
      $region38: #{_lambda_.3} parent=31 // pred_check_branch
        %5232 = sbr.rel (%p5230) target = $region40
      $region39: #{_lambda_.3} parent=31 // pred_region
        %s5233 = smul.u32 %s21, 2
        %s5234 = sadd.s32 %s5233, %s20
      $region40: #{_lambda_.3} parent=31 // pred_fallthru
        _
      // Predicated region
      $region41: #{_lambda_.3} parent=31 // pred_check
        %p5235 = pneg %p148
      $region42: #{_lambda_.3} parent=31 // pred_check_branch
        %5237 = sbr.rel (%p5235) target = $region44
      $region43: #{_lambda_.3} parent=31 // pred_region
        _
      $region44: #{_lambda_.3} parent=31 // pred_fallthru
        _
    $region32: #{_lambda_.3} parent=5 // pred_fallthru
      _
    %p5238 = scmp.le.s32.totalorder 2, %s11
    // Predicated region
    $region45: #{_lambda_.3} parent=5 // pred_check
      %p5239 = pneg %p5238
    $region46: #{_lambda_.3} parent=5 // pred_check_branch
      %5241 = sbr.rel (%p5239) target = $region48
    $region47: #{_lambda_.3} parent=5 // pred_region
      %s5242 = ssub.s32 %s11, 2
      // Predicated region
      $region49: #{_lambda_.3} parent=47 // pred_check
        %p5243 = pneg %p128
      $region50: #{_lambda_.3} parent=47 // pred_check_branch
        %5245 = sbr.rel (%p5243) target = $region52
      $region51: #{_lambda_.3} parent=47 // pred_region
        %s5246 = smul.u32 %s23, 2
        %s5247 = sadd.s32 %s5246, %s22
        %p5248 = scmp.lt.s32.totalorder %s5247, 15
        %s5249 = scalar_select %p5248, %s5247, 15
        %s5250 = smul.addr %s5249, 32
        %s5251 = smul.addr %s5250, 8
        %s5252 = scalar_lea.vmem %s3, %s5251
      $region52: #{_lambda_.3} parent=47 // pred_fallthru
        _
      // Predicated region
      $region53: #{_lambda_.3} parent=47 // pred_check
        %p5253 = pneg %p154
      $region54: #{_lambda_.3} parent=47 // pred_check_branch
        %5255 = sbr.rel (%p5253) target = $region56
      $region55: #{_lambda_.3} parent=47 // pred_region
        %p5256 = scmp.lt.s32.totalorder %s22, 1
        %s5257 = scalar_select %p5256, %s22, 1
        %s5258 = smul.addr %s5257, 32
        %s5259 = smul.addr %s5258, 8
        %s5260 = scalar_lea.vmem %s4, %s5259
      $region56: #{_lambda_.3} parent=47 // pred_fallthru
        _
    $region48: #{_lambda_.3} parent=5 // pred_fallthru
      _
  $region6: #{_lambda_.3} parent=0 // loop_footer
    %s15 = sadd.s32 1, %s11
  $region7: #{_lambda_.3} parent=0 // loop_footer_branch
    %10 = sbr.rel target = $region3
  $region8: #{_lambda_.3} parent=0 // loop_exit
    _

</llo_original>
